<compile_context>
chip_gen: v7x
topology: tpu7x:2x2x1
jax: 0.10.0
libtpu: 0.0.40
codegen_flags: <defaults>
</compile_context>

<pallas_src>
import functools

import numpy as np

import jax
import jax.numpy as jnp
from jax.experimental import pallas as pl
from jax.experimental.pallas import tpu as pltpu


# ----------------------------------------------------------------------------
# Host-side constant builders (run once per board shape, cached)
# ----------------------------------------------------------------------------
@functools.lru_cache(maxsize=None)
def _head_constants(board_height, board_width):
    """0/1 matrices that turn the row-flat head-conv output into PyTorch's
    .view(-1, C*H*W) flatten order using only matmuls + an elementwise mask."""
    H, W = board_height, board_width
    Hp, Wp = H + 2, W + 2
    A = H * W
    Rp = Hp * Wp

    q = np.arange(Rp)
    hp, wp = q // Wp, q % Wp
    interior = (hp >= 1) & (hp <= H) & (wp >= 1) & (wp <= W)
    p_of = (hp - 1) * W + (wp - 1)                 # torch spatial index h*W + w

    mask = interior.astype(np.float32)[:, None]    # (Rp, 1) interior mask

    def spread_and_match(channels):
        j = np.arange(channels * A)
        cj, pj = j // A, j % A
        spread = (np.arange(channels)[:, None] == cj[None, :]).astype(np.float32)
        match = (interior[:, None] & (p_of[:, None] == pj[None, :])).astype(np.float32)
        return spread, match                       # (C, C*A), (Rp, C*A)

    ea, ma = spread_and_match(4)                   # policy head (4 channels)
    ev, mv = spread_and_match(2)                   # value head  (2 channels)
    return mask, ea, ma, ev, mv


def _full_block(shape):
    nd = len(shape)
    return pl.BlockSpec(tuple(shape), lambda b, _nd=nd: (0,) * _nd)


# ----------------------------------------------------------------------------
# The fused kernel (one grid step == one batch element)
# ----------------------------------------------------------------------------
def _qrqac_kernel(
    x_ref,
    w1_ref, b1_ref, w2_ref, b2_ref, w3_ref, b3_ref,
    wa_ref, ba_ref, wv_ref, bv_ref,
    wafc_ref, bafc_ref, wvfc1_ref, bvfc1_ref, wvfc2_ref, bvfc2_ref,
    mask_ref, ea_ref, ma_ref, ev_ref, mv_ref,
    act_ref, val_ref,
    s1_ref, s2_ref, s3_ref,
    *, rp, guard, wpad,
):
    f32, bf16 = jnp.float32, jnp.bfloat16
    # flat-row offset of each 3x3 tap in the zero-padded (Hp, Wp) board
    taps = [(kh - 1) * wpad + (kw - 1) for kh in range(3) for kw in range(3)]

    # Guard rows and the zero-padding border of each conv output must stay 0:
    # the shifted reads of the next layer rely on it.  Zero the scratch once.
    s1_ref[...] = jnp.zeros_like(s1_ref)
    s2_ref[...] = jnp.zeros_like(s2_ref)

    interior = mask_ref[...]                       # (rp, 1) 0/1 interior mask

    def conv3x3_relu(load, w_ref, b_ref, cout):
        acc = jnp.zeros((rp, cout), f32)
        for k, d in enumerate(taps):
            lhs = load(guard + d).astype(bf16)     # (rp, cin) shifted window
            acc = acc + jnp.dot(lhs, w_ref[k], preferred_element_type=f32)
        return jnp.maximum(acc + b_ref[...], 0.0) * interior

    # conv1 reads the pre-padded input block; conv2/3 read VMEM-resident scratch
    s1_ref[guard:guard + rp, :] = conv3x3_relu(
        lambda s: x_ref[0, s:s + rp, :], w1_ref, b1_ref, 32)
    s2_ref[guard:guard + rp, :] = conv3x3_relu(
        lambda s: s1_ref[s:s + rp, :], w2_ref, b2_ref, 64)
    s3_ref[guard:guard + rp, :] = conv3x3_relu(
        lambda s: s2_ref[s:s + rp, :], w3_ref, b3_ref, 128)

    x3 = s3_ref[guard:guard + rp, :].astype(bf16)  # (rp, 128)
    ones_row = jnp.ones((1, rp), bf16)

    def flatten_torch_order(head, e_ref, m_ref):
        # (rp, C) rows-in-(hp,wp) layout -> (1, C*A) in torch (c, h, w) order:
        # spread channels across lanes, keep the lane whose spatial index matches
        # the row, then sum rows (exactly one nonzero contribution per column).
        spread = jnp.dot(head.astype(bf16), e_ref[...], preferred_element_type=f32)
        picked = spread * m_ref[...]
        return jnp.dot(ones_row, picked.astype(bf16), preferred_element_type=f32)

    # ---------------- policy head ----------------
    xa = jnp.maximum(
        jnp.dot(x3, wa_ref[...], preferred_element_type=f32) + ba_ref[...], 0.0)
    xa_flat = flatten_torch_order(xa, ea_ref, ma_ref)           # (1, 4*A)
    logits = jnp.dot(xa_flat.astype(bf16), wafc_ref[...],
                     preferred_element_type=f32) + bafc_ref[...]
    zmax = jnp.max(logits, axis=-1, keepdims=True)
    z = logits - zmax
    logp = z - jnp.log(jnp.sum(jnp.exp(z), axis=-1, keepdims=True))
    act_ref[0] = logp.astype(act_ref.dtype)

    # ---------------- value head ----------------
    xv = jnp.maximum(
        jnp.dot(x3, wv_ref[...], preferred_element_type=f32) + bv_ref[...], 0.0)
    xv_flat = flatten_torch_order(xv, ev_ref, mv_ref)           # (1, 2*A)
    h1 = jnp.maximum(
        jnp.dot(xv_flat.astype(bf16), wvfc1_ref[...],
                preferred_element_type=f32) + bvfc1_ref[...], 0.0)
    val = jnp.dot(h1.astype(bf16), wvfc2_ref[...],
                  preferred_element_type=f32) + bvfc2_ref[...]
    val_ref[0] = val.astype(val_ref.dtype)


# ----------------------------------------------------------------------------
# Forward wrapper
# ----------------------------------------------------------------------------
def qrqac_forward(params, state_nchw, board_width, board_height, num_quantiles):
    B, C_in, H, W = state_nchw.shape
    assert H == board_height and W == board_width
    Hp, Wp = H + 2, W + 2
    A = H * W
    N = num_quantiles
    Rp = Hp * Wp                                   # padded positions per board
    guard = max(8, -(-(Wp + 1) // 8) * 8)          # >= Wp+1, multiple of 8
    Rb = Rp + 2 * guard

    # Tiny one-off input massaging (NCHW -> zero-padded, row-flat NHWC).
    x = jnp.transpose(state_nchw.astype(jnp.float32), (0, 2, 3, 1))   # (B,H,W,C)
    x = jnp.pad(x, ((0, 0), (1, 1), (1, 1), (0, 0)))                  # (B,Hp,Wp,C)
    x = x.reshape(B, Rp, C_in)
    x = jnp.pad(x, ((0, 0), (guard, guard), (0, 0)))                  # (B,Rb,C)

    mask_np, ea_np, ma_np, ev_np, mv_np = _head_constants(H, W)
    mask = jnp.asarray(mask_np, jnp.float32)
    ea = jnp.asarray(ea_np, jnp.bfloat16)
    ma = jnp.asarray(ma_np, jnp.float32)
    ev = jnp.asarray(ev_np, jnp.bfloat16)
    mv = jnp.asarray(mv_np, jnp.float32)

    inputs = [
        x,
        params["w1"], params["b1"], params["w2"], params["b2"],
        params["w3"], params["b3"],
        params["wa"], params["ba"], params["wv"], params["bv"],
        params["wafc"], params["bafc"],
        params["wvfc1"], params["bvfc1"],
        params["wvfc2"], params["bvfc2"],
        mask, ea, ma, ev, mv,
    ]

    in_specs = [pl.BlockSpec((1, Rb, C_in), lambda b: (b, 0, 0))]
    in_specs += [_full_block(a.shape) for a in inputs[1:]]

    out_shape = (
        jax.ShapeDtypeStruct((B, 1, A), jnp.float32),
        jax.ShapeDtypeStruct((B, 1, N * A), jnp.float32),
    )
    out_specs = (
        pl.BlockSpec((1, 1, A), lambda b: (b, 0, 0)),
        pl.BlockSpec((1, 1, N * A), lambda b: (b, 0, 0)),
    )

    scratch_shapes = [
        pltpu.VMEM((Rb, 32), jnp.float32),
        pltpu.VMEM((Rb, 64), jnp.float32),
        pltpu.VMEM((Rb, 128), jnp.float32),
    ]

    conv_flops = 2 * B * Rp * 9 * (C_in * 32 + 32 * 64 + 64 * 128)
    head_flops = 2 * B * Rp * 128 * 6
    flat_flops = 2 * B * Rp * (4 * 4 * A + 2 * 2 * A + 4 * A + 2 * A)
    fc_flops = 2 * B * (4 * A * A + 2 * A * 64 + 64 * A * N)
    in_bytes = sum(int(np.prod(a.shape)) * a.dtype.itemsize for a in inputs)
    out_bytes = B * (A + N * A) * 4
    cost = pl.CostEstimate(
        flops=conv_flops + head_flops + flat_flops + fc_flops,
        transcendentals=2 * B * A,
        bytes_accessed=in_bytes + out_bytes,
    )

    kern = functools.partial(_qrqac_kernel, rp=Rp, guard=guard, wpad=Wp)
    x_act, x_val = pl.pallas_call(
        kern,
        out_shape=out_shape,
        grid=(B,),
        in_specs=in_specs,
        out_specs=out_specs,
        scratch_shapes=scratch_shapes,
        compiler_params=pltpu.CompilerParams(
            dimension_semantics=("parallel",),
            vmem_limit_bytes=32 * 1024 * 1024,
        ),
        cost_estimate=cost,
    )(*inputs)

    return x_act.reshape(B, A), x_val.reshape(B, N, A)


# ----------------------------------------------------------------------------
# Parameters: PyTorch-convention weights, packed once into kernel layouts
# ----------------------------------------------------------------------------
def init_torch_params(key, board_width, board_height, num_quantiles):
    A = board_width * board_height
    spec = {
        "conv1_w": (32, 5, 3, 3),      "conv1_b": (32,),
        "conv2_w": (64, 32, 3, 3),     "conv2_b": (64,),
        "conv3_w": (128, 64, 3, 3),    "conv3_b": (128,),
        "act_conv1_w": (4, 128, 1, 1), "act_conv1_b": (4,),
        "act_fc1_w": (A, 4 * A),       "act_fc1_b": (A,),
        "val_conv1_w": (2, 128, 1, 1), "val_conv1_b": (2,),
        "val_fc1_w": (64, 2 * A),      "val_fc1_b": (64,),
        "val_fc2_w": (A * num_quantiles, 64), "val_fc2_b": (A * num_quantiles,),
    }
    keys = jax.random.split(key, len(spec))
    return {name: 0.1 * jax.random.normal(k, shp, jnp.float32)
            for (name, shp), k in zip(spec.items(), keys)}


def pack_params(tp):
    """One-time repack (off the hot path): conv3x3 -> (tap, Cin, Cout),
    conv1x1 / Linear -> (in, out); MXU operands bf16, biases f32 (1, N)."""
    def conv3x3_w(w):
        return jnp.transpose(w, (2, 3, 1, 0)).reshape(
            9, w.shape[1], w.shape[0]).astype(jnp.bfloat16)

    def conv1x1_w(w):
        return jnp.transpose(w.reshape(w.shape[0], w.shape[1]),
                             (1, 0)).astype(jnp.bfloat16)

    def fc_w(w):
        return jnp.transpose(w, (1, 0)).astype(jnp.bfloat16)

    def bias(b):
        return b.reshape(1, -1).astype(jnp.float32)

    return {
        "w1": conv3x3_w(tp["conv1_w"]), "b1": bias(tp["conv1_b"]),
        "w2": conv3x3_w(tp["conv2_w"]), "b2": bias(tp["conv2_b"]),
        "w3": conv3x3_w(tp["conv3_w"]), "b3": bias(tp["conv3_b"]),
        "wa": conv1x1_w(tp["act_conv1_w"]), "ba": bias(tp["act_conv1_b"]),
        "wv": conv1x1_w(tp["val_conv1_w"]), "bv": bias(tp["val_conv1_b"]),
        "wafc": fc_w(tp["act_fc1_w"]), "bafc": bias(tp["act_fc1_b"]),
        "wvfc1": fc_w(tp["val_fc1_w"]), "bvfc1": bias(tp["val_fc1_b"]),
        "wvfc2": fc_w(tp["val_fc2_w"]), "bvfc2": bias(tp["val_fc2_b"]),
    }


# ----------------------------------------------------------------------------
# Pure-JAX f32 reference of QRQAC.forward (for a correctness check only)
# ----------------------------------------------------------------------------
def reference_forward(tp, state, board_width, board_height, num_quantiles):
    A = board_width * board_height
    hi = jax.lax.Precision.HIGHEST
    dn = ("NCHW", "OIHW", "NCHW")

    def conv(x, w, b):
        y = jax.lax.conv_general_dilated(x, w, (1, 1), "SAME",
                                         dimension_numbers=dn, precision=hi)
        return y + b.reshape(1, -1, 1, 1)

    x = jax.nn.relu(conv(state, tp["conv1_w"], tp["conv1_b"]))
    x = jax.nn.relu(conv(x, tp["conv2_w"], tp["conv2_b"]))
    x = jax.nn.relu(conv(x, tp["conv3_w"], tp["conv3_b"]))

    xa = jax.nn.relu(conv(x, tp["act_conv1_w"], tp["act_conv1_b"]))
    xa = xa.reshape(xa.shape[0], -1)
    xa = jnp.dot(xa, tp["act_fc1_w"].T, precision=hi) + tp["act_fc1_b"]
    xa = jax.nn.log_softmax(xa, axis=1)

    xv = jax.nn.relu(conv(x, tp["val_conv1_w"], tp["val_conv1_b"]))
    xv = xv.reshape(xv.shape[0], -1)
    xv = jax.nn.relu(jnp.dot(xv, tp["val_fc1_w"].T, precision=hi) + tp["val_fc1_b"])
    xv = jnp.dot(xv, tp["val_fc2_w"].T, precision=hi) + tp["val_fc2_b"]
    return xa, xv.reshape(-1, num_quantiles, A)


# ----------------------------------------------------------------------------
if __name__ == "__main__":
    board_width = 8
    board_height = 8
    num_quantiles = 8
    batch = 2

    root = jax.random.PRNGKey(0)
    kp, kx = jax.random.split(root)
    torch_params = init_torch_params(kp, board_width, board_height, num_quantiles)
    params = pack_params(torch_params)          # one-time layout repack

    state_input = jax.random.normal(
        kx, (batch, 5, board_height, board_width), jnp.float32)   # NCHW like PyTorch

    fwd = jax.jit(functools.partial(
        qrqac_forward,
        board_width=board_width,
        board_height=board_height,
        num_quantiles=num_quantiles))

    x_act, x_val = fwd(params, state_input)
    jax.block_until_ready((x_act, x_val))

    num_actions = board_width * board_height
    assert x_act.shape == (batch, num_actions), x_act.shape
    assert x_val.shape == (batch, num_quantiles, num_actions), x_val.shape

    # log_softmax rows must (log-)sum to ~0
    row_lse = jax.scipy.special.logsumexp(x_act, axis=1)
    assert jnp.max(jnp.abs(row_lse)) < 1e-3, row_lse

    # compare against the pure-JAX f32 reference (bf16 MXU operands => loose tol)
    ref_act, ref_val = reference_forward(
        torch_params, state_input, board_width, board_height, num_quantiles)
    assert jnp.max(jnp.abs(x_act - ref_act)) < 0.15
    assert jnp.max(jnp.abs(x_val - ref_val)) < 0.15

    print("KERNEL_OK")
</pallas_src>

<mosaic_0001>
module attributes {stable_mosaic.version = 11 : i64} {
  func.func @_qrqac_kernel(%arg0: i32, %arg1: memref<1x132x5xf32, #tpu.memory_space<vmem>>, %arg2: memref<9x5x32xbf16, #tpu.memory_space<vmem>>, %arg3: memref<1x32xf32, #tpu.memory_space<vmem>>, %arg4: memref<9x32x64xbf16, #tpu.memory_space<vmem>>, %arg5: memref<1x64xf32, #tpu.memory_space<vmem>>, %arg6: memref<9x64x128xbf16, #tpu.memory_space<vmem>>, %arg7: memref<1x128xf32, #tpu.memory_space<vmem>>, %arg8: memref<128x4xbf16, #tpu.memory_space<vmem>>, %arg9: memref<1x4xf32, #tpu.memory_space<vmem>>, %arg10: memref<128x2xbf16, #tpu.memory_space<vmem>>, %arg11: memref<1x2xf32, #tpu.memory_space<vmem>>, %arg12: memref<256x64xbf16, #tpu.memory_space<vmem>>, %arg13: memref<1x64xf32, #tpu.memory_space<vmem>>, %arg14: memref<128x64xbf16, #tpu.memory_space<vmem>>, %arg15: memref<1x64xf32, #tpu.memory_space<vmem>>, %arg16: memref<64x512xbf16, #tpu.memory_space<vmem>>, %arg17: memref<1x512xf32, #tpu.memory_space<vmem>>, %arg18: memref<100x1xf32, #tpu.memory_space<vmem>>, %arg19: memref<4x256xbf16, #tpu.memory_space<vmem>>, %arg20: memref<100x256xf32, #tpu.memory_space<vmem>>, %arg21: memref<2x128xbf16, #tpu.memory_space<vmem>>, %arg22: memref<100x128xf32, #tpu.memory_space<vmem>>, %arg23: memref<1x1x64xf32, #tpu.memory_space<vmem>>, %arg24: memref<1x1x512xf32, #tpu.memory_space<vmem>>, %arg25: memref<132x32xf32, #tpu.memory_space<vmem>>, %arg26: memref<132x64xf32, #tpu.memory_space<vmem>>, %arg27: memref<132x128xf32, #tpu.memory_space<vmem>>) attributes {dimension_semantics = [#tpu.dimension_semantics<parallel>], iteration_bounds = array<i64: 2>, scalar_prefetch = 0 : i64, scratch_operands = 3 : i64, tpu.core_type = #tpu.core_type<tc>, window_params = [{transform_indices = @transform_0, window_bounds = array<i64: 1, 132, 5>}, {pipeline_mode = #tpu.pipeline_mode<synchronous>, transform_indices = @transform_1, window_bounds = array<i64: 9, 5, 32>}, {pipeline_mode = #tpu.pipeline_mode<synchronous>, transform_indices = @transform_2, window_bounds = array<i64: 1, 32>}, {pipeline_mode = #tpu.pipeline_mode<synchronous>, transform_indices = @transform_3, window_bounds = array<i64: 9, 32, 64>}, {pipeline_mode = #tpu.pipeline_mode<synchronous>, transform_indices = @transform_4, window_bounds = array<i64: 1, 64>}, {pipeline_mode = #tpu.pipeline_mode<synchronous>, transform_indices = @transform_5, window_bounds = array<i64: 9, 64, 128>}, {pipeline_mode = #tpu.pipeline_mode<synchronous>, transform_indices = @transform_6, window_bounds = array<i64: 1, 128>}, {pipeline_mode = #tpu.pipeline_mode<synchronous>, transform_indices = @transform_7, window_bounds = array<i64: 128, 4>}, {pipeline_mode = #tpu.pipeline_mode<synchronous>, transform_indices = @transform_8, window_bounds = array<i64: 1, 4>}, {pipeline_mode = #tpu.pipeline_mode<synchronous>, transform_indices = @transform_9, window_bounds = array<i64: 128, 2>}, {pipeline_mode = #tpu.pipeline_mode<synchronous>, transform_indices = @transform_10, window_bounds = array<i64: 1, 2>}, {pipeline_mode = #tpu.pipeline_mode<synchronous>, transform_indices = @transform_11, window_bounds = array<i64: 256, 64>}, {pipeline_mode = #tpu.pipeline_mode<synchronous>, transform_indices = @transform_12, window_bounds = array<i64: 1, 64>}, {pipeline_mode = #tpu.pipeline_mode<synchronous>, transform_indices = @transform_13, window_bounds = array<i64: 128, 64>}, {pipeline_mode = #tpu.pipeline_mode<synchronous>, transform_indices = @transform_14, window_bounds = array<i64: 1, 64>}, {pipeline_mode = #tpu.pipeline_mode<synchronous>, transform_indices = @transform_15, window_bounds = array<i64: 64, 512>}, {pipeline_mode = #tpu.pipeline_mode<synchronous>, transform_indices = @transform_16, window_bounds = array<i64: 1, 512>}, {pipeline_mode = #tpu.pipeline_mode<synchronous>, transform_indices = @transform_17, window_bounds = array<i64: 100, 1>}, {pipeline_mode = #tpu.pipeline_mode<synchronous>, transform_indices = @transform_18, window_bounds = array<i64: 4, 256>}, {pipeline_mode = #tpu.pipeline_mode<synchronous>, transform_indices = @transform_19, window_bounds = array<i64: 100, 256>}, {pipeline_mode = #tpu.pipeline_mode<synchronous>, transform_indices = @transform_20, window_bounds = array<i64: 2, 128>}, {pipeline_mode = #tpu.pipeline_mode<synchronous>, transform_indices = @transform_21, window_bounds = array<i64: 100, 128>}, {transform_indices = @transform_22, window_bounds = array<i64: 1, 1, 64>}, {transform_indices = @transform_23, window_bounds = array<i64: 1, 1, 512>}]} {
    %cst = arith.constant 0.000000e+00 : f32
    %0 = vector.broadcast %cst : f32 to vector<132x32xf32>
    %c0 = arith.constant 0 : index
    %c0_0 = arith.constant 0 : index
    %1 = vector.load %arg25[%c0, %c0_0] : memref<132x32xf32, #tpu.memory_space<vmem>>, vector<132x32xf32>
    tpu.vector_store %arg25[%c0, %c0_0], %0 {strides = array<i32>} : memref<132x32xf32, #tpu.memory_space<vmem>>, vector<132x32xf32>,
    %cst_1 = arith.constant 0.000000e+00 : f32
    %2 = vector.broadcast %cst_1 : f32 to vector<132x64xf32>
    %c0_2 = arith.constant 0 : index
    %c0_3 = arith.constant 0 : index
    %3 = vector.load %arg26[%c0_2, %c0_3] : memref<132x64xf32, #tpu.memory_space<vmem>>, vector<132x64xf32>
    tpu.vector_store %arg26[%c0_2, %c0_3], %2 {strides = array<i32>} : memref<132x64xf32, #tpu.memory_space<vmem>>, vector<132x64xf32>,
    %c0_4 = arith.constant 0 : index
    %c0_5 = arith.constant 0 : index
    %4 = vector.load %arg18[%c0_4, %c0_5] : memref<100x1xf32, #tpu.memory_space<vmem>>, vector<100x1xf32>
    %cst_6 = arith.constant 0.000000e+00 : f32
    %5 = vector.broadcast %cst_6 : f32 to vector<100x32xf32>
    %c0_7 = arith.constant 0 : index
    %c5 = arith.constant 5 : index
    %c0_8 = arith.constant 0 : index
    %6 = vector.load %arg1[%c0_7, %c5, %c0_8] : memref<1x132x5xf32, #tpu.memory_space<vmem>>, vector<1x100x5xf32>
    %7 = vector.shape_cast %6 : vector<1x100x5xf32> to vector<100x5xf32>
    %8 = arith.truncf %7 : vector<100x5xf32> to vector<100x5xbf16>
    %c0_9 = arith.constant 0 : index
    %c0_10 = arith.constant 0 : index
    %c0_11 = arith.constant 0 : index
    %9 = vector.load %arg2[%c0_9, %c0_10, %c0_11] : memref<9x5x32xbf16, #tpu.memory_space<vmem>>, vector<1x5x32xbf16>
    %10 = vector.shape_cast %9 : vector<1x5x32xbf16> to vector<5x32xbf16>
    %cst_12 = arith.constant dense<0.000000e+00> : vector<100x32xf32>
    %11 = tpu.matmul %8, %10, %cst_12 {dimension_numbers = #tpu.dot_dimension_numbers<[1], [0], [0], [1], [0, 0, 1, 1], [], []>} : vector<100x5xbf16>, vector<5x32xbf16>, vector<100x32xf32> -> vector<100x32xf32>
    %12 = arith.addf %5, %11 : vector<100x32xf32>
    %c0_13 = arith.constant 0 : index
    %c6 = arith.constant 6 : index
    %c0_14 = arith.constant 0 : index
    %13 = vector.load %arg1[%c0_13, %c6, %c0_14] : memref<1x132x5xf32, #tpu.memory_space<vmem>>, vector<1x100x5xf32>
    %14 = vector.shape_cast %13 : vector<1x100x5xf32> to vector<100x5xf32>
    %15 = arith.truncf %14 : vector<100x5xf32> to vector<100x5xbf16>
    %c1 = arith.constant 1 : index
    %c0_15 = arith.constant 0 : index
    %c0_16 = arith.constant 0 : index
    %16 = vector.load %arg2[%c1, %c0_15, %c0_16] : memref<9x5x32xbf16, #tpu.memory_space<vmem>>, vector<1x5x32xbf16>
    %17 = vector.shape_cast %16 : vector<1x5x32xbf16> to vector<5x32xbf16>
    %cst_17 = arith.constant dense<0.000000e+00> : vector<100x32xf32>
    %18 = tpu.matmul %15, %17, %cst_17 {dimension_numbers = #tpu.dot_dimension_numbers<[1], [0], [0], [1], [0, 0, 1, 1], [], []>} : vector<100x5xbf16>, vector<5x32xbf16>, vector<100x32xf32> -> vector<100x32xf32>
    %19 = arith.addf %12, %18 : vector<100x32xf32>
    %c0_18 = arith.constant 0 : index
    %c7 = arith.constant 7 : index
    %c0_19 = arith.constant 0 : index
    %20 = vector.load %arg1[%c0_18, %c7, %c0_19] : memref<1x132x5xf32, #tpu.memory_space<vmem>>, vector<1x100x5xf32>
    %21 = vector.shape_cast %20 : vector<1x100x5xf32> to vector<100x5xf32>
    %22 = arith.truncf %21 : vector<100x5xf32> to vector<100x5xbf16>
    %c2 = arith.constant 2 : index
    %c0_20 = arith.constant 0 : index
    %c0_21 = arith.constant 0 : index
    %23 = vector.load %arg2[%c2, %c0_20, %c0_21] : memref<9x5x32xbf16, #tpu.memory_space<vmem>>, vector<1x5x32xbf16>
    %24 = vector.shape_cast %23 : vector<1x5x32xbf16> to vector<5x32xbf16>
    %cst_22 = arith.constant dense<0.000000e+00> : vector<100x32xf32>
    %25 = tpu.matmul %22, %24, %cst_22 {dimension_numbers = #tpu.dot_dimension_numbers<[1], [0], [0], [1], [0, 0, 1, 1], [], []>} : vector<100x5xbf16>, vector<5x32xbf16>, vector<100x32xf32> -> vector<100x32xf32>
    %26 = arith.addf %19, %25 : vector<100x32xf32>
    %c0_23 = arith.constant 0 : index
    %c15 = arith.constant 15 : index
    %c0_24 = arith.constant 0 : index
    %27 = vector.load %arg1[%c0_23, %c15, %c0_24] : memref<1x132x5xf32, #tpu.memory_space<vmem>>, vector<1x100x5xf32>
    %28 = vector.shape_cast %27 : vector<1x100x5xf32> to vector<100x5xf32>
    %29 = arith.truncf %28 : vector<100x5xf32> to vector<100x5xbf16>
    %c3 = arith.constant 3 : index
    %c0_25 = arith.constant 0 : index
    %c0_26 = arith.constant 0 : index
    %30 = vector.load %arg2[%c3, %c0_25, %c0_26] : memref<9x5x32xbf16, #tpu.memory_space<vmem>>, vector<1x5x32xbf16>
    %31 = vector.shape_cast %30 : vector<1x5x32xbf16> to vector<5x32xbf16>
    %cst_27 = arith.constant dense<0.000000e+00> : vector<100x32xf32>
    %32 = tpu.matmul %29, %31, %cst_27 {dimension_numbers = #tpu.dot_dimension_numbers<[1], [0], [0], [1], [0, 0, 1, 1], [], []>} : vector<100x5xbf16>, vector<5x32xbf16>, vector<100x32xf32> -> vector<100x32xf32>
    %33 = arith.addf %26, %32 : vector<100x32xf32>
    %c0_28 = arith.constant 0 : index
    %c16 = arith.constant 16 : index
    %c0_29 = arith.constant 0 : index
    %34 = vector.load %arg1[%c0_28, %c16, %c0_29] : memref<1x132x5xf32, #tpu.memory_space<vmem>>, vector<1x100x5xf32>
    %35 = vector.shape_cast %34 : vector<1x100x5xf32> to vector<100x5xf32>
    %36 = arith.truncf %35 : vector<100x5xf32> to vector<100x5xbf16>
    %c4 = arith.constant 4 : index
    %c0_30 = arith.constant 0 : index
    %c0_31 = arith.constant 0 : index
    %37 = vector.load %arg2[%c4, %c0_30, %c0_31] : memref<9x5x32xbf16, #tpu.memory_space<vmem>>, vector<1x5x32xbf16>
    %38 = vector.shape_cast %37 : vector<1x5x32xbf16> to vector<5x32xbf16>
    %cst_32 = arith.constant dense<0.000000e+00> : vector<100x32xf32>
    %39 = tpu.matmul %36, %38, %cst_32 {dimension_numbers = #tpu.dot_dimension_numbers<[1], [0], [0], [1], [0, 0, 1, 1], [], []>} : vector<100x5xbf16>, vector<5x32xbf16>, vector<100x32xf32> -> vector<100x32xf32>
    %40 = arith.addf %33, %39 : vector<100x32xf32>
    %c0_33 = arith.constant 0 : index
    %c17 = arith.constant 17 : index
    %c0_34 = arith.constant 0 : index
    %41 = vector.load %arg1[%c0_33, %c17, %c0_34] : memref<1x132x5xf32, #tpu.memory_space<vmem>>, vector<1x100x5xf32>
    %42 = vector.shape_cast %41 : vector<1x100x5xf32> to vector<100x5xf32>
    %43 = arith.truncf %42 : vector<100x5xf32> to vector<100x5xbf16>
    %c5_35 = arith.constant 5 : index
    %c0_36 = arith.constant 0 : index
    %c0_37 = arith.constant 0 : index
    %44 = vector.load %arg2[%c5_35, %c0_36, %c0_37] : memref<9x5x32xbf16, #tpu.memory_space<vmem>>, vector<1x5x32xbf16>
    %45 = vector.shape_cast %44 : vector<1x5x32xbf16> to vector<5x32xbf16>
    %cst_38 = arith.constant dense<0.000000e+00> : vector<100x32xf32>
    %46 = tpu.matmul %43, %45, %cst_38 {dimension_numbers = #tpu.dot_dimension_numbers<[1], [0], [0], [1], [0, 0, 1, 1], [], []>} : vector<100x5xbf16>, vector<5x32xbf16>, vector<100x32xf32> -> vector<100x32xf32>
    %47 = arith.addf %40, %46 : vector<100x32xf32>
    %c0_39 = arith.constant 0 : index
    %c25 = arith.constant 25 : index
    %c0_40 = arith.constant 0 : index
    %48 = vector.load %arg1[%c0_39, %c25, %c0_40] : memref<1x132x5xf32, #tpu.memory_space<vmem>>, vector<1x100x5xf32>
    %49 = vector.shape_cast %48 : vector<1x100x5xf32> to vector<100x5xf32>
    %50 = arith.truncf %49 : vector<100x5xf32> to vector<100x5xbf16>
    %c6_41 = arith.constant 6 : index
    %c0_42 = arith.constant 0 : index
    %c0_43 = arith.constant 0 : index
    %51 = vector.load %arg2[%c6_41, %c0_42, %c0_43] : memref<9x5x32xbf16, #tpu.memory_space<vmem>>, vector<1x5x32xbf16>
    %52 = vector.shape_cast %51 : vector<1x5x32xbf16> to vector<5x32xbf16>
    %cst_44 = arith.constant dense<0.000000e+00> : vector<100x32xf32>
    %53 = tpu.matmul %50, %52, %cst_44 {dimension_numbers = #tpu.dot_dimension_numbers<[1], [0], [0], [1], [0, 0, 1, 1], [], []>} : vector<100x5xbf16>, vector<5x32xbf16>, vector<100x32xf32> -> vector<100x32xf32>
    %54 = arith.addf %47, %53 : vector<100x32xf32>
    %c0_45 = arith.constant 0 : index
    %c26 = arith.constant 26 : index
    %c0_46 = arith.constant 0 : index
    %55 = vector.load %arg1[%c0_45, %c26, %c0_46] : memref<1x132x5xf32, #tpu.memory_space<vmem>>, vector<1x100x5xf32>
    %56 = vector.shape_cast %55 : vector<1x100x5xf32> to vector<100x5xf32>
    %57 = arith.truncf %56 : vector<100x5xf32> to vector<100x5xbf16>
    %c7_47 = arith.constant 7 : index
    %c0_48 = arith.constant 0 : index
    %c0_49 = arith.constant 0 : index
    %58 = vector.load %arg2[%c7_47, %c0_48, %c0_49] : memref<9x5x32xbf16, #tpu.memory_space<vmem>>, vector<1x5x32xbf16>
    %59 = vector.shape_cast %58 : vector<1x5x32xbf16> to vector<5x32xbf16>
    %cst_50 = arith.constant dense<0.000000e+00> : vector<100x32xf32>
    %60 = tpu.matmul %57, %59, %cst_50 {dimension_numbers = #tpu.dot_dimension_numbers<[1], [0], [0], [1], [0, 0, 1, 1], [], []>} : vector<100x5xbf16>, vector<5x32xbf16>, vector<100x32xf32> -> vector<100x32xf32>
    %61 = arith.addf %54, %60 : vector<100x32xf32>
    %c0_51 = arith.constant 0 : index
    %c27 = arith.constant 27 : index
    %c0_52 = arith.constant 0 : index
    %62 = vector.load %arg1[%c0_51, %c27, %c0_52] : memref<1x132x5xf32, #tpu.memory_space<vmem>>, vector<1x100x5xf32>
    %63 = vector.shape_cast %62 : vector<1x100x5xf32> to vector<100x5xf32>
    %64 = arith.truncf %63 : vector<100x5xf32> to vector<100x5xbf16>
    %c8 = arith.constant 8 : index
    %c0_53 = arith.constant 0 : index
    %c0_54 = arith.constant 0 : index
    %65 = vector.load %arg2[%c8, %c0_53, %c0_54] : memref<9x5x32xbf16, #tpu.memory_space<vmem>>, vector<1x5x32xbf16>
    %66 = vector.shape_cast %65 : vector<1x5x32xbf16> to vector<5x32xbf16>
    %cst_55 = arith.constant dense<0.000000e+00> : vector<100x32xf32>
    %67 = tpu.matmul %64, %66, %cst_55 {dimension_numbers = #tpu.dot_dimension_numbers<[1], [0], [0], [1], [0, 0, 1, 1], [], []>} : vector<100x5xbf16>, vector<5x32xbf16>, vector<100x32xf32> -> vector<100x32xf32>
    %68 = arith.addf %61, %67 : vector<100x32xf32>
    %c0_56 = arith.constant 0 : index
    %c0_57 = arith.constant 0 : index
    %69 = vector.load %arg3[%c0_56, %c0_57] : memref<1x32xf32, #tpu.memory_space<vmem>>, vector<1x32xf32>
    %70 = vector.broadcast %69 : vector<1x32xf32> to vector<100x32xf32>
    %71 = arith.addf %68, %70 : vector<100x32xf32>
    %cst_58 = arith.constant 0.000000e+00 : f32
    %72 = vector.broadcast %cst_58 : f32 to vector<100x32xf32>
    %73 = arith.maximumf %71, %72 : vector<100x32xf32>
    %74 = vector.broadcast %4 : vector<100x1xf32> to vector<100x32xf32>
    %75 = arith.mulf %73, %74 : vector<100x32xf32>
    %c16_59 = arith.constant 16 : index
    %c0_60 = arith.constant 0 : index
    %76 = vector.load %arg25[%c16_59, %c0_60] : memref<132x32xf32, #tpu.memory_space<vmem>>, vector<100x32xf32>
    tpu.vector_store %arg25[%c16_59, %c0_60], %75 {strides = array<i32>} : memref<132x32xf32, #tpu.memory_space<vmem>>, vector<100x32xf32>,
    %cst_61 = arith.constant 0.000000e+00 : f32
    %77 = vector.broadcast %cst_61 : f32 to vector<100x64xf32>
    %c5_62 = arith.constant 5 : index
    %c0_63 = arith.constant 0 : index
    %78 = vector.load %arg25[%c5_62, %c0_63] : memref<132x32xf32, #tpu.memory_space<vmem>>, vector<100x32xf32>
    %79 = arith.truncf %78 : vector<100x32xf32> to vector<100x32xbf16>
    %c0_64 = arith.constant 0 : index
    %c0_65 = arith.constant 0 : index
    %c0_66 = arith.constant 0 : index
    %80 = vector.load %arg4[%c0_64, %c0_65, %c0_66] : memref<9x32x64xbf16, #tpu.memory_space<vmem>>, vector<1x32x64xbf16>
    %81 = vector.shape_cast %80 : vector<1x32x64xbf16> to vector<32x64xbf16>
    %cst_67 = arith.constant dense<0.000000e+00> : vector<100x64xf32>
    %82 = tpu.matmul %79, %81, %cst_67 {dimension_numbers = #tpu.dot_dimension_numbers<[1], [0], [0], [1], [0, 0, 1, 1], [], []>} : vector<100x32xbf16>, vector<32x64xbf16>, vector<100x64xf32> -> vector<100x64xf32>
    %83 = arith.addf %77, %82 : vector<100x64xf32>
    %c6_68 = arith.constant 6 : index
    %c0_69 = arith.constant 0 : index
    %84 = vector.load %arg25[%c6_68, %c0_69] : memref<132x32xf32, #tpu.memory_space<vmem>>, vector<100x32xf32>
    %85 = arith.truncf %84 : vector<100x32xf32> to vector<100x32xbf16>
    %c1_70 = arith.constant 1 : index
    %c0_71 = arith.constant 0 : index
    %c0_72 = arith.constant 0 : index
    %86 = vector.load %arg4[%c1_70, %c0_71, %c0_72] : memref<9x32x64xbf16, #tpu.memory_space<vmem>>, vector<1x32x64xbf16>
    %87 = vector.shape_cast %86 : vector<1x32x64xbf16> to vector<32x64xbf16>
    %cst_73 = arith.constant dense<0.000000e+00> : vector<100x64xf32>
    %88 = tpu.matmul %85, %87, %cst_73 {dimension_numbers = #tpu.dot_dimension_numbers<[1], [0], [0], [1], [0, 0, 1, 1], [], []>} : vector<100x32xbf16>, vector<32x64xbf16>, vector<100x64xf32> -> vector<100x64xf32>
    %89 = arith.addf %83, %88 : vector<100x64xf32>
    %c7_74 = arith.constant 7 : index
    %c0_75 = arith.constant 0 : index
    %90 = vector.load %arg25[%c7_74, %c0_75] : memref<132x32xf32, #tpu.memory_space<vmem>>, vector<100x32xf32>
    %91 = arith.truncf %90 : vector<100x32xf32> to vector<100x32xbf16>
    %c2_76 = arith.constant 2 : index
    %c0_77 = arith.constant 0 : index
    %c0_78 = arith.constant 0 : index
    %92 = vector.load %arg4[%c2_76, %c0_77, %c0_78] : memref<9x32x64xbf16, #tpu.memory_space<vmem>>, vector<1x32x64xbf16>
    %93 = vector.shape_cast %92 : vector<1x32x64xbf16> to vector<32x64xbf16>
    %cst_79 = arith.constant dense<0.000000e+00> : vector<100x64xf32>
    %94 = tpu.matmul %91, %93, %cst_79 {dimension_numbers = #tpu.dot_dimension_numbers<[1], [0], [0], [1], [0, 0, 1, 1], [], []>} : vector<100x32xbf16>, vector<32x64xbf16>, vector<100x64xf32> -> vector<100x64xf32>
    %95 = arith.addf %89, %94 : vector<100x64xf32>
    %c15_80 = arith.constant 15 : index
    %c0_81 = arith.constant 0 : index
    %96 = vector.load %arg25[%c15_80, %c0_81] : memref<132x32xf32, #tpu.memory_space<vmem>>, vector<100x32xf32>
    %97 = arith.truncf %96 : vector<100x32xf32> to vector<100x32xbf16>
    %c3_82 = arith.constant 3 : index
    %c0_83 = arith.constant 0 : index
    %c0_84 = arith.constant 0 : index
    %98 = vector.load %arg4[%c3_82, %c0_83, %c0_84] : memref<9x32x64xbf16, #tpu.memory_space<vmem>>, vector<1x32x64xbf16>
    %99 = vector.shape_cast %98 : vector<1x32x64xbf16> to vector<32x64xbf16>
    %cst_85 = arith.constant dense<0.000000e+00> : vector<100x64xf32>
    %100 = tpu.matmul %97, %99, %cst_85 {dimension_numbers = #tpu.dot_dimension_numbers<[1], [0], [0], [1], [0, 0, 1, 1], [], []>} : vector<100x32xbf16>, vector<32x64xbf16>, vector<100x64xf32> -> vector<100x64xf32>
    %101 = arith.addf %95, %100 : vector<100x64xf32>
    %c16_86 = arith.constant 16 : index
    %c0_87 = arith.constant 0 : index
    %102 = vector.load %arg25[%c16_86, %c0_87] : memref<132x32xf32, #tpu.memory_space<vmem>>, vector<100x32xf32>
    %103 = arith.truncf %102 : vector<100x32xf32> to vector<100x32xbf16>
    %c4_88 = arith.constant 4 : index
    %c0_89 = arith.constant 0 : index
    %c0_90 = arith.constant 0 : index
    %104 = vector.load %arg4[%c4_88, %c0_89, %c0_90] : memref<9x32x64xbf16, #tpu.memory_space<vmem>>, vector<1x32x64xbf16>
    %105 = vector.shape_cast %104 : vector<1x32x64xbf16> to vector<32x64xbf16>
    %cst_91 = arith.constant dense<0.000000e+00> : vector<100x64xf32>
    %106 = tpu.matmul %103, %105, %cst_91 {dimension_numbers = #tpu.dot_dimension_numbers<[1], [0], [0], [1], [0, 0, 1, 1], [], []>} : vector<100x32xbf16>, vector<32x64xbf16>, vector<100x64xf32> -> vector<100x64xf32>
    %107 = arith.addf %101, %106 : vector<100x64xf32>
    %c17_92 = arith.constant 17 : index
    %c0_93 = arith.constant 0 : index
    %108 = vector.load %arg25[%c17_92, %c0_93] : memref<132x32xf32, #tpu.memory_space<vmem>>, vector<100x32xf32>
    %109 = arith.truncf %108 : vector<100x32xf32> to vector<100x32xbf16>
    %c5_94 = arith.constant 5 : index
    %c0_95 = arith.constant 0 : index
    %c0_96 = arith.constant 0 : index
    %110 = vector.load %arg4[%c5_94, %c0_95, %c0_96] : memref<9x32x64xbf16, #tpu.memory_space<vmem>>, vector<1x32x64xbf16>
    %111 = vector.shape_cast %110 : vector<1x32x64xbf16> to vector<32x64xbf16>
    %cst_97 = arith.constant dense<0.000000e+00> : vector<100x64xf32>
    %112 = tpu.matmul %109, %111, %cst_97 {dimension_numbers = #tpu.dot_dimension_numbers<[1], [0], [0], [1], [0, 0, 1, 1], [], []>} : vector<100x32xbf16>, vector<32x64xbf16>, vector<100x64xf32> -> vector<100x64xf32>
    %113 = arith.addf %107, %112 : vector<100x64xf32>
    %c25_98 = arith.constant 25 : index
    %c0_99 = arith.constant 0 : index
    %114 = vector.load %arg25[%c25_98, %c0_99] : memref<132x32xf32, #tpu.memory_space<vmem>>, vector<100x32xf32>
    %115 = arith.truncf %114 : vector<100x32xf32> to vector<100x32xbf16>
    %c6_100 = arith.constant 6 : index
    %c0_101 = arith.constant 0 : index
    %c0_102 = arith.constant 0 : index
    %116 = vector.load %arg4[%c6_100, %c0_101, %c0_102] : memref<9x32x64xbf16, #tpu.memory_space<vmem>>, vector<1x32x64xbf16>
    %117 = vector.shape_cast %116 : vector<1x32x64xbf16> to vector<32x64xbf16>
    %cst_103 = arith.constant dense<0.000000e+00> : vector<100x64xf32>
    %118 = tpu.matmul %115, %117, %cst_103 {dimension_numbers = #tpu.dot_dimension_numbers<[1], [0], [0], [1], [0, 0, 1, 1], [], []>} : vector<100x32xbf16>, vector<32x64xbf16>, vector<100x64xf32> -> vector<100x64xf32>
    %119 = arith.addf %113, %118 : vector<100x64xf32>
    %c26_104 = arith.constant 26 : index
    %c0_105 = arith.constant 0 : index
    %120 = vector.load %arg25[%c26_104, %c0_105] : memref<132x32xf32, #tpu.memory_space<vmem>>, vector<100x32xf32>
    %121 = arith.truncf %120 : vector<100x32xf32> to vector<100x32xbf16>
    %c7_106 = arith.constant 7 : index
    %c0_107 = arith.constant 0 : index
    %c0_108 = arith.constant 0 : index
    %122 = vector.load %arg4[%c7_106, %c0_107, %c0_108] : memref<9x32x64xbf16, #tpu.memory_space<vmem>>, vector<1x32x64xbf16>
    %123 = vector.shape_cast %122 : vector<1x32x64xbf16> to vector<32x64xbf16>
    %cst_109 = arith.constant dense<0.000000e+00> : vector<100x64xf32>
    %124 = tpu.matmul %121, %123, %cst_109 {dimension_numbers = #tpu.dot_dimension_numbers<[1], [0], [0], [1], [0, 0, 1, 1], [], []>} : vector<100x32xbf16>, vector<32x64xbf16>, vector<100x64xf32> -> vector<100x64xf32>
    %125 = arith.addf %119, %124 : vector<100x64xf32>
    %c27_110 = arith.constant 27 : index
    %c0_111 = arith.constant 0 : index
    %126 = vector.load %arg25[%c27_110, %c0_111] : memref<132x32xf32, #tpu.memory_space<vmem>>, vector<100x32xf32>
    %127 = arith.truncf %126 : vector<100x32xf32> to vector<100x32xbf16>
    %c8_112 = arith.constant 8 : index
    %c0_113 = arith.constant 0 : index
    %c0_114 = arith.constant 0 : index
    %128 = vector.load %arg4[%c8_112, %c0_113, %c0_114] : memref<9x32x64xbf16, #tpu.memory_space<vmem>>, vector<1x32x64xbf16>
    %129 = vector.shape_cast %128 : vector<1x32x64xbf16> to vector<32x64xbf16>
    %cst_115 = arith.constant dense<0.000000e+00> : vector<100x64xf32>
    %130 = tpu.matmul %127, %129, %cst_115 {dimension_numbers = #tpu.dot_dimension_numbers<[1], [0], [0], [1], [0, 0, 1, 1], [], []>} : vector<100x32xbf16>, vector<32x64xbf16>, vector<100x64xf32> -> vector<100x64xf32>
    %131 = arith.addf %125, %130 : vector<100x64xf32>
    %c0_116 = arith.constant 0 : index
    %c0_117 = arith.constant 0 : index
    %132 = vector.load %arg5[%c0_116, %c0_117] : memref<1x64xf32, #tpu.memory_space<vmem>>, vector<1x64xf32>
    %133 = vector.broadcast %132 : vector<1x64xf32> to vector<100x64xf32>
    %134 = arith.addf %131, %133 : vector<100x64xf32>
    %cst_118 = arith.constant 0.000000e+00 : f32
    %135 = vector.broadcast %cst_118 : f32 to vector<100x64xf32>
    %136 = arith.maximumf %134, %135 : vector<100x64xf32>
    %137 = vector.broadcast %4 : vector<100x1xf32> to vector<100x64xf32>
    %138 = arith.mulf %136, %137 : vector<100x64xf32>
    %c16_119 = arith.constant 16 : index
    %c0_120 = arith.constant 0 : index
    %139 = vector.load %arg26[%c16_119, %c0_120] : memref<132x64xf32, #tpu.memory_space<vmem>>, vector<100x64xf32>
    tpu.vector_store %arg26[%c16_119, %c0_120], %138 {strides = array<i32>} : memref<132x64xf32, #tpu.memory_space<vmem>>, vector<100x64xf32>,
    %cst_121 = arith.constant 0.000000e+00 : f32
    %140 = vector.broadcast %cst_121 : f32 to vector<100x128xf32>
    %c5_122 = arith.constant 5 : index
    %c0_123 = arith.constant 0 : index
    %141 = vector.load %arg26[%c5_122, %c0_123] : memref<132x64xf32, #tpu.memory_space<vmem>>, vector<100x64xf32>
    %142 = arith.truncf %141 : vector<100x64xf32> to vector<100x64xbf16>
    %c0_124 = arith.constant 0 : index
    %c0_125 = arith.constant 0 : index
    %c0_126 = arith.constant 0 : index
    %143 = vector.load %arg6[%c0_124, %c0_125, %c0_126] : memref<9x64x128xbf16, #tpu.memory_space<vmem>>, vector<1x64x128xbf16>
    %144 = vector.shape_cast %143 : vector<1x64x128xbf16> to vector<64x128xbf16>
    %cst_127 = arith.constant dense<0.000000e+00> : vector<100x128xf32>
    %145 = tpu.matmul %142, %144, %cst_127 {dimension_numbers = #tpu.dot_dimension_numbers<[1], [0], [0], [1], [0, 0, 1, 1], [], []>} : vector<100x64xbf16>, vector<64x128xbf16>, vector<100x128xf32> -> vector<100x128xf32>
    %146 = arith.addf %140, %145 : vector<100x128xf32>
    %c6_128 = arith.constant 6 : index
    %c0_129 = arith.constant 0 : index
    %147 = vector.load %arg26[%c6_128, %c0_129] : memref<132x64xf32, #tpu.memory_space<vmem>>, vector<100x64xf32>
    %148 = arith.truncf %147 : vector<100x64xf32> to vector<100x64xbf16>
    %c1_130 = arith.constant 1 : index
    %c0_131 = arith.constant 0 : index
    %c0_132 = arith.constant 0 : index
    %149 = vector.load %arg6[%c1_130, %c0_131, %c0_132] : memref<9x64x128xbf16, #tpu.memory_space<vmem>>, vector<1x64x128xbf16>
    %150 = vector.shape_cast %149 : vector<1x64x128xbf16> to vector<64x128xbf16>
    %cst_133 = arith.constant dense<0.000000e+00> : vector<100x128xf32>
    %151 = tpu.matmul %148, %150, %cst_133 {dimension_numbers = #tpu.dot_dimension_numbers<[1], [0], [0], [1], [0, 0, 1, 1], [], []>} : vector<100x64xbf16>, vector<64x128xbf16>, vector<100x128xf32> -> vector<100x128xf32>
    %152 = arith.addf %146, %151 : vector<100x128xf32>
    %c7_134 = arith.constant 7 : index
    %c0_135 = arith.constant 0 : index
    %153 = vector.load %arg26[%c7_134, %c0_135] : memref<132x64xf32, #tpu.memory_space<vmem>>, vector<100x64xf32>
    %154 = arith.truncf %153 : vector<100x64xf32> to vector<100x64xbf16>
    %c2_136 = arith.constant 2 : index
    %c0_137 = arith.constant 0 : index
    %c0_138 = arith.constant 0 : index
    %155 = vector.load %arg6[%c2_136, %c0_137, %c0_138] : memref<9x64x128xbf16, #tpu.memory_space<vmem>>, vector<1x64x128xbf16>
    %156 = vector.shape_cast %155 : vector<1x64x128xbf16> to vector<64x128xbf16>
    %cst_139 = arith.constant dense<0.000000e+00> : vector<100x128xf32>
    %157 = tpu.matmul %154, %156, %cst_139 {dimension_numbers = #tpu.dot_dimension_numbers<[1], [0], [0], [1], [0, 0, 1, 1], [], []>} : vector<100x64xbf16>, vector<64x128xbf16>, vector<100x128xf32> -> vector<100x128xf32>
    %158 = arith.addf %152, %157 : vector<100x128xf32>
    %c15_140 = arith.constant 15 : index
    %c0_141 = arith.constant 0 : index
    %159 = vector.load %arg26[%c15_140, %c0_141] : memref<132x64xf32, #tpu.memory_space<vmem>>, vector<100x64xf32>
    %160 = arith.truncf %159 : vector<100x64xf32> to vector<100x64xbf16>
    %c3_142 = arith.constant 3 : index
    %c0_143 = arith.constant 0 : index
    %c0_144 = arith.constant 0 : index
    %161 = vector.load %arg6[%c3_142, %c0_143, %c0_144] : memref<9x64x128xbf16, #tpu.memory_space<vmem>>, vector<1x64x128xbf16>
    %162 = vector.shape_cast %161 : vector<1x64x128xbf16> to vector<64x128xbf16>
    %cst_145 = arith.constant dense<0.000000e+00> : vector<100x128xf32>
    %163 = tpu.matmul %160, %162, %cst_145 {dimension_numbers = #tpu.dot_dimension_numbers<[1], [0], [0], [1], [0, 0, 1, 1], [], []>} : vector<100x64xbf16>, vector<64x128xbf16>, vector<100x128xf32> -> vector<100x128xf32>
    %164 = arith.addf %158, %163 : vector<100x128xf32>
    %c16_146 = arith.constant 16 : index
    %c0_147 = arith.constant 0 : index
    %165 = vector.load %arg26[%c16_146, %c0_147] : memref<132x64xf32, #tpu.memory_space<vmem>>, vector<100x64xf32>
    %166 = arith.truncf %165 : vector<100x64xf32> to vector<100x64xbf16>
    %c4_148 = arith.constant 4 : index
    %c0_149 = arith.constant 0 : index
    %c0_150 = arith.constant 0 : index
    %167 = vector.load %arg6[%c4_148, %c0_149, %c0_150] : memref<9x64x128xbf16, #tpu.memory_space<vmem>>, vector<1x64x128xbf16>
    %168 = vector.shape_cast %167 : vector<1x64x128xbf16> to vector<64x128xbf16>
    %cst_151 = arith.constant dense<0.000000e+00> : vector<100x128xf32>
    %169 = tpu.matmul %166, %168, %cst_151 {dimension_numbers = #tpu.dot_dimension_numbers<[1], [0], [0], [1], [0, 0, 1, 1], [], []>} : vector<100x64xbf16>, vector<64x128xbf16>, vector<100x128xf32> -> vector<100x128xf32>
    %170 = arith.addf %164, %169 : vector<100x128xf32>
    %c17_152 = arith.constant 17 : index
    %c0_153 = arith.constant 0 : index
    %171 = vector.load %arg26[%c17_152, %c0_153] : memref<132x64xf32, #tpu.memory_space<vmem>>, vector<100x64xf32>
    %172 = arith.truncf %171 : vector<100x64xf32> to vector<100x64xbf16>
    %c5_154 = arith.constant 5 : index
    %c0_155 = arith.constant 0 : index
    %c0_156 = arith.constant 0 : index
    %173 = vector.load %arg6[%c5_154, %c0_155, %c0_156] : memref<9x64x128xbf16, #tpu.memory_space<vmem>>, vector<1x64x128xbf16>
    %174 = vector.shape_cast %173 : vector<1x64x128xbf16> to vector<64x128xbf16>
    %cst_157 = arith.constant dense<0.000000e+00> : vector<100x128xf32>
    %175 = tpu.matmul %172, %174, %cst_157 {dimension_numbers = #tpu.dot_dimension_numbers<[1], [0], [0], [1], [0, 0, 1, 1], [], []>} : vector<100x64xbf16>, vector<64x128xbf16>, vector<100x128xf32> -> vector<100x128xf32>
    %176 = arith.addf %170, %175 : vector<100x128xf32>
    %c25_158 = arith.constant 25 : index
    %c0_159 = arith.constant 0 : index
    %177 = vector.load %arg26[%c25_158, %c0_159] : memref<132x64xf32, #tpu.memory_space<vmem>>, vector<100x64xf32>
    %178 = arith.truncf %177 : vector<100x64xf32> to vector<100x64xbf16>
    %c6_160 = arith.constant 6 : index
    %c0_161 = arith.constant 0 : index
    %c0_162 = arith.constant 0 : index
    %179 = vector.load %arg6[%c6_160, %c0_161, %c0_162] : memref<9x64x128xbf16, #tpu.memory_space<vmem>>, vector<1x64x128xbf16>
    %180 = vector.shape_cast %179 : vector<1x64x128xbf16> to vector<64x128xbf16>
    %cst_163 = arith.constant dense<0.000000e+00> : vector<100x128xf32>
    %181 = tpu.matmul %178, %180, %cst_163 {dimension_numbers = #tpu.dot_dimension_numbers<[1], [0], [0], [1], [0, 0, 1, 1], [], []>} : vector<100x64xbf16>, vector<64x128xbf16>, vector<100x128xf32> -> vector<100x128xf32>
    %182 = arith.addf %176, %181 : vector<100x128xf32>
    %c26_164 = arith.constant 26 : index
    %c0_165 = arith.constant 0 : index
    %183 = vector.load %arg26[%c26_164, %c0_165] : memref<132x64xf32, #tpu.memory_space<vmem>>, vector<100x64xf32>
    %184 = arith.truncf %183 : vector<100x64xf32> to vector<100x64xbf16>
    %c7_166 = arith.constant 7 : index
    %c0_167 = arith.constant 0 : index
    %c0_168 = arith.constant 0 : index
    %185 = vector.load %arg6[%c7_166, %c0_167, %c0_168] : memref<9x64x128xbf16, #tpu.memory_space<vmem>>, vector<1x64x128xbf16>
    %186 = vector.shape_cast %185 : vector<1x64x128xbf16> to vector<64x128xbf16>
    %cst_169 = arith.constant dense<0.000000e+00> : vector<100x128xf32>
    %187 = tpu.matmul %184, %186, %cst_169 {dimension_numbers = #tpu.dot_dimension_numbers<[1], [0], [0], [1], [0, 0, 1, 1], [], []>} : vector<100x64xbf16>, vector<64x128xbf16>, vector<100x128xf32> -> vector<100x128xf32>
    %188 = arith.addf %182, %187 : vector<100x128xf32>
    %c27_170 = arith.constant 27 : index
    %c0_171 = arith.constant 0 : index
    %189 = vector.load %arg26[%c27_170, %c0_171] : memref<132x64xf32, #tpu.memory_space<vmem>>, vector<100x64xf32>
    %190 = arith.truncf %189 : vector<100x64xf32> to vector<100x64xbf16>
    %c8_172 = arith.constant 8 : index
    %c0_173 = arith.constant 0 : index
    %c0_174 = arith.constant 0 : index
    %191 = vector.load %arg6[%c8_172, %c0_173, %c0_174] : memref<9x64x128xbf16, #tpu.memory_space<vmem>>, vector<1x64x128xbf16>
    %192 = vector.shape_cast %191 : vector<1x64x128xbf16> to vector<64x128xbf16>
    %cst_175 = arith.constant dense<0.000000e+00> : vector<100x128xf32>
    %193 = tpu.matmul %190, %192, %cst_175 {dimension_numbers = #tpu.dot_dimension_numbers<[1], [0], [0], [1], [0, 0, 1, 1], [], []>} : vector<100x64xbf16>, vector<64x128xbf16>, vector<100x128xf32> -> vector<100x128xf32>
    %194 = arith.addf %188, %193 : vector<100x128xf32>
    %c0_176 = arith.constant 0 : index
    %c0_177 = arith.constant 0 : index
    %195 = vector.load %arg7[%c0_176, %c0_177] : memref<1x128xf32, #tpu.memory_space<vmem>>, vector<1x128xf32>
    %196 = vector.broadcast %195 : vector<1x128xf32> to vector<100x128xf32>
    %197 = arith.addf %194, %196 : vector<100x128xf32>
    %cst_178 = arith.constant 0.000000e+00 : f32
    %198 = vector.broadcast %cst_178 : f32 to vector<100x128xf32>
    %199 = arith.maximumf %197, %198 : vector<100x128xf32>
    %200 = vector.broadcast %4 : vector<100x1xf32> to vector<100x128xf32>
    %201 = arith.mulf %199, %200 : vector<100x128xf32>
    %c16_179 = arith.constant 16 : index
    %c0_180 = arith.constant 0 : index
    %202 = vector.load %arg27[%c16_179, %c0_180] : memref<132x128xf32, #tpu.memory_space<vmem>>, vector<100x128xf32>
    tpu.vector_store %arg27[%c16_179, %c0_180], %201 {strides = array<i32>} : memref<132x128xf32, #tpu.memory_space<vmem>>, vector<100x128xf32>,
    %c16_181 = arith.constant 16 : index
    %c0_182 = arith.constant 0 : index
    %203 = vector.load %arg27[%c16_181, %c0_182] : memref<132x128xf32, #tpu.memory_space<vmem>>, vector<100x128xf32>
    %204 = arith.truncf %203 : vector<100x128xf32> to vector<100x128xbf16>
    %cst_183 = arith.constant 1.000000e+00 : bf16
    %205 = vector.broadcast %cst_183 : bf16 to vector<1x100xbf16>
    %c0_184 = arith.constant 0 : index
    %c0_185 = arith.constant 0 : index
    %206 = vector.load %arg8[%c0_184, %c0_185] : memref<128x4xbf16, #tpu.memory_space<vmem>>, vector<128x4xbf16>
    %cst_186 = arith.constant dense<0.000000e+00> : vector<100x4xf32>
    %207 = tpu.matmul %204, %206, %cst_186 {dimension_numbers = #tpu.dot_dimension_numbers<[1], [0], [0], [1], [0, 0, 1, 1], [], []>} : vector<100x128xbf16>, vector<128x4xbf16>, vector<100x4xf32> -> vector<100x4xf32>
    %c0_187 = arith.constant 0 : index
    %c0_188 = arith.constant 0 : index
    %208 = vector.load %arg9[%c0_187, %c0_188] : memref<1x4xf32, #tpu.memory_space<vmem>>, vector<1x4xf32>
    %209 = vector.broadcast %208 : vector<1x4xf32> to vector<100x4xf32>
    %210 = arith.addf %207, %209 : vector<100x4xf32>
    %cst_189 = arith.constant 0.000000e+00 : f32
    %211 = vector.broadcast %cst_189 : f32 to vector<100x4xf32>
    %212 = arith.maximumf %210, %211 : vector<100x4xf32>
    %213 = arith.truncf %212 : vector<100x4xf32> to vector<100x4xbf16>
    %c0_190 = arith.constant 0 : index
    %c0_191 = arith.constant 0 : index
    %214 = vector.load %arg19[%c0_190, %c0_191] : memref<4x256xbf16, #tpu.memory_space<vmem>>, vector<4x256xbf16>
    %cst_192 = arith.constant dense<0.000000e+00> : vector<100x256xf32>
    %215 = tpu.matmul %213, %214, %cst_192 {dimension_numbers = #tpu.dot_dimension_numbers<[1], [0], [0], [1], [0, 0, 1, 1], [], []>} : vector<100x4xbf16>, vector<4x256xbf16>, vector<100x256xf32> -> vector<100x256xf32>
    %c0_193 = arith.constant 0 : index
    %c0_194 = arith.constant 0 : index
    %216 = vector.load %arg20[%c0_193, %c0_194] : memref<100x256xf32, #tpu.memory_space<vmem>>, vector<100x256xf32>
    %217 = arith.mulf %215, %216 : vector<100x256xf32>
    %218 = arith.truncf %217 : vector<100x256xf32> to vector<100x256xbf16>
    %cst_195 = arith.constant dense<0.000000e+00> : vector<1x256xf32>
    %219 = tpu.matmul %205, %218, %cst_195 {dimension_numbers = #tpu.dot_dimension_numbers<[1], [0], [0], [1], [0, 0, 1, 1], [], []>} : vector<1x100xbf16>, vector<100x256xbf16>, vector<1x256xf32> -> vector<1x256xf32>
    %220 = arith.truncf %219 : vector<1x256xf32> to vector<1x256xbf16>
    %c0_196 = arith.constant 0 : index
    %c0_197 = arith.constant 0 : index
    %221 = vector.load %arg12[%c0_196, %c0_197] : memref<256x64xbf16, #tpu.memory_space<vmem>>, vector<256x64xbf16>
    %cst_198 = arith.constant dense<0.000000e+00> : vector<1x64xf32>
    %222 = tpu.matmul %220, %221, %cst_198 {dimension_numbers = #tpu.dot_dimension_numbers<[1], [0], [0], [1], [0, 0, 1, 1], [], []>} : vector<1x256xbf16>, vector<256x64xbf16>, vector<1x64xf32> -> vector<1x64xf32>
    %c0_199 = arith.constant 0 : index
    %c0_200 = arith.constant 0 : index
    %223 = vector.load %arg13[%c0_199, %c0_200] : memref<1x64xf32, #tpu.memory_space<vmem>>, vector<1x64xf32>
    %224 = arith.addf %222, %223 : vector<1x64xf32>
    %cst_201 = arith.constant dense<0xFF800000> : vector<1xf32>
    %225 = vector.multi_reduction <maximumf>, %224, %cst_201 [1] : vector<1x64xf32> to vector<1xf32>
    %226 = vector.shape_cast %225 : vector<1xf32> to vector<1x1xf32>
    %227 = vector.broadcast %226 : vector<1x1xf32> to vector<1x64xf32>
    %228 = arith.subf %224, %227 : vector<1x64xf32>
    %229 = math.exp %228 : vector<1x64xf32>
    %cst_202 = arith.constant dense<0.000000e+00> : vector<1xf32>
    %230 = vector.multi_reduction <add>, %229, %cst_202 [1] : vector<1x64xf32> to vector<1xf32>
    %231 = vector.shape_cast %230 : vector<1xf32> to vector<1x1xf32>
    %232 = math.log %231 : vector<1x1xf32>
    %233 = vector.broadcast %232 : vector<1x1xf32> to vector<1x64xf32>
    %234 = arith.subf %228, %233 : vector<1x64xf32>
    %c0_203 = arith.constant 0 : index
    %c0_204 = arith.constant 0 : index
    %c0_205 = arith.constant 0 : index
    %235 = vector.load %arg23[%c0_203, %c0_204, %c0_205] : memref<1x1x64xf32, #tpu.memory_space<vmem>>, vector<1x1x64xf32>
    %236 = vector.shape_cast %235 : vector<1x1x64xf32> to vector<1x64xf32>
    %237 = vector.shape_cast %234 : vector<1x64xf32> to vector<1x1x64xf32>
    tpu.vector_store %arg23[%c0_203, %c0_204, %c0_205], %237 {strides = array<i32>} : memref<1x1x64xf32, #tpu.memory_space<vmem>>, vector<1x1x64xf32>,
    %c0_206 = arith.constant 0 : index
    %c0_207 = arith.constant 0 : index
    %238 = vector.load %arg10[%c0_206, %c0_207] : memref<128x2xbf16, #tpu.memory_space<vmem>>, vector<128x2xbf16>
    %cst_208 = arith.constant dense<0.000000e+00> : vector<100x2xf32>
    %239 = tpu.matmul %204, %238, %cst_208 {dimension_numbers = #tpu.dot_dimension_numbers<[1], [0], [0], [1], [0, 0, 1, 1], [], []>} : vector<100x128xbf16>, vector<128x2xbf16>, vector<100x2xf32> -> vector<100x2xf32>
    %c0_209 = arith.constant 0 : index
    %c0_210 = arith.constant 0 : index
    %240 = vector.load %arg11[%c0_209, %c0_210] : memref<1x2xf32, #tpu.memory_space<vmem>>, vector<1x2xf32>
    %241 = vector.broadcast %240 : vector<1x2xf32> to vector<100x2xf32>
    %242 = arith.addf %239, %241 : vector<100x2xf32>
    %cst_211 = arith.constant 0.000000e+00 : f32
    %243 = vector.broadcast %cst_211 : f32 to vector<100x2xf32>
    %244 = arith.maximumf %242, %243 : vector<100x2xf32>
    %245 = arith.truncf %244 : vector<100x2xf32> to vector<100x2xbf16>
    %c0_212 = arith.constant 0 : index
    %c0_213 = arith.constant 0 : index
    %246 = vector.load %arg21[%c0_212, %c0_213] : memref<2x128xbf16, #tpu.memory_space<vmem>>, vector<2x128xbf16>
    %cst_214 = arith.constant dense<0.000000e+00> : vector<100x128xf32>
    %247 = tpu.matmul %245, %246, %cst_214 {dimension_numbers = #tpu.dot_dimension_numbers<[1], [0], [0], [1], [0, 0, 1, 1], [], []>} : vector<100x2xbf16>, vector<2x128xbf16>, vector<100x128xf32> -> vector<100x128xf32>
    %c0_215 = arith.constant 0 : index
    %c0_216 = arith.constant 0 : index
    %248 = vector.load %arg22[%c0_215, %c0_216] : memref<100x128xf32, #tpu.memory_space<vmem>>, vector<100x128xf32>
    %249 = arith.mulf %247, %248 : vector<100x128xf32>
    %250 = arith.truncf %249 : vector<100x128xf32> to vector<100x128xbf16>
    %cst_217 = arith.constant dense<0.000000e+00> : vector<1x128xf32>
    %251 = tpu.matmul %205, %250, %cst_217 {dimension_numbers = #tpu.dot_dimension_numbers<[1], [0], [0], [1], [0, 0, 1, 1], [], []>} : vector<1x100xbf16>, vector<100x128xbf16>, vector<1x128xf32> -> vector<1x128xf32>
    %252 = arith.truncf %251 : vector<1x128xf32> to vector<1x128xbf16>
    %c0_218 = arith.constant 0 : index
    %c0_219 = arith.constant 0 : index
    %253 = vector.load %arg14[%c0_218, %c0_219] : memref<128x64xbf16, #tpu.memory_space<vmem>>, vector<128x64xbf16>
    %cst_220 = arith.constant dense<0.000000e+00> : vector<1x64xf32>
    %254 = tpu.matmul %252, %253, %cst_220 {dimension_numbers = #tpu.dot_dimension_numbers<[1], [0], [0], [1], [0, 0, 1, 1], [], []>} : vector<1x128xbf16>, vector<128x64xbf16>, vector<1x64xf32> -> vector<1x64xf32>
    %c0_221 = arith.constant 0 : index
    %c0_222 = arith.constant 0 : index
    %255 = vector.load %arg15[%c0_221, %c0_222] : memref<1x64xf32, #tpu.memory_space<vmem>>, vector<1x64xf32>
    %256 = arith.addf %254, %255 : vector<1x64xf32>
    %cst_223 = arith.constant 0.000000e+00 : f32
    %257 = vector.broadcast %cst_223 : f32 to vector<1x64xf32>
    %258 = arith.maximumf %256, %257 : vector<1x64xf32>
    %259 = arith.truncf %258 : vector<1x64xf32> to vector<1x64xbf16>
    %c0_224 = arith.constant 0 : index
    %c0_225 = arith.constant 0 : index
    %260 = vector.load %arg16[%c0_224, %c0_225] : memref<64x512xbf16, #tpu.memory_space<vmem>>, vector<64x512xbf16>
    %cst_226 = arith.constant dense<0.000000e+00> : vector<1x512xf32>
    %261 = tpu.matmul %259, %260, %cst_226 {dimension_numbers = #tpu.dot_dimension_numbers<[1], [0], [0], [1], [0, 0, 1, 1], [], []>} : vector<1x64xbf16>, vector<64x512xbf16>, vector<1x512xf32> -> vector<1x512xf32>
    %c0_227 = arith.constant 0 : index
    %c0_228 = arith.constant 0 : index
    %262 = vector.load %arg17[%c0_227, %c0_228] : memref<1x512xf32, #tpu.memory_space<vmem>>, vector<1x512xf32>
    %263 = arith.addf %261, %262 : vector<1x512xf32>
    %c0_229 = arith.constant 0 : index
    %c0_230 = arith.constant 0 : index
    %c0_231 = arith.constant 0 : index
    %264 = vector.load %arg24[%c0_229, %c0_230, %c0_231] : memref<1x1x512xf32, #tpu.memory_space<vmem>>, vector<1x1x512xf32>
    %265 = vector.shape_cast %264 : vector<1x1x512xf32> to vector<1x512xf32>
    %266 = vector.shape_cast %263 : vector<1x512xf32> to vector<1x1x512xf32>
    tpu.vector_store %arg24[%c0_229, %c0_230, %c0_231], %266 {strides = array<i32>} : memref<1x1x512xf32, #tpu.memory_space<vmem>>, vector<1x1x512xf32>,
    return
  }
  func.func @transform_0(%arg0: i32) -> (i32, i32, i32) {
    %c0_i32 = arith.constant 0 : i32
    %c0_i32_0 = arith.constant 0 : i32
    %c0_i32_1 = arith.constant 0 : i32
    return %arg0, %c0_i32, %c0_i32_0 : i32, i32, i32
  }
  func.func @transform_1(%arg0: i32) -> (i32, i32, i32) {
    %c0_i32 = arith.constant 0 : i32
    %c0_i32_0 = arith.constant 0 : i32
    %c0_i32_1 = arith.constant 0 : i32
    %c0_i32_2 = arith.constant 0 : i32
    return %c0_i32, %c0_i32_0, %c0_i32_1 : i32, i32, i32
  }
  func.func @transform_2(%arg0: i32) -> (i32, i32) {
    %c0_i32 = arith.constant 0 : i32
    %c0_i32_0 = arith.constant 0 : i32
    %c0_i32_1 = arith.constant 0 : i32
    return %c0_i32, %c0_i32_0 : i32, i32
  }
  func.func @transform_3(%arg0: i32) -> (i32, i32, i32) {
    %c0_i32 = arith.constant 0 : i32
    %c0_i32_0 = arith.constant 0 : i32
    %c0_i32_1 = arith.constant 0 : i32
    %c0_i32_2 = arith.constant 0 : i32
    return %c0_i32, %c0_i32_0, %c0_i32_1 : i32, i32, i32
  }
  func.func @transform_4(%arg0: i32) -> (i32, i32) {
    %c0_i32 = arith.constant 0 : i32
    %c0_i32_0 = arith.constant 0 : i32
    %c0_i32_1 = arith.constant 0 : i32
    return %c0_i32, %c0_i32_0 : i32, i32
  }
  func.func @transform_5(%arg0: i32) -> (i32, i32, i32) {
    %c0_i32 = arith.constant 0 : i32
    %c0_i32_0 = arith.constant 0 : i32
    %c0_i32_1 = arith.constant 0 : i32
    %c0_i32_2 = arith.constant 0 : i32
    return %c0_i32, %c0_i32_0, %c0_i32_1 : i32, i32, i32
  }
  func.func @transform_6(%arg0: i32) -> (i32, i32) {
    %c0_i32 = arith.constant 0 : i32
    %c0_i32_0 = arith.constant 0 : i32
    %c0_i32_1 = arith.constant 0 : i32
    return %c0_i32, %c0_i32_0 : i32, i32
  }
  func.func @transform_7(%arg0: i32) -> (i32, i32) {
    %c0_i32 = arith.constant 0 : i32
    %c0_i32_0 = arith.constant 0 : i32
    %c0_i32_1 = arith.constant 0 : i32
    return %c0_i32, %c0_i32_0 : i32, i32
  }
  func.func @transform_8(%arg0: i32) -> (i32, i32) {
    %c0_i32 = arith.constant 0 : i32
    %c0_i32_0 = arith.constant 0 : i32
    %c0_i32_1 = arith.constant 0 : i32
    return %c0_i32, %c0_i32_0 : i32, i32
  }
  func.func @transform_9(%arg0: i32) -> (i32, i32) {
    %c0_i32 = arith.constant 0 : i32
    %c0_i32_0 = arith.constant 0 : i32
    %c0_i32_1 = arith.constant 0 : i32
    return %c0_i32, %c0_i32_0 : i32, i32
  }
  func.func @transform_10(%arg0: i32) -> (i32, i32) {
    %c0_i32 = arith.constant 0 : i32
    %c0_i32_0 = arith.constant 0 : i32
    %c0_i32_1 = arith.constant 0 : i32
    return %c0_i32, %c0_i32_0 : i32, i32
  }
  func.func @transform_11(%arg0: i32) -> (i32, i32) {
    %c0_i32 = arith.constant 0 : i32
    %c0_i32_0 = arith.constant 0 : i32
    %c0_i32_1 = arith.constant 0 : i32
    return %c0_i32, %c0_i32_0 : i32, i32
  }
  func.func @transform_12(%arg0: i32) -> (i32, i32) {
    %c0_i32 = arith.constant 0 : i32
    %c0_i32_0 = arith.constant 0 : i32
    %c0_i32_1 = arith.constant 0 : i32
    return %c0_i32, %c0_i32_0 : i32, i32
  }
  func.func @transform_13(%arg0: i32) -> (i32, i32) {
    %c0_i32 = arith.constant 0 : i32
    %c0_i32_0 = arith.constant 0 : i32
    %c0_i32_1 = arith.constant 0 : i32
    return %c0_i32, %c0_i32_0 : i32, i32
  }
  func.func @transform_14(%arg0: i32) -> (i32, i32) {
    %c0_i32 = arith.constant 0 : i32
    %c0_i32_0 = arith.constant 0 : i32
    %c0_i32_1 = arith.constant 0 : i32
    return %c0_i32, %c0_i32_0 : i32, i32
  }
  func.func @transform_15(%arg0: i32) -> (i32, i32) {
    %c0_i32 = arith.constant 0 : i32
    %c0_i32_0 = arith.constant 0 : i32
    %c0_i32_1 = arith.constant 0 : i32
    return %c0_i32, %c0_i32_0 : i32, i32
  }
  func.func @transform_16(%arg0: i32) -> (i32, i32) {
    %c0_i32 = arith.constant 0 : i32
    %c0_i32_0 = arith.constant 0 : i32
    %c0_i32_1 = arith.constant 0 : i32
    return %c0_i32, %c0_i32_0 : i32, i32
  }
  func.func @transform_17(%arg0: i32) -> (i32, i32) {
    %c0_i32 = arith.constant 0 : i32
    %c0_i32_0 = arith.constant 0 : i32
    %c0_i32_1 = arith.constant 0 : i32
    return %c0_i32, %c0_i32_0 : i32, i32
  }
  func.func @transform_18(%arg0: i32) -> (i32, i32) {
    %c0_i32 = arith.constant 0 : i32
    %c0_i32_0 = arith.constant 0 : i32
    %c0_i32_1 = arith.constant 0 : i32
    return %c0_i32, %c0_i32_0 : i32, i32
  }
  func.func @transform_19(%arg0: i32) -> (i32, i32) {
    %c0_i32 = arith.constant 0 : i32
    %c0_i32_0 = arith.constant 0 : i32
    %c0_i32_1 = arith.constant 0 : i32
    return %c0_i32, %c0_i32_0 : i32, i32
  }
  func.func @transform_20(%arg0: i32) -> (i32, i32) {
    %c0_i32 = arith.constant 0 : i32
    %c0_i32_0 = arith.constant 0 : i32
    %c0_i32_1 = arith.constant 0 : i32
    return %c0_i32, %c0_i32_0 : i32, i32
  }
  func.func @transform_21(%arg0: i32) -> (i32, i32) {
    %c0_i32 = arith.constant 0 : i32
    %c0_i32_0 = arith.constant 0 : i32
    %c0_i32_1 = arith.constant 0 : i32
    return %c0_i32, %c0_i32_0 : i32, i32
  }
  func.func @transform_22(%arg0: i32) -> (i32, i32, i32) {
    %c0_i32 = arith.constant 0 : i32
    %c0_i32_0 = arith.constant 0 : i32
    %c0_i32_1 = arith.constant 0 : i32
    return %arg0, %c0_i32, %c0_i32_0 : i32, i32, i32
  }
  func.func @transform_23(%arg0: i32) -> (i32, i32, i32) {
    %c0_i32 = arith.constant 0 : i32
    %c0_i32_0 = arith.constant 0 : i32
    %c0_i32_1 = arith.constant 0 : i32
    return %arg0, %c0_i32, %c0_i32_0 : i32, i32, i32
  }
}

</mosaic_0001>

<llo_original>
// kernel: qrqac_forward.1
$region0: #{qrqac_forward.1}
  #allocation0 [shape = 'u32[]', space=smem, size = 0x4, offset = 0x4, fixed_abs, tag = 'smem constant byte address 0x4 - core index']
  #allocation1 [shape = 'u32[144,128]{1,0:T(1,128)}', space=vmem, size = 0x12000, scoped, tag = 'internal scratch']
  #allocation2 [shape = 'f32[132,32]{1,0:T(8,128)}', space=vmem, size = 0x11000, scoped, tag = 'scratch operand']
  #allocation3 [shape = 'f32[132,64]{1,0:T(8,128)}', space=vmem, size = 0x11000, scoped, tag = 'scratch operand']
  #allocation4 [shape = 'f32[132,128]{1,0:T(8,128)}', space=vmem, size = 0x11000, scoped, tag = 'scratch operand']
  %s0 = inlined_call_operand.vmem [shape: f32[2,132,5], index: 0, kind: input, shape index: {}]
  %s1 = inlined_call_operand.vmem [shape: bf16[9,5,32], index: 1, kind: input, shape index: {}]
  %s2 = inlined_call_operand.vmem [shape: f32[1,32], index: 2, kind: input, shape index: {}]
  %s3 = inlined_call_operand.vmem [shape: bf16[9,32,64], index: 3, kind: input, shape index: {}]
  %s4 = inlined_call_operand.vmem [shape: f32[1,64], index: 4, kind: input, shape index: {}]
  %s5 = inlined_call_operand.vmem [shape: bf16[9,64,128], index: 5, kind: input, shape index: {}]
  %s6 = inlined_call_operand.vmem [shape: f32[1,128], index: 6, kind: input, shape index: {}]
  %s7 = inlined_call_operand.vmem [shape: bf16[128,4], index: 7, kind: input, shape index: {}]
  %s8 = inlined_call_operand.vmem [shape: f32[1,4], index: 8, kind: input, shape index: {}]
  %s9 = inlined_call_operand.vmem [shape: bf16[128,2], index: 9, kind: input, shape index: {}]
  %s10 = inlined_call_operand.vmem [shape: f32[1,2], index: 10, kind: input, shape index: {}]
  %s11 = inlined_call_operand.vmem [shape: bf16[256,64], index: 11, kind: input, shape index: {}]
  %s12 = inlined_call_operand.vmem [shape: f32[1,64], index: 12, kind: input, shape index: {}]
  %s13 = inlined_call_operand.vmem [shape: bf16[128,64], index: 13, kind: input, shape index: {}]
  %s14 = inlined_call_operand.vmem [shape: f32[1,64], index: 14, kind: input, shape index: {}]
  %s15 = inlined_call_operand.vmem [shape: bf16[64,512], index: 15, kind: input, shape index: {}]
  %s16 = inlined_call_operand.vmem [shape: f32[1,512], index: 16, kind: input, shape index: {}]
  %s17 = inlined_call_operand.vmem [shape: f32[100,1], index: 17, kind: input, shape index: {}]
  %s18 = inlined_call_operand.vmem [shape: bf16[4,256], index: 18, kind: input, shape index: {}]
  %s19 = inlined_call_operand.vmem [shape: f32[100,256], index: 19, kind: input, shape index: {}]
  %s20 = inlined_call_operand.vmem [shape: bf16[2,128], index: 20, kind: input, shape index: {}]
  %s21 = inlined_call_operand.vmem [shape: f32[100,128], index: 21, kind: input, shape index: {}]
  %s22 = inlined_call_operand.hbm [shape: f32[2,1,64], index: 22, kind: output, shape index: {0}]
  %s23 = inlined_call_operand.vmem [shape: f32[2,1,512], index: 23, kind: output, shape index: {1}]
  %24 = xla_tuple %s22, %s23
  %s25 = sld [smem:[#allocation0]]
  $region129: #{qrqac_forward.1} parent=0
    _
  %s27 = ssub.s32 1, %s25
  %s28 = scalar_select 0, %s27, %s25
  $region1: #{qrqac_forward.1} parent=0
    #allocation5 [shape = 'u8[1024]{0}', space=vmem, size = 0x400, scoped, tag = 'output window, operand 0']
    #allocation6 [shape = 's32[2]{0}', space=sflag, size = 0x8, scoped, tag = 'scoped memory for qrqac_forward.1']
    %29 = vsyncpa [#allocation6], 0
    %s30 = scalar_lea.sflag [#allocation6], 1
    %31 = vsyncpa %s30, 0
    loop: start=0, step=1, limit=4
    $region2: #{qrqac_forward.1} parent=1 // loop_pre_header
      _
    $region3: #{qrqac_forward.1} parent=1 // loop_header
      %s33 = sphi 0, %s37
      %p34 = scmp.ge.s32.totalorder %s33, 4
      %s43 = sphi 0, %s45
      %s46 = sphi 0, %s43
      %s47 = sphi 0, %s46
      %s63 = sphi 0, %s47
      %s67 = sphi 0, %s67
      %s69 = sphi 0, %s67
      %s70 = sphi 0, %s69
      %s84 = sphi 0, %s70
      %s88 = sphi 0, %s88
      %s90 = sphi 0, %s88
      %s91 = sphi 0, %s90
      %s105 = sphi 0, %s91
      %s109 = sphi 0, %s109
      %s111 = sphi 0, %s109
      %s112 = sphi 0, %s111
      %s126 = sphi 0, %s112
      %s130 = sphi 0, %s130
      %s132 = sphi 0, %s130
      %s133 = sphi 0, %s132
      %s147 = sphi 0, %s133
      %s151 = sphi 0, %s151
      %s153 = sphi 0, %s151
      %s154 = sphi 0, %s153
      %s168 = sphi 0, %s154
      %s172 = sphi 0, %s172
      %s174 = sphi 0, %s172
      %s175 = sphi 0, %s174
      %s189 = sphi 0, %s175
      %s193 = sphi 0, %s193
      %s195 = sphi 0, %s193
      %s196 = sphi 0, %s195
      %s210 = sphi 0, %s196
      %s214 = sphi 0, %s214
      %s216 = sphi 0, %s214
      %s217 = sphi 0, %s216
      %s231 = sphi 0, %s217
      %s235 = sphi 0, %s235
      %s237 = sphi 0, %s235
      %s238 = sphi 0, %s237
      %s252 = sphi 0, %s238
      %s256 = sphi 0, %s256
      %s258 = sphi 0, %s256
      %s259 = sphi 0, %s258
      %s273 = sphi 0, %s259
      %s277 = sphi 0, %s277
      %s279 = sphi 0, %s277
      %s280 = sphi 0, %s279
      %s294 = sphi 0, %s280
      %s298 = sphi 0, %s298
      %s300 = sphi 0, %s298
      %s301 = sphi 0, %s300
      %s315 = sphi 0, %s301
      %s319 = sphi 0, %s319
      %s321 = sphi 0, %s319
      %s322 = sphi 0, %s321
      %s336 = sphi 0, %s322
      %s340 = sphi 0, %s340
      %s342 = sphi 0, %s340
      %s343 = sphi 0, %s342
      %s357 = sphi 0, %s343
      %s361 = sphi 0, %s361
      %s363 = sphi 0, %s361
      %s364 = sphi 0, %s363
      %s378 = sphi 0, %s364
      %s382 = sphi 0, %s382
      %s384 = sphi 0, %s382
      %s385 = sphi 0, %s384
      %s399 = sphi 0, %s385
      %s403 = sphi 0, %s403
      %s405 = sphi 0, %s403
      %s406 = sphi 0, %s405
      %s420 = sphi 0, %s406
      %s424 = sphi 0, %s424
      %s426 = sphi 0, %s424
      %s427 = sphi 0, %s426
      %s441 = sphi 0, %s427
      %s445 = sphi 0, %s445
      %s447 = sphi 0, %s445
      %s448 = sphi 0, %s447
      %s462 = sphi 0, %s448
      %s466 = sphi 0, %s466
      %s468 = sphi 0, %s466
      %s469 = sphi 0, %s468
      %s483 = sphi 0, %s469
      %s487 = sphi 0, %s487
      %s489 = sphi 0, %s487
      %s490 = sphi 0, %s489
      %s504 = sphi 0, %s490
      %s510 = sphi 0, %s512
      %s513 = sphi 0, %s510
      %s514 = sphi 0, %s513
      %s530 = sphi 0, %s514
      %s536 = sphi 0, %s538
      %s539 = sphi 0, %s536
      %s540 = sphi 0, %s539
      %s556 = sphi 0, %s540
    $region4: #{qrqac_forward.1} parent=1 // loop_header_branch
      %36 = sbr.rel (%p34) target = $region8
    $region5: #{qrqac_forward.1} parent=1 // loop_body
      %s38 = ssub.s32 %s33, 1
      %s39 = ssub.s32 %s33, 2
      %s40 = sadd.s32 %s33, 1
      %s41 = ssub.s32 %s33, %s40
      %p42 = scmp.eq.s32.totalorder %s41, 0
      %s44 = sadd.s32 %s43, 1
      %s45 = scalar_select %p42, %s43, %s44
      %p48 = pneg %p42
      %p49 = scmp.eq.s32.totalorder %s33, 1
      %p50 = por %p48, %p49
      %p51 = scmp.ne.s32.totalorder %s43, %s46
      %p52 = scmp.eq.s32.totalorder %s33, 0
      %p53 = por %p51, %p52
      %p54 = scmp.ne.s32.totalorder %s43, %s46
      %p55 = scmp.eq.s32.totalorder %s38, 1
      %p56 = por %p54, %p55
      %p57 = scmp.ne.s32.totalorder %s46, %s47
      %p58 = scmp.eq.s32.totalorder %s38, 0
      %p59 = por %p57, %p58
      %p60 = scmp.ne.s32.totalorder %s46, %s47
      %p61 = scmp.eq.s32.totalorder %s39, 1
      %p62 = por %p60, %p61
      %p64 = scmp.ne.s32.totalorder %s47, %s63
      %p65 = scmp.eq.s32.totalorder %s39, 0
      %p66 = por %p64, %p65
      %s68 = sadd.s32 %s67, 1
      %p71 = scmp.eq.s32.totalorder %s33, 1
      %p72 = scmp.ne.s32.totalorder %s67, %s69
      %p73 = scmp.eq.s32.totalorder %s33, 0
      %p74 = por %p72, %p73
      %p75 = scmp.ne.s32.totalorder %s67, %s69
      %p76 = scmp.eq.s32.totalorder %s38, 1
      %p77 = por %p75, %p76
      %p78 = scmp.ne.s32.totalorder %s69, %s70
      %p79 = scmp.eq.s32.totalorder %s38, 0
      %p80 = por %p78, %p79
      %p81 = scmp.ne.s32.totalorder %s69, %s70
      %p82 = scmp.eq.s32.totalorder %s39, 1
      %p83 = por %p81, %p82
      %p85 = scmp.ne.s32.totalorder %s70, %s84
      %p86 = scmp.eq.s32.totalorder %s39, 0
      %p87 = por %p85, %p86
      %s89 = sadd.s32 %s88, 1
      %p92 = scmp.eq.s32.totalorder %s33, 1
      %p93 = scmp.ne.s32.totalorder %s88, %s90
      %p94 = scmp.eq.s32.totalorder %s33, 0
      %p95 = por %p93, %p94
      %p96 = scmp.ne.s32.totalorder %s88, %s90
      %p97 = scmp.eq.s32.totalorder %s38, 1
      %p98 = por %p96, %p97
      %p99 = scmp.ne.s32.totalorder %s90, %s91
      %p100 = scmp.eq.s32.totalorder %s38, 0
      %p101 = por %p99, %p100
      %p102 = scmp.ne.s32.totalorder %s90, %s91
      %p103 = scmp.eq.s32.totalorder %s39, 1
      %p104 = por %p102, %p103
      %p106 = scmp.ne.s32.totalorder %s91, %s105
      %p107 = scmp.eq.s32.totalorder %s39, 0
      %p108 = por %p106, %p107
      %s110 = sadd.s32 %s109, 1
      %p113 = scmp.eq.s32.totalorder %s33, 1
      %p114 = scmp.ne.s32.totalorder %s109, %s111
      %p115 = scmp.eq.s32.totalorder %s33, 0
      %p116 = por %p114, %p115
      %p117 = scmp.ne.s32.totalorder %s109, %s111
      %p118 = scmp.eq.s32.totalorder %s38, 1
      %p119 = por %p117, %p118
      %p120 = scmp.ne.s32.totalorder %s111, %s112
      %p121 = scmp.eq.s32.totalorder %s38, 0
      %p122 = por %p120, %p121
      %p123 = scmp.ne.s32.totalorder %s111, %s112
      %p124 = scmp.eq.s32.totalorder %s39, 1
      %p125 = por %p123, %p124
      %p127 = scmp.ne.s32.totalorder %s112, %s126
      %p128 = scmp.eq.s32.totalorder %s39, 0
      %p129 = por %p127, %p128
      %s131 = sadd.s32 %s130, 1
      %p134 = scmp.eq.s32.totalorder %s33, 1
      %p135 = scmp.ne.s32.totalorder %s130, %s132
      %p136 = scmp.eq.s32.totalorder %s33, 0
      %p137 = por %p135, %p136
      %p138 = scmp.ne.s32.totalorder %s130, %s132
      %p139 = scmp.eq.s32.totalorder %s38, 1
      %p140 = por %p138, %p139
      %p141 = scmp.ne.s32.totalorder %s132, %s133
      %p142 = scmp.eq.s32.totalorder %s38, 0
      %p143 = por %p141, %p142
      %p144 = scmp.ne.s32.totalorder %s132, %s133
      %p145 = scmp.eq.s32.totalorder %s39, 1
      %p146 = por %p144, %p145
      %p148 = scmp.ne.s32.totalorder %s133, %s147
      %p149 = scmp.eq.s32.totalorder %s39, 0
      %p150 = por %p148, %p149
      %s152 = sadd.s32 %s151, 1
      %p155 = scmp.eq.s32.totalorder %s33, 1
      %p156 = scmp.ne.s32.totalorder %s151, %s153
      %p157 = scmp.eq.s32.totalorder %s33, 0
      %p158 = por %p156, %p157
      %p159 = scmp.ne.s32.totalorder %s151, %s153
      %p160 = scmp.eq.s32.totalorder %s38, 1
      %p161 = por %p159, %p160
      %p162 = scmp.ne.s32.totalorder %s153, %s154
      %p163 = scmp.eq.s32.totalorder %s38, 0
      %p164 = por %p162, %p163
      %p165 = scmp.ne.s32.totalorder %s153, %s154
      %p166 = scmp.eq.s32.totalorder %s39, 1
      %p167 = por %p165, %p166
      %p169 = scmp.ne.s32.totalorder %s154, %s168
      %p170 = scmp.eq.s32.totalorder %s39, 0
      %p171 = por %p169, %p170
      %s173 = sadd.s32 %s172, 1
      %p176 = scmp.eq.s32.totalorder %s33, 1
      %p177 = scmp.ne.s32.totalorder %s172, %s174
      %p178 = scmp.eq.s32.totalorder %s33, 0
      %p179 = por %p177, %p178
      %p180 = scmp.ne.s32.totalorder %s172, %s174
      %p181 = scmp.eq.s32.totalorder %s38, 1
      %p182 = por %p180, %p181
      %p183 = scmp.ne.s32.totalorder %s174, %s175
      %p184 = scmp.eq.s32.totalorder %s38, 0
      %p185 = por %p183, %p184
      %p186 = scmp.ne.s32.totalorder %s174, %s175
      %p187 = scmp.eq.s32.totalorder %s39, 1
      %p188 = por %p186, %p187
      %p190 = scmp.ne.s32.totalorder %s175, %s189
      %p191 = scmp.eq.s32.totalorder %s39, 0
      %p192 = por %p190, %p191
      %s194 = sadd.s32 %s193, 1
      %p197 = scmp.eq.s32.totalorder %s33, 1
      %p198 = scmp.ne.s32.totalorder %s193, %s195
      %p199 = scmp.eq.s32.totalorder %s33, 0
      %p200 = por %p198, %p199
      %p201 = scmp.ne.s32.totalorder %s193, %s195
      %p202 = scmp.eq.s32.totalorder %s38, 1
      %p203 = por %p201, %p202
      %p204 = scmp.ne.s32.totalorder %s195, %s196
      %p205 = scmp.eq.s32.totalorder %s38, 0
      %p206 = por %p204, %p205
      %p207 = scmp.ne.s32.totalorder %s195, %s196
      %p208 = scmp.eq.s32.totalorder %s39, 1
      %p209 = por %p207, %p208
      %p211 = scmp.ne.s32.totalorder %s196, %s210
      %p212 = scmp.eq.s32.totalorder %s39, 0
      %p213 = por %p211, %p212
      %s215 = sadd.s32 %s214, 1
      %p218 = scmp.eq.s32.totalorder %s33, 1
      %p219 = scmp.ne.s32.totalorder %s214, %s216
      %p220 = scmp.eq.s32.totalorder %s33, 0
      %p221 = por %p219, %p220
      %p222 = scmp.ne.s32.totalorder %s214, %s216
      %p223 = scmp.eq.s32.totalorder %s38, 1
      %p224 = por %p222, %p223
      %p225 = scmp.ne.s32.totalorder %s216, %s217
      %p226 = scmp.eq.s32.totalorder %s38, 0
      %p227 = por %p225, %p226
      %p228 = scmp.ne.s32.totalorder %s216, %s217
      %p229 = scmp.eq.s32.totalorder %s39, 1
      %p230 = por %p228, %p229
      %p232 = scmp.ne.s32.totalorder %s217, %s231
      %p233 = scmp.eq.s32.totalorder %s39, 0
      %p234 = por %p232, %p233
      %s236 = sadd.s32 %s235, 1
      %p239 = scmp.eq.s32.totalorder %s33, 1
      %p240 = scmp.ne.s32.totalorder %s235, %s237
      %p241 = scmp.eq.s32.totalorder %s33, 0
      %p242 = por %p240, %p241
      %p243 = scmp.ne.s32.totalorder %s235, %s237
      %p244 = scmp.eq.s32.totalorder %s38, 1
      %p245 = por %p243, %p244
      %p246 = scmp.ne.s32.totalorder %s237, %s238
      %p247 = scmp.eq.s32.totalorder %s38, 0
      %p248 = por %p246, %p247
      %p249 = scmp.ne.s32.totalorder %s237, %s238
      %p250 = scmp.eq.s32.totalorder %s39, 1
      %p251 = por %p249, %p250
      %p253 = scmp.ne.s32.totalorder %s238, %s252
      %p254 = scmp.eq.s32.totalorder %s39, 0
      %p255 = por %p253, %p254
      %s257 = sadd.s32 %s256, 1
      %p260 = scmp.eq.s32.totalorder %s33, 1
      %p261 = scmp.ne.s32.totalorder %s256, %s258
      %p262 = scmp.eq.s32.totalorder %s33, 0
      %p263 = por %p261, %p262
      %p264 = scmp.ne.s32.totalorder %s256, %s258
      %p265 = scmp.eq.s32.totalorder %s38, 1
      %p266 = por %p264, %p265
      %p267 = scmp.ne.s32.totalorder %s258, %s259
      %p268 = scmp.eq.s32.totalorder %s38, 0
      %p269 = por %p267, %p268
      %p270 = scmp.ne.s32.totalorder %s258, %s259
      %p271 = scmp.eq.s32.totalorder %s39, 1
      %p272 = por %p270, %p271
      %p274 = scmp.ne.s32.totalorder %s259, %s273
      %p275 = scmp.eq.s32.totalorder %s39, 0
      %p276 = por %p274, %p275
      %s278 = sadd.s32 %s277, 1
      %p281 = scmp.eq.s32.totalorder %s33, 1
      %p282 = scmp.ne.s32.totalorder %s277, %s279
      %p283 = scmp.eq.s32.totalorder %s33, 0
      %p284 = por %p282, %p283
      %p285 = scmp.ne.s32.totalorder %s277, %s279
      %p286 = scmp.eq.s32.totalorder %s38, 1
      %p287 = por %p285, %p286
      %p288 = scmp.ne.s32.totalorder %s279, %s280
      %p289 = scmp.eq.s32.totalorder %s38, 0
      %p290 = por %p288, %p289
      %p291 = scmp.ne.s32.totalorder %s279, %s280
      %p292 = scmp.eq.s32.totalorder %s39, 1
      %p293 = por %p291, %p292
      %p295 = scmp.ne.s32.totalorder %s280, %s294
      %p296 = scmp.eq.s32.totalorder %s39, 0
      %p297 = por %p295, %p296
      %s299 = sadd.s32 %s298, 1
      %p302 = scmp.eq.s32.totalorder %s33, 1
      %p303 = scmp.ne.s32.totalorder %s298, %s300
      %p304 = scmp.eq.s32.totalorder %s33, 0
      %p305 = por %p303, %p304
      %p306 = scmp.ne.s32.totalorder %s298, %s300
      %p307 = scmp.eq.s32.totalorder %s38, 1
      %p308 = por %p306, %p307
      %p309 = scmp.ne.s32.totalorder %s300, %s301
      %p310 = scmp.eq.s32.totalorder %s38, 0
      %p311 = por %p309, %p310
      %p312 = scmp.ne.s32.totalorder %s300, %s301
      %p313 = scmp.eq.s32.totalorder %s39, 1
      %p314 = por %p312, %p313
      %p316 = scmp.ne.s32.totalorder %s301, %s315
      %p317 = scmp.eq.s32.totalorder %s39, 0
      %p318 = por %p316, %p317
      %s320 = sadd.s32 %s319, 1
      %p323 = scmp.eq.s32.totalorder %s33, 1
      %p324 = scmp.ne.s32.totalorder %s319, %s321
      %p325 = scmp.eq.s32.totalorder %s33, 0
      %p326 = por %p324, %p325
      %p327 = scmp.ne.s32.totalorder %s319, %s321
      %p328 = scmp.eq.s32.totalorder %s38, 1
      %p329 = por %p327, %p328
      %p330 = scmp.ne.s32.totalorder %s321, %s322
      %p331 = scmp.eq.s32.totalorder %s38, 0
      %p332 = por %p330, %p331
      %p333 = scmp.ne.s32.totalorder %s321, %s322
      %p334 = scmp.eq.s32.totalorder %s39, 1
      %p335 = por %p333, %p334
      %p337 = scmp.ne.s32.totalorder %s322, %s336
      %p338 = scmp.eq.s32.totalorder %s39, 0
      %p339 = por %p337, %p338
      %s341 = sadd.s32 %s340, 1
      %p344 = scmp.eq.s32.totalorder %s33, 1
      %p345 = scmp.ne.s32.totalorder %s340, %s342
      %p346 = scmp.eq.s32.totalorder %s33, 0
      %p347 = por %p345, %p346
      %p348 = scmp.ne.s32.totalorder %s340, %s342
      %p349 = scmp.eq.s32.totalorder %s38, 1
      %p350 = por %p348, %p349
      %p351 = scmp.ne.s32.totalorder %s342, %s343
      %p352 = scmp.eq.s32.totalorder %s38, 0
      %p353 = por %p351, %p352
      %p354 = scmp.ne.s32.totalorder %s342, %s343
      %p355 = scmp.eq.s32.totalorder %s39, 1
      %p356 = por %p354, %p355
      %p358 = scmp.ne.s32.totalorder %s343, %s357
      %p359 = scmp.eq.s32.totalorder %s39, 0
      %p360 = por %p358, %p359
      %s362 = sadd.s32 %s361, 1
      %p365 = scmp.eq.s32.totalorder %s33, 1
      %p366 = scmp.ne.s32.totalorder %s361, %s363
      %p367 = scmp.eq.s32.totalorder %s33, 0
      %p368 = por %p366, %p367
      %p369 = scmp.ne.s32.totalorder %s361, %s363
      %p370 = scmp.eq.s32.totalorder %s38, 1
      %p371 = por %p369, %p370
      %p372 = scmp.ne.s32.totalorder %s363, %s364
      %p373 = scmp.eq.s32.totalorder %s38, 0
      %p374 = por %p372, %p373
      %p375 = scmp.ne.s32.totalorder %s363, %s364
      %p376 = scmp.eq.s32.totalorder %s39, 1
      %p377 = por %p375, %p376
      %p379 = scmp.ne.s32.totalorder %s364, %s378
      %p380 = scmp.eq.s32.totalorder %s39, 0
      %p381 = por %p379, %p380
      %s383 = sadd.s32 %s382, 1
      %p386 = scmp.eq.s32.totalorder %s33, 1
      %p387 = scmp.ne.s32.totalorder %s382, %s384
      %p388 = scmp.eq.s32.totalorder %s33, 0
      %p389 = por %p387, %p388
      %p390 = scmp.ne.s32.totalorder %s382, %s384
      %p391 = scmp.eq.s32.totalorder %s38, 1
      %p392 = por %p390, %p391
      %p393 = scmp.ne.s32.totalorder %s384, %s385
      %p394 = scmp.eq.s32.totalorder %s38, 0
      %p395 = por %p393, %p394
      %p396 = scmp.ne.s32.totalorder %s384, %s385
      %p397 = scmp.eq.s32.totalorder %s39, 1
      %p398 = por %p396, %p397
      %p400 = scmp.ne.s32.totalorder %s385, %s399
      %p401 = scmp.eq.s32.totalorder %s39, 0
      %p402 = por %p400, %p401
      %s404 = sadd.s32 %s403, 1
      %p407 = scmp.eq.s32.totalorder %s33, 1
      %p408 = scmp.ne.s32.totalorder %s403, %s405
      %p409 = scmp.eq.s32.totalorder %s33, 0
      %p410 = por %p408, %p409
      %p411 = scmp.ne.s32.totalorder %s403, %s405
      %p412 = scmp.eq.s32.totalorder %s38, 1
      %p413 = por %p411, %p412
      %p414 = scmp.ne.s32.totalorder %s405, %s406
      %p415 = scmp.eq.s32.totalorder %s38, 0
      %p416 = por %p414, %p415
      %p417 = scmp.ne.s32.totalorder %s405, %s406
      %p418 = scmp.eq.s32.totalorder %s39, 1
      %p419 = por %p417, %p418
      %p421 = scmp.ne.s32.totalorder %s406, %s420
      %p422 = scmp.eq.s32.totalorder %s39, 0
      %p423 = por %p421, %p422
      %s425 = sadd.s32 %s424, 1
      %p428 = scmp.eq.s32.totalorder %s33, 1
      %p429 = scmp.ne.s32.totalorder %s424, %s426
      %p430 = scmp.eq.s32.totalorder %s33, 0
      %p431 = por %p429, %p430
      %p432 = scmp.ne.s32.totalorder %s424, %s426
      %p433 = scmp.eq.s32.totalorder %s38, 1
      %p434 = por %p432, %p433
      %p435 = scmp.ne.s32.totalorder %s426, %s427
      %p436 = scmp.eq.s32.totalorder %s38, 0
      %p437 = por %p435, %p436
      %p438 = scmp.ne.s32.totalorder %s426, %s427
      %p439 = scmp.eq.s32.totalorder %s39, 1
      %p440 = por %p438, %p439
      %p442 = scmp.ne.s32.totalorder %s427, %s441
      %p443 = scmp.eq.s32.totalorder %s39, 0
      %p444 = por %p442, %p443
      %s446 = sadd.s32 %s445, 1
      %p449 = scmp.eq.s32.totalorder %s33, 1
      %p450 = scmp.ne.s32.totalorder %s445, %s447
      %p451 = scmp.eq.s32.totalorder %s33, 0
      %p452 = por %p450, %p451
      %p453 = scmp.ne.s32.totalorder %s445, %s447
      %p454 = scmp.eq.s32.totalorder %s38, 1
      %p455 = por %p453, %p454
      %p456 = scmp.ne.s32.totalorder %s447, %s448
      %p457 = scmp.eq.s32.totalorder %s38, 0
      %p458 = por %p456, %p457
      %p459 = scmp.ne.s32.totalorder %s447, %s448
      %p460 = scmp.eq.s32.totalorder %s39, 1
      %p461 = por %p459, %p460
      %p463 = scmp.ne.s32.totalorder %s448, %s462
      %p464 = scmp.eq.s32.totalorder %s39, 0
      %p465 = por %p463, %p464
      %s467 = sadd.s32 %s466, 1
      %p470 = scmp.eq.s32.totalorder %s33, 1
      %p471 = scmp.ne.s32.totalorder %s466, %s468
      %p472 = scmp.eq.s32.totalorder %s33, 0
      %p473 = por %p471, %p472
      %p474 = scmp.ne.s32.totalorder %s466, %s468
      %p475 = scmp.eq.s32.totalorder %s38, 1
      %p476 = por %p474, %p475
      %p477 = scmp.ne.s32.totalorder %s468, %s469
      %p478 = scmp.eq.s32.totalorder %s38, 0
      %p479 = por %p477, %p478
      %p480 = scmp.ne.s32.totalorder %s468, %s469
      %p481 = scmp.eq.s32.totalorder %s39, 1
      %p482 = por %p480, %p481
      %p484 = scmp.ne.s32.totalorder %s469, %s483
      %p485 = scmp.eq.s32.totalorder %s39, 0
      %p486 = por %p484, %p485
      %s488 = sadd.s32 %s487, 1
      %p491 = scmp.eq.s32.totalorder %s33, 1
      %p492 = scmp.ne.s32.totalorder %s487, %s489
      %p493 = scmp.eq.s32.totalorder %s33, 0
      %p494 = por %p492, %p493
      %p495 = scmp.ne.s32.totalorder %s487, %s489
      %p496 = scmp.eq.s32.totalorder %s38, 1
      %p497 = por %p495, %p496
      %p498 = scmp.ne.s32.totalorder %s489, %s490
      %p499 = scmp.eq.s32.totalorder %s38, 0
      %p500 = por %p498, %p499
      %p501 = scmp.ne.s32.totalorder %s489, %s490
      %p502 = scmp.eq.s32.totalorder %s39, 1
      %p503 = por %p501, %p502
      %p505 = scmp.ne.s32.totalorder %s490, %s504
      %p506 = scmp.eq.s32.totalorder %s39, 0
      %p507 = por %p505, %p506
      %s508 = ssub.s32 %s33, %s40
      %p509 = scmp.eq.s32.totalorder %s508, 0
      %s511 = sadd.s32 %s510, 1
      %s512 = scalar_select %p509, %s510, %s511
      %p515 = pneg %p509
      %p516 = scmp.eq.s32.totalorder %s33, 1
      %p517 = por %p515, %p516
      %p518 = scmp.ne.s32.totalorder %s510, %s513
      %p519 = scmp.eq.s32.totalorder %s33, 0
      %p520 = por %p518, %p519
      %p521 = scmp.ne.s32.totalorder %s510, %s513
      %p522 = scmp.eq.s32.totalorder %s38, 1
      %p523 = por %p521, %p522
      %p524 = scmp.ne.s32.totalorder %s513, %s514
      %p525 = scmp.eq.s32.totalorder %s38, 0
      %p526 = por %p524, %p525
      %p527 = scmp.ne.s32.totalorder %s513, %s514
      %p528 = scmp.eq.s32.totalorder %s39, 1
      %p529 = por %p527, %p528
      %p531 = scmp.ne.s32.totalorder %s514, %s530
      %p532 = scmp.eq.s32.totalorder %s39, 0
      %p533 = por %p531, %p532
      %s534 = ssub.s32 %s33, %s40
      %p535 = scmp.eq.s32.totalorder %s534, 0
      %s537 = sadd.s32 %s536, 1
      %s538 = scalar_select %p535, %s536, %s537
      %p541 = pneg %p535
      %p542 = scmp.eq.s32.totalorder %s33, 1
      %p543 = por %p541, %p542
      %p544 = scmp.ne.s32.totalorder %s536, %s539
      %p545 = scmp.eq.s32.totalorder %s33, 0
      %p546 = por %p544, %p545
      %p547 = scmp.ne.s32.totalorder %s536, %s539
      %p548 = scmp.eq.s32.totalorder %s38, 1
      %p549 = por %p547, %p548
      %p550 = scmp.ne.s32.totalorder %s539, %s540
      %p551 = scmp.eq.s32.totalorder %s38, 0
      %p552 = por %p550, %p551
      %p553 = scmp.ne.s32.totalorder %s539, %s540
      %p554 = scmp.eq.s32.totalorder %s39, 1
      %p555 = por %p553, %p554
      %p557 = scmp.ne.s32.totalorder %s540, %s556
      %p558 = scmp.eq.s32.totalorder %s39, 0
      %p559 = por %p557, %p558
      %p560 = scmp.le.s32.totalorder 1, %s33
      %p561 = scmp.lt.s32.totalorder %s33, 3
      %p562 = pnand %p560, %p561
      %p563 = pneg %p562
      // Predicated region
      $region9: #{qrqac_forward.1} parent=5 // pred_check
        _
      $region10: #{qrqac_forward.1} parent=5 // pred_check_branch
        %565 = sbr.rel (%p562) target = $region12
      $region11: #{qrqac_forward.1} parent=5 // pred_region
        %s566 = ssub.s32 %s33, 1
        // Predicated region
        $region13: #{qrqac_forward.1} parent=11 // pred_check
          %p567 = pneg %p80
        $region14: #{qrqac_forward.1} parent=11 // pred_check_branch
          %569 = sbr.rel (%p567) target = $region16
        $region15: #{qrqac_forward.1} parent=11 // pred_region
          _
        $region16: #{qrqac_forward.1} parent=11 // pred_fallthru
          _
        // Predicated region
        $region17: #{qrqac_forward.1} parent=11 // pred_check
          %p570 = pneg %p101
        $region18: #{qrqac_forward.1} parent=11 // pred_check_branch
          %572 = sbr.rel (%p570) target = $region20
        $region19: #{qrqac_forward.1} parent=11 // pred_region
          _
        $region20: #{qrqac_forward.1} parent=11 // pred_fallthru
          _
        // Predicated region
        $region21: #{qrqac_forward.1} parent=11 // pred_check
          %p573 = pneg %p122
        $region22: #{qrqac_forward.1} parent=11 // pred_check_branch
          %575 = sbr.rel (%p573) target = $region24
        $region23: #{qrqac_forward.1} parent=11 // pred_region
          _
        $region24: #{qrqac_forward.1} parent=11 // pred_fallthru
          _
        // Predicated region
        $region25: #{qrqac_forward.1} parent=11 // pred_check
          %p576 = pneg %p143
        $region26: #{qrqac_forward.1} parent=11 // pred_check_branch
          %578 = sbr.rel (%p576) target = $region28
        $region27: #{qrqac_forward.1} parent=11 // pred_region
          _
        $region28: #{qrqac_forward.1} parent=11 // pred_fallthru
          _
        // Predicated region
        $region29: #{qrqac_forward.1} parent=11 // pred_check
          %p579 = pneg %p164
        $region30: #{qrqac_forward.1} parent=11 // pred_check_branch
          %581 = sbr.rel (%p579) target = $region32
        $region31: #{qrqac_forward.1} parent=11 // pred_region
          _
        $region32: #{qrqac_forward.1} parent=11 // pred_fallthru
          _
        // Predicated region
        $region33: #{qrqac_forward.1} parent=11 // pred_check
          %p582 = pneg %p185
        $region34: #{qrqac_forward.1} parent=11 // pred_check_branch
          %584 = sbr.rel (%p582) target = $region36
        $region35: #{qrqac_forward.1} parent=11 // pred_region
          _
        $region36: #{qrqac_forward.1} parent=11 // pred_fallthru
          _
        // Predicated region
        $region37: #{qrqac_forward.1} parent=11 // pred_check
          %p585 = pneg %p206
        $region38: #{qrqac_forward.1} parent=11 // pred_check_branch
          %587 = sbr.rel (%p585) target = $region40
        $region39: #{qrqac_forward.1} parent=11 // pred_region
          _
        $region40: #{qrqac_forward.1} parent=11 // pred_fallthru
          _
        // Predicated region
        $region41: #{qrqac_forward.1} parent=11 // pred_check
          %p588 = pneg %p227
        $region42: #{qrqac_forward.1} parent=11 // pred_check_branch
          %590 = sbr.rel (%p588) target = $region44
        $region43: #{qrqac_forward.1} parent=11 // pred_region
          _
        $region44: #{qrqac_forward.1} parent=11 // pred_fallthru
          _
        // Predicated region
        $region45: #{qrqac_forward.1} parent=11 // pred_check
          %p591 = pneg %p248
        $region46: #{qrqac_forward.1} parent=11 // pred_check_branch
          %593 = sbr.rel (%p591) target = $region48
        $region47: #{qrqac_forward.1} parent=11 // pred_region
          _
        $region48: #{qrqac_forward.1} parent=11 // pred_fallthru
          _
        // Predicated region
        $region49: #{qrqac_forward.1} parent=11 // pred_check
          %p594 = pneg %p269
        $region50: #{qrqac_forward.1} parent=11 // pred_check_branch
          %596 = sbr.rel (%p594) target = $region52
        $region51: #{qrqac_forward.1} parent=11 // pred_region
          _
        $region52: #{qrqac_forward.1} parent=11 // pred_fallthru
          _
        // Predicated region
        $region53: #{qrqac_forward.1} parent=11 // pred_check
          %p597 = pneg %p290
        $region54: #{qrqac_forward.1} parent=11 // pred_check_branch
          %599 = sbr.rel (%p597) target = $region56
        $region55: #{qrqac_forward.1} parent=11 // pred_region
          _
        $region56: #{qrqac_forward.1} parent=11 // pred_fallthru
          _
        // Predicated region
        $region57: #{qrqac_forward.1} parent=11 // pred_check
          %p600 = pneg %p311
        $region58: #{qrqac_forward.1} parent=11 // pred_check_branch
          %602 = sbr.rel (%p600) target = $region60
        $region59: #{qrqac_forward.1} parent=11 // pred_region
          _
        $region60: #{qrqac_forward.1} parent=11 // pred_fallthru
          _
        // Predicated region
        $region61: #{qrqac_forward.1} parent=11 // pred_check
          %p603 = pneg %p332
        $region62: #{qrqac_forward.1} parent=11 // pred_check_branch
          %605 = sbr.rel (%p603) target = $region64
        $region63: #{qrqac_forward.1} parent=11 // pred_region
          _
        $region64: #{qrqac_forward.1} parent=11 // pred_fallthru
          _
        // Predicated region
        $region65: #{qrqac_forward.1} parent=11 // pred_check
          %p606 = pneg %p353
        $region66: #{qrqac_forward.1} parent=11 // pred_check_branch
          %608 = sbr.rel (%p606) target = $region68
        $region67: #{qrqac_forward.1} parent=11 // pred_region
          _
        $region68: #{qrqac_forward.1} parent=11 // pred_fallthru
          _
        // Predicated region
        $region69: #{qrqac_forward.1} parent=11 // pred_check
          %p609 = pneg %p374
        $region70: #{qrqac_forward.1} parent=11 // pred_check_branch
          %611 = sbr.rel (%p609) target = $region72
        $region71: #{qrqac_forward.1} parent=11 // pred_region
          _
        $region72: #{qrqac_forward.1} parent=11 // pred_fallthru
          _
        // Predicated region
        $region73: #{qrqac_forward.1} parent=11 // pred_check
          %p612 = pneg %p395
        $region74: #{qrqac_forward.1} parent=11 // pred_check_branch
          %614 = sbr.rel (%p612) target = $region76
        $region75: #{qrqac_forward.1} parent=11 // pred_region
          _
        $region76: #{qrqac_forward.1} parent=11 // pred_fallthru
          _
        // Predicated region
        $region77: #{qrqac_forward.1} parent=11 // pred_check
          %p615 = pneg %p416
        $region78: #{qrqac_forward.1} parent=11 // pred_check_branch
          %617 = sbr.rel (%p615) target = $region80
        $region79: #{qrqac_forward.1} parent=11 // pred_region
          _
        $region80: #{qrqac_forward.1} parent=11 // pred_fallthru
          _
        // Predicated region
        $region81: #{qrqac_forward.1} parent=11 // pred_check
          %p618 = pneg %p437
        $region82: #{qrqac_forward.1} parent=11 // pred_check_branch
          %620 = sbr.rel (%p618) target = $region84
        $region83: #{qrqac_forward.1} parent=11 // pred_region
          _
        $region84: #{qrqac_forward.1} parent=11 // pred_fallthru
          _
        // Predicated region
        $region85: #{qrqac_forward.1} parent=11 // pred_check
          %p621 = pneg %p458
        $region86: #{qrqac_forward.1} parent=11 // pred_check_branch
          %623 = sbr.rel (%p621) target = $region88
        $region87: #{qrqac_forward.1} parent=11 // pred_region
          _
        $region88: #{qrqac_forward.1} parent=11 // pred_fallthru
          _
        // Predicated region
        $region89: #{qrqac_forward.1} parent=11 // pred_check
          %p624 = pneg %p479
        $region90: #{qrqac_forward.1} parent=11 // pred_check_branch
          %626 = sbr.rel (%p624) target = $region92
        $region91: #{qrqac_forward.1} parent=11 // pred_region
          _
        $region92: #{qrqac_forward.1} parent=11 // pred_fallthru
          _
        // Predicated region
        $region93: #{qrqac_forward.1} parent=11 // pred_check
          %p627 = pneg %p500
        $region94: #{qrqac_forward.1} parent=11 // pred_check_branch
          %629 = sbr.rel (%p627) target = $region96
        $region95: #{qrqac_forward.1} parent=11 // pred_region
          _
        $region96: #{qrqac_forward.1} parent=11 // pred_fallthru
          _
      $region12: #{qrqac_forward.1} parent=5 // pred_fallthru
        _
      %p630 = scmp.lt.s32.totalorder %s33, 2
      // Predicated region
      $region97: #{qrqac_forward.1} parent=5 // pred_check
        %p631 = pneg %p630
      $region98: #{qrqac_forward.1} parent=5 // pred_check_branch
        %633 = sbr.rel (%p631) target = $region100
      $region99: #{qrqac_forward.1} parent=5 // pred_region
        // Predicated region
        $region101: #{qrqac_forward.1} parent=99 // pred_check
          %p634 = pneg %p53
        $region102: #{qrqac_forward.1} parent=99 // pred_check_branch
          %636 = sbr.rel (%p634) target = $region104
        $region103: #{qrqac_forward.1} parent=99 // pred_region
          %p637 = scmp.lt.s32.totalorder %s33, 1
          %s638 = scalar_select %p637, %s33, 1
          %s639 = smul.addr %s638, 17
          %s640 = smul.addr %s639, 8
          %s641 = scalar_lea.vmem %s0, %s640
        $region104: #{qrqac_forward.1} parent=99 // pred_fallthru
          _
      $region100: #{qrqac_forward.1} parent=5 // pred_fallthru
        _
      %p642 = scmp.le.s32.totalorder 1, %s33
      %p643 = scmp.lt.s32.totalorder %s33, 3
      %p644 = pnand %p642, %p643
      %p645 = pneg %p644
      // Predicated region
      $region105: #{qrqac_forward.1} parent=5 // pred_check
        _
      $region106: #{qrqac_forward.1} parent=5 // pred_check_branch
        %647 = sbr.rel (%p644) target = $region108
      $region107: #{qrqac_forward.1} parent=5 // pred_region
        %s648 = ssub.s32 %s33, 1
        %p649 = scmp.lt.s32.totalorder %s38, 1
        %s650 = scalar_select %p649, %s38, 1
        %s651 = smul.addr %s650, 17
        %s652 = smul.addr %s651, 8
        %s653 = scalar_lea.vmem %s0, %s652
        %p654 = pneg %p59
        %p655 = pneg %p56
        %p656 = pneg %p80
        %p657 = pneg %p77
        %p658 = pneg %p101
        %p659 = pneg %p98
        %p660 = pneg %p122
        %p661 = pneg %p119
        %p662 = pneg %p143
        %p663 = pneg %p140
        %p664 = pneg %p164
        %p665 = pneg %p161
        %p666 = pneg %p185
        %p667 = pneg %p182
        %p668 = pneg %p206
        %p669 = pneg %p203
        %p670 = pneg %p227
        %p671 = pneg %p224
        %p672 = pneg %p248
        %p673 = pneg %p245
        %p674 = pneg %p269
        %p675 = pneg %p266
        %p676 = pneg %p290
        %p677 = pneg %p287
        %p678 = pneg %p311
        %p679 = pneg %p308
        %p680 = pneg %p332
        %p681 = pneg %p329
        %p682 = pneg %p353
        %p683 = pneg %p350
        %p684 = pneg %p374
        %p685 = pneg %p371
        %p686 = pneg %p395
        %p687 = pneg %p392
        %p688 = pneg %p416
        %p689 = pneg %p413
        %p690 = pneg %p437
        %p691 = pneg %p434
        %p692 = pneg %p458
        %p693 = pneg %p455
        %p694 = pneg %p479
        %p695 = pneg %p476
        %p696 = pneg %p500
        %p697 = pneg %p497
        %p698 = pneg %p526
        %p699 = pneg %p523
        %s700 = sand.u32 %s513, 1
        %s701 = scalar_lea.sflag [#allocation6], %s700
        %s702 = sand.u32 %s513, 1
        %s703 = scalar_lea.vmem [#allocation5], %s702
        %p704 = pneg %p552
        %p705 = pneg %p549
        %p706 = scmp.lt.s32.totalorder %s38, 1
        %s707 = scalar_select %p706, %s38, 1
        %s708 = smul.addr %s707, 4
        %s709 = scalar_lea.vmem %s23, %s708
        %p710 = scmp.lt.s32.totalorder %s38, 1
        %s711 = scalar_select %p710, %s38, 1
        %s712 = smul.addr %s711, 17
        %s713 = smul.addr %s712, 8
        %s714 = scalar_lea.vmem %s0, %s713
        %p715 = scmp.lt.s32.totalorder %s38, 1
        %s716 = scalar_select %p715, %s38, 1
        %s717 = smul.addr %s716, 4
        %s718 = scalar_lea.vmem %s23, %s717
        %vm721 = vcmask 261120
        %722 = vst.msk [vmem:[#allocation2] sm:$0xff] %vm721, 0.0
        %723 = vst.msk [vmem:[#allocation2 + $0x8] sm:$0xff] %vm721, 0.0
        %724 = vst.msk [vmem:[#allocation2 + $0x10] sm:$0xff] %vm721, 0.0
        %725 = vst.msk [vmem:[#allocation2 + $0x18] sm:$0xff] %vm721, 0.0
        %726 = vst.msk [vmem:[#allocation2 + $0x20] sm:$0xff] %vm721, 0.0
        %727 = vst.msk [vmem:[#allocation2 + $0x28] sm:$0xff] %vm721, 0.0
        %728 = vst.msk [vmem:[#allocation2 + $0x30] sm:$0xff] %vm721, 0.0
        %729 = vst.msk [vmem:[#allocation2 + $0x38] sm:$0xff] %vm721, 0.0
        %730 = vst.msk [vmem:[#allocation2 + $0x40] sm:$0xff] %vm721, 0.0
        %731 = vst.msk [vmem:[#allocation2 + $0x48] sm:$0xff] %vm721, 0.0
        %732 = vst.msk [vmem:[#allocation2 + $0x50] sm:$0xff] %vm721, 0.0
        %733 = vst.msk [vmem:[#allocation2 + $0x58] sm:$0xff] %vm721, 0.0
        %734 = vst.msk [vmem:[#allocation2 + $0x60] sm:$0xff] %vm721, 0.0
        %735 = vst.msk [vmem:[#allocation2 + $0x68] sm:$0xff] %vm721, 0.0
        %736 = vst.msk [vmem:[#allocation2 + $0x70] sm:$0xff] %vm721, 0.0
        %737 = vst.msk [vmem:[#allocation2 + $0x78] sm:$0xff] %vm721, 0.0
        %vm738 = vcmask 257024
        %739 = vst.msk [vmem:[#allocation2 + $0x80] sm:$0xf] %vm738, 0.0
        %vm740 = vcmask 523264
        %741 = vst.msk [vmem:[#allocation3] sm:$0xff] %vm740, 0.0
        %742 = vst.msk [vmem:[#allocation3 + $0x8] sm:$0xff] %vm740, 0.0
        %743 = vst.msk [vmem:[#allocation3 + $0x10] sm:$0xff] %vm740, 0.0
        %744 = vst.msk [vmem:[#allocation3 + $0x18] sm:$0xff] %vm740, 0.0
        %745 = vst.msk [vmem:[#allocation3 + $0x20] sm:$0xff] %vm740, 0.0
        %746 = vst.msk [vmem:[#allocation3 + $0x28] sm:$0xff] %vm740, 0.0
        %747 = vst.msk [vmem:[#allocation3 + $0x30] sm:$0xff] %vm740, 0.0
        %748 = vst.msk [vmem:[#allocation3 + $0x38] sm:$0xff] %vm740, 0.0
        %749 = vst.msk [vmem:[#allocation3 + $0x40] sm:$0xff] %vm740, 0.0
        %750 = vst.msk [vmem:[#allocation3 + $0x48] sm:$0xff] %vm740, 0.0
        %751 = vst.msk [vmem:[#allocation3 + $0x50] sm:$0xff] %vm740, 0.0
        %752 = vst.msk [vmem:[#allocation3 + $0x58] sm:$0xff] %vm740, 0.0
        %753 = vst.msk [vmem:[#allocation3 + $0x60] sm:$0xff] %vm740, 0.0
        %754 = vst.msk [vmem:[#allocation3 + $0x68] sm:$0xff] %vm740, 0.0
        %755 = vst.msk [vmem:[#allocation3 + $0x70] sm:$0xff] %vm740, 0.0
        %756 = vst.msk [vmem:[#allocation3 + $0x78] sm:$0xff] %vm740, 0.0
        %vm757 = vcmask 519168
        %758 = vst.msk [vmem:[#allocation3 + $0x80] sm:$0xf] %vm757, 0.0
        %v759 = vld [vmem:[%s17] sm:$0xff]
        %v760 = vld [vmem:[%s17 + $0x8] sm:$0xff]
        %v761 = vld [vmem:[%s17 + $0x10] sm:$0xff]
        %v762 = vld [vmem:[%s17 + $0x18] sm:$0xff]
        %v763 = vld [vmem:[%s17 + $0x20] sm:$0xff]
        %v764 = vld [vmem:[%s17 + $0x28] sm:$0xff]
        %v765 = vld [vmem:[%s17 + $0x30] sm:$0xff]
        %v766 = vld [vmem:[%s17 + $0x38] sm:$0xff]
        %v767 = vld [vmem:[%s17 + $0x40] sm:$0xff]
        %v768 = vld [vmem:[%s17 + $0x48] sm:$0xff]
        %v769 = vld [vmem:[%s17 + $0x50] sm:$0xff]
        %v770 = vld [vmem:[%s17 + $0x58] sm:$0xff]
        %v771 = vld [vmem:[%s17 + $0x60] sm:$0xf]
        %v772 = vld [vmem:[%s714 + $0x5] sm:$0xff]
        %v773 = vld [vmem:[%s714 + $0xd] sm:$0xff]
        %v774 = vld [vmem:[%s714 + $0x15] sm:$0xff]
        %v775 = vld [vmem:[%s714 + $0x1d] sm:$0xff]
        %v776 = vld [vmem:[%s714 + $0x25] sm:$0xff]
        %v777 = vld [vmem:[%s714 + $0x2d] sm:$0xff]
        %v778 = vld [vmem:[%s714 + $0x35] sm:$0xff]
        %v779 = vld [vmem:[%s714 + $0x3d] sm:$0xff]
        %v780 = vld [vmem:[%s714 + $0x45] sm:$0xff]
        %v781 = vld [vmem:[%s714 + $0x4d] sm:$0xff]
        %v782 = vld [vmem:[%s714 + $0x55] sm:$0xff]
        %v783 = vld [vmem:[%s714 + $0x5d] sm:$0xff]
        %v784 = vld [vmem:[%s714 + $0x65] sm:$0xf]
        %v785 = vpack.c.bf16 %v773, %v772
        %v786 = vpack.c.bf16 %v775, %v774
        %v787 = vpack.c.bf16 %v777, %v776
        %v788 = vpack.c.bf16 %v779, %v778
        %v789 = vpack.c.bf16 %v781, %v780
        %v790 = vpack.c.bf16 %v783, %v782
        %v791 = vpack.c.bf16 %v784, %v784
        %v792 = vld [vmem:[%s1] sm:$0x7]
        %v793 = vld [vmem:[%s714 + $0x6] sm:$0xff]
        %v794 = vld [vmem:[%s714 + $0xe] sm:$0xff]
        %v795 = vld [vmem:[%s714 + $0x16] sm:$0xff]
        %v796 = vld [vmem:[%s714 + $0x1e] sm:$0xff]
        %v797 = vld [vmem:[%s714 + $0x26] sm:$0xff]
        %v798 = vld [vmem:[%s714 + $0x2e] sm:$0xff]
        %v799 = vld [vmem:[%s714 + $0x36] sm:$0xff]
        %v800 = vld [vmem:[%s714 + $0x3e] sm:$0xff]
        %v801 = vld [vmem:[%s714 + $0x46] sm:$0xff]
        %v802 = vld [vmem:[%s714 + $0x4e] sm:$0xff]
        %v803 = vld [vmem:[%s714 + $0x56] sm:$0xff]
        %v804 = vld [vmem:[%s714 + $0x5e] sm:$0xff]
        %v805 = vld [vmem:[%s714 + $0x66] sm:$0xf]
        %v806 = vpack.c.bf16 %v794, %v793
        %v807 = vpack.c.bf16 %v796, %v795
        %v808 = vpack.c.bf16 %v798, %v797
        %v809 = vpack.c.bf16 %v800, %v799
        %v810 = vpack.c.bf16 %v802, %v801
        %v811 = vpack.c.bf16 %v804, %v803
        %v812 = vpack.c.bf16 %v805, %v805
        %s813 = scalar_lea.vmem %s1, 4
        %v814 = vld [vmem:[%s813] sm:$0x7]
        %vm815 = vcmask 39936
        %v817 = vsel %vm815, %v806, 0
        %v820 = vsel %vm815, %v807, 0
        %v823 = vsel %vm815, %v808, 0
        %v826 = vsel %vm815, %v809, 0
        %v829 = vsel %vm815, %v810, 0
        %v832 = vsel %vm815, %v811, 0
        %v835 = vsel %vm815, %v812, 0
        %vm837 = vcmask 1041408
        %vm838 = vcmask 1042432
        %v839 = vsel %vm837, 4294967295, 65535
        %v840 = vsel %vm838, %v839, 0
        %v842 = vand.u32 %v814, %v840
        %844 = vmatprep.subr.bf16.mxu0 0
        %845 = vmatpush1.bf16.msra.mxu0 %v842
        %846 = vmatprep.subr.bf16.mxu0 0
        %847 = vmatpush1.bf16.msra.mxu0 0
        %848 = vmatprep.subr.bf16.mxu0 0
        %849 = vmatpush1.bf16.msra.mxu0 0
        %850 = vmatprep.subr.bf16.mxu0 0
        %851 = vmatpush1.bf16.msra.mxu0 0
        %852 = vmatprep.subr.bf16.mxu0 0
        %853 = vmatpush1.bf16.msra.mxu0 0
        %854 = vmatprep.subr.bf16.mxu0 0
        %855 = vmatpush1.bf16.msra.mxu0 0
        %856 = vmatprep.subr.bf16.mxu0 0
        %857 = vmatpush1.bf16.msra.mxu0 0
        %858 = vmatprep.subr.bf16.mxu0 0
        %859 = vmatpush1.bf16.msra.mxu0 0
        %860 = vmatprep.subr.bf16.mxu0 0
        %861 = vmatpush1.bf16.msra.mxu0 0
        %862 = vmatprep.subr.bf16.mxu0 0
        %863 = vmatpush1.bf16.msra.mxu0 0
        %864 = vmatprep.subr.bf16.mxu0 0
        %865 = vmatpush1.bf16.msra.mxu0 0
        %866 = vmatprep.subr.bf16.mxu0 0
        %867 = vmatpush1.bf16.msra.mxu0 0
        %868 = vmatprep.subr.bf16.mxu0 0
        %869 = vmatpush1.bf16.msra.mxu0 0
        %870 = vmatprep.subr.bf16.mxu0 0
        %871 = vmatpush1.bf16.msra.mxu0 0
        %872 = vmatprep.subr.bf16.mxu0 0
        %873 = vmatpush1.bf16.msra.mxu0 0
        %874 = vmatprep.subr.bf16.mxu0 0
        %875 = vmatpush1.bf16.msra.mxu0 0
        %876 = vmatprep.mubr.bf16.mxu0 0
        %877 = vmatmul.mubr.bf16.gmra.mrb[0].mxu0 %v817
        %v878 = vpop.f32.mrb[0].mxu0
        %v879 = vadd.f32 0.0, %v878
        %v880 = vpop.f32.mrb[0].mxu0
        %v881 = vpop.f32.mrb[0].mxu0
        %v882 = vadd.f32 0.0, %v881
        %v883 = vpop.f32.mrb[0].mxu0
        %884 = vmatprep.mubr.bf16.mxu0 0
        %885 = vmatmul.mubr.bf16.gmra.mrb[0].mxu0 %v820
        %v886 = vpop.f32.mrb[0].mxu0
        %v887 = vadd.f32 0.0, %v886
        %v888 = vpop.f32.mrb[0].mxu0
        %v889 = vpop.f32.mrb[0].mxu0
        %v890 = vadd.f32 0.0, %v889
        %v891 = vpop.f32.mrb[0].mxu0
        %892 = vmatprep.mubr.bf16.mxu0 0
        %893 = vmatmul.mubr.bf16.gmra.mrb[0].mxu0 %v823
        %v894 = vpop.f32.mrb[0].mxu0
        %v895 = vadd.f32 0.0, %v894
        %v896 = vpop.f32.mrb[0].mxu0
        %v897 = vpop.f32.mrb[0].mxu0
        %v898 = vadd.f32 0.0, %v897
        %v899 = vpop.f32.mrb[0].mxu0
        %900 = vmatprep.mubr.bf16.mxu0 0
        %901 = vmatmul.mubr.bf16.gmra.mrb[0].mxu0 %v826
        %v902 = vpop.f32.mrb[0].mxu0
        %v903 = vadd.f32 0.0, %v902
        %v904 = vpop.f32.mrb[0].mxu0
        %v905 = vpop.f32.mrb[0].mxu0
        %v906 = vadd.f32 0.0, %v905
        %v907 = vpop.f32.mrb[0].mxu0
        %908 = vmatprep.mubr.bf16.mxu0 0
        %909 = vmatmul.mubr.bf16.gmra.mrb[0].mxu0 %v829
        %v910 = vpop.f32.mrb[0].mxu0
        %v911 = vadd.f32 0.0, %v910
        %v912 = vpop.f32.mrb[0].mxu0
        %v913 = vpop.f32.mrb[0].mxu0
        %v914 = vadd.f32 0.0, %v913
        %v915 = vpop.f32.mrb[0].mxu0
        %916 = vmatprep.mubr.bf16.mxu0 0
        %917 = vmatmul.mubr.bf16.gmra.mrb[0].mxu0 %v832
        %v918 = vpop.f32.mrb[0].mxu0
        %v919 = vadd.f32 0.0, %v918
        %v920 = vpop.f32.mrb[0].mxu0
        %v921 = vpop.f32.mrb[0].mxu0
        %v922 = vadd.f32 0.0, %v921
        %v923 = vpop.f32.mrb[0].mxu0
        %924 = vmatprep.mubr.bf16.mxu0 0
        %925 = vmatmul.mubr.bf16.gmra.mrb[0].mxu0 %v835
        %v926 = vpop.f32.mrb[0].mxu0
        %v927 = vadd.f32 0.0, %v926
        %v928 = vpop.f32.mrb[0].mxu0
        %v929 = vpop.f32.mrb[0].mxu0
        %v930 = vpop.f32.mrb[0].mxu0
        %931 = vdwg.mxu0
        %v933 = vsel %vm815, %v785, 0
        %v936 = vsel %vm815, %v786, 0
        %v939 = vsel %vm815, %v787, 0
        %v942 = vsel %vm815, %v788, 0
        %v945 = vsel %vm815, %v789, 0
        %v948 = vsel %vm815, %v790, 0
        %v951 = vsel %vm815, %v791, 0
        %v954 = vand.u32 %v792, %v840
        %956 = vmatprep.subr.bf16.mxu0 0
        %957 = vmatpush1.bf16.msra.mxu0 %v954
        %958 = vmatprep.subr.bf16.mxu0 0
        %959 = vmatpush1.bf16.msra.mxu0 0
        %960 = vmatprep.subr.bf16.mxu0 0
        %961 = vmatpush1.bf16.msra.mxu0 0
        %962 = vmatprep.subr.bf16.mxu0 0
        %963 = vmatpush1.bf16.msra.mxu0 0
        %964 = vmatprep.subr.bf16.mxu0 0
        %965 = vmatpush1.bf16.msra.mxu0 0
        %966 = vmatprep.subr.bf16.mxu0 0
        %967 = vmatpush1.bf16.msra.mxu0 0
        %968 = vmatprep.subr.bf16.mxu0 0
        %969 = vmatpush1.bf16.msra.mxu0 0
        %970 = vmatprep.subr.bf16.mxu0 0
        %971 = vmatpush1.bf16.msra.mxu0 0
        %972 = vmatprep.subr.bf16.mxu0 0
        %973 = vmatpush1.bf16.msra.mxu0 0
        %974 = vmatprep.subr.bf16.mxu0 0
        %975 = vmatpush1.bf16.msra.mxu0 0
        %976 = vmatprep.subr.bf16.mxu0 0
        %977 = vmatpush1.bf16.msra.mxu0 0
        %978 = vmatprep.subr.bf16.mxu0 0
        %979 = vmatpush1.bf16.msra.mxu0 0
        %980 = vmatprep.subr.bf16.mxu0 0
        %981 = vmatpush1.bf16.msra.mxu0 0
        %982 = vmatprep.subr.bf16.mxu0 0
        %983 = vmatpush1.bf16.msra.mxu0 0
        %984 = vmatprep.subr.bf16.mxu0 0
        %985 = vmatpush1.bf16.msra.mxu0 0
        %986 = vmatprep.subr.bf16.mxu0 0
        %987 = vmatpush1.bf16.msra.mxu0 0
        %988 = vmatprep.mubr.bf16.mxu0 0
        %989 = vmatmul.mubr.bf16.gmra.mrb[0].mxu0 %v933
        %v990 = vpop.f32.mrb[0].mxu0
        %v991 = vadd.f32 %v879, %v990
        %v992 = vpop.f32.mrb[0].mxu0
        %v993 = vpop.f32.mrb[0].mxu0
        %v994 = vadd.f32 %v882, %v993
        %v995 = vpop.f32.mrb[0].mxu0
        %996 = vmatprep.mubr.bf16.mxu0 0
        %997 = vmatmul.mubr.bf16.gmra.mrb[0].mxu0 %v936
        %v998 = vpop.f32.mrb[0].mxu0
        %v999 = vadd.f32 %v887, %v998
        %v1000 = vpop.f32.mrb[0].mxu0
        %v1001 = vpop.f32.mrb[0].mxu0
        %v1002 = vadd.f32 %v890, %v1001
        %v1003 = vpop.f32.mrb[0].mxu0
        %1004 = vmatprep.mubr.bf16.mxu0 0
        %1005 = vmatmul.mubr.bf16.gmra.mrb[0].mxu0 %v939
        %v1006 = vpop.f32.mrb[0].mxu0
        %v1007 = vadd.f32 %v895, %v1006
        %v1008 = vpop.f32.mrb[0].mxu0
        %v1009 = vpop.f32.mrb[0].mxu0
        %v1010 = vadd.f32 %v898, %v1009
        %v1011 = vpop.f32.mrb[0].mxu0
        %1012 = vmatprep.mubr.bf16.mxu0 0
        %1013 = vmatmul.mubr.bf16.gmra.mrb[0].mxu0 %v942
        %v1014 = vpop.f32.mrb[0].mxu0
        %v1015 = vadd.f32 %v903, %v1014
        %v1016 = vpop.f32.mrb[0].mxu0
        %v1017 = vpop.f32.mrb[0].mxu0
        %v1018 = vadd.f32 %v906, %v1017
        %v1019 = vpop.f32.mrb[0].mxu0
        %1020 = vmatprep.mubr.bf16.mxu0 0
        %1021 = vmatmul.mubr.bf16.gmra.mrb[0].mxu0 %v945
        %v1022 = vpop.f32.mrb[0].mxu0
        %v1023 = vadd.f32 %v911, %v1022
        %v1024 = vpop.f32.mrb[0].mxu0
        %v1025 = vpop.f32.mrb[0].mxu0
        %v1026 = vadd.f32 %v914, %v1025
        %v1027 = vpop.f32.mrb[0].mxu0
        %1028 = vmatprep.mubr.bf16.mxu0 0
        %1029 = vmatmul.mubr.bf16.gmra.mrb[0].mxu0 %v948
        %v1030 = vpop.f32.mrb[0].mxu0
        %v1031 = vadd.f32 %v919, %v1030
        %v1032 = vpop.f32.mrb[0].mxu0
        %v1033 = vpop.f32.mrb[0].mxu0
        %v1034 = vadd.f32 %v922, %v1033
        %v1035 = vpop.f32.mrb[0].mxu0
        %1036 = vmatprep.mubr.bf16.mxu0 0
        %1037 = vmatmul.mubr.bf16.gmra.mrb[0].mxu0 %v951
        %v1038 = vpop.f32.mrb[0].mxu0
        %v1039 = vadd.f32 %v927, %v1038
        %v1040 = vpop.f32.mrb[0].mxu0
        %v1041 = vpop.f32.mrb[0].mxu0
        %v1042 = vpop.f32.mrb[0].mxu0
        %1043 = vdwg.mxu0
        %v1044 = vld [vmem:[%s714 + $0x7] sm:$0xff]
        %v1045 = vld [vmem:[%s714 + $0xf] sm:$0xff]
        %v1046 = vld [vmem:[%s714 + $0x17] sm:$0xff]
        %v1047 = vld [vmem:[%s714 + $0x1f] sm:$0xff]
        %v1048 = vld [vmem:[%s714 + $0x27] sm:$0xff]
        %v1049 = vld [vmem:[%s714 + $0x2f] sm:$0xff]
        %v1050 = vld [vmem:[%s714 + $0x37] sm:$0xff]
        %v1051 = vld [vmem:[%s714 + $0x3f] sm:$0xff]
        %v1052 = vld [vmem:[%s714 + $0x47] sm:$0xff]
        %v1053 = vld [vmem:[%s714 + $0x4f] sm:$0xff]
        %v1054 = vld [vmem:[%s714 + $0x57] sm:$0xff]
        %v1055 = vld [vmem:[%s714 + $0x5f] sm:$0xff]
        %v1056 = vld [vmem:[%s714 + $0x67] sm:$0xf]
        %v1057 = vpack.c.bf16 %v1045, %v1044
        %v1058 = vpack.c.bf16 %v1047, %v1046
        %v1059 = vpack.c.bf16 %v1049, %v1048
        %v1060 = vpack.c.bf16 %v1051, %v1050
        %v1061 = vpack.c.bf16 %v1053, %v1052
        %v1062 = vpack.c.bf16 %v1055, %v1054
        %v1063 = vpack.c.bf16 %v1056, %v1056
        %s1064 = scalar_lea.vmem %s1, 8
        %v1065 = vld [vmem:[%s1064] sm:$0x7]
        %v1067 = vsel %vm815, %v1057, 0
        %v1070 = vsel %vm815, %v1058, 0
        %v1073 = vsel %vm815, %v1059, 0
        %v1076 = vsel %vm815, %v1060, 0
        %v1079 = vsel %vm815, %v1061, 0
        %v1082 = vsel %vm815, %v1062, 0
        %v1085 = vsel %vm815, %v1063, 0
        %v1088 = vand.u32 %v1065, %v840
        %1090 = vmatprep.subr.bf16.mxu0 0
        %1091 = vmatpush1.bf16.msra.mxu0 %v1088
        %1092 = vmatprep.subr.bf16.mxu0 0
        %1093 = vmatpush1.bf16.msra.mxu0 0
        %1094 = vmatprep.subr.bf16.mxu0 0
        %1095 = vmatpush1.bf16.msra.mxu0 0
        %1096 = vmatprep.subr.bf16.mxu0 0
        %1097 = vmatpush1.bf16.msra.mxu0 0
        %1098 = vmatprep.subr.bf16.mxu0 0
        %1099 = vmatpush1.bf16.msra.mxu0 0
        %1100 = vmatprep.subr.bf16.mxu0 0
        %1101 = vmatpush1.bf16.msra.mxu0 0
        %1102 = vmatprep.subr.bf16.mxu0 0
        %1103 = vmatpush1.bf16.msra.mxu0 0
        %1104 = vmatprep.subr.bf16.mxu0 0
        %1105 = vmatpush1.bf16.msra.mxu0 0
        %1106 = vmatprep.subr.bf16.mxu0 0
        %1107 = vmatpush1.bf16.msra.mxu0 0
        %1108 = vmatprep.subr.bf16.mxu0 0
        %1109 = vmatpush1.bf16.msra.mxu0 0
        %1110 = vmatprep.subr.bf16.mxu0 0
        %1111 = vmatpush1.bf16.msra.mxu0 0
        %1112 = vmatprep.subr.bf16.mxu0 0
        %1113 = vmatpush1.bf16.msra.mxu0 0
        %1114 = vmatprep.subr.bf16.mxu0 0
        %1115 = vmatpush1.bf16.msra.mxu0 0
        %1116 = vmatprep.subr.bf16.mxu0 0
        %1117 = vmatpush1.bf16.msra.mxu0 0
        %1118 = vmatprep.subr.bf16.mxu0 0
        %1119 = vmatpush1.bf16.msra.mxu0 0
        %1120 = vmatprep.subr.bf16.mxu0 0
        %1121 = vmatpush1.bf16.msra.mxu0 0
        %1122 = vmatprep.mubr.bf16.mxu0 0
        %1123 = vmatmul.mubr.bf16.gmra.mrb[0].mxu0 %v1067
        %v1124 = vpop.f32.mrb[0].mxu0
        %v1125 = vadd.f32 0.0, %v1124
        %v1126 = vpop.f32.mrb[0].mxu0
        %v1127 = vpop.f32.mrb[0].mxu0
        %v1128 = vadd.f32 0.0, %v1127
        %v1129 = vpop.f32.mrb[0].mxu0
        %1130 = vmatprep.mubr.bf16.mxu0 0
        %1131 = vmatmul.mubr.bf16.gmra.mrb[0].mxu0 %v1070
        %v1132 = vpop.f32.mrb[0].mxu0
        %v1133 = vadd.f32 0.0, %v1132
        %v1134 = vpop.f32.mrb[0].mxu0
        %v1135 = vpop.f32.mrb[0].mxu0
        %v1136 = vadd.f32 0.0, %v1135
        %v1137 = vpop.f32.mrb[0].mxu0
        %1138 = vmatprep.mubr.bf16.mxu0 0
        %1139 = vmatmul.mubr.bf16.gmra.mrb[0].mxu0 %v1073
        %v1140 = vpop.f32.mrb[0].mxu0
        %v1141 = vadd.f32 0.0, %v1140
        %v1142 = vpop.f32.mrb[0].mxu0
        %v1143 = vpop.f32.mrb[0].mxu0
        %v1144 = vadd.f32 0.0, %v1143
        %v1145 = vpop.f32.mrb[0].mxu0
        %1146 = vmatprep.mubr.bf16.mxu0 0
        %1147 = vmatmul.mubr.bf16.gmra.mrb[0].mxu0 %v1076
        %v1148 = vpop.f32.mrb[0].mxu0
        %v1149 = vadd.f32 0.0, %v1148
        %v1150 = vpop.f32.mrb[0].mxu0
        %v1151 = vpop.f32.mrb[0].mxu0
        %v1152 = vadd.f32 0.0, %v1151
        %v1153 = vpop.f32.mrb[0].mxu0
        %1154 = vmatprep.mubr.bf16.mxu0 0
        %1155 = vmatmul.mubr.bf16.gmra.mrb[0].mxu0 %v1079
        %v1156 = vpop.f32.mrb[0].mxu0
        %v1157 = vadd.f32 0.0, %v1156
        %v1158 = vpop.f32.mrb[0].mxu0
        %v1159 = vpop.f32.mrb[0].mxu0
        %v1160 = vadd.f32 0.0, %v1159
        %v1161 = vpop.f32.mrb[0].mxu0
        %1162 = vmatprep.mubr.bf16.mxu0 0
        %1163 = vmatmul.mubr.bf16.gmra.mrb[0].mxu0 %v1082
        %v1164 = vpop.f32.mrb[0].mxu0
        %v1165 = vadd.f32 0.0, %v1164
        %v1166 = vpop.f32.mrb[0].mxu0
        %v1167 = vpop.f32.mrb[0].mxu0
        %v1168 = vadd.f32 0.0, %v1167
        %v1169 = vpop.f32.mrb[0].mxu0
        %1170 = vmatprep.mubr.bf16.mxu0 0
        %1171 = vmatmul.mubr.bf16.gmra.mrb[0].mxu0 %v1085
        %v1172 = vpop.f32.mrb[0].mxu0
        %v1173 = vadd.f32 0.0, %v1172
        %v1174 = vpop.f32.mrb[0].mxu0
        %v1175 = vpop.f32.mrb[0].mxu0
        %v1176 = vpop.f32.mrb[0].mxu0
        %1177 = vdwg.mxu0
        %v1178 = vadd.f32 %v991, %v1125
        %v1179 = vadd.f32 %v994, %v1128
        %v1180 = vadd.f32 %v999, %v1133
        %v1181 = vadd.f32 %v1002, %v1136
        %v1182 = vadd.f32 %v1007, %v1141
        %v1183 = vadd.f32 %v1010, %v1144
        %v1184 = vadd.f32 %v1015, %v1149
        %v1185 = vadd.f32 %v1018, %v1152
        %v1186 = vadd.f32 %v1023, %v1157
        %v1187 = vadd.f32 %v1026, %v1160
        %v1188 = vadd.f32 %v1031, %v1165
        %v1189 = vadd.f32 %v1034, %v1168
        %v1190 = vadd.f32 %v1039, %v1173
        %v1191 = vld [vmem:[%s714 + $0xf] sm:$0xff]
        %v1192 = vld [vmem:[%s714 + $0x17] sm:$0xff]
        %v1193 = vld [vmem:[%s714 + $0x1f] sm:$0xff]
        %v1194 = vld [vmem:[%s714 + $0x27] sm:$0xff]
        %v1195 = vld [vmem:[%s714 + $0x2f] sm:$0xff]
        %v1196 = vld [vmem:[%s714 + $0x37] sm:$0xff]
        %v1197 = vld [vmem:[%s714 + $0x3f] sm:$0xff]
        %v1198 = vld [vmem:[%s714 + $0x47] sm:$0xff]
        %v1199 = vld [vmem:[%s714 + $0x4f] sm:$0xff]
        %v1200 = vld [vmem:[%s714 + $0x57] sm:$0xff]
        %v1201 = vld [vmem:[%s714 + $0x5f] sm:$0xff]
        %v1202 = vld [vmem:[%s714 + $0x67] sm:$0xff]
        %v1203 = vld [vmem:[%s714 + $0x6f] sm:$0xf]
        %v1204 = vpack.c.bf16 %v1192, %v1191
        %v1205 = vpack.c.bf16 %v1194, %v1193
        %v1206 = vpack.c.bf16 %v1196, %v1195
        %v1207 = vpack.c.bf16 %v1198, %v1197
        %v1208 = vpack.c.bf16 %v1200, %v1199
        %v1209 = vpack.c.bf16 %v1202, %v1201
        %v1210 = vpack.c.bf16 %v1203, %v1203
        %s1211 = scalar_lea.vmem %s1, 12
        %v1212 = vld [vmem:[%s1211] sm:$0x7]
        %v1214 = vsel %vm815, %v1204, 0
        %v1217 = vsel %vm815, %v1205, 0
        %v1220 = vsel %vm815, %v1206, 0
        %v1223 = vsel %vm815, %v1207, 0
        %v1226 = vsel %vm815, %v1208, 0
        %v1229 = vsel %vm815, %v1209, 0
        %v1232 = vsel %vm815, %v1210, 0
        %v1235 = vand.u32 %v1212, %v840
        %1237 = vmatprep.subr.bf16.mxu0 0
        %1238 = vmatpush1.bf16.msra.mxu0 %v1235
        %1239 = vmatprep.subr.bf16.mxu0 0
        %1240 = vmatpush1.bf16.msra.mxu0 0
        %1241 = vmatprep.subr.bf16.mxu0 0
        %1242 = vmatpush1.bf16.msra.mxu0 0
        %1243 = vmatprep.subr.bf16.mxu0 0
        %1244 = vmatpush1.bf16.msra.mxu0 0
        %1245 = vmatprep.subr.bf16.mxu0 0
        %1246 = vmatpush1.bf16.msra.mxu0 0
        %1247 = vmatprep.subr.bf16.mxu0 0
        %1248 = vmatpush1.bf16.msra.mxu0 0
        %1249 = vmatprep.subr.bf16.mxu0 0
        %1250 = vmatpush1.bf16.msra.mxu0 0
        %1251 = vmatprep.subr.bf16.mxu0 0
        %1252 = vmatpush1.bf16.msra.mxu0 0
        %1253 = vmatprep.subr.bf16.mxu0 0
        %1254 = vmatpush1.bf16.msra.mxu0 0
        %1255 = vmatprep.subr.bf16.mxu0 0
        %1256 = vmatpush1.bf16.msra.mxu0 0
        %1257 = vmatprep.subr.bf16.mxu0 0
        %1258 = vmatpush1.bf16.msra.mxu0 0
        %1259 = vmatprep.subr.bf16.mxu0 0
        %1260 = vmatpush1.bf16.msra.mxu0 0
        %1261 = vmatprep.subr.bf16.mxu0 0
        %1262 = vmatpush1.bf16.msra.mxu0 0
        %1263 = vmatprep.subr.bf16.mxu0 0
        %1264 = vmatpush1.bf16.msra.mxu0 0
        %1265 = vmatprep.subr.bf16.mxu0 0
        %1266 = vmatpush1.bf16.msra.mxu0 0
        %1267 = vmatprep.subr.bf16.mxu0 0
        %1268 = vmatpush1.bf16.msra.mxu0 0
        %1269 = vmatprep.mubr.bf16.mxu0 0
        %1270 = vmatmul.mubr.bf16.gmra.mrb[0].mxu0 %v1214
        %v1271 = vpop.f32.mrb[0].mxu0
        %v1272 = vadd.f32 0.0, %v1271
        %v1273 = vpop.f32.mrb[0].mxu0
        %v1274 = vpop.f32.mrb[0].mxu0
        %v1275 = vadd.f32 0.0, %v1274
        %v1276 = vpop.f32.mrb[0].mxu0
        %1277 = vmatprep.mubr.bf16.mxu0 0
        %1278 = vmatmul.mubr.bf16.gmra.mrb[0].mxu0 %v1217
        %v1279 = vpop.f32.mrb[0].mxu0
        %v1280 = vadd.f32 0.0, %v1279
        %v1281 = vpop.f32.mrb[0].mxu0
        %v1282 = vpop.f32.mrb[0].mxu0
        %v1283 = vadd.f32 0.0, %v1282
        %v1284 = vpop.f32.mrb[0].mxu0
        %1285 = vmatprep.mubr.bf16.mxu0 0
        %1286 = vmatmul.mubr.bf16.gmra.mrb[0].mxu0 %v1220
        %v1287 = vpop.f32.mrb[0].mxu0
        %v1288 = vadd.f32 0.0, %v1287
        %v1289 = vpop.f32.mrb[0].mxu0
        %v1290 = vpop.f32.mrb[0].mxu0
        %v1291 = vadd.f32 0.0, %v1290
        %v1292 = vpop.f32.mrb[0].mxu0
        %1293 = vmatprep.mubr.bf16.mxu0 0
        %1294 = vmatmul.mubr.bf16.gmra.mrb[0].mxu0 %v1223
        %v1295 = vpop.f32.mrb[0].mxu0
        %v1296 = vadd.f32 0.0, %v1295
        %v1297 = vpop.f32.mrb[0].mxu0
        %v1298 = vpop.f32.mrb[0].mxu0
        %v1299 = vadd.f32 0.0, %v1298
        %v1300 = vpop.f32.mrb[0].mxu0
        %1301 = vmatprep.mubr.bf16.mxu0 0
        %1302 = vmatmul.mubr.bf16.gmra.mrb[0].mxu0 %v1226
        %v1303 = vpop.f32.mrb[0].mxu0
        %v1304 = vadd.f32 0.0, %v1303
        %v1305 = vpop.f32.mrb[0].mxu0
        %v1306 = vpop.f32.mrb[0].mxu0
        %v1307 = vadd.f32 0.0, %v1306
        %v1308 = vpop.f32.mrb[0].mxu0
        %1309 = vmatprep.mubr.bf16.mxu0 0
        %1310 = vmatmul.mubr.bf16.gmra.mrb[0].mxu0 %v1229
        %v1311 = vpop.f32.mrb[0].mxu0
        %v1312 = vadd.f32 0.0, %v1311
        %v1313 = vpop.f32.mrb[0].mxu0
        %v1314 = vpop.f32.mrb[0].mxu0
        %v1315 = vadd.f32 0.0, %v1314
        %v1316 = vpop.f32.mrb[0].mxu0
        %1317 = vmatprep.mubr.bf16.mxu0 0
        %1318 = vmatmul.mubr.bf16.gmra.mrb[0].mxu0 %v1232
        %v1319 = vpop.f32.mrb[0].mxu0
        %v1320 = vadd.f32 0.0, %v1319
        %v1321 = vpop.f32.mrb[0].mxu0
        %v1322 = vpop.f32.mrb[0].mxu0
        %v1323 = vpop.f32.mrb[0].mxu0
        %1324 = vdwg.mxu0
        %v1325 = vadd.f32 %v1178, %v1272
        %v1326 = vadd.f32 %v1179, %v1275
        %v1327 = vadd.f32 %v1180, %v1280
        %v1328 = vadd.f32 %v1181, %v1283
        %v1329 = vadd.f32 %v1182, %v1288
        %v1330 = vadd.f32 %v1183, %v1291
        %v1331 = vadd.f32 %v1184, %v1296
        %v1332 = vadd.f32 %v1185, %v1299
        %v1333 = vadd.f32 %v1186, %v1304
        %v1334 = vadd.f32 %v1187, %v1307
        %v1335 = vadd.f32 %v1188, %v1312
        %v1336 = vadd.f32 %v1189, %v1315
        %v1337 = vadd.f32 %v1190, %v1320
        %v1338 = vld [vmem:[%s714 + $0x10] sm:$0xff]
        %v1339 = vld [vmem:[%s714 + $0x18] sm:$0xff]
        %v1340 = vld [vmem:[%s714 + $0x20] sm:$0xff]
        %v1341 = vld [vmem:[%s714 + $0x28] sm:$0xff]
        %v1342 = vld [vmem:[%s714 + $0x30] sm:$0xff]
        %v1343 = vld [vmem:[%s714 + $0x38] sm:$0xff]
        %v1344 = vld [vmem:[%s714 + $0x40] sm:$0xff]
        %v1345 = vld [vmem:[%s714 + $0x48] sm:$0xff]
        %v1346 = vld [vmem:[%s714 + $0x50] sm:$0xff]
        %v1347 = vld [vmem:[%s714 + $0x58] sm:$0xff]
        %v1348 = vld [vmem:[%s714 + $0x60] sm:$0xff]
        %v1349 = vld [vmem:[%s714 + $0x68] sm:$0xff]
        %v1350 = vld [vmem:[%s714 + $0x70] sm:$0xf]
        %v1351 = vpack.c.bf16 %v1339, %v1338
        %v1352 = vpack.c.bf16 %v1341, %v1340
        %v1353 = vpack.c.bf16 %v1343, %v1342
        %v1354 = vpack.c.bf16 %v1345, %v1344
        %v1355 = vpack.c.bf16 %v1347, %v1346
        %v1356 = vpack.c.bf16 %v1349, %v1348
        %v1357 = vpack.c.bf16 %v1350, %v1350
        %s1358 = scalar_lea.vmem %s1, 16
        %v1359 = vld [vmem:[%s1358] sm:$0x7]
        %v1361 = vsel %vm815, %v1351, 0
        %v1364 = vsel %vm815, %v1352, 0
        %v1367 = vsel %vm815, %v1353, 0
        %v1370 = vsel %vm815, %v1354, 0
        %v1373 = vsel %vm815, %v1355, 0
        %v1376 = vsel %vm815, %v1356, 0
        %v1379 = vsel %vm815, %v1357, 0
        %v1382 = vand.u32 %v1359, %v840
        %1384 = vmatprep.subr.bf16.mxu0 0
        %1385 = vmatpush1.bf16.msra.mxu0 %v1382
        %1386 = vmatprep.subr.bf16.mxu0 0
        %1387 = vmatpush1.bf16.msra.mxu0 0
        %1388 = vmatprep.subr.bf16.mxu0 0
        %1389 = vmatpush1.bf16.msra.mxu0 0
        %1390 = vmatprep.subr.bf16.mxu0 0
        %1391 = vmatpush1.bf16.msra.mxu0 0
        %1392 = vmatprep.subr.bf16.mxu0 0
        %1393 = vmatpush1.bf16.msra.mxu0 0
        %1394 = vmatprep.subr.bf16.mxu0 0
        %1395 = vmatpush1.bf16.msra.mxu0 0
        %1396 = vmatprep.subr.bf16.mxu0 0
        %1397 = vmatpush1.bf16.msra.mxu0 0
        %1398 = vmatprep.subr.bf16.mxu0 0
        %1399 = vmatpush1.bf16.msra.mxu0 0
        %1400 = vmatprep.subr.bf16.mxu0 0
        %1401 = vmatpush1.bf16.msra.mxu0 0
        %1402 = vmatprep.subr.bf16.mxu0 0
        %1403 = vmatpush1.bf16.msra.mxu0 0
        %1404 = vmatprep.subr.bf16.mxu0 0
        %1405 = vmatpush1.bf16.msra.mxu0 0
        %1406 = vmatprep.subr.bf16.mxu0 0
        %1407 = vmatpush1.bf16.msra.mxu0 0
        %1408 = vmatprep.subr.bf16.mxu0 0
        %1409 = vmatpush1.bf16.msra.mxu0 0
        %1410 = vmatprep.subr.bf16.mxu0 0
        %1411 = vmatpush1.bf16.msra.mxu0 0
        %1412 = vmatprep.subr.bf16.mxu0 0
        %1413 = vmatpush1.bf16.msra.mxu0 0
        %1414 = vmatprep.subr.bf16.mxu0 0
        %1415 = vmatpush1.bf16.msra.mxu0 0
        %1416 = vmatprep.mubr.bf16.mxu0 0
        %1417 = vmatmul.mubr.bf16.gmra.mrb[0].mxu0 %v1361
        %v1418 = vpop.f32.mrb[0].mxu0
        %v1419 = vadd.f32 0.0, %v1418
        %v1420 = vpop.f32.mrb[0].mxu0
        %v1421 = vpop.f32.mrb[0].mxu0
        %v1422 = vadd.f32 0.0, %v1421
        %v1423 = vpop.f32.mrb[0].mxu0
        %1424 = vmatprep.mubr.bf16.mxu0 0
        %1425 = vmatmul.mubr.bf16.gmra.mrb[0].mxu0 %v1364
        %v1426 = vpop.f32.mrb[0].mxu0
        %v1427 = vadd.f32 0.0, %v1426
        %v1428 = vpop.f32.mrb[0].mxu0
        %v1429 = vpop.f32.mrb[0].mxu0
        %v1430 = vadd.f32 0.0, %v1429
        %v1431 = vpop.f32.mrb[0].mxu0
        %1432 = vmatprep.mubr.bf16.mxu0 0
        %1433 = vmatmul.mubr.bf16.gmra.mrb[0].mxu0 %v1367
        %v1434 = vpop.f32.mrb[0].mxu0
        %v1435 = vadd.f32 0.0, %v1434
        %v1436 = vpop.f32.mrb[0].mxu0
        %v1437 = vpop.f32.mrb[0].mxu0
        %v1438 = vadd.f32 0.0, %v1437
        %v1439 = vpop.f32.mrb[0].mxu0
        %1440 = vmatprep.mubr.bf16.mxu0 0
        %1441 = vmatmul.mubr.bf16.gmra.mrb[0].mxu0 %v1370
        %v1442 = vpop.f32.mrb[0].mxu0
        %v1443 = vadd.f32 0.0, %v1442
        %v1444 = vpop.f32.mrb[0].mxu0
        %v1445 = vpop.f32.mrb[0].mxu0
        %v1446 = vadd.f32 0.0, %v1445
        %v1447 = vpop.f32.mrb[0].mxu0
        %1448 = vmatprep.mubr.bf16.mxu0 0
        %1449 = vmatmul.mubr.bf16.gmra.mrb[0].mxu0 %v1373
        %v1450 = vpop.f32.mrb[0].mxu0
        %v1451 = vadd.f32 0.0, %v1450
        %v1452 = vpop.f32.mrb[0].mxu0
        %v1453 = vpop.f32.mrb[0].mxu0
        %v1454 = vadd.f32 0.0, %v1453
        %v1455 = vpop.f32.mrb[0].mxu0
        %1456 = vmatprep.mubr.bf16.mxu0 0
        %1457 = vmatmul.mubr.bf16.gmra.mrb[0].mxu0 %v1376
        %v1458 = vpop.f32.mrb[0].mxu0
        %v1459 = vadd.f32 0.0, %v1458
        %v1460 = vpop.f32.mrb[0].mxu0
        %v1461 = vpop.f32.mrb[0].mxu0
        %v1462 = vadd.f32 0.0, %v1461
        %v1463 = vpop.f32.mrb[0].mxu0
        %1464 = vmatprep.mubr.bf16.mxu0 0
        %1465 = vmatmul.mubr.bf16.gmra.mrb[0].mxu0 %v1379
        %v1466 = vpop.f32.mrb[0].mxu0
        %v1467 = vadd.f32 0.0, %v1466
        %v1468 = vpop.f32.mrb[0].mxu0
        %v1469 = vpop.f32.mrb[0].mxu0
        %v1470 = vpop.f32.mrb[0].mxu0
        %1471 = vdwg.mxu0
        %v1472 = vadd.f32 %v1325, %v1419
        %v1473 = vadd.f32 %v1326, %v1422
        %v1474 = vadd.f32 %v1327, %v1427
        %v1475 = vadd.f32 %v1328, %v1430
        %v1476 = vadd.f32 %v1329, %v1435
        %v1477 = vadd.f32 %v1330, %v1438
        %v1478 = vadd.f32 %v1331, %v1443
        %v1479 = vadd.f32 %v1332, %v1446
        %v1480 = vadd.f32 %v1333, %v1451
        %v1481 = vadd.f32 %v1334, %v1454
        %v1482 = vadd.f32 %v1335, %v1459
        %v1483 = vadd.f32 %v1336, %v1462
        %v1484 = vadd.f32 %v1337, %v1467
        %v1485 = vld [vmem:[%s714 + $0x11] sm:$0xff]
        %v1486 = vld [vmem:[%s714 + $0x19] sm:$0xff]
        %v1487 = vld [vmem:[%s714 + $0x21] sm:$0xff]
        %v1488 = vld [vmem:[%s714 + $0x29] sm:$0xff]
        %v1489 = vld [vmem:[%s714 + $0x31] sm:$0xff]
        %v1490 = vld [vmem:[%s714 + $0x39] sm:$0xff]
        %v1491 = vld [vmem:[%s714 + $0x41] sm:$0xff]
        %v1492 = vld [vmem:[%s714 + $0x49] sm:$0xff]
        %v1493 = vld [vmem:[%s714 + $0x51] sm:$0xff]
        %v1494 = vld [vmem:[%s714 + $0x59] sm:$0xff]
        %v1495 = vld [vmem:[%s714 + $0x61] sm:$0xff]
        %v1496 = vld [vmem:[%s714 + $0x69] sm:$0xff]
        %v1497 = vld [vmem:[%s714 + $0x71] sm:$0xf]
        %v1498 = vpack.c.bf16 %v1486, %v1485
        %v1499 = vpack.c.bf16 %v1488, %v1487
        %v1500 = vpack.c.bf16 %v1490, %v1489
        %v1501 = vpack.c.bf16 %v1492, %v1491
        %v1502 = vpack.c.bf16 %v1494, %v1493
        %v1503 = vpack.c.bf16 %v1496, %v1495
        %v1504 = vpack.c.bf16 %v1497, %v1497
        %s1505 = scalar_lea.vmem %s1, 20
        %v1506 = vld [vmem:[%s1505] sm:$0x7]
        %v1508 = vsel %vm815, %v1498, 0
        %v1511 = vsel %vm815, %v1499, 0
        %v1514 = vsel %vm815, %v1500, 0
        %v1517 = vsel %vm815, %v1501, 0
        %v1520 = vsel %vm815, %v1502, 0
        %v1523 = vsel %vm815, %v1503, 0
        %v1526 = vsel %vm815, %v1504, 0
        %v1529 = vand.u32 %v1506, %v840
        %1531 = vmatprep.subr.bf16.mxu0 0
        %1532 = vmatpush1.bf16.msra.mxu0 %v1529
        %1533 = vmatprep.subr.bf16.mxu0 0
        %1534 = vmatpush1.bf16.msra.mxu0 0
        %1535 = vmatprep.subr.bf16.mxu0 0
        %1536 = vmatpush1.bf16.msra.mxu0 0
        %1537 = vmatprep.subr.bf16.mxu0 0
        %1538 = vmatpush1.bf16.msra.mxu0 0
        %1539 = vmatprep.subr.bf16.mxu0 0
        %1540 = vmatpush1.bf16.msra.mxu0 0
        %1541 = vmatprep.subr.bf16.mxu0 0
        %1542 = vmatpush1.bf16.msra.mxu0 0
        %1543 = vmatprep.subr.bf16.mxu0 0
        %1544 = vmatpush1.bf16.msra.mxu0 0
        %1545 = vmatprep.subr.bf16.mxu0 0
        %1546 = vmatpush1.bf16.msra.mxu0 0
        %1547 = vmatprep.subr.bf16.mxu0 0
        %1548 = vmatpush1.bf16.msra.mxu0 0
        %1549 = vmatprep.subr.bf16.mxu0 0
        %1550 = vmatpush1.bf16.msra.mxu0 0
        %1551 = vmatprep.subr.bf16.mxu0 0
        %1552 = vmatpush1.bf16.msra.mxu0 0
        %1553 = vmatprep.subr.bf16.mxu0 0
        %1554 = vmatpush1.bf16.msra.mxu0 0
        %1555 = vmatprep.subr.bf16.mxu0 0
        %1556 = vmatpush1.bf16.msra.mxu0 0
        %1557 = vmatprep.subr.bf16.mxu0 0
        %1558 = vmatpush1.bf16.msra.mxu0 0
        %1559 = vmatprep.subr.bf16.mxu0 0
        %1560 = vmatpush1.bf16.msra.mxu0 0
        %1561 = vmatprep.subr.bf16.mxu0 0
        %1562 = vmatpush1.bf16.msra.mxu0 0
        %1563 = vmatprep.mubr.bf16.mxu0 0
        %1564 = vmatmul.mubr.bf16.gmra.mrb[0].mxu0 %v1508
        %v1565 = vpop.f32.mrb[0].mxu0
        %v1566 = vadd.f32 0.0, %v1565
        %v1567 = vpop.f32.mrb[0].mxu0
        %v1568 = vpop.f32.mrb[0].mxu0
        %v1569 = vadd.f32 0.0, %v1568
        %v1570 = vpop.f32.mrb[0].mxu0
        %1571 = vmatprep.mubr.bf16.mxu0 0
        %1572 = vmatmul.mubr.bf16.gmra.mrb[0].mxu0 %v1511
        %v1573 = vpop.f32.mrb[0].mxu0
        %v1574 = vadd.f32 0.0, %v1573
        %v1575 = vpop.f32.mrb[0].mxu0
        %v1576 = vpop.f32.mrb[0].mxu0
        %v1577 = vadd.f32 0.0, %v1576
        %v1578 = vpop.f32.mrb[0].mxu0
        %1579 = vmatprep.mubr.bf16.mxu0 0
        %1580 = vmatmul.mubr.bf16.gmra.mrb[0].mxu0 %v1514
        %v1581 = vpop.f32.mrb[0].mxu0
        %v1582 = vadd.f32 0.0, %v1581
        %v1583 = vpop.f32.mrb[0].mxu0
        %v1584 = vpop.f32.mrb[0].mxu0
        %v1585 = vadd.f32 0.0, %v1584
        %v1586 = vpop.f32.mrb[0].mxu0
        %1587 = vmatprep.mubr.bf16.mxu0 0
        %1588 = vmatmul.mubr.bf16.gmra.mrb[0].mxu0 %v1517
        %v1589 = vpop.f32.mrb[0].mxu0
        %v1590 = vadd.f32 0.0, %v1589
        %v1591 = vpop.f32.mrb[0].mxu0
        %v1592 = vpop.f32.mrb[0].mxu0
        %v1593 = vadd.f32 0.0, %v1592
        %v1594 = vpop.f32.mrb[0].mxu0
        %1595 = vmatprep.mubr.bf16.mxu0 0
        %1596 = vmatmul.mubr.bf16.gmra.mrb[0].mxu0 %v1520
        %v1597 = vpop.f32.mrb[0].mxu0
        %v1598 = vadd.f32 0.0, %v1597
        %v1599 = vpop.f32.mrb[0].mxu0
        %v1600 = vpop.f32.mrb[0].mxu0
        %v1601 = vadd.f32 0.0, %v1600
        %v1602 = vpop.f32.mrb[0].mxu0
        %1603 = vmatprep.mubr.bf16.mxu0 0
        %1604 = vmatmul.mubr.bf16.gmra.mrb[0].mxu0 %v1523
        %v1605 = vpop.f32.mrb[0].mxu0
        %v1606 = vadd.f32 0.0, %v1605
        %v1607 = vpop.f32.mrb[0].mxu0
        %v1608 = vpop.f32.mrb[0].mxu0
        %v1609 = vadd.f32 0.0, %v1608
        %v1610 = vpop.f32.mrb[0].mxu0
        %1611 = vmatprep.mubr.bf16.mxu0 0
        %1612 = vmatmul.mubr.bf16.gmra.mrb[0].mxu0 %v1526
        %v1613 = vpop.f32.mrb[0].mxu0
        %v1614 = vadd.f32 0.0, %v1613
        %v1615 = vpop.f32.mrb[0].mxu0
        %v1616 = vpop.f32.mrb[0].mxu0
        %v1617 = vpop.f32.mrb[0].mxu0
        %1618 = vdwg.mxu0
        %v1619 = vadd.f32 %v1472, %v1566
        %v1620 = vadd.f32 %v1473, %v1569
        %v1621 = vadd.f32 %v1474, %v1574
        %v1622 = vadd.f32 %v1475, %v1577
        %v1623 = vadd.f32 %v1476, %v1582
        %v1624 = vadd.f32 %v1477, %v1585
        %v1625 = vadd.f32 %v1478, %v1590
        %v1626 = vadd.f32 %v1479, %v1593
        %v1627 = vadd.f32 %v1480, %v1598
        %v1628 = vadd.f32 %v1481, %v1601
        %v1629 = vadd.f32 %v1482, %v1606
        %v1630 = vadd.f32 %v1483, %v1609
        %v1631 = vadd.f32 %v1484, %v1614
        %v1632 = vld [vmem:[%s714 + $0x19] sm:$0xff]
        %v1633 = vld [vmem:[%s714 + $0x21] sm:$0xff]
        %v1634 = vld [vmem:[%s714 + $0x29] sm:$0xff]
        %v1635 = vld [vmem:[%s714 + $0x31] sm:$0xff]
        %v1636 = vld [vmem:[%s714 + $0x39] sm:$0xff]
        %v1637 = vld [vmem:[%s714 + $0x41] sm:$0xff]
        %v1638 = vld [vmem:[%s714 + $0x49] sm:$0xff]
        %v1639 = vld [vmem:[%s714 + $0x51] sm:$0xff]
        %v1640 = vld [vmem:[%s714 + $0x59] sm:$0xff]
        %v1641 = vld [vmem:[%s714 + $0x61] sm:$0xff]
        %v1642 = vld [vmem:[%s714 + $0x69] sm:$0xff]
        %v1643 = vld [vmem:[%s714 + $0x71] sm:$0xff]
        %v1644 = vld [vmem:[%s714 + $0x79] sm:$0xf]
        %v1645 = vpack.c.bf16 %v1633, %v1632
        %v1646 = vpack.c.bf16 %v1635, %v1634
        %v1647 = vpack.c.bf16 %v1637, %v1636
        %v1648 = vpack.c.bf16 %v1639, %v1638
        %v1649 = vpack.c.bf16 %v1641, %v1640
        %v1650 = vpack.c.bf16 %v1643, %v1642
        %v1651 = vpack.c.bf16 %v1644, %v1644
        %s1652 = scalar_lea.vmem %s1, 24
        %v1653 = vld [vmem:[%s1652] sm:$0x7]
        %v1655 = vsel %vm815, %v1645, 0
        %v1658 = vsel %vm815, %v1646, 0
        %v1661 = vsel %vm815, %v1647, 0
        %v1664 = vsel %vm815, %v1648, 0
        %v1667 = vsel %vm815, %v1649, 0
        %v1670 = vsel %vm815, %v1650, 0
        %v1673 = vsel %vm815, %v1651, 0
        %v1676 = vand.u32 %v1653, %v840
        %1678 = vmatprep.subr.bf16.mxu0 0
        %1679 = vmatpush1.bf16.msra.mxu0 %v1676
        %1680 = vmatprep.subr.bf16.mxu0 0
        %1681 = vmatpush1.bf16.msra.mxu0 0
        %1682 = vmatprep.subr.bf16.mxu0 0
        %1683 = vmatpush1.bf16.msra.mxu0 0
        %1684 = vmatprep.subr.bf16.mxu0 0
        %1685 = vmatpush1.bf16.msra.mxu0 0
        %1686 = vmatprep.subr.bf16.mxu0 0
        %1687 = vmatpush1.bf16.msra.mxu0 0
        %1688 = vmatprep.subr.bf16.mxu0 0
        %1689 = vmatpush1.bf16.msra.mxu0 0
        %1690 = vmatprep.subr.bf16.mxu0 0
        %1691 = vmatpush1.bf16.msra.mxu0 0
        %1692 = vmatprep.subr.bf16.mxu0 0
        %1693 = vmatpush1.bf16.msra.mxu0 0
        %1694 = vmatprep.subr.bf16.mxu0 0
        %1695 = vmatpush1.bf16.msra.mxu0 0
        %1696 = vmatprep.subr.bf16.mxu0 0
        %1697 = vmatpush1.bf16.msra.mxu0 0
        %1698 = vmatprep.subr.bf16.mxu0 0
        %1699 = vmatpush1.bf16.msra.mxu0 0
        %1700 = vmatprep.subr.bf16.mxu0 0
        %1701 = vmatpush1.bf16.msra.mxu0 0
        %1702 = vmatprep.subr.bf16.mxu0 0
        %1703 = vmatpush1.bf16.msra.mxu0 0
        %1704 = vmatprep.subr.bf16.mxu0 0
        %1705 = vmatpush1.bf16.msra.mxu0 0
        %1706 = vmatprep.subr.bf16.mxu0 0
        %1707 = vmatpush1.bf16.msra.mxu0 0
        %1708 = vmatprep.subr.bf16.mxu0 0
        %1709 = vmatpush1.bf16.msra.mxu0 0
        %1710 = vmatprep.mubr.bf16.mxu0 0
        %1711 = vmatmul.mubr.bf16.gmra.mrb[0].mxu0 %v1655
        %v1712 = vpop.f32.mrb[0].mxu0
        %v1713 = vadd.f32 0.0, %v1712
        %v1714 = vpop.f32.mrb[0].mxu0
        %v1715 = vpop.f32.mrb[0].mxu0
        %v1716 = vadd.f32 0.0, %v1715
        %v1717 = vpop.f32.mrb[0].mxu0
        %1718 = vmatprep.mubr.bf16.mxu0 0
        %1719 = vmatmul.mubr.bf16.gmra.mrb[0].mxu0 %v1658
        %v1720 = vpop.f32.mrb[0].mxu0
        %v1721 = vadd.f32 0.0, %v1720
        %v1722 = vpop.f32.mrb[0].mxu0
        %v1723 = vpop.f32.mrb[0].mxu0
        %v1724 = vadd.f32 0.0, %v1723
        %v1725 = vpop.f32.mrb[0].mxu0
        %1726 = vmatprep.mubr.bf16.mxu0 0
        %1727 = vmatmul.mubr.bf16.gmra.mrb[0].mxu0 %v1661
        %v1728 = vpop.f32.mrb[0].mxu0
        %v1729 = vadd.f32 0.0, %v1728
        %v1730 = vpop.f32.mrb[0].mxu0
        %v1731 = vpop.f32.mrb[0].mxu0
        %v1732 = vadd.f32 0.0, %v1731
        %v1733 = vpop.f32.mrb[0].mxu0
        %1734 = vmatprep.mubr.bf16.mxu0 0
        %1735 = vmatmul.mubr.bf16.gmra.mrb[0].mxu0 %v1664
        %v1736 = vpop.f32.mrb[0].mxu0
        %v1737 = vadd.f32 0.0, %v1736
        %v1738 = vpop.f32.mrb[0].mxu0
        %v1739 = vpop.f32.mrb[0].mxu0
        %v1740 = vadd.f32 0.0, %v1739
        %v1741 = vpop.f32.mrb[0].mxu0
        %1742 = vmatprep.mubr.bf16.mxu0 0
        %1743 = vmatmul.mubr.bf16.gmra.mrb[0].mxu0 %v1667
        %v1744 = vpop.f32.mrb[0].mxu0
        %v1745 = vadd.f32 0.0, %v1744
        %v1746 = vpop.f32.mrb[0].mxu0
        %v1747 = vpop.f32.mrb[0].mxu0
        %v1748 = vadd.f32 0.0, %v1747
        %v1749 = vpop.f32.mrb[0].mxu0
        %1750 = vmatprep.mubr.bf16.mxu0 0
        %1751 = vmatmul.mubr.bf16.gmra.mrb[0].mxu0 %v1670
        %v1752 = vpop.f32.mrb[0].mxu0
        %v1753 = vadd.f32 0.0, %v1752
        %v1754 = vpop.f32.mrb[0].mxu0
        %v1755 = vpop.f32.mrb[0].mxu0
        %v1756 = vadd.f32 0.0, %v1755
        %v1757 = vpop.f32.mrb[0].mxu0
        %1758 = vmatprep.mubr.bf16.mxu0 0
        %1759 = vmatmul.mubr.bf16.gmra.mrb[0].mxu0 %v1673
        %v1760 = vpop.f32.mrb[0].mxu0
        %v1761 = vadd.f32 0.0, %v1760
        %v1762 = vpop.f32.mrb[0].mxu0
        %v1763 = vpop.f32.mrb[0].mxu0
        %v1764 = vpop.f32.mrb[0].mxu0
        %1765 = vdwg.mxu0
        %v1766 = vadd.f32 %v1619, %v1713
        %v1767 = vadd.f32 %v1620, %v1716
        %v1768 = vadd.f32 %v1621, %v1721
        %v1769 = vadd.f32 %v1622, %v1724
        %v1770 = vadd.f32 %v1623, %v1729
        %v1771 = vadd.f32 %v1624, %v1732
        %v1772 = vadd.f32 %v1625, %v1737
        %v1773 = vadd.f32 %v1626, %v1740
        %v1774 = vadd.f32 %v1627, %v1745
        %v1775 = vadd.f32 %v1628, %v1748
        %v1776 = vadd.f32 %v1629, %v1753
        %v1777 = vadd.f32 %v1630, %v1756
        %v1778 = vadd.f32 %v1631, %v1761
        %v1779 = vld [vmem:[%s714 + $0x1a] sm:$0xff]
        %v1780 = vld [vmem:[%s714 + $0x22] sm:$0xff]
        %v1781 = vld [vmem:[%s714 + $0x2a] sm:$0xff]
        %v1782 = vld [vmem:[%s714 + $0x32] sm:$0xff]
        %v1783 = vld [vmem:[%s714 + $0x3a] sm:$0xff]
        %v1784 = vld [vmem:[%s714 + $0x42] sm:$0xff]
        %v1785 = vld [vmem:[%s714 + $0x4a] sm:$0xff]
        %v1786 = vld [vmem:[%s714 + $0x52] sm:$0xff]
        %v1787 = vld [vmem:[%s714 + $0x5a] sm:$0xff]
        %v1788 = vld [vmem:[%s714 + $0x62] sm:$0xff]
        %v1789 = vld [vmem:[%s714 + $0x6a] sm:$0xff]
        %v1790 = vld [vmem:[%s714 + $0x72] sm:$0xff]
        %v1791 = vld [vmem:[%s714 + $0x7a] sm:$0xf]
        %v1792 = vpack.c.bf16 %v1780, %v1779
        %v1793 = vpack.c.bf16 %v1782, %v1781
        %v1794 = vpack.c.bf16 %v1784, %v1783
        %v1795 = vpack.c.bf16 %v1786, %v1785
        %v1796 = vpack.c.bf16 %v1788, %v1787
        %v1797 = vpack.c.bf16 %v1790, %v1789
        %v1798 = vpack.c.bf16 %v1791, %v1791
        %s1799 = scalar_lea.vmem %s1, 28
        %v1800 = vld [vmem:[%s1799] sm:$0x7]
        %v1802 = vsel %vm815, %v1792, 0
        %v1805 = vsel %vm815, %v1793, 0
        %v1808 = vsel %vm815, %v1794, 0
        %v1811 = vsel %vm815, %v1795, 0
        %v1814 = vsel %vm815, %v1796, 0
        %v1817 = vsel %vm815, %v1797, 0
        %v1820 = vsel %vm815, %v1798, 0
        %v1823 = vand.u32 %v1800, %v840
        %1825 = vmatprep.subr.bf16.mxu0 0
        %1826 = vmatpush1.bf16.msra.mxu0 %v1823
        %1827 = vmatprep.subr.bf16.mxu0 0
        %1828 = vmatpush1.bf16.msra.mxu0 0
        %1829 = vmatprep.subr.bf16.mxu0 0
        %1830 = vmatpush1.bf16.msra.mxu0 0
        %1831 = vmatprep.subr.bf16.mxu0 0
        %1832 = vmatpush1.bf16.msra.mxu0 0
        %1833 = vmatprep.subr.bf16.mxu0 0
        %1834 = vmatpush1.bf16.msra.mxu0 0
        %1835 = vmatprep.subr.bf16.mxu0 0
        %1836 = vmatpush1.bf16.msra.mxu0 0
        %1837 = vmatprep.subr.bf16.mxu0 0
        %1838 = vmatpush1.bf16.msra.mxu0 0
        %1839 = vmatprep.subr.bf16.mxu0 0
        %1840 = vmatpush1.bf16.msra.mxu0 0
        %1841 = vmatprep.subr.bf16.mxu0 0
        %1842 = vmatpush1.bf16.msra.mxu0 0
        %1843 = vmatprep.subr.bf16.mxu0 0
        %1844 = vmatpush1.bf16.msra.mxu0 0
        %1845 = vmatprep.subr.bf16.mxu0 0
        %1846 = vmatpush1.bf16.msra.mxu0 0
        %1847 = vmatprep.subr.bf16.mxu0 0
        %1848 = vmatpush1.bf16.msra.mxu0 0
        %1849 = vmatprep.subr.bf16.mxu0 0
        %1850 = vmatpush1.bf16.msra.mxu0 0
        %1851 = vmatprep.subr.bf16.mxu0 0
        %1852 = vmatpush1.bf16.msra.mxu0 0
        %1853 = vmatprep.subr.bf16.mxu0 0
        %1854 = vmatpush1.bf16.msra.mxu0 0
        %1855 = vmatprep.subr.bf16.mxu0 0
        %1856 = vmatpush1.bf16.msra.mxu0 0
        %1857 = vmatprep.mubr.bf16.mxu0 0
        %1858 = vmatmul.mubr.bf16.gmra.mrb[0].mxu0 %v1802
        %v1859 = vpop.f32.mrb[0].mxu0
        %v1860 = vadd.f32 0.0, %v1859
        %v1861 = vpop.f32.mrb[0].mxu0
        %v1862 = vpop.f32.mrb[0].mxu0
        %v1863 = vadd.f32 0.0, %v1862
        %v1864 = vpop.f32.mrb[0].mxu0
        %1865 = vmatprep.mubr.bf16.mxu0 0
        %1866 = vmatmul.mubr.bf16.gmra.mrb[0].mxu0 %v1805
        %v1867 = vpop.f32.mrb[0].mxu0
        %v1868 = vadd.f32 0.0, %v1867
        %v1869 = vpop.f32.mrb[0].mxu0
        %v1870 = vpop.f32.mrb[0].mxu0
        %v1871 = vadd.f32 0.0, %v1870
        %v1872 = vpop.f32.mrb[0].mxu0
        %1873 = vmatprep.mubr.bf16.mxu0 0
        %1874 = vmatmul.mubr.bf16.gmra.mrb[0].mxu0 %v1808
        %v1875 = vpop.f32.mrb[0].mxu0
        %v1876 = vadd.f32 0.0, %v1875
        %v1877 = vpop.f32.mrb[0].mxu0
        %v1878 = vpop.f32.mrb[0].mxu0
        %v1879 = vadd.f32 0.0, %v1878
        %v1880 = vpop.f32.mrb[0].mxu0
        %1881 = vmatprep.mubr.bf16.mxu0 0
        %1882 = vmatmul.mubr.bf16.gmra.mrb[0].mxu0 %v1811
        %v1883 = vpop.f32.mrb[0].mxu0
        %v1884 = vadd.f32 0.0, %v1883
        %v1885 = vpop.f32.mrb[0].mxu0
        %v1886 = vpop.f32.mrb[0].mxu0
        %v1887 = vadd.f32 0.0, %v1886
        %v1888 = vpop.f32.mrb[0].mxu0
        %1889 = vmatprep.mubr.bf16.mxu0 0
        %1890 = vmatmul.mubr.bf16.gmra.mrb[0].mxu0 %v1814
        %v1891 = vpop.f32.mrb[0].mxu0
        %v1892 = vadd.f32 0.0, %v1891
        %v1893 = vpop.f32.mrb[0].mxu0
        %v1894 = vpop.f32.mrb[0].mxu0
        %v1895 = vadd.f32 0.0, %v1894
        %v1896 = vpop.f32.mrb[0].mxu0
        %1897 = vmatprep.mubr.bf16.mxu0 0
        %1898 = vmatmul.mubr.bf16.gmra.mrb[0].mxu0 %v1817
        %v1899 = vpop.f32.mrb[0].mxu0
        %v1900 = vadd.f32 0.0, %v1899
        %v1901 = vpop.f32.mrb[0].mxu0
        %v1902 = vpop.f32.mrb[0].mxu0
        %v1903 = vadd.f32 0.0, %v1902
        %v1904 = vpop.f32.mrb[0].mxu0
        %1905 = vmatprep.mubr.bf16.mxu0 0
        %1906 = vmatmul.mubr.bf16.gmra.mrb[0].mxu0 %v1820
        %v1907 = vpop.f32.mrb[0].mxu0
        %v1908 = vadd.f32 0.0, %v1907
        %v1909 = vpop.f32.mrb[0].mxu0
        %v1910 = vpop.f32.mrb[0].mxu0
        %v1911 = vpop.f32.mrb[0].mxu0
        %1912 = vdwg.mxu0
        %v1913 = vadd.f32 %v1766, %v1860
        %v1914 = vadd.f32 %v1767, %v1863
        %v1915 = vadd.f32 %v1768, %v1868
        %v1916 = vadd.f32 %v1769, %v1871
        %v1917 = vadd.f32 %v1770, %v1876
        %v1918 = vadd.f32 %v1771, %v1879
        %v1919 = vadd.f32 %v1772, %v1884
        %v1920 = vadd.f32 %v1773, %v1887
        %v1921 = vadd.f32 %v1774, %v1892
        %v1922 = vadd.f32 %v1775, %v1895
        %v1923 = vadd.f32 %v1776, %v1900
        %v1924 = vadd.f32 %v1777, %v1903
        %v1925 = vadd.f32 %v1778, %v1908
        %v1926 = vld [vmem:[%s714 + $0x1b] sm:$0xff]
        %v1927 = vld [vmem:[%s714 + $0x23] sm:$0xff]
        %v1928 = vld [vmem:[%s714 + $0x2b] sm:$0xff]
        %v1929 = vld [vmem:[%s714 + $0x33] sm:$0xff]
        %v1930 = vld [vmem:[%s714 + $0x3b] sm:$0xff]
        %v1931 = vld [vmem:[%s714 + $0x43] sm:$0xff]
        %v1932 = vld [vmem:[%s714 + $0x4b] sm:$0xff]
        %v1933 = vld [vmem:[%s714 + $0x53] sm:$0xff]
        %v1934 = vld [vmem:[%s714 + $0x5b] sm:$0xff]
        %v1935 = vld [vmem:[%s714 + $0x63] sm:$0xff]
        %v1936 = vld [vmem:[%s714 + $0x6b] sm:$0xff]
        %v1937 = vld [vmem:[%s714 + $0x73] sm:$0xff]
        %v1938 = vld [vmem:[%s714 + $0x7b] sm:$0xf]
        %v1939 = vpack.c.bf16 %v1927, %v1926
        %v1940 = vpack.c.bf16 %v1929, %v1928
        %v1941 = vpack.c.bf16 %v1931, %v1930
        %v1942 = vpack.c.bf16 %v1933, %v1932
        %v1943 = vpack.c.bf16 %v1935, %v1934
        %v1944 = vpack.c.bf16 %v1937, %v1936
        %v1945 = vpack.c.bf16 %v1938, %v1938
        %s1946 = scalar_lea.vmem %s1, 32
        %v1947 = vld [vmem:[%s1946] sm:$0x7]
        %v1949 = vsel %vm815, %v1939, 0
        %v1952 = vsel %vm815, %v1940, 0
        %v1955 = vsel %vm815, %v1941, 0
        %v1958 = vsel %vm815, %v1942, 0
        %v1961 = vsel %vm815, %v1943, 0
        %v1964 = vsel %vm815, %v1944, 0
        %v1967 = vsel %vm815, %v1945, 0
        %v1970 = vand.u32 %v1947, %v840
        %1972 = vmatprep.subr.bf16.mxu0 0
        %1973 = vmatpush1.bf16.msra.mxu0 %v1970
        %1974 = vmatprep.subr.bf16.mxu0 0
        %1975 = vmatpush1.bf16.msra.mxu0 0
        %1976 = vmatprep.subr.bf16.mxu0 0
        %1977 = vmatpush1.bf16.msra.mxu0 0
        %1978 = vmatprep.subr.bf16.mxu0 0
        %1979 = vmatpush1.bf16.msra.mxu0 0
        %1980 = vmatprep.subr.bf16.mxu0 0
        %1981 = vmatpush1.bf16.msra.mxu0 0
        %1982 = vmatprep.subr.bf16.mxu0 0
        %1983 = vmatpush1.bf16.msra.mxu0 0
        %1984 = vmatprep.subr.bf16.mxu0 0
        %1985 = vmatpush1.bf16.msra.mxu0 0
        %1986 = vmatprep.subr.bf16.mxu0 0
        %1987 = vmatpush1.bf16.msra.mxu0 0
        %1988 = vmatprep.subr.bf16.mxu0 0
        %1989 = vmatpush1.bf16.msra.mxu0 0
        %1990 = vmatprep.subr.bf16.mxu0 0
        %1991 = vmatpush1.bf16.msra.mxu0 0
        %1992 = vmatprep.subr.bf16.mxu0 0
        %1993 = vmatpush1.bf16.msra.mxu0 0
        %1994 = vmatprep.subr.bf16.mxu0 0
        %1995 = vmatpush1.bf16.msra.mxu0 0
        %1996 = vmatprep.subr.bf16.mxu0 0
        %1997 = vmatpush1.bf16.msra.mxu0 0
        %1998 = vmatprep.subr.bf16.mxu0 0
        %1999 = vmatpush1.bf16.msra.mxu0 0
        %2000 = vmatprep.subr.bf16.mxu0 0
        %2001 = vmatpush1.bf16.msra.mxu0 0
        %2002 = vmatprep.subr.bf16.mxu0 0
        %2003 = vmatpush1.bf16.msra.mxu0 0
        %2004 = vmatprep.mubr.bf16.mxu0 0
        %2005 = vmatmul.mubr.bf16.gmra.mrb[0].mxu0 %v1949
        %v2006 = vpop.f32.mrb[0].mxu0
        %v2007 = vadd.f32 0.0, %v2006
        %v2008 = vpop.f32.mrb[0].mxu0
        %v2009 = vpop.f32.mrb[0].mxu0
        %v2010 = vadd.f32 0.0, %v2009
        %v2011 = vpop.f32.mrb[0].mxu0
        %2012 = vmatprep.mubr.bf16.mxu0 0
        %2013 = vmatmul.mubr.bf16.gmra.mrb[0].mxu0 %v1952
        %v2014 = vpop.f32.mrb[0].mxu0
        %v2015 = vadd.f32 0.0, %v2014
        %v2016 = vpop.f32.mrb[0].mxu0
        %v2017 = vpop.f32.mrb[0].mxu0
        %v2018 = vadd.f32 0.0, %v2017
        %v2019 = vpop.f32.mrb[0].mxu0
        %2020 = vmatprep.mubr.bf16.mxu0 0
        %2021 = vmatmul.mubr.bf16.gmra.mrb[0].mxu0 %v1955
        %v2022 = vpop.f32.mrb[0].mxu0
        %v2023 = vadd.f32 0.0, %v2022
        %v2024 = vpop.f32.mrb[0].mxu0
        %v2025 = vpop.f32.mrb[0].mxu0
        %v2026 = vadd.f32 0.0, %v2025
        %v2027 = vpop.f32.mrb[0].mxu0
        %2028 = vmatprep.mubr.bf16.mxu0 0
        %2029 = vmatmul.mubr.bf16.gmra.mrb[0].mxu0 %v1958
        %v2030 = vpop.f32.mrb[0].mxu0
        %v2031 = vadd.f32 0.0, %v2030
        %v2032 = vpop.f32.mrb[0].mxu0
        %v2033 = vpop.f32.mrb[0].mxu0
        %v2034 = vadd.f32 0.0, %v2033
        %v2035 = vpop.f32.mrb[0].mxu0
        %2036 = vmatprep.mubr.bf16.mxu0 0
        %2037 = vmatmul.mubr.bf16.gmra.mrb[0].mxu0 %v1961
        %v2038 = vpop.f32.mrb[0].mxu0
        %v2039 = vadd.f32 0.0, %v2038
        %v2040 = vpop.f32.mrb[0].mxu0
        %v2041 = vpop.f32.mrb[0].mxu0
        %v2042 = vadd.f32 0.0, %v2041
        %v2043 = vpop.f32.mrb[0].mxu0
        %2044 = vmatprep.mubr.bf16.mxu0 0
        %2045 = vmatmul.mubr.bf16.gmra.mrb[0].mxu0 %v1964
        %v2046 = vpop.f32.mrb[0].mxu0
        %v2047 = vadd.f32 0.0, %v2046
        %v2048 = vpop.f32.mrb[0].mxu0
        %v2049 = vpop.f32.mrb[0].mxu0
        %v2050 = vadd.f32 0.0, %v2049
        %v2051 = vpop.f32.mrb[0].mxu0
        %2052 = vmatprep.mubr.bf16.mxu0 0
        %2053 = vmatmul.mubr.bf16.gmra.mrb[0].mxu0 %v1967
        %v2054 = vpop.f32.mrb[0].mxu0
        %v2055 = vadd.f32 0.0, %v2054
        %v2056 = vpop.f32.mrb[0].mxu0
        %v2057 = vpop.f32.mrb[0].mxu0
        %v2058 = vpop.f32.mrb[0].mxu0
        %2059 = vdwg.mxu0
        %v2060 = vadd.f32 %v1913, %v2007
        %v2061 = vadd.f32 %v1914, %v2010
        %v2062 = vadd.f32 %v1915, %v2015
        %v2063 = vadd.f32 %v1916, %v2018
        %v2064 = vadd.f32 %v1917, %v2023
        %v2065 = vadd.f32 %v1918, %v2026
        %v2066 = vadd.f32 %v1919, %v2031
        %v2067 = vadd.f32 %v1920, %v2034
        %v2068 = vadd.f32 %v1921, %v2039
        %v2069 = vadd.f32 %v1922, %v2042
        %v2070 = vadd.f32 %v1923, %v2047
        %v2071 = vadd.f32 %v1924, %v2050
        %v2072 = vadd.f32 %v1925, %v2055
        %v2073 = vld [vmem:[%s2] sm:$0x1]
        %v2075 = vlaneseq
        %v2076 = vshrl.u32 %v2075, 7
        %v2077 = vsub.s32 0, %v2076
        %v2078 = vrot.slane %v2073, %v2077
        %v2080 = vadd.f32 %v2060, %v2078
        %v2081 = vadd.f32 %v2061, %v2078
        %v2082 = vadd.f32 %v2062, %v2078
        %v2083 = vadd.f32 %v2063, %v2078
        %v2084 = vadd.f32 %v2064, %v2078
        %v2085 = vadd.f32 %v2065, %v2078
        %v2086 = vadd.f32 %v2066, %v2078
        %v2087 = vadd.f32 %v2067, %v2078
        %v2088 = vadd.f32 %v2068, %v2078
        %v2089 = vadd.f32 %v2069, %v2078
        %v2090 = vadd.f32 %v2070, %v2078
        %v2091 = vadd.f32 %v2071, %v2078
        %v2092 = vadd.f32 %v2072, %v2078
        %v2093 = vmax.f32 %v2080, 0.0
        %v2094 = vmax.f32 %v2081, 0.0
        %v2095 = vmax.f32 %v2082, 0.0
        %v2096 = vmax.f32 %v2083, 0.0
        %v2097 = vmax.f32 %v2084, 0.0
        %v2098 = vmax.f32 %v2085, 0.0
        %v2099 = vmax.f32 %v2086, 0.0
        %v2100 = vmax.f32 %v2087, 0.0
        %v2101 = vmax.f32 %v2088, 0.0
        %v2102 = vmax.f32 %v2089, 0.0
        %v2103 = vmax.f32 %v2090, 0.0
        %v2104 = vmax.f32 %v2091, 0.0
        %v2105 = vmax.f32 %v2092, 0.0
        %2107 = vset.pattern.permute.xlu0 0
        %2108 = vperm.xlu0 %2107, %v759
        %v2109 = vpop.permute.xlu0 %2108
        %2112 = vset.pattern.permute.xlu0 0
        %2113 = vperm.xlu0 %2112, %v760
        %v2114 = vpop.permute.xlu0 %2113
        %2117 = vset.pattern.permute.xlu0 0
        %2118 = vperm.xlu0 %2117, %v761
        %v2119 = vpop.permute.xlu0 %2118
        %2122 = vset.pattern.permute.xlu0 0
        %2123 = vperm.xlu0 %2122, %v762
        %v2124 = vpop.permute.xlu0 %2123
        %2127 = vset.pattern.permute.xlu0 0
        %2128 = vperm.xlu0 %2127, %v763
        %v2129 = vpop.permute.xlu0 %2128
        %2132 = vset.pattern.permute.xlu0 0
        %2133 = vperm.xlu0 %2132, %v764
        %v2134 = vpop.permute.xlu0 %2133
        %2137 = vset.pattern.permute.xlu0 0
        %2138 = vperm.xlu0 %2137, %v765
        %v2139 = vpop.permute.xlu0 %2138
        %2142 = vset.pattern.permute.xlu0 0
        %2143 = vperm.xlu0 %2142, %v766
        %v2144 = vpop.permute.xlu0 %2143
        %2147 = vset.pattern.permute.xlu0 0
        %2148 = vperm.xlu0 %2147, %v767
        %v2149 = vpop.permute.xlu0 %2148
        %2152 = vset.pattern.permute.xlu0 0
        %2153 = vperm.xlu0 %2152, %v768
        %v2154 = vpop.permute.xlu0 %2153
        %2157 = vset.pattern.permute.xlu0 0
        %2158 = vperm.xlu0 %2157, %v769
        %v2159 = vpop.permute.xlu0 %2158
        %2162 = vset.pattern.permute.xlu0 0
        %2163 = vperm.xlu0 %2162, %v770
        %v2164 = vpop.permute.xlu0 %2163
        %2167 = vset.pattern.permute.xlu0 0
        %2168 = vperm.xlu0 %2167, %v771
        %v2169 = vpop.permute.xlu0 %2168
        %v2171 = vmul.f32 %v2093, %v2109
        %v2172 = vmul.f32 %v2094, %v2114
        %v2173 = vmul.f32 %v2095, %v2119
        %v2174 = vmul.f32 %v2096, %v2124
        %v2175 = vmul.f32 %v2097, %v2129
        %v2176 = vmul.f32 %v2098, %v2134
        %v2177 = vmul.f32 %v2099, %v2139
        %v2178 = vmul.f32 %v2100, %v2144
        %v2179 = vmul.f32 %v2101, %v2149
        %v2180 = vmul.f32 %v2102, %v2154
        %v2181 = vmul.f32 %v2103, %v2159
        %v2182 = vmul.f32 %v2104, %v2164
        %v2183 = vmul.f32 %v2105, %v2169
        %2184 = vst.msk [vmem:[#allocation2 + $0x10] sm:$0xff] %vm721, %v2171
        %2185 = vst.msk [vmem:[#allocation2 + $0x18] sm:$0xff] %vm721, %v2172
        %2186 = vst.msk [vmem:[#allocation2 + $0x20] sm:$0xff] %vm721, %v2173
        %2187 = vst.msk [vmem:[#allocation2 + $0x28] sm:$0xff] %vm721, %v2174
        %2188 = vst.msk [vmem:[#allocation2 + $0x30] sm:$0xff] %vm721, %v2175
        %2189 = vst.msk [vmem:[#allocation2 + $0x38] sm:$0xff] %vm721, %v2176
        %2190 = vst.msk [vmem:[#allocation2 + $0x40] sm:$0xff] %vm721, %v2177
        %2191 = vst.msk [vmem:[#allocation2 + $0x48] sm:$0xff] %vm721, %v2178
        %2192 = vst.msk [vmem:[#allocation2 + $0x50] sm:$0xff] %vm721, %v2179
        %2193 = vst.msk [vmem:[#allocation2 + $0x58] sm:$0xff] %vm721, %v2180
        %2194 = vst.msk [vmem:[#allocation2 + $0x60] sm:$0xff] %vm721, %v2181
        %2195 = vst.msk [vmem:[#allocation2 + $0x68] sm:$0xff] %vm721, %v2182
        %2196 = vst.msk [vmem:[#allocation2 + $0x70] sm:$0xf] %vm738, %v2183
        %v2197 = vld [vmem:[#allocation2 + $0x5] sm:$0xff]
        %v2198 = vld [vmem:[#allocation2 + $0xd] sm:$0xff]
        %v2199 = vld [vmem:[#allocation2 + $0x15] sm:$0xff]
        %v2200 = vld [vmem:[#allocation2 + $0x1d] sm:$0xff]
        %v2201 = vld [vmem:[#allocation2 + $0x25] sm:$0xff]
        %v2202 = vld [vmem:[#allocation2 + $0x2d] sm:$0xff]
        %v2203 = vld [vmem:[#allocation2 + $0x35] sm:$0xff]
        %v2204 = vld [vmem:[#allocation2 + $0x3d] sm:$0xff]
        %v2205 = vld [vmem:[#allocation2 + $0x45] sm:$0xff]
        %v2206 = vld [vmem:[#allocation2 + $0x4d] sm:$0xff]
        %v2207 = vld [vmem:[#allocation2 + $0x55] sm:$0xff]
        %v2208 = vld [vmem:[#allocation2 + $0x5d] sm:$0xff]
        %v2209 = vld [vmem:[#allocation2 + $0x65] sm:$0xf]
        %v2210 = vpack.c.bf16 %v2198, %v2197
        %v2211 = vpack.c.bf16 %v2200, %v2199
        %v2212 = vpack.c.bf16 %v2202, %v2201
        %v2213 = vpack.c.bf16 %v2204, %v2203
        %v2214 = vpack.c.bf16 %v2206, %v2205
        %v2215 = vpack.c.bf16 %v2208, %v2207
        %v2216 = vpack.c.bf16 %v2209, %v2209
        %v2217 = vld [vmem:[%s3] sm:$0xf]
        %v2218 = vld [vmem:[%s3 + $0x4] sm:$0xf]
        %v2219 = vld [vmem:[%s3 + $0x8] sm:$0xf]
        %v2220 = vld [vmem:[%s3 + $0xc] sm:$0xf]
        %v2221 = vld [vmem:[#allocation2 + $0x6] sm:$0xff]
        %v2222 = vld [vmem:[#allocation2 + $0xe] sm:$0xff]
        %v2223 = vld [vmem:[#allocation2 + $0x16] sm:$0xff]
        %v2224 = vld [vmem:[#allocation2 + $0x1e] sm:$0xff]
        %v2225 = vld [vmem:[#allocation2 + $0x26] sm:$0xff]
        %v2226 = vld [vmem:[#allocation2 + $0x2e] sm:$0xff]
        %v2227 = vld [vmem:[#allocation2 + $0x36] sm:$0xff]
        %v2228 = vld [vmem:[#allocation2 + $0x3e] sm:$0xff]
        %v2229 = vld [vmem:[#allocation2 + $0x46] sm:$0xff]
        %v2230 = vld [vmem:[#allocation2 + $0x4e] sm:$0xff]
        %v2231 = vld [vmem:[#allocation2 + $0x56] sm:$0xff]
        %v2232 = vld [vmem:[#allocation2 + $0x5e] sm:$0xff]
        %v2233 = vld [vmem:[#allocation2 + $0x66] sm:$0xf]
        %v2234 = vpack.c.bf16 %v2222, %v2221
        %v2235 = vpack.c.bf16 %v2224, %v2223
        %v2236 = vpack.c.bf16 %v2226, %v2225
        %v2237 = vpack.c.bf16 %v2228, %v2227
        %v2238 = vpack.c.bf16 %v2230, %v2229
        %v2239 = vpack.c.bf16 %v2232, %v2231
        %v2240 = vpack.c.bf16 %v2233, %v2233
        %s2241 = scalar_lea.vmem %s3, 16
        %v2242 = vld [vmem:[%s2241] sm:$0xf]
        %v2243 = vld [vmem:[%s2241 + $0x4] sm:$0xf]
        %v2244 = vld [vmem:[%s2241 + $0x8] sm:$0xf]
        %v2245 = vld [vmem:[%s2241 + $0xc] sm:$0xf]
        %v2250 = vunpack.c.l.b16 %v2242
        %v2251 = vunpack.c.l.b16 %v2243
        %v2252 = vunpack.c.l.b16 %v2244
        %v2253 = vunpack.c.l.b16 %v2245
        %v2254 = vpack.c.b16 %v2251, %v2250
        %v2255 = vpack.c.b16 %v2253, %v2252
        %v2259 = vsel %vm721, %v2234, 0
        %v2262 = vsel %vm721, %v2235, 0
        %v2265 = vsel %vm721, %v2236, 0
        %v2268 = vsel %vm721, %v2237, 0
        %v2271 = vsel %vm721, %v2238, 0
        %v2274 = vsel %vm721, %v2239, 0
        %v2277 = vsel %vm721, %v2240, 0
        %2279 = vmatprep.subr.bf16.mxu0 0
        %2280 = vmatpush1.bf16.msra.mxu0 %v2254
        %2281 = vmatprep.subr.bf16.mxu0 0
        %2282 = vmatpush1.bf16.msra.mxu0 %v2255
        %2283 = vmatprep.subr.bf16.mxu0 0
        %2284 = vmatpush1.bf16.msra.mxu0 0
        %2285 = vmatprep.subr.bf16.mxu0 0
        %2286 = vmatpush1.bf16.msra.mxu0 0
        %2287 = vmatprep.subr.bf16.mxu0 0
        %2288 = vmatpush1.bf16.msra.mxu0 0
        %2289 = vmatprep.subr.bf16.mxu0 0
        %2290 = vmatpush1.bf16.msra.mxu0 0
        %2291 = vmatprep.subr.bf16.mxu0 0
        %2292 = vmatpush1.bf16.msra.mxu0 0
        %2293 = vmatprep.subr.bf16.mxu0 0
        %2294 = vmatpush1.bf16.msra.mxu0 0
        %2295 = vmatprep.subr.bf16.mxu0 0
        %2296 = vmatpush1.bf16.msra.mxu0 0
        %2297 = vmatprep.subr.bf16.mxu0 0
        %2298 = vmatpush1.bf16.msra.mxu0 0
        %2299 = vmatprep.subr.bf16.mxu0 0
        %2300 = vmatpush1.bf16.msra.mxu0 0
        %2301 = vmatprep.subr.bf16.mxu0 0
        %2302 = vmatpush1.bf16.msra.mxu0 0
        %2303 = vmatprep.subr.bf16.mxu0 0
        %2304 = vmatpush1.bf16.msra.mxu0 0
        %2305 = vmatprep.subr.bf16.mxu0 0
        %2306 = vmatpush1.bf16.msra.mxu0 0
        %2307 = vmatprep.subr.bf16.mxu0 0
        %2308 = vmatpush1.bf16.msra.mxu0 0
        %2309 = vmatprep.subr.bf16.mxu0 0
        %2310 = vmatpush1.bf16.msra.mxu0 0
        %2311 = vmatprep.mubr.bf16.mxu0 0
        %2312 = vmatmul.mubr.bf16.gmra.mrb[0].mxu0 %v2259
        %v2313 = vpop.f32.mrb[0].mxu0
        %v2314 = vadd.f32 0.0, %v2313
        %v2315 = vpop.f32.mrb[0].mxu0
        %v2316 = vpop.f32.mrb[0].mxu0
        %v2317 = vadd.f32 0.0, %v2316
        %v2318 = vpop.f32.mrb[0].mxu0
        %2319 = vmatprep.mubr.bf16.mxu0 0
        %2320 = vmatmul.mubr.bf16.gmra.mrb[0].mxu0 %v2262
        %v2321 = vpop.f32.mrb[0].mxu0
        %v2322 = vadd.f32 0.0, %v2321
        %v2323 = vpop.f32.mrb[0].mxu0
        %v2324 = vpop.f32.mrb[0].mxu0
        %v2325 = vadd.f32 0.0, %v2324
        %v2326 = vpop.f32.mrb[0].mxu0
        %2327 = vmatprep.mubr.bf16.mxu0 0
        %2328 = vmatmul.mubr.bf16.gmra.mrb[0].mxu0 %v2265
        %v2329 = vpop.f32.mrb[0].mxu0
        %v2330 = vadd.f32 0.0, %v2329
        %v2331 = vpop.f32.mrb[0].mxu0
        %v2332 = vpop.f32.mrb[0].mxu0
        %v2333 = vadd.f32 0.0, %v2332
        %v2334 = vpop.f32.mrb[0].mxu0
        %2335 = vmatprep.mubr.bf16.mxu0 0
        %2336 = vmatmul.mubr.bf16.gmra.mrb[0].mxu0 %v2268
        %v2337 = vpop.f32.mrb[0].mxu0
        %v2338 = vadd.f32 0.0, %v2337
        %v2339 = vpop.f32.mrb[0].mxu0
        %v2340 = vpop.f32.mrb[0].mxu0
        %v2341 = vadd.f32 0.0, %v2340
        %v2342 = vpop.f32.mrb[0].mxu0
        %2343 = vmatprep.mubr.bf16.mxu0 0
        %2344 = vmatmul.mubr.bf16.gmra.mrb[0].mxu0 %v2271
        %v2345 = vpop.f32.mrb[0].mxu0
        %v2346 = vadd.f32 0.0, %v2345
        %v2347 = vpop.f32.mrb[0].mxu0
        %v2348 = vpop.f32.mrb[0].mxu0
        %v2349 = vadd.f32 0.0, %v2348
        %v2350 = vpop.f32.mrb[0].mxu0
        %2351 = vmatprep.mubr.bf16.mxu0 0
        %2352 = vmatmul.mubr.bf16.gmra.mrb[0].mxu0 %v2274
        %v2353 = vpop.f32.mrb[0].mxu0
        %v2354 = vadd.f32 0.0, %v2353
        %v2355 = vpop.f32.mrb[0].mxu0
        %v2356 = vpop.f32.mrb[0].mxu0
        %v2357 = vadd.f32 0.0, %v2356
        %v2358 = vpop.f32.mrb[0].mxu0
        %2359 = vmatprep.mubr.bf16.mxu0 0
        %2360 = vmatmul.mubr.bf16.gmra.mrb[0].mxu0 %v2277
        %v2361 = vpop.f32.mrb[0].mxu0
        %v2362 = vadd.f32 0.0, %v2361
        %v2363 = vpop.f32.mrb[0].mxu0
        %v2364 = vpop.f32.mrb[0].mxu0
        %v2365 = vpop.f32.mrb[0].mxu0
        %2366 = vdwg.mxu0
        %v2371 = vunpack.c.l.b16 %v2217
        %v2372 = vunpack.c.l.b16 %v2218
        %v2373 = vunpack.c.l.b16 %v2219
        %v2374 = vunpack.c.l.b16 %v2220
        %v2375 = vpack.c.b16 %v2372, %v2371
        %v2376 = vpack.c.b16 %v2374, %v2373
        %v2380 = vsel %vm721, %v2210, 0
        %v2383 = vsel %vm721, %v2211, 0
        %v2386 = vsel %vm721, %v2212, 0
        %v2389 = vsel %vm721, %v2213, 0
        %v2392 = vsel %vm721, %v2214, 0
        %v2395 = vsel %vm721, %v2215, 0
        %v2398 = vsel %vm721, %v2216, 0
        %2400 = vmatprep.subr.bf16.mxu0 0
        %2401 = vmatpush1.bf16.msra.mxu0 %v2375
        %2402 = vmatprep.subr.bf16.mxu0 0
        %2403 = vmatpush1.bf16.msra.mxu0 %v2376
        %2404 = vmatprep.subr.bf16.mxu0 0
        %2405 = vmatpush1.bf16.msra.mxu0 0
        %2406 = vmatprep.subr.bf16.mxu0 0
        %2407 = vmatpush1.bf16.msra.mxu0 0
        %2408 = vmatprep.subr.bf16.mxu0 0
        %2409 = vmatpush1.bf16.msra.mxu0 0
        %2410 = vmatprep.subr.bf16.mxu0 0
        %2411 = vmatpush1.bf16.msra.mxu0 0
        %2412 = vmatprep.subr.bf16.mxu0 0
        %2413 = vmatpush1.bf16.msra.mxu0 0
        %2414 = vmatprep.subr.bf16.mxu0 0
        %2415 = vmatpush1.bf16.msra.mxu0 0
        %2416 = vmatprep.subr.bf16.mxu0 0
        %2417 = vmatpush1.bf16.msra.mxu0 0
        %2418 = vmatprep.subr.bf16.mxu0 0
        %2419 = vmatpush1.bf16.msra.mxu0 0
        %2420 = vmatprep.subr.bf16.mxu0 0
        %2421 = vmatpush1.bf16.msra.mxu0 0
        %2422 = vmatprep.subr.bf16.mxu0 0
        %2423 = vmatpush1.bf16.msra.mxu0 0
        %2424 = vmatprep.subr.bf16.mxu0 0
        %2425 = vmatpush1.bf16.msra.mxu0 0
        %2426 = vmatprep.subr.bf16.mxu0 0
        %2427 = vmatpush1.bf16.msra.mxu0 0
        %2428 = vmatprep.subr.bf16.mxu0 0
        %2429 = vmatpush1.bf16.msra.mxu0 0
        %2430 = vmatprep.subr.bf16.mxu0 0
        %2431 = vmatpush1.bf16.msra.mxu0 0
        %2432 = vmatprep.mubr.bf16.mxu0 0
        %2433 = vmatmul.mubr.bf16.gmra.mrb[0].mxu0 %v2380
        %v2434 = vpop.f32.mrb[0].mxu0
        %v2435 = vadd.f32 %v2314, %v2434
        %v2436 = vpop.f32.mrb[0].mxu0
        %v2437 = vpop.f32.mrb[0].mxu0
        %v2438 = vadd.f32 %v2317, %v2437
        %v2439 = vpop.f32.mrb[0].mxu0
        %2440 = vmatprep.mubr.bf16.mxu0 0
        %2441 = vmatmul.mubr.bf16.gmra.mrb[0].mxu0 %v2383
        %v2442 = vpop.f32.mrb[0].mxu0
        %v2443 = vadd.f32 %v2322, %v2442
        %v2444 = vpop.f32.mrb[0].mxu0
        %v2445 = vpop.f32.mrb[0].mxu0
        %v2446 = vadd.f32 %v2325, %v2445
        %v2447 = vpop.f32.mrb[0].mxu0
        %2448 = vmatprep.mubr.bf16.mxu0 0
        %2449 = vmatmul.mubr.bf16.gmra.mrb[0].mxu0 %v2386
        %v2450 = vpop.f32.mrb[0].mxu0
        %v2451 = vadd.f32 %v2330, %v2450
        %v2452 = vpop.f32.mrb[0].mxu0
        %v2453 = vpop.f32.mrb[0].mxu0
        %v2454 = vadd.f32 %v2333, %v2453
        %v2455 = vpop.f32.mrb[0].mxu0
        %2456 = vmatprep.mubr.bf16.mxu0 0
        %2457 = vmatmul.mubr.bf16.gmra.mrb[0].mxu0 %v2389
        %v2458 = vpop.f32.mrb[0].mxu0
        %v2459 = vadd.f32 %v2338, %v2458
        %v2460 = vpop.f32.mrb[0].mxu0
        %v2461 = vpop.f32.mrb[0].mxu0
        %v2462 = vadd.f32 %v2341, %v2461
        %v2463 = vpop.f32.mrb[0].mxu0
        %2464 = vmatprep.mubr.bf16.mxu0 0
        %2465 = vmatmul.mubr.bf16.gmra.mrb[0].mxu0 %v2392
        %v2466 = vpop.f32.mrb[0].mxu0
        %v2467 = vadd.f32 %v2346, %v2466
        %v2468 = vpop.f32.mrb[0].mxu0
        %v2469 = vpop.f32.mrb[0].mxu0
        %v2470 = vadd.f32 %v2349, %v2469
        %v2471 = vpop.f32.mrb[0].mxu0
        %2472 = vmatprep.mubr.bf16.mxu0 0
        %2473 = vmatmul.mubr.bf16.gmra.mrb[0].mxu0 %v2395
        %v2474 = vpop.f32.mrb[0].mxu0
        %v2475 = vadd.f32 %v2354, %v2474
        %v2476 = vpop.f32.mrb[0].mxu0
        %v2477 = vpop.f32.mrb[0].mxu0
        %v2478 = vadd.f32 %v2357, %v2477
        %v2479 = vpop.f32.mrb[0].mxu0
        %2480 = vmatprep.mubr.bf16.mxu0 0
        %2481 = vmatmul.mubr.bf16.gmra.mrb[0].mxu0 %v2398
        %v2482 = vpop.f32.mrb[0].mxu0
        %v2483 = vadd.f32 %v2362, %v2482
        %v2484 = vpop.f32.mrb[0].mxu0
        %v2485 = vpop.f32.mrb[0].mxu0
        %v2486 = vpop.f32.mrb[0].mxu0
        %2487 = vdwg.mxu0
        %v2488 = vld [vmem:[#allocation2 + $0x7] sm:$0xff]
        %v2489 = vld [vmem:[#allocation2 + $0xf] sm:$0xff]
        %v2490 = vld [vmem:[#allocation2 + $0x17] sm:$0xff]
        %v2491 = vld [vmem:[#allocation2 + $0x1f] sm:$0xff]
        %v2492 = vld [vmem:[#allocation2 + $0x27] sm:$0xff]
        %v2493 = vld [vmem:[#allocation2 + $0x2f] sm:$0xff]
        %v2494 = vld [vmem:[#allocation2 + $0x37] sm:$0xff]
        %v2495 = vld [vmem:[#allocation2 + $0x3f] sm:$0xff]
        %v2496 = vld [vmem:[#allocation2 + $0x47] sm:$0xff]
        %v2497 = vld [vmem:[#allocation2 + $0x4f] sm:$0xff]
        %v2498 = vld [vmem:[#allocation2 + $0x57] sm:$0xff]
        %v2499 = vld [vmem:[#allocation2 + $0x5f] sm:$0xff]
        %v2500 = vld [vmem:[#allocation2 + $0x67] sm:$0xf]
        %v2501 = vpack.c.bf16 %v2489, %v2488
        %v2502 = vpack.c.bf16 %v2491, %v2490
        %v2503 = vpack.c.bf16 %v2493, %v2492
        %v2504 = vpack.c.bf16 %v2495, %v2494
        %v2505 = vpack.c.bf16 %v2497, %v2496
        %v2506 = vpack.c.bf16 %v2499, %v2498
        %v2507 = vpack.c.bf16 %v2500, %v2500
        %s2508 = scalar_lea.vmem %s3, 32
        %v2509 = vld [vmem:[%s2508] sm:$0xf]
        %v2510 = vld [vmem:[%s2508 + $0x4] sm:$0xf]
        %v2511 = vld [vmem:[%s2508 + $0x8] sm:$0xf]
        %v2512 = vld [vmem:[%s2508 + $0xc] sm:$0xf]
        %v2517 = vunpack.c.l.b16 %v2509
        %v2518 = vunpack.c.l.b16 %v2510
        %v2519 = vunpack.c.l.b16 %v2511
        %v2520 = vunpack.c.l.b16 %v2512
        %v2521 = vpack.c.b16 %v2518, %v2517
        %v2522 = vpack.c.b16 %v2520, %v2519
        %v2526 = vsel %vm721, %v2501, 0
        %v2529 = vsel %vm721, %v2502, 0
        %v2532 = vsel %vm721, %v2503, 0
        %v2535 = vsel %vm721, %v2504, 0
        %v2538 = vsel %vm721, %v2505, 0
        %v2541 = vsel %vm721, %v2506, 0
        %v2544 = vsel %vm721, %v2507, 0
        %2546 = vmatprep.subr.bf16.mxu0 0
        %2547 = vmatpush1.bf16.msra.mxu0 %v2521
        %2548 = vmatprep.subr.bf16.mxu0 0
        %2549 = vmatpush1.bf16.msra.mxu0 %v2522
        %2550 = vmatprep.subr.bf16.mxu0 0
        %2551 = vmatpush1.bf16.msra.mxu0 0
        %2552 = vmatprep.subr.bf16.mxu0 0
        %2553 = vmatpush1.bf16.msra.mxu0 0
        %2554 = vmatprep.subr.bf16.mxu0 0
        %2555 = vmatpush1.bf16.msra.mxu0 0
        %2556 = vmatprep.subr.bf16.mxu0 0
        %2557 = vmatpush1.bf16.msra.mxu0 0
        %2558 = vmatprep.subr.bf16.mxu0 0
        %2559 = vmatpush1.bf16.msra.mxu0 0
        %2560 = vmatprep.subr.bf16.mxu0 0
        %2561 = vmatpush1.bf16.msra.mxu0 0
        %2562 = vmatprep.subr.bf16.mxu0 0
        %2563 = vmatpush1.bf16.msra.mxu0 0
        %2564 = vmatprep.subr.bf16.mxu0 0
        %2565 = vmatpush1.bf16.msra.mxu0 0
        %2566 = vmatprep.subr.bf16.mxu0 0
        %2567 = vmatpush1.bf16.msra.mxu0 0
        %2568 = vmatprep.subr.bf16.mxu0 0
        %2569 = vmatpush1.bf16.msra.mxu0 0
        %2570 = vmatprep.subr.bf16.mxu0 0
        %2571 = vmatpush1.bf16.msra.mxu0 0
        %2572 = vmatprep.subr.bf16.mxu0 0
        %2573 = vmatpush1.bf16.msra.mxu0 0
        %2574 = vmatprep.subr.bf16.mxu0 0
        %2575 = vmatpush1.bf16.msra.mxu0 0
        %2576 = vmatprep.subr.bf16.mxu0 0
        %2577 = vmatpush1.bf16.msra.mxu0 0
        %2578 = vmatprep.mubr.bf16.mxu0 0
        %2579 = vmatmul.mubr.bf16.gmra.mrb[0].mxu0 %v2526
        %v2580 = vpop.f32.mrb[0].mxu0
        %v2581 = vadd.f32 0.0, %v2580
        %v2582 = vpop.f32.mrb[0].mxu0
        %v2583 = vpop.f32.mrb[0].mxu0
        %v2584 = vadd.f32 0.0, %v2583
        %v2585 = vpop.f32.mrb[0].mxu0
        %2586 = vmatprep.mubr.bf16.mxu0 0
        %2587 = vmatmul.mubr.bf16.gmra.mrb[0].mxu0 %v2529
        %v2588 = vpop.f32.mrb[0].mxu0
        %v2589 = vadd.f32 0.0, %v2588
        %v2590 = vpop.f32.mrb[0].mxu0
        %v2591 = vpop.f32.mrb[0].mxu0
        %v2592 = vadd.f32 0.0, %v2591
        %v2593 = vpop.f32.mrb[0].mxu0
        %2594 = vmatprep.mubr.bf16.mxu0 0
        %2595 = vmatmul.mubr.bf16.gmra.mrb[0].mxu0 %v2532
        %v2596 = vpop.f32.mrb[0].mxu0
        %v2597 = vadd.f32 0.0, %v2596
        %v2598 = vpop.f32.mrb[0].mxu0
        %v2599 = vpop.f32.mrb[0].mxu0
        %v2600 = vadd.f32 0.0, %v2599
        %v2601 = vpop.f32.mrb[0].mxu0
        %2602 = vmatprep.mubr.bf16.mxu0 0
        %2603 = vmatmul.mubr.bf16.gmra.mrb[0].mxu0 %v2535
        %v2604 = vpop.f32.mrb[0].mxu0
        %v2605 = vadd.f32 0.0, %v2604
        %v2606 = vpop.f32.mrb[0].mxu0
        %v2607 = vpop.f32.mrb[0].mxu0
        %v2608 = vadd.f32 0.0, %v2607
        %v2609 = vpop.f32.mrb[0].mxu0
        %2610 = vmatprep.mubr.bf16.mxu0 0
        %2611 = vmatmul.mubr.bf16.gmra.mrb[0].mxu0 %v2538
        %v2612 = vpop.f32.mrb[0].mxu0
        %v2613 = vadd.f32 0.0, %v2612
        %v2614 = vpop.f32.mrb[0].mxu0
        %v2615 = vpop.f32.mrb[0].mxu0
        %v2616 = vadd.f32 0.0, %v2615
        %v2617 = vpop.f32.mrb[0].mxu0
        %2618 = vmatprep.mubr.bf16.mxu0 0
        %2619 = vmatmul.mubr.bf16.gmra.mrb[0].mxu0 %v2541
        %v2620 = vpop.f32.mrb[0].mxu0
        %v2621 = vadd.f32 0.0, %v2620
        %v2622 = vpop.f32.mrb[0].mxu0
        %v2623 = vpop.f32.mrb[0].mxu0
        %v2624 = vadd.f32 0.0, %v2623
        %v2625 = vpop.f32.mrb[0].mxu0
        %2626 = vmatprep.mubr.bf16.mxu0 0
        %2627 = vmatmul.mubr.bf16.gmra.mrb[0].mxu0 %v2544
        %v2628 = vpop.f32.mrb[0].mxu0
        %v2629 = vadd.f32 0.0, %v2628
        %v2630 = vpop.f32.mrb[0].mxu0
        %v2631 = vpop.f32.mrb[0].mxu0
        %v2632 = vpop.f32.mrb[0].mxu0
        %2633 = vdwg.mxu0
        %v2634 = vadd.f32 %v2435, %v2581
        %v2635 = vadd.f32 %v2438, %v2584
        %v2636 = vadd.f32 %v2443, %v2589
        %v2637 = vadd.f32 %v2446, %v2592
        %v2638 = vadd.f32 %v2451, %v2597
        %v2639 = vadd.f32 %v2454, %v2600
        %v2640 = vadd.f32 %v2459, %v2605
        %v2641 = vadd.f32 %v2462, %v2608
        %v2642 = vadd.f32 %v2467, %v2613
        %v2643 = vadd.f32 %v2470, %v2616
        %v2644 = vadd.f32 %v2475, %v2621
        %v2645 = vadd.f32 %v2478, %v2624
        %v2646 = vadd.f32 %v2483, %v2629
        %v2647 = vld [vmem:[#allocation2 + $0xf] sm:$0xff]
        %v2648 = vld [vmem:[#allocation2 + $0x17] sm:$0xff]
        %v2649 = vld [vmem:[#allocation2 + $0x1f] sm:$0xff]
        %v2650 = vld [vmem:[#allocation2 + $0x27] sm:$0xff]
        %v2651 = vld [vmem:[#allocation2 + $0x2f] sm:$0xff]
        %v2652 = vld [vmem:[#allocation2 + $0x37] sm:$0xff]
        %v2653 = vld [vmem:[#allocation2 + $0x3f] sm:$0xff]
        %v2654 = vld [vmem:[#allocation2 + $0x47] sm:$0xff]
        %v2655 = vld [vmem:[#allocation2 + $0x4f] sm:$0xff]
        %v2656 = vld [vmem:[#allocation2 + $0x57] sm:$0xff]
        %v2657 = vld [vmem:[#allocation2 + $0x5f] sm:$0xff]
        %v2658 = vld [vmem:[#allocation2 + $0x67] sm:$0xff]
        %v2659 = vld [vmem:[#allocation2 + $0x6f] sm:$0xf]
        %v2660 = vpack.c.bf16 %v2648, %v2647
        %v2661 = vpack.c.bf16 %v2650, %v2649
        %v2662 = vpack.c.bf16 %v2652, %v2651
        %v2663 = vpack.c.bf16 %v2654, %v2653
        %v2664 = vpack.c.bf16 %v2656, %v2655
        %v2665 = vpack.c.bf16 %v2658, %v2657
        %v2666 = vpack.c.bf16 %v2659, %v2659
        %s2667 = scalar_lea.vmem %s3, 48
        %v2668 = vld [vmem:[%s2667] sm:$0xf]
        %v2669 = vld [vmem:[%s2667 + $0x4] sm:$0xf]
        %v2670 = vld [vmem:[%s2667 + $0x8] sm:$0xf]
        %v2671 = vld [vmem:[%s2667 + $0xc] sm:$0xf]
        %v2676 = vunpack.c.l.b16 %v2668
        %v2677 = vunpack.c.l.b16 %v2669
        %v2678 = vunpack.c.l.b16 %v2670
        %v2679 = vunpack.c.l.b16 %v2671
        %v2680 = vpack.c.b16 %v2677, %v2676
        %v2681 = vpack.c.b16 %v2679, %v2678
        %v2685 = vsel %vm721, %v2660, 0
        %v2688 = vsel %vm721, %v2661, 0
        %v2691 = vsel %vm721, %v2662, 0
        %v2694 = vsel %vm721, %v2663, 0
        %v2697 = vsel %vm721, %v2664, 0
        %v2700 = vsel %vm721, %v2665, 0
        %v2703 = vsel %vm721, %v2666, 0
        %2705 = vmatprep.subr.bf16.mxu0 0
        %2706 = vmatpush1.bf16.msra.mxu0 %v2680
        %2707 = vmatprep.subr.bf16.mxu0 0
        %2708 = vmatpush1.bf16.msra.mxu0 %v2681
        %2709 = vmatprep.subr.bf16.mxu0 0
        %2710 = vmatpush1.bf16.msra.mxu0 0
        %2711 = vmatprep.subr.bf16.mxu0 0
        %2712 = vmatpush1.bf16.msra.mxu0 0
        %2713 = vmatprep.subr.bf16.mxu0 0
        %2714 = vmatpush1.bf16.msra.mxu0 0
        %2715 = vmatprep.subr.bf16.mxu0 0
        %2716 = vmatpush1.bf16.msra.mxu0 0
        %2717 = vmatprep.subr.bf16.mxu0 0
        %2718 = vmatpush1.bf16.msra.mxu0 0
        %2719 = vmatprep.subr.bf16.mxu0 0
        %2720 = vmatpush1.bf16.msra.mxu0 0
        %2721 = vmatprep.subr.bf16.mxu0 0
        %2722 = vmatpush1.bf16.msra.mxu0 0
        %2723 = vmatprep.subr.bf16.mxu0 0
        %2724 = vmatpush1.bf16.msra.mxu0 0
        %2725 = vmatprep.subr.bf16.mxu0 0
        %2726 = vmatpush1.bf16.msra.mxu0 0
        %2727 = vmatprep.subr.bf16.mxu0 0
        %2728 = vmatpush1.bf16.msra.mxu0 0
        %2729 = vmatprep.subr.bf16.mxu0 0
        %2730 = vmatpush1.bf16.msra.mxu0 0
        %2731 = vmatprep.subr.bf16.mxu0 0
        %2732 = vmatpush1.bf16.msra.mxu0 0
        %2733 = vmatprep.subr.bf16.mxu0 0
        %2734 = vmatpush1.bf16.msra.mxu0 0
        %2735 = vmatprep.subr.bf16.mxu0 0
        %2736 = vmatpush1.bf16.msra.mxu0 0
        %2737 = vmatprep.mubr.bf16.mxu0 0
        %2738 = vmatmul.mubr.bf16.gmra.mrb[0].mxu0 %v2685
        %v2739 = vpop.f32.mrb[0].mxu0
        %v2740 = vadd.f32 0.0, %v2739
        %v2741 = vpop.f32.mrb[0].mxu0
        %v2742 = vpop.f32.mrb[0].mxu0
        %v2743 = vadd.f32 0.0, %v2742
        %v2744 = vpop.f32.mrb[0].mxu0
        %2745 = vmatprep.mubr.bf16.mxu0 0
        %2746 = vmatmul.mubr.bf16.gmra.mrb[0].mxu0 %v2688
        %v2747 = vpop.f32.mrb[0].mxu0
        %v2748 = vadd.f32 0.0, %v2747
        %v2749 = vpop.f32.mrb[0].mxu0
        %v2750 = vpop.f32.mrb[0].mxu0
        %v2751 = vadd.f32 0.0, %v2750
        %v2752 = vpop.f32.mrb[0].mxu0
        %2753 = vmatprep.mubr.bf16.mxu0 0
        %2754 = vmatmul.mubr.bf16.gmra.mrb[0].mxu0 %v2691
        %v2755 = vpop.f32.mrb[0].mxu0
        %v2756 = vadd.f32 0.0, %v2755
        %v2757 = vpop.f32.mrb[0].mxu0
        %v2758 = vpop.f32.mrb[0].mxu0
        %v2759 = vadd.f32 0.0, %v2758
        %v2760 = vpop.f32.mrb[0].mxu0
        %2761 = vmatprep.mubr.bf16.mxu0 0
        %2762 = vmatmul.mubr.bf16.gmra.mrb[0].mxu0 %v2694
        %v2763 = vpop.f32.mrb[0].mxu0
        %v2764 = vadd.f32 0.0, %v2763
        %v2765 = vpop.f32.mrb[0].mxu0
        %v2766 = vpop.f32.mrb[0].mxu0
        %v2767 = vadd.f32 0.0, %v2766
        %v2768 = vpop.f32.mrb[0].mxu0
        %2769 = vmatprep.mubr.bf16.mxu0 0
        %2770 = vmatmul.mubr.bf16.gmra.mrb[0].mxu0 %v2697
        %v2771 = vpop.f32.mrb[0].mxu0
        %v2772 = vadd.f32 0.0, %v2771
        %v2773 = vpop.f32.mrb[0].mxu0
        %v2774 = vpop.f32.mrb[0].mxu0
        %v2775 = vadd.f32 0.0, %v2774
        %v2776 = vpop.f32.mrb[0].mxu0
        %2777 = vmatprep.mubr.bf16.mxu0 0
        %2778 = vmatmul.mubr.bf16.gmra.mrb[0].mxu0 %v2700
        %v2779 = vpop.f32.mrb[0].mxu0
        %v2780 = vadd.f32 0.0, %v2779
        %v2781 = vpop.f32.mrb[0].mxu0
        %v2782 = vpop.f32.mrb[0].mxu0
        %v2783 = vadd.f32 0.0, %v2782
        %v2784 = vpop.f32.mrb[0].mxu0
        %2785 = vmatprep.mubr.bf16.mxu0 0
        %2786 = vmatmul.mubr.bf16.gmra.mrb[0].mxu0 %v2703
        %v2787 = vpop.f32.mrb[0].mxu0
        %v2788 = vadd.f32 0.0, %v2787
        %v2789 = vpop.f32.mrb[0].mxu0
        %v2790 = vpop.f32.mrb[0].mxu0
        %v2791 = vpop.f32.mrb[0].mxu0
        %2792 = vdwg.mxu0
        %v2793 = vadd.f32 %v2634, %v2740
        %v2794 = vadd.f32 %v2635, %v2743
        %v2795 = vadd.f32 %v2636, %v2748
        %v2796 = vadd.f32 %v2637, %v2751
        %v2797 = vadd.f32 %v2638, %v2756
        %v2798 = vadd.f32 %v2639, %v2759
        %v2799 = vadd.f32 %v2640, %v2764
        %v2800 = vadd.f32 %v2641, %v2767
        %v2801 = vadd.f32 %v2642, %v2772
        %v2802 = vadd.f32 %v2643, %v2775
        %v2803 = vadd.f32 %v2644, %v2780
        %v2804 = vadd.f32 %v2645, %v2783
        %v2805 = vadd.f32 %v2646, %v2788
        %v2806 = vld [vmem:[#allocation2 + $0x10] sm:$0xff]
        %v2807 = vld [vmem:[#allocation2 + $0x18] sm:$0xff]
        %v2808 = vld [vmem:[#allocation2 + $0x20] sm:$0xff]
        %v2809 = vld [vmem:[#allocation2 + $0x28] sm:$0xff]
        %v2810 = vld [vmem:[#allocation2 + $0x30] sm:$0xff]
        %v2811 = vld [vmem:[#allocation2 + $0x38] sm:$0xff]
        %v2812 = vld [vmem:[#allocation2 + $0x40] sm:$0xff]
        %v2813 = vld [vmem:[#allocation2 + $0x48] sm:$0xff]
        %v2814 = vld [vmem:[#allocation2 + $0x50] sm:$0xff]
        %v2815 = vld [vmem:[#allocation2 + $0x58] sm:$0xff]
        %v2816 = vld [vmem:[#allocation2 + $0x60] sm:$0xff]
        %v2817 = vld [vmem:[#allocation2 + $0x68] sm:$0xff]
        %v2818 = vld [vmem:[#allocation2 + $0x70] sm:$0xf]
        %v2819 = vpack.c.bf16 %v2807, %v2806
        %v2820 = vpack.c.bf16 %v2809, %v2808
        %v2821 = vpack.c.bf16 %v2811, %v2810
        %v2822 = vpack.c.bf16 %v2813, %v2812
        %v2823 = vpack.c.bf16 %v2815, %v2814
        %v2824 = vpack.c.bf16 %v2817, %v2816
        %v2825 = vpack.c.bf16 %v2818, %v2818
        %s2826 = scalar_lea.vmem %s3, 64
        %v2827 = vld [vmem:[%s2826] sm:$0xf]
        %v2828 = vld [vmem:[%s2826 + $0x4] sm:$0xf]
        %v2829 = vld [vmem:[%s2826 + $0x8] sm:$0xf]
        %v2830 = vld [vmem:[%s2826 + $0xc] sm:$0xf]
        %v2835 = vunpack.c.l.b16 %v2827
        %v2836 = vunpack.c.l.b16 %v2828
        %v2837 = vunpack.c.l.b16 %v2829
        %v2838 = vunpack.c.l.b16 %v2830
        %v2839 = vpack.c.b16 %v2836, %v2835
        %v2840 = vpack.c.b16 %v2838, %v2837
        %v2844 = vsel %vm721, %v2819, 0
        %v2847 = vsel %vm721, %v2820, 0
        %v2850 = vsel %vm721, %v2821, 0
        %v2853 = vsel %vm721, %v2822, 0
        %v2856 = vsel %vm721, %v2823, 0
        %v2859 = vsel %vm721, %v2824, 0
        %v2862 = vsel %vm721, %v2825, 0
        %2864 = vmatprep.subr.bf16.mxu0 0
        %2865 = vmatpush1.bf16.msra.mxu0 %v2839
        %2866 = vmatprep.subr.bf16.mxu0 0
        %2867 = vmatpush1.bf16.msra.mxu0 %v2840
        %2868 = vmatprep.subr.bf16.mxu0 0
        %2869 = vmatpush1.bf16.msra.mxu0 0
        %2870 = vmatprep.subr.bf16.mxu0 0
        %2871 = vmatpush1.bf16.msra.mxu0 0
        %2872 = vmatprep.subr.bf16.mxu0 0
        %2873 = vmatpush1.bf16.msra.mxu0 0
        %2874 = vmatprep.subr.bf16.mxu0 0
        %2875 = vmatpush1.bf16.msra.mxu0 0
        %2876 = vmatprep.subr.bf16.mxu0 0
        %2877 = vmatpush1.bf16.msra.mxu0 0
        %2878 = vmatprep.subr.bf16.mxu0 0
        %2879 = vmatpush1.bf16.msra.mxu0 0
        %2880 = vmatprep.subr.bf16.mxu0 0
        %2881 = vmatpush1.bf16.msra.mxu0 0
        %2882 = vmatprep.subr.bf16.mxu0 0
        %2883 = vmatpush1.bf16.msra.mxu0 0
        %2884 = vmatprep.subr.bf16.mxu0 0
        %2885 = vmatpush1.bf16.msra.mxu0 0
        %2886 = vmatprep.subr.bf16.mxu0 0
        %2887 = vmatpush1.bf16.msra.mxu0 0
        %2888 = vmatprep.subr.bf16.mxu0 0
        %2889 = vmatpush1.bf16.msra.mxu0 0
        %2890 = vmatprep.subr.bf16.mxu0 0
        %2891 = vmatpush1.bf16.msra.mxu0 0
        %2892 = vmatprep.subr.bf16.mxu0 0
        %2893 = vmatpush1.bf16.msra.mxu0 0
        %2894 = vmatprep.subr.bf16.mxu0 0
        %2895 = vmatpush1.bf16.msra.mxu0 0
        %2896 = vmatprep.mubr.bf16.mxu0 0
        %2897 = vmatmul.mubr.bf16.gmra.mrb[0].mxu0 %v2844
        %v2898 = vpop.f32.mrb[0].mxu0
        %v2899 = vadd.f32 0.0, %v2898
        %v2900 = vpop.f32.mrb[0].mxu0
        %v2901 = vpop.f32.mrb[0].mxu0
        %v2902 = vadd.f32 0.0, %v2901
        %v2903 = vpop.f32.mrb[0].mxu0
        %2904 = vmatprep.mubr.bf16.mxu0 0
        %2905 = vmatmul.mubr.bf16.gmra.mrb[0].mxu0 %v2847
        %v2906 = vpop.f32.mrb[0].mxu0
        %v2907 = vadd.f32 0.0, %v2906
        %v2908 = vpop.f32.mrb[0].mxu0
        %v2909 = vpop.f32.mrb[0].mxu0
        %v2910 = vadd.f32 0.0, %v2909
        %v2911 = vpop.f32.mrb[0].mxu0
        %2912 = vmatprep.mubr.bf16.mxu0 0
        %2913 = vmatmul.mubr.bf16.gmra.mrb[0].mxu0 %v2850
        %v2914 = vpop.f32.mrb[0].mxu0
        %v2915 = vadd.f32 0.0, %v2914
        %v2916 = vpop.f32.mrb[0].mxu0
        %v2917 = vpop.f32.mrb[0].mxu0
        %v2918 = vadd.f32 0.0, %v2917
        %v2919 = vpop.f32.mrb[0].mxu0
        %2920 = vmatprep.mubr.bf16.mxu0 0
        %2921 = vmatmul.mubr.bf16.gmra.mrb[0].mxu0 %v2853
        %v2922 = vpop.f32.mrb[0].mxu0
        %v2923 = vadd.f32 0.0, %v2922
        %v2924 = vpop.f32.mrb[0].mxu0
        %v2925 = vpop.f32.mrb[0].mxu0
        %v2926 = vadd.f32 0.0, %v2925
        %v2927 = vpop.f32.mrb[0].mxu0
        %2928 = vmatprep.mubr.bf16.mxu0 0
        %2929 = vmatmul.mubr.bf16.gmra.mrb[0].mxu0 %v2856
        %v2930 = vpop.f32.mrb[0].mxu0
        %v2931 = vadd.f32 0.0, %v2930
        %v2932 = vpop.f32.mrb[0].mxu0
        %v2933 = vpop.f32.mrb[0].mxu0
        %v2934 = vadd.f32 0.0, %v2933
        %v2935 = vpop.f32.mrb[0].mxu0
        %2936 = vmatprep.mubr.bf16.mxu0 0
        %2937 = vmatmul.mubr.bf16.gmra.mrb[0].mxu0 %v2859
        %v2938 = vpop.f32.mrb[0].mxu0
        %v2939 = vadd.f32 0.0, %v2938
        %v2940 = vpop.f32.mrb[0].mxu0
        %v2941 = vpop.f32.mrb[0].mxu0
        %v2942 = vadd.f32 0.0, %v2941
        %v2943 = vpop.f32.mrb[0].mxu0
        %2944 = vmatprep.mubr.bf16.mxu0 0
        %2945 = vmatmul.mubr.bf16.gmra.mrb[0].mxu0 %v2862
        %v2946 = vpop.f32.mrb[0].mxu0
        %v2947 = vadd.f32 0.0, %v2946
        %v2948 = vpop.f32.mrb[0].mxu0
        %v2949 = vpop.f32.mrb[0].mxu0
        %v2950 = vpop.f32.mrb[0].mxu0
        %2951 = vdwg.mxu0
        %v2952 = vadd.f32 %v2793, %v2899
        %v2953 = vadd.f32 %v2794, %v2902
        %v2954 = vadd.f32 %v2795, %v2907
        %v2955 = vadd.f32 %v2796, %v2910
        %v2956 = vadd.f32 %v2797, %v2915
        %v2957 = vadd.f32 %v2798, %v2918
        %v2958 = vadd.f32 %v2799, %v2923
        %v2959 = vadd.f32 %v2800, %v2926
        %v2960 = vadd.f32 %v2801, %v2931
        %v2961 = vadd.f32 %v2802, %v2934
        %v2962 = vadd.f32 %v2803, %v2939
        %v2963 = vadd.f32 %v2804, %v2942
        %v2964 = vadd.f32 %v2805, %v2947
        %v2965 = vld [vmem:[#allocation2 + $0x11] sm:$0xff]
        %v2966 = vld [vmem:[#allocation2 + $0x19] sm:$0xff]
        %v2967 = vld [vmem:[#allocation2 + $0x21] sm:$0xff]
        %v2968 = vld [vmem:[#allocation2 + $0x29] sm:$0xff]
        %v2969 = vld [vmem:[#allocation2 + $0x31] sm:$0xff]
        %v2970 = vld [vmem:[#allocation2 + $0x39] sm:$0xff]
        %v2971 = vld [vmem:[#allocation2 + $0x41] sm:$0xff]
        %v2972 = vld [vmem:[#allocation2 + $0x49] sm:$0xff]
        %v2973 = vld [vmem:[#allocation2 + $0x51] sm:$0xff]
        %v2974 = vld [vmem:[#allocation2 + $0x59] sm:$0xff]
        %v2975 = vld [vmem:[#allocation2 + $0x61] sm:$0xff]
        %v2976 = vld [vmem:[#allocation2 + $0x69] sm:$0xff]
        %v2977 = vld [vmem:[#allocation2 + $0x71] sm:$0xf]
        %v2978 = vpack.c.bf16 %v2966, %v2965
        %v2979 = vpack.c.bf16 %v2968, %v2967
        %v2980 = vpack.c.bf16 %v2970, %v2969
        %v2981 = vpack.c.bf16 %v2972, %v2971
        %v2982 = vpack.c.bf16 %v2974, %v2973
        %v2983 = vpack.c.bf16 %v2976, %v2975
        %v2984 = vpack.c.bf16 %v2977, %v2977
        %s2985 = scalar_lea.vmem %s3, 80
        %v2986 = vld [vmem:[%s2985] sm:$0xf]
        %v2987 = vld [vmem:[%s2985 + $0x4] sm:$0xf]
        %v2988 = vld [vmem:[%s2985 + $0x8] sm:$0xf]
        %v2989 = vld [vmem:[%s2985 + $0xc] sm:$0xf]
        %v2994 = vunpack.c.l.b16 %v2986
        %v2995 = vunpack.c.l.b16 %v2987
        %v2996 = vunpack.c.l.b16 %v2988
        %v2997 = vunpack.c.l.b16 %v2989
        %v2998 = vpack.c.b16 %v2995, %v2994
        %v2999 = vpack.c.b16 %v2997, %v2996
        %v3003 = vsel %vm721, %v2978, 0
        %v3006 = vsel %vm721, %v2979, 0
        %v3009 = vsel %vm721, %v2980, 0
        %v3012 = vsel %vm721, %v2981, 0
        %v3015 = vsel %vm721, %v2982, 0
        %v3018 = vsel %vm721, %v2983, 0
        %v3021 = vsel %vm721, %v2984, 0
        %3023 = vmatprep.subr.bf16.mxu0 0
        %3024 = vmatpush1.bf16.msra.mxu0 %v2998
        %3025 = vmatprep.subr.bf16.mxu0 0
        %3026 = vmatpush1.bf16.msra.mxu0 %v2999
        %3027 = vmatprep.subr.bf16.mxu0 0
        %3028 = vmatpush1.bf16.msra.mxu0 0
        %3029 = vmatprep.subr.bf16.mxu0 0
        %3030 = vmatpush1.bf16.msra.mxu0 0
        %3031 = vmatprep.subr.bf16.mxu0 0
        %3032 = vmatpush1.bf16.msra.mxu0 0
        %3033 = vmatprep.subr.bf16.mxu0 0
        %3034 = vmatpush1.bf16.msra.mxu0 0
        %3035 = vmatprep.subr.bf16.mxu0 0
        %3036 = vmatpush1.bf16.msra.mxu0 0
        %3037 = vmatprep.subr.bf16.mxu0 0
        %3038 = vmatpush1.bf16.msra.mxu0 0
        %3039 = vmatprep.subr.bf16.mxu0 0
        %3040 = vmatpush1.bf16.msra.mxu0 0
        %3041 = vmatprep.subr.bf16.mxu0 0
        %3042 = vmatpush1.bf16.msra.mxu0 0
        %3043 = vmatprep.subr.bf16.mxu0 0
        %3044 = vmatpush1.bf16.msra.mxu0 0
        %3045 = vmatprep.subr.bf16.mxu0 0
        %3046 = vmatpush1.bf16.msra.mxu0 0
        %3047 = vmatprep.subr.bf16.mxu0 0
        %3048 = vmatpush1.bf16.msra.mxu0 0
        %3049 = vmatprep.subr.bf16.mxu0 0
        %3050 = vmatpush1.bf16.msra.mxu0 0
        %3051 = vmatprep.subr.bf16.mxu0 0
        %3052 = vmatpush1.bf16.msra.mxu0 0
        %3053 = vmatprep.subr.bf16.mxu0 0
        %3054 = vmatpush1.bf16.msra.mxu0 0
        %3055 = vmatprep.mubr.bf16.mxu0 0
        %3056 = vmatmul.mubr.bf16.gmra.mrb[0].mxu0 %v3003
        %v3057 = vpop.f32.mrb[0].mxu0
        %v3058 = vadd.f32 0.0, %v3057
        %v3059 = vpop.f32.mrb[0].mxu0
        %v3060 = vpop.f32.mrb[0].mxu0
        %v3061 = vadd.f32 0.0, %v3060
        %v3062 = vpop.f32.mrb[0].mxu0
        %3063 = vmatprep.mubr.bf16.mxu0 0
        %3064 = vmatmul.mubr.bf16.gmra.mrb[0].mxu0 %v3006
        %v3065 = vpop.f32.mrb[0].mxu0
        %v3066 = vadd.f32 0.0, %v3065
        %v3067 = vpop.f32.mrb[0].mxu0
        %v3068 = vpop.f32.mrb[0].mxu0
        %v3069 = vadd.f32 0.0, %v3068
        %v3070 = vpop.f32.mrb[0].mxu0
        %3071 = vmatprep.mubr.bf16.mxu0 0
        %3072 = vmatmul.mubr.bf16.gmra.mrb[0].mxu0 %v3009
        %v3073 = vpop.f32.mrb[0].mxu0
        %v3074 = vadd.f32 0.0, %v3073
        %v3075 = vpop.f32.mrb[0].mxu0
        %v3076 = vpop.f32.mrb[0].mxu0
        %v3077 = vadd.f32 0.0, %v3076
        %v3078 = vpop.f32.mrb[0].mxu0
        %3079 = vmatprep.mubr.bf16.mxu0 0
        %3080 = vmatmul.mubr.bf16.gmra.mrb[0].mxu0 %v3012
        %v3081 = vpop.f32.mrb[0].mxu0
        %v3082 = vadd.f32 0.0, %v3081
        %v3083 = vpop.f32.mrb[0].mxu0
        %v3084 = vpop.f32.mrb[0].mxu0
        %v3085 = vadd.f32 0.0, %v3084
        %v3086 = vpop.f32.mrb[0].mxu0
        %3087 = vmatprep.mubr.bf16.mxu0 0
        %3088 = vmatmul.mubr.bf16.gmra.mrb[0].mxu0 %v3015
        %v3089 = vpop.f32.mrb[0].mxu0
        %v3090 = vadd.f32 0.0, %v3089
        %v3091 = vpop.f32.mrb[0].mxu0
        %v3092 = vpop.f32.mrb[0].mxu0
        %v3093 = vadd.f32 0.0, %v3092
        %v3094 = vpop.f32.mrb[0].mxu0
        %3095 = vmatprep.mubr.bf16.mxu0 0
        %3096 = vmatmul.mubr.bf16.gmra.mrb[0].mxu0 %v3018
        %v3097 = vpop.f32.mrb[0].mxu0
        %v3098 = vadd.f32 0.0, %v3097
        %v3099 = vpop.f32.mrb[0].mxu0
        %v3100 = vpop.f32.mrb[0].mxu0
        %v3101 = vadd.f32 0.0, %v3100
        %v3102 = vpop.f32.mrb[0].mxu0
        %3103 = vmatprep.mubr.bf16.mxu0 0
        %3104 = vmatmul.mubr.bf16.gmra.mrb[0].mxu0 %v3021
        %v3105 = vpop.f32.mrb[0].mxu0
        %v3106 = vadd.f32 0.0, %v3105
        %v3107 = vpop.f32.mrb[0].mxu0
        %v3108 = vpop.f32.mrb[0].mxu0
        %v3109 = vpop.f32.mrb[0].mxu0
        %3110 = vdwg.mxu0
        %v3111 = vadd.f32 %v2952, %v3058
        %v3112 = vadd.f32 %v2953, %v3061
        %v3113 = vadd.f32 %v2954, %v3066
        %v3114 = vadd.f32 %v2955, %v3069
        %v3115 = vadd.f32 %v2956, %v3074
        %v3116 = vadd.f32 %v2957, %v3077
        %v3117 = vadd.f32 %v2958, %v3082
        %v3118 = vadd.f32 %v2959, %v3085
        %v3119 = vadd.f32 %v2960, %v3090
        %v3120 = vadd.f32 %v2961, %v3093
        %v3121 = vadd.f32 %v2962, %v3098
        %v3122 = vadd.f32 %v2963, %v3101
        %v3123 = vadd.f32 %v2964, %v3106
        %v3124 = vld [vmem:[#allocation2 + $0x19] sm:$0xff]
        %v3125 = vld [vmem:[#allocation2 + $0x21] sm:$0xff]
        %v3126 = vld [vmem:[#allocation2 + $0x29] sm:$0xff]
        %v3127 = vld [vmem:[#allocation2 + $0x31] sm:$0xff]
        %v3128 = vld [vmem:[#allocation2 + $0x39] sm:$0xff]
        %v3129 = vld [vmem:[#allocation2 + $0x41] sm:$0xff]
        %v3130 = vld [vmem:[#allocation2 + $0x49] sm:$0xff]
        %v3131 = vld [vmem:[#allocation2 + $0x51] sm:$0xff]
        %v3132 = vld [vmem:[#allocation2 + $0x59] sm:$0xff]
        %v3133 = vld [vmem:[#allocation2 + $0x61] sm:$0xff]
        %v3134 = vld [vmem:[#allocation2 + $0x69] sm:$0xff]
        %v3135 = vld [vmem:[#allocation2 + $0x71] sm:$0xff]
        %v3136 = vld [vmem:[#allocation2 + $0x79] sm:$0xf]
        %v3137 = vpack.c.bf16 %v3125, %v3124
        %v3138 = vpack.c.bf16 %v3127, %v3126
        %v3139 = vpack.c.bf16 %v3129, %v3128
        %v3140 = vpack.c.bf16 %v3131, %v3130
        %v3141 = vpack.c.bf16 %v3133, %v3132
        %v3142 = vpack.c.bf16 %v3135, %v3134
        %v3143 = vpack.c.bf16 %v3136, %v3136
        %s3144 = scalar_lea.vmem %s3, 96
        %v3145 = vld [vmem:[%s3144] sm:$0xf]
        %v3146 = vld [vmem:[%s3144 + $0x4] sm:$0xf]
        %v3147 = vld [vmem:[%s3144 + $0x8] sm:$0xf]
        %v3148 = vld [vmem:[%s3144 + $0xc] sm:$0xf]
        %v3153 = vunpack.c.l.b16 %v3145
        %v3154 = vunpack.c.l.b16 %v3146
        %v3155 = vunpack.c.l.b16 %v3147
        %v3156 = vunpack.c.l.b16 %v3148
        %v3157 = vpack.c.b16 %v3154, %v3153
        %v3158 = vpack.c.b16 %v3156, %v3155
        %v3162 = vsel %vm721, %v3137, 0
        %v3165 = vsel %vm721, %v3138, 0
        %v3168 = vsel %vm721, %v3139, 0
        %v3171 = vsel %vm721, %v3140, 0
        %v3174 = vsel %vm721, %v3141, 0
        %v3177 = vsel %vm721, %v3142, 0
        %v3180 = vsel %vm721, %v3143, 0
        %3182 = vmatprep.subr.bf16.mxu0 0
        %3183 = vmatpush1.bf16.msra.mxu0 %v3157
        %3184 = vmatprep.subr.bf16.mxu0 0
        %3185 = vmatpush1.bf16.msra.mxu0 %v3158
        %3186 = vmatprep.subr.bf16.mxu0 0
        %3187 = vmatpush1.bf16.msra.mxu0 0
        %3188 = vmatprep.subr.bf16.mxu0 0
        %3189 = vmatpush1.bf16.msra.mxu0 0
        %3190 = vmatprep.subr.bf16.mxu0 0
        %3191 = vmatpush1.bf16.msra.mxu0 0
        %3192 = vmatprep.subr.bf16.mxu0 0
        %3193 = vmatpush1.bf16.msra.mxu0 0
        %3194 = vmatprep.subr.bf16.mxu0 0
        %3195 = vmatpush1.bf16.msra.mxu0 0
        %3196 = vmatprep.subr.bf16.mxu0 0
        %3197 = vmatpush1.bf16.msra.mxu0 0
        %3198 = vmatprep.subr.bf16.mxu0 0
        %3199 = vmatpush1.bf16.msra.mxu0 0
        %3200 = vmatprep.subr.bf16.mxu0 0
        %3201 = vmatpush1.bf16.msra.mxu0 0
        %3202 = vmatprep.subr.bf16.mxu0 0
        %3203 = vmatpush1.bf16.msra.mxu0 0
        %3204 = vmatprep.subr.bf16.mxu0 0
        %3205 = vmatpush1.bf16.msra.mxu0 0
        %3206 = vmatprep.subr.bf16.mxu0 0
        %3207 = vmatpush1.bf16.msra.mxu0 0
        %3208 = vmatprep.subr.bf16.mxu0 0
        %3209 = vmatpush1.bf16.msra.mxu0 0
        %3210 = vmatprep.subr.bf16.mxu0 0
        %3211 = vmatpush1.bf16.msra.mxu0 0
        %3212 = vmatprep.subr.bf16.mxu0 0
        %3213 = vmatpush1.bf16.msra.mxu0 0
        %3214 = vmatprep.mubr.bf16.mxu0 0
        %3215 = vmatmul.mubr.bf16.gmra.mrb[0].mxu0 %v3162
        %v3216 = vpop.f32.mrb[0].mxu0
        %v3217 = vadd.f32 0.0, %v3216
        %v3218 = vpop.f32.mrb[0].mxu0
        %v3219 = vpop.f32.mrb[0].mxu0
        %v3220 = vadd.f32 0.0, %v3219
        %v3221 = vpop.f32.mrb[0].mxu0
        %3222 = vmatprep.mubr.bf16.mxu0 0
        %3223 = vmatmul.mubr.bf16.gmra.mrb[0].mxu0 %v3165
        %v3224 = vpop.f32.mrb[0].mxu0
        %v3225 = vadd.f32 0.0, %v3224
        %v3226 = vpop.f32.mrb[0].mxu0
        %v3227 = vpop.f32.mrb[0].mxu0
        %v3228 = vadd.f32 0.0, %v3227
        %v3229 = vpop.f32.mrb[0].mxu0
        %3230 = vmatprep.mubr.bf16.mxu0 0
        %3231 = vmatmul.mubr.bf16.gmra.mrb[0].mxu0 %v3168
        %v3232 = vpop.f32.mrb[0].mxu0
        %v3233 = vadd.f32 0.0, %v3232
        %v3234 = vpop.f32.mrb[0].mxu0
        %v3235 = vpop.f32.mrb[0].mxu0
        %v3236 = vadd.f32 0.0, %v3235
        %v3237 = vpop.f32.mrb[0].mxu0
        %3238 = vmatprep.mubr.bf16.mxu0 0
        %3239 = vmatmul.mubr.bf16.gmra.mrb[0].mxu0 %v3171
        %v3240 = vpop.f32.mrb[0].mxu0
        %v3241 = vadd.f32 0.0, %v3240
        %v3242 = vpop.f32.mrb[0].mxu0
        %v3243 = vpop.f32.mrb[0].mxu0
        %v3244 = vadd.f32 0.0, %v3243
        %v3245 = vpop.f32.mrb[0].mxu0
        %3246 = vmatprep.mubr.bf16.mxu0 0
        %3247 = vmatmul.mubr.bf16.gmra.mrb[0].mxu0 %v3174
        %v3248 = vpop.f32.mrb[0].mxu0
        %v3249 = vadd.f32 0.0, %v3248
        %v3250 = vpop.f32.mrb[0].mxu0
        %v3251 = vpop.f32.mrb[0].mxu0
        %v3252 = vadd.f32 0.0, %v3251
        %v3253 = vpop.f32.mrb[0].mxu0
        %3254 = vmatprep.mubr.bf16.mxu0 0
        %3255 = vmatmul.mubr.bf16.gmra.mrb[0].mxu0 %v3177
        %v3256 = vpop.f32.mrb[0].mxu0
        %v3257 = vadd.f32 0.0, %v3256
        %v3258 = vpop.f32.mrb[0].mxu0
        %v3259 = vpop.f32.mrb[0].mxu0
        %v3260 = vadd.f32 0.0, %v3259
        %v3261 = vpop.f32.mrb[0].mxu0
        %3262 = vmatprep.mubr.bf16.mxu0 0
        %3263 = vmatmul.mubr.bf16.gmra.mrb[0].mxu0 %v3180
        %v3264 = vpop.f32.mrb[0].mxu0
        %v3265 = vadd.f32 0.0, %v3264
        %v3266 = vpop.f32.mrb[0].mxu0
        %v3267 = vpop.f32.mrb[0].mxu0
        %v3268 = vpop.f32.mrb[0].mxu0
        %3269 = vdwg.mxu0
        %v3270 = vadd.f32 %v3111, %v3217
        %v3271 = vadd.f32 %v3112, %v3220
        %v3272 = vadd.f32 %v3113, %v3225
        %v3273 = vadd.f32 %v3114, %v3228
        %v3274 = vadd.f32 %v3115, %v3233
        %v3275 = vadd.f32 %v3116, %v3236
        %v3276 = vadd.f32 %v3117, %v3241
        %v3277 = vadd.f32 %v3118, %v3244
        %v3278 = vadd.f32 %v3119, %v3249
        %v3279 = vadd.f32 %v3120, %v3252
        %v3280 = vadd.f32 %v3121, %v3257
        %v3281 = vadd.f32 %v3122, %v3260
        %v3282 = vadd.f32 %v3123, %v3265
        %v3283 = vld [vmem:[#allocation2 + $0x1a] sm:$0xff]
        %v3284 = vld [vmem:[#allocation2 + $0x22] sm:$0xff]
        %v3285 = vld [vmem:[#allocation2 + $0x2a] sm:$0xff]
        %v3286 = vld [vmem:[#allocation2 + $0x32] sm:$0xff]
        %v3287 = vld [vmem:[#allocation2 + $0x3a] sm:$0xff]
        %v3288 = vld [vmem:[#allocation2 + $0x42] sm:$0xff]
        %v3289 = vld [vmem:[#allocation2 + $0x4a] sm:$0xff]
        %v3290 = vld [vmem:[#allocation2 + $0x52] sm:$0xff]
        %v3291 = vld [vmem:[#allocation2 + $0x5a] sm:$0xff]
        %v3292 = vld [vmem:[#allocation2 + $0x62] sm:$0xff]
        %v3293 = vld [vmem:[#allocation2 + $0x6a] sm:$0xff]
        %v3294 = vld [vmem:[#allocation2 + $0x72] sm:$0xff]
        %v3295 = vld [vmem:[#allocation2 + $0x7a] sm:$0xf]
        %v3296 = vpack.c.bf16 %v3284, %v3283
        %v3297 = vpack.c.bf16 %v3286, %v3285
        %v3298 = vpack.c.bf16 %v3288, %v3287
        %v3299 = vpack.c.bf16 %v3290, %v3289
        %v3300 = vpack.c.bf16 %v3292, %v3291
        %v3301 = vpack.c.bf16 %v3294, %v3293
        %v3302 = vpack.c.bf16 %v3295, %v3295
        %s3303 = scalar_lea.vmem %s3, 112
        %v3304 = vld [vmem:[%s3303] sm:$0xf]
        %v3305 = vld [vmem:[%s3303 + $0x4] sm:$0xf]
        %v3306 = vld [vmem:[%s3303 + $0x8] sm:$0xf]
        %v3307 = vld [vmem:[%s3303 + $0xc] sm:$0xf]
        %v3312 = vunpack.c.l.b16 %v3304
        %v3313 = vunpack.c.l.b16 %v3305
        %v3314 = vunpack.c.l.b16 %v3306
        %v3315 = vunpack.c.l.b16 %v3307
        %v3316 = vpack.c.b16 %v3313, %v3312
        %v3317 = vpack.c.b16 %v3315, %v3314
        %v3321 = vsel %vm721, %v3296, 0
        %v3324 = vsel %vm721, %v3297, 0
        %v3327 = vsel %vm721, %v3298, 0
        %v3330 = vsel %vm721, %v3299, 0
        %v3333 = vsel %vm721, %v3300, 0
        %v3336 = vsel %vm721, %v3301, 0
        %v3339 = vsel %vm721, %v3302, 0
        %3341 = vmatprep.subr.bf16.mxu0 0
        %3342 = vmatpush1.bf16.msra.mxu0 %v3316
        %3343 = vmatprep.subr.bf16.mxu0 0
        %3344 = vmatpush1.bf16.msra.mxu0 %v3317
        %3345 = vmatprep.subr.bf16.mxu0 0
        %3346 = vmatpush1.bf16.msra.mxu0 0
        %3347 = vmatprep.subr.bf16.mxu0 0
        %3348 = vmatpush1.bf16.msra.mxu0 0
        %3349 = vmatprep.subr.bf16.mxu0 0
        %3350 = vmatpush1.bf16.msra.mxu0 0
        %3351 = vmatprep.subr.bf16.mxu0 0
        %3352 = vmatpush1.bf16.msra.mxu0 0
        %3353 = vmatprep.subr.bf16.mxu0 0
        %3354 = vmatpush1.bf16.msra.mxu0 0
        %3355 = vmatprep.subr.bf16.mxu0 0
        %3356 = vmatpush1.bf16.msra.mxu0 0
        %3357 = vmatprep.subr.bf16.mxu0 0
        %3358 = vmatpush1.bf16.msra.mxu0 0
        %3359 = vmatprep.subr.bf16.mxu0 0
        %3360 = vmatpush1.bf16.msra.mxu0 0
        %3361 = vmatprep.subr.bf16.mxu0 0
        %3362 = vmatpush1.bf16.msra.mxu0 0
        %3363 = vmatprep.subr.bf16.mxu0 0
        %3364 = vmatpush1.bf16.msra.mxu0 0
        %3365 = vmatprep.subr.bf16.mxu0 0
        %3366 = vmatpush1.bf16.msra.mxu0 0
        %3367 = vmatprep.subr.bf16.mxu0 0
        %3368 = vmatpush1.bf16.msra.mxu0 0
        %3369 = vmatprep.subr.bf16.mxu0 0
        %3370 = vmatpush1.bf16.msra.mxu0 0
        %3371 = vmatprep.subr.bf16.mxu0 0
        %3372 = vmatpush1.bf16.msra.mxu0 0
        %3373 = vmatprep.mubr.bf16.mxu0 0
        %3374 = vmatmul.mubr.bf16.gmra.mrb[0].mxu0 %v3321
        %v3375 = vpop.f32.mrb[0].mxu0
        %v3376 = vadd.f32 0.0, %v3375
        %v3377 = vpop.f32.mrb[0].mxu0
        %v3378 = vpop.f32.mrb[0].mxu0
        %v3379 = vadd.f32 0.0, %v3378
        %v3380 = vpop.f32.mrb[0].mxu0
        %3381 = vmatprep.mubr.bf16.mxu0 0
        %3382 = vmatmul.mubr.bf16.gmra.mrb[0].mxu0 %v3324
        %v3383 = vpop.f32.mrb[0].mxu0
        %v3384 = vadd.f32 0.0, %v3383
        %v3385 = vpop.f32.mrb[0].mxu0
        %v3386 = vpop.f32.mrb[0].mxu0
        %v3387 = vadd.f32 0.0, %v3386
        %v3388 = vpop.f32.mrb[0].mxu0
        %3389 = vmatprep.mubr.bf16.mxu0 0
        %3390 = vmatmul.mubr.bf16.gmra.mrb[0].mxu0 %v3327
        %v3391 = vpop.f32.mrb[0].mxu0
        %v3392 = vadd.f32 0.0, %v3391
        %v3393 = vpop.f32.mrb[0].mxu0
        %v3394 = vpop.f32.mrb[0].mxu0
        %v3395 = vadd.f32 0.0, %v3394
        %v3396 = vpop.f32.mrb[0].mxu0
        %3397 = vmatprep.mubr.bf16.mxu0 0
        %3398 = vmatmul.mubr.bf16.gmra.mrb[0].mxu0 %v3330
        %v3399 = vpop.f32.mrb[0].mxu0
        %v3400 = vadd.f32 0.0, %v3399
        %v3401 = vpop.f32.mrb[0].mxu0
        %v3402 = vpop.f32.mrb[0].mxu0
        %v3403 = vadd.f32 0.0, %v3402
        %v3404 = vpop.f32.mrb[0].mxu0
        %3405 = vmatprep.mubr.bf16.mxu0 0
        %3406 = vmatmul.mubr.bf16.gmra.mrb[0].mxu0 %v3333
        %v3407 = vpop.f32.mrb[0].mxu0
        %v3408 = vadd.f32 0.0, %v3407
        %v3409 = vpop.f32.mrb[0].mxu0
        %v3410 = vpop.f32.mrb[0].mxu0
        %v3411 = vadd.f32 0.0, %v3410
        %v3412 = vpop.f32.mrb[0].mxu0
        %3413 = vmatprep.mubr.bf16.mxu0 0
        %3414 = vmatmul.mubr.bf16.gmra.mrb[0].mxu0 %v3336
        %v3415 = vpop.f32.mrb[0].mxu0
        %v3416 = vadd.f32 0.0, %v3415
        %v3417 = vpop.f32.mrb[0].mxu0
        %v3418 = vpop.f32.mrb[0].mxu0
        %v3419 = vadd.f32 0.0, %v3418
        %v3420 = vpop.f32.mrb[0].mxu0
        %3421 = vmatprep.mubr.bf16.mxu0 0
        %3422 = vmatmul.mubr.bf16.gmra.mrb[0].mxu0 %v3339
        %v3423 = vpop.f32.mrb[0].mxu0
        %v3424 = vadd.f32 0.0, %v3423
        %v3425 = vpop.f32.mrb[0].mxu0
        %v3426 = vpop.f32.mrb[0].mxu0
        %v3427 = vpop.f32.mrb[0].mxu0
        %3428 = vdwg.mxu0
        %v3429 = vadd.f32 %v3270, %v3376
        %v3430 = vadd.f32 %v3271, %v3379
        %v3431 = vadd.f32 %v3272, %v3384
        %v3432 = vadd.f32 %v3273, %v3387
        %v3433 = vadd.f32 %v3274, %v3392
        %v3434 = vadd.f32 %v3275, %v3395
        %v3435 = vadd.f32 %v3276, %v3400
        %v3436 = vadd.f32 %v3277, %v3403
        %v3437 = vadd.f32 %v3278, %v3408
        %v3438 = vadd.f32 %v3279, %v3411
        %v3439 = vadd.f32 %v3280, %v3416
        %v3440 = vadd.f32 %v3281, %v3419
        %v3441 = vadd.f32 %v3282, %v3424
        %v3442 = vld [vmem:[#allocation2 + $0x1b] sm:$0xff]
        %v3443 = vld [vmem:[#allocation2 + $0x23] sm:$0xff]
        %v3444 = vld [vmem:[#allocation2 + $0x2b] sm:$0xff]
        %v3445 = vld [vmem:[#allocation2 + $0x33] sm:$0xff]
        %v3446 = vld [vmem:[#allocation2 + $0x3b] sm:$0xff]
        %v3447 = vld [vmem:[#allocation2 + $0x43] sm:$0xff]
        %v3448 = vld [vmem:[#allocation2 + $0x4b] sm:$0xff]
        %v3449 = vld [vmem:[#allocation2 + $0x53] sm:$0xff]
        %v3450 = vld [vmem:[#allocation2 + $0x5b] sm:$0xff]
        %v3451 = vld [vmem:[#allocation2 + $0x63] sm:$0xff]
        %v3452 = vld [vmem:[#allocation2 + $0x6b] sm:$0xff]
        %v3453 = vld [vmem:[#allocation2 + $0x73] sm:$0xff]
        %v3454 = vld [vmem:[#allocation2 + $0x7b] sm:$0xf]
        %v3455 = vpack.c.bf16 %v3443, %v3442
        %v3456 = vpack.c.bf16 %v3445, %v3444
        %v3457 = vpack.c.bf16 %v3447, %v3446
        %v3458 = vpack.c.bf16 %v3449, %v3448
        %v3459 = vpack.c.bf16 %v3451, %v3450
        %v3460 = vpack.c.bf16 %v3453, %v3452
        %v3461 = vpack.c.bf16 %v3454, %v3454
        %s3462 = scalar_lea.vmem %s3, 128
        %v3463 = vld [vmem:[%s3462] sm:$0xf]
        %v3464 = vld [vmem:[%s3462 + $0x4] sm:$0xf]
        %v3465 = vld [vmem:[%s3462 + $0x8] sm:$0xf]
        %v3466 = vld [vmem:[%s3462 + $0xc] sm:$0xf]
        %v3471 = vunpack.c.l.b16 %v3463
        %v3472 = vunpack.c.l.b16 %v3464
        %v3473 = vunpack.c.l.b16 %v3465
        %v3474 = vunpack.c.l.b16 %v3466
        %v3475 = vpack.c.b16 %v3472, %v3471
        %v3476 = vpack.c.b16 %v3474, %v3473
        %v3480 = vsel %vm721, %v3455, 0
        %v3483 = vsel %vm721, %v3456, 0
        %v3486 = vsel %vm721, %v3457, 0
        %v3489 = vsel %vm721, %v3458, 0
        %v3492 = vsel %vm721, %v3459, 0
        %v3495 = vsel %vm721, %v3460, 0
        %v3498 = vsel %vm721, %v3461, 0
        %3500 = vmatprep.subr.bf16.mxu0 0
        %3501 = vmatpush1.bf16.msra.mxu0 %v3475
        %3502 = vmatprep.subr.bf16.mxu0 0
        %3503 = vmatpush1.bf16.msra.mxu0 %v3476
        %3504 = vmatprep.subr.bf16.mxu0 0
        %3505 = vmatpush1.bf16.msra.mxu0 0
        %3506 = vmatprep.subr.bf16.mxu0 0
        %3507 = vmatpush1.bf16.msra.mxu0 0
        %3508 = vmatprep.subr.bf16.mxu0 0
        %3509 = vmatpush1.bf16.msra.mxu0 0
        %3510 = vmatprep.subr.bf16.mxu0 0
        %3511 = vmatpush1.bf16.msra.mxu0 0
        %3512 = vmatprep.subr.bf16.mxu0 0
        %3513 = vmatpush1.bf16.msra.mxu0 0
        %3514 = vmatprep.subr.bf16.mxu0 0
        %3515 = vmatpush1.bf16.msra.mxu0 0
        %3516 = vmatprep.subr.bf16.mxu0 0
        %3517 = vmatpush1.bf16.msra.mxu0 0
        %3518 = vmatprep.subr.bf16.mxu0 0
        %3519 = vmatpush1.bf16.msra.mxu0 0
        %3520 = vmatprep.subr.bf16.mxu0 0
        %3521 = vmatpush1.bf16.msra.mxu0 0
        %3522 = vmatprep.subr.bf16.mxu0 0
        %3523 = vmatpush1.bf16.msra.mxu0 0
        %3524 = vmatprep.subr.bf16.mxu0 0
        %3525 = vmatpush1.bf16.msra.mxu0 0
        %3526 = vmatprep.subr.bf16.mxu0 0
        %3527 = vmatpush1.bf16.msra.mxu0 0
        %3528 = vmatprep.subr.bf16.mxu0 0
        %3529 = vmatpush1.bf16.msra.mxu0 0
        %3530 = vmatprep.subr.bf16.mxu0 0
        %3531 = vmatpush1.bf16.msra.mxu0 0
        %3532 = vmatprep.mubr.bf16.mxu0 0
        %3533 = vmatmul.mubr.bf16.gmra.mrb[0].mxu0 %v3480
        %v3534 = vpop.f32.mrb[0].mxu0
        %v3535 = vadd.f32 0.0, %v3534
        %v3536 = vpop.f32.mrb[0].mxu0
        %v3537 = vpop.f32.mrb[0].mxu0
        %v3538 = vadd.f32 0.0, %v3537
        %v3539 = vpop.f32.mrb[0].mxu0
        %3540 = vmatprep.mubr.bf16.mxu0 0
        %3541 = vmatmul.mubr.bf16.gmra.mrb[0].mxu0 %v3483
        %v3542 = vpop.f32.mrb[0].mxu0
        %v3543 = vadd.f32 0.0, %v3542
        %v3544 = vpop.f32.mrb[0].mxu0
        %v3545 = vpop.f32.mrb[0].mxu0
        %v3546 = vadd.f32 0.0, %v3545
        %v3547 = vpop.f32.mrb[0].mxu0
        %3548 = vmatprep.mubr.bf16.mxu0 0
        %3549 = vmatmul.mubr.bf16.gmra.mrb[0].mxu0 %v3486
        %v3550 = vpop.f32.mrb[0].mxu0
        %v3551 = vadd.f32 0.0, %v3550
        %v3552 = vpop.f32.mrb[0].mxu0
        %v3553 = vpop.f32.mrb[0].mxu0
        %v3554 = vadd.f32 0.0, %v3553
        %v3555 = vpop.f32.mrb[0].mxu0
        %3556 = vmatprep.mubr.bf16.mxu0 0
        %3557 = vmatmul.mubr.bf16.gmra.mrb[0].mxu0 %v3489
        %v3558 = vpop.f32.mrb[0].mxu0
        %v3559 = vadd.f32 0.0, %v3558
        %v3560 = vpop.f32.mrb[0].mxu0
        %v3561 = vpop.f32.mrb[0].mxu0
        %v3562 = vadd.f32 0.0, %v3561
        %v3563 = vpop.f32.mrb[0].mxu0
        %3564 = vmatprep.mubr.bf16.mxu0 0
        %3565 = vmatmul.mubr.bf16.gmra.mrb[0].mxu0 %v3492
        %v3566 = vpop.f32.mrb[0].mxu0
        %v3567 = vadd.f32 0.0, %v3566
        %v3568 = vpop.f32.mrb[0].mxu0
        %v3569 = vpop.f32.mrb[0].mxu0
        %v3570 = vadd.f32 0.0, %v3569
        %v3571 = vpop.f32.mrb[0].mxu0
        %3572 = vmatprep.mubr.bf16.mxu0 0
        %3573 = vmatmul.mubr.bf16.gmra.mrb[0].mxu0 %v3495
        %v3574 = vpop.f32.mrb[0].mxu0
        %v3575 = vadd.f32 0.0, %v3574
        %v3576 = vpop.f32.mrb[0].mxu0
        %v3577 = vpop.f32.mrb[0].mxu0
        %v3578 = vadd.f32 0.0, %v3577
        %v3579 = vpop.f32.mrb[0].mxu0
        %3580 = vmatprep.mubr.bf16.mxu0 0
        %3581 = vmatmul.mubr.bf16.gmra.mrb[0].mxu0 %v3498
        %v3582 = vpop.f32.mrb[0].mxu0
        %v3583 = vadd.f32 0.0, %v3582
        %v3584 = vpop.f32.mrb[0].mxu0
        %v3585 = vpop.f32.mrb[0].mxu0
        %v3586 = vpop.f32.mrb[0].mxu0
        %3587 = vdwg.mxu0
        %v3588 = vadd.f32 %v3429, %v3535
        %v3589 = vadd.f32 %v3430, %v3538
        %v3590 = vadd.f32 %v3431, %v3543
        %v3591 = vadd.f32 %v3432, %v3546
        %v3592 = vadd.f32 %v3433, %v3551
        %v3593 = vadd.f32 %v3434, %v3554
        %v3594 = vadd.f32 %v3435, %v3559
        %v3595 = vadd.f32 %v3436, %v3562
        %v3596 = vadd.f32 %v3437, %v3567
        %v3597 = vadd.f32 %v3438, %v3570
        %v3598 = vadd.f32 %v3439, %v3575
        %v3599 = vadd.f32 %v3440, %v3578
        %v3600 = vadd.f32 %v3441, %v3583
        %v3601 = vld [vmem:[%s4] sm:$0x1]
        %v3603 = vlaneseq
        %v3604 = vshrl.u32 %v3603, 7
        %v3605 = vsub.s32 0, %v3604
        %v3606 = vrot.slane %v3601, %v3605
        %v3608 = vadd.f32 %v3588, %v3606
        %v3609 = vadd.f32 %v3589, %v3606
        %v3610 = vadd.f32 %v3590, %v3606
        %v3611 = vadd.f32 %v3591, %v3606
        %v3612 = vadd.f32 %v3592, %v3606
        %v3613 = vadd.f32 %v3593, %v3606
        %v3614 = vadd.f32 %v3594, %v3606
        %v3615 = vadd.f32 %v3595, %v3606
        %v3616 = vadd.f32 %v3596, %v3606
        %v3617 = vadd.f32 %v3597, %v3606
        %v3618 = vadd.f32 %v3598, %v3606
        %v3619 = vadd.f32 %v3599, %v3606
        %v3620 = vadd.f32 %v3600, %v3606
        %v3621 = vmax.f32 %v3608, 0.0
        %v3622 = vmax.f32 %v3609, 0.0
        %v3623 = vmax.f32 %v3610, 0.0
        %v3624 = vmax.f32 %v3611, 0.0
        %v3625 = vmax.f32 %v3612, 0.0
        %v3626 = vmax.f32 %v3613, 0.0
        %v3627 = vmax.f32 %v3614, 0.0
        %v3628 = vmax.f32 %v3615, 0.0
        %v3629 = vmax.f32 %v3616, 0.0
        %v3630 = vmax.f32 %v3617, 0.0
        %v3631 = vmax.f32 %v3618, 0.0
        %v3632 = vmax.f32 %v3619, 0.0
        %v3633 = vmax.f32 %v3620, 0.0
        %v3634 = vmul.f32 %v3621, %v2109
        %v3635 = vmul.f32 %v3622, %v2114
        %v3636 = vmul.f32 %v3623, %v2119
        %v3637 = vmul.f32 %v3624, %v2124
        %v3638 = vmul.f32 %v3625, %v2129
        %v3639 = vmul.f32 %v3626, %v2134
        %v3640 = vmul.f32 %v3627, %v2139
        %v3641 = vmul.f32 %v3628, %v2144
        %v3642 = vmul.f32 %v3629, %v2149
        %v3643 = vmul.f32 %v3630, %v2154
        %v3644 = vmul.f32 %v3631, %v2159
        %v3645 = vmul.f32 %v3632, %v2164
        %v3646 = vmul.f32 %v3633, %v2169
        %3647 = vst.msk [vmem:[#allocation3 + $0x10] sm:$0xff] %vm740, %v3634
        %3648 = vst.msk [vmem:[#allocation3 + $0x18] sm:$0xff] %vm740, %v3635
        %3649 = vst.msk [vmem:[#allocation3 + $0x20] sm:$0xff] %vm740, %v3636
        %3650 = vst.msk [vmem:[#allocation3 + $0x28] sm:$0xff] %vm740, %v3637
        %3651 = vst.msk [vmem:[#allocation3 + $0x30] sm:$0xff] %vm740, %v3638
        %3652 = vst.msk [vmem:[#allocation3 + $0x38] sm:$0xff] %vm740, %v3639
        %3653 = vst.msk [vmem:[#allocation3 + $0x40] sm:$0xff] %vm740, %v3640
        %3654 = vst.msk [vmem:[#allocation3 + $0x48] sm:$0xff] %vm740, %v3641
        %3655 = vst.msk [vmem:[#allocation3 + $0x50] sm:$0xff] %vm740, %v3642
        %3656 = vst.msk [vmem:[#allocation3 + $0x58] sm:$0xff] %vm740, %v3643
        %3657 = vst.msk [vmem:[#allocation3 + $0x60] sm:$0xff] %vm740, %v3644
        %3658 = vst.msk [vmem:[#allocation3 + $0x68] sm:$0xff] %vm740, %v3645
        %3659 = vst.msk [vmem:[#allocation3 + $0x70] sm:$0xf] %vm757, %v3646
        %v3660 = vld [vmem:[#allocation3 + $0x5] sm:$0xff]
        %v3661 = vld [vmem:[#allocation3 + $0xd] sm:$0xff]
        %v3662 = vld [vmem:[#allocation3 + $0x15] sm:$0xff]
        %v3663 = vld [vmem:[#allocation3 + $0x1d] sm:$0xff]
        %v3664 = vld [vmem:[#allocation3 + $0x25] sm:$0xff]
        %v3665 = vld [vmem:[#allocation3 + $0x2d] sm:$0xff]
        %v3666 = vld [vmem:[#allocation3 + $0x35] sm:$0xff]
        %v3667 = vld [vmem:[#allocation3 + $0x3d] sm:$0xff]
        %v3668 = vld [vmem:[#allocation3 + $0x45] sm:$0xff]
        %v3669 = vld [vmem:[#allocation3 + $0x4d] sm:$0xff]
        %v3670 = vld [vmem:[#allocation3 + $0x55] sm:$0xff]
        %v3671 = vld [vmem:[#allocation3 + $0x5d] sm:$0xff]
        %v3672 = vld [vmem:[#allocation3 + $0x65] sm:$0xf]
        %v3673 = vpack.c.bf16 %v3661, %v3660
        %v3674 = vpack.c.bf16 %v3663, %v3662
        %v3675 = vpack.c.bf16 %v3665, %v3664
        %v3676 = vpack.c.bf16 %v3667, %v3666
        %v3677 = vpack.c.bf16 %v3669, %v3668
        %v3678 = vpack.c.bf16 %v3671, %v3670
        %v3679 = vpack.c.bf16 %v3672, %v3672
        %v3680 = vld [vmem:[%s5] sm:$0xf]
        %v3681 = vld [vmem:[%s5 + $0x4] sm:$0xf]
        %v3682 = vld [vmem:[%s5 + $0x8] sm:$0xf]
        %v3683 = vld [vmem:[%s5 + $0xc] sm:$0xf]
        %v3684 = vld [vmem:[%s5 + $0x10] sm:$0xf]
        %v3685 = vld [vmem:[%s5 + $0x14] sm:$0xf]
        %v3686 = vld [vmem:[%s5 + $0x18] sm:$0xf]
        %v3687 = vld [vmem:[%s5 + $0x1c] sm:$0xf]
        %v3688 = vld [vmem:[#allocation3 + $0x6] sm:$0xff]
        %v3689 = vld [vmem:[#allocation3 + $0xe] sm:$0xff]
        %v3690 = vld [vmem:[#allocation3 + $0x16] sm:$0xff]
        %v3691 = vld [vmem:[#allocation3 + $0x1e] sm:$0xff]
        %v3692 = vld [vmem:[#allocation3 + $0x26] sm:$0xff]
        %v3693 = vld [vmem:[#allocation3 + $0x2e] sm:$0xff]
        %v3694 = vld [vmem:[#allocation3 + $0x36] sm:$0xff]
        %v3695 = vld [vmem:[#allocation3 + $0x3e] sm:$0xff]
        %v3696 = vld [vmem:[#allocation3 + $0x46] sm:$0xff]
        %v3697 = vld [vmem:[#allocation3 + $0x4e] sm:$0xff]
        %v3698 = vld [vmem:[#allocation3 + $0x56] sm:$0xff]
        %v3699 = vld [vmem:[#allocation3 + $0x5e] sm:$0xff]
        %v3700 = vld [vmem:[#allocation3 + $0x66] sm:$0xf]
        %v3701 = vpack.c.bf16 %v3689, %v3688
        %v3702 = vpack.c.bf16 %v3691, %v3690
        %v3703 = vpack.c.bf16 %v3693, %v3692
        %v3704 = vpack.c.bf16 %v3695, %v3694
        %v3705 = vpack.c.bf16 %v3697, %v3696
        %v3706 = vpack.c.bf16 %v3699, %v3698
        %v3707 = vpack.c.bf16 %v3700, %v3700
        %s3708 = scalar_lea.vmem %s5, 32
        %v3709 = vld [vmem:[%s3708] sm:$0xf]
        %v3710 = vld [vmem:[%s3708 + $0x4] sm:$0xf]
        %v3711 = vld [vmem:[%s3708 + $0x8] sm:$0xf]
        %v3712 = vld [vmem:[%s3708 + $0xc] sm:$0xf]
        %v3713 = vld [vmem:[%s3708 + $0x10] sm:$0xf]
        %v3714 = vld [vmem:[%s3708 + $0x14] sm:$0xf]
        %v3715 = vld [vmem:[%s3708 + $0x18] sm:$0xf]
        %v3716 = vld [vmem:[%s3708 + $0x1c] sm:$0xf]
        %v3725 = vunpack.c.l.b16 %v3709
        %v3726 = vunpack.c.l.b16 %v3710
        %v3727 = vunpack.c.l.b16 %v3711
        %v3728 = vunpack.c.l.b16 %v3712
        %v3729 = vunpack.c.l.b16 %v3713
        %v3730 = vunpack.c.l.b16 %v3714
        %v3731 = vunpack.c.l.b16 %v3715
        %v3732 = vunpack.c.l.b16 %v3716
        %v3733 = vpack.c.b16 %v3726, %v3725
        %v3734 = vpack.c.b16 %v3728, %v3727
        %v3735 = vpack.c.b16 %v3730, %v3729
        %v3736 = vpack.c.b16 %v3732, %v3731
        %v3742 = vsel %vm740, %v3701, 0
        %v3745 = vsel %vm740, %v3702, 0
        %v3748 = vsel %vm740, %v3703, 0
        %v3751 = vsel %vm740, %v3704, 0
        %v3754 = vsel %vm740, %v3705, 0
        %v3757 = vsel %vm740, %v3706, 0
        %v3760 = vsel %vm740, %v3707, 0
        %3762 = vmatprep.subr.bf16.mxu0 0
        %3763 = vmatpush1.bf16.msra.mxu0 %v3733
        %3764 = vmatprep.subr.bf16.mxu0 0
        %3765 = vmatpush1.bf16.msra.mxu0 %v3734
        %3766 = vmatprep.subr.bf16.mxu0 0
        %3767 = vmatpush1.bf16.msra.mxu0 %v3735
        %3768 = vmatprep.subr.bf16.mxu0 0
        %3769 = vmatpush1.bf16.msra.mxu0 %v3736
        %3770 = vmatprep.subr.bf16.mxu0 0
        %3771 = vmatpush1.bf16.msra.mxu0 0
        %3772 = vmatprep.subr.bf16.mxu0 0
        %3773 = vmatpush1.bf16.msra.mxu0 0
        %3774 = vmatprep.subr.bf16.mxu0 0
        %3775 = vmatpush1.bf16.msra.mxu0 0
        %3776 = vmatprep.subr.bf16.mxu0 0
        %3777 = vmatpush1.bf16.msra.mxu0 0
        %3778 = vmatprep.subr.bf16.mxu0 0
        %3779 = vmatpush1.bf16.msra.mxu0 0
        %3780 = vmatprep.subr.bf16.mxu0 0
        %3781 = vmatpush1.bf16.msra.mxu0 0
        %3782 = vmatprep.subr.bf16.mxu0 0
        %3783 = vmatpush1.bf16.msra.mxu0 0
        %3784 = vmatprep.subr.bf16.mxu0 0
        %3785 = vmatpush1.bf16.msra.mxu0 0
        %3786 = vmatprep.subr.bf16.mxu0 0
        %3787 = vmatpush1.bf16.msra.mxu0 0
        %3788 = vmatprep.subr.bf16.mxu0 0
        %3789 = vmatpush1.bf16.msra.mxu0 0
        %3790 = vmatprep.subr.bf16.mxu0 0
        %3791 = vmatpush1.bf16.msra.mxu0 0
        %3792 = vmatprep.subr.bf16.mxu0 0
        %3793 = vmatpush1.bf16.msra.mxu0 0
        %3794 = vmatprep.mubr.bf16.mxu0 0
        %3795 = vmatmul.mubr.bf16.gmra.mrb[0].mxu0 %v3742
        %v3796 = vpop.f32.mrb[0].mxu0
        %v3797 = vadd.f32 0.0, %v3796
        %v3798 = vpop.f32.mrb[0].mxu0
        %v3799 = vpop.f32.mrb[0].mxu0
        %v3800 = vadd.f32 0.0, %v3799
        %v3801 = vpop.f32.mrb[0].mxu0
        %3802 = vmatprep.mubr.bf16.mxu0 0
        %3803 = vmatmul.mubr.bf16.gmra.mrb[0].mxu0 %v3745
        %v3804 = vpop.f32.mrb[0].mxu0
        %v3805 = vadd.f32 0.0, %v3804
        %v3806 = vpop.f32.mrb[0].mxu0
        %v3807 = vpop.f32.mrb[0].mxu0
        %v3808 = vadd.f32 0.0, %v3807
        %v3809 = vpop.f32.mrb[0].mxu0
        %3810 = vmatprep.mubr.bf16.mxu0 0
        %3811 = vmatmul.mubr.bf16.gmra.mrb[0].mxu0 %v3748
        %v3812 = vpop.f32.mrb[0].mxu0
        %v3813 = vadd.f32 0.0, %v3812
        %v3814 = vpop.f32.mrb[0].mxu0
        %v3815 = vpop.f32.mrb[0].mxu0
        %v3816 = vadd.f32 0.0, %v3815
        %v3817 = vpop.f32.mrb[0].mxu0
        %3818 = vmatprep.mubr.bf16.mxu0 0
        %3819 = vmatmul.mubr.bf16.gmra.mrb[0].mxu0 %v3751
        %v3820 = vpop.f32.mrb[0].mxu0
        %v3821 = vadd.f32 0.0, %v3820
        %v3822 = vpop.f32.mrb[0].mxu0
        %v3823 = vpop.f32.mrb[0].mxu0
        %v3824 = vadd.f32 0.0, %v3823
        %v3825 = vpop.f32.mrb[0].mxu0
        %3826 = vmatprep.mubr.bf16.mxu0 0
        %3827 = vmatmul.mubr.bf16.gmra.mrb[0].mxu0 %v3754
        %v3828 = vpop.f32.mrb[0].mxu0
        %v3829 = vadd.f32 0.0, %v3828
        %v3830 = vpop.f32.mrb[0].mxu0
        %v3831 = vpop.f32.mrb[0].mxu0
        %v3832 = vadd.f32 0.0, %v3831
        %v3833 = vpop.f32.mrb[0].mxu0
        %3834 = vmatprep.mubr.bf16.mxu0 0
        %3835 = vmatmul.mubr.bf16.gmra.mrb[0].mxu0 %v3757
        %v3836 = vpop.f32.mrb[0].mxu0
        %v3837 = vadd.f32 0.0, %v3836
        %v3838 = vpop.f32.mrb[0].mxu0
        %v3839 = vpop.f32.mrb[0].mxu0
        %v3840 = vadd.f32 0.0, %v3839
        %v3841 = vpop.f32.mrb[0].mxu0
        %3842 = vmatprep.mubr.bf16.mxu0 0
        %3843 = vmatmul.mubr.bf16.gmra.mrb[0].mxu0 %v3760
        %v3844 = vpop.f32.mrb[0].mxu0
        %v3845 = vadd.f32 0.0, %v3844
        %v3846 = vpop.f32.mrb[0].mxu0
        %v3847 = vpop.f32.mrb[0].mxu0
        %v3848 = vpop.f32.mrb[0].mxu0
        %3849 = vdwg.mxu0
        %v3858 = vunpack.c.l.b16 %v3680
        %v3859 = vunpack.c.l.b16 %v3681
        %v3860 = vunpack.c.l.b16 %v3682
        %v3861 = vunpack.c.l.b16 %v3683
        %v3862 = vunpack.c.l.b16 %v3684
        %v3863 = vunpack.c.l.b16 %v3685
        %v3864 = vunpack.c.l.b16 %v3686
        %v3865 = vunpack.c.l.b16 %v3687
        %v3866 = vpack.c.b16 %v3859, %v3858
        %v3867 = vpack.c.b16 %v3861, %v3860
        %v3868 = vpack.c.b16 %v3863, %v3862
        %v3869 = vpack.c.b16 %v3865, %v3864
        %v3875 = vsel %vm740, %v3673, 0
        %v3878 = vsel %vm740, %v3674, 0
        %v3881 = vsel %vm740, %v3675, 0
        %v3884 = vsel %vm740, %v3676, 0
        %v3887 = vsel %vm740, %v3677, 0
        %v3890 = vsel %vm740, %v3678, 0
        %v3893 = vsel %vm740, %v3679, 0
        %3895 = vmatprep.subr.bf16.mxu0 0
        %3896 = vmatpush1.bf16.msra.mxu0 %v3866
        %3897 = vmatprep.subr.bf16.mxu0 0
        %3898 = vmatpush1.bf16.msra.mxu0 %v3867
        %3899 = vmatprep.subr.bf16.mxu0 0
        %3900 = vmatpush1.bf16.msra.mxu0 %v3868
        %3901 = vmatprep.subr.bf16.mxu0 0
        %3902 = vmatpush1.bf16.msra.mxu0 %v3869
        %3903 = vmatprep.subr.bf16.mxu0 0
        %3904 = vmatpush1.bf16.msra.mxu0 0
        %3905 = vmatprep.subr.bf16.mxu0 0
        %3906 = vmatpush1.bf16.msra.mxu0 0
        %3907 = vmatprep.subr.bf16.mxu0 0
        %3908 = vmatpush1.bf16.msra.mxu0 0
        %3909 = vmatprep.subr.bf16.mxu0 0
        %3910 = vmatpush1.bf16.msra.mxu0 0
        %3911 = vmatprep.subr.bf16.mxu0 0
        %3912 = vmatpush1.bf16.msra.mxu0 0
        %3913 = vmatprep.subr.bf16.mxu0 0
        %3914 = vmatpush1.bf16.msra.mxu0 0
        %3915 = vmatprep.subr.bf16.mxu0 0
        %3916 = vmatpush1.bf16.msra.mxu0 0
        %3917 = vmatprep.subr.bf16.mxu0 0
        %3918 = vmatpush1.bf16.msra.mxu0 0
        %3919 = vmatprep.subr.bf16.mxu0 0
        %3920 = vmatpush1.bf16.msra.mxu0 0
        %3921 = vmatprep.subr.bf16.mxu0 0
        %3922 = vmatpush1.bf16.msra.mxu0 0
        %3923 = vmatprep.subr.bf16.mxu0 0
        %3924 = vmatpush1.bf16.msra.mxu0 0
        %3925 = vmatprep.subr.bf16.mxu0 0
        %3926 = vmatpush1.bf16.msra.mxu0 0
        %3927 = vmatprep.mubr.bf16.mxu0 0
        %3928 = vmatmul.mubr.bf16.gmra.mrb[0].mxu0 %v3875
        %v3929 = vpop.f32.mrb[0].mxu0
        %v3930 = vadd.f32 %v3797, %v3929
        %v3931 = vpop.f32.mrb[0].mxu0
        %v3932 = vpop.f32.mrb[0].mxu0
        %v3933 = vadd.f32 %v3800, %v3932
        %v3934 = vpop.f32.mrb[0].mxu0
        %3935 = vmatprep.mubr.bf16.mxu0 0
        %3936 = vmatmul.mubr.bf16.gmra.mrb[0].mxu0 %v3878
        %v3937 = vpop.f32.mrb[0].mxu0
        %v3938 = vadd.f32 %v3805, %v3937
        %v3939 = vpop.f32.mrb[0].mxu0
        %v3940 = vpop.f32.mrb[0].mxu0
        %v3941 = vadd.f32 %v3808, %v3940
        %v3942 = vpop.f32.mrb[0].mxu0
        %3943 = vmatprep.mubr.bf16.mxu0 0
        %3944 = vmatmul.mubr.bf16.gmra.mrb[0].mxu0 %v3881
        %v3945 = vpop.f32.mrb[0].mxu0
        %v3946 = vadd.f32 %v3813, %v3945
        %v3947 = vpop.f32.mrb[0].mxu0
        %v3948 = vpop.f32.mrb[0].mxu0
        %v3949 = vadd.f32 %v3816, %v3948
        %v3950 = vpop.f32.mrb[0].mxu0
        %3951 = vmatprep.mubr.bf16.mxu0 0
        %3952 = vmatmul.mubr.bf16.gmra.mrb[0].mxu0 %v3884
        %v3953 = vpop.f32.mrb[0].mxu0
        %v3954 = vadd.f32 %v3821, %v3953
        %v3955 = vpop.f32.mrb[0].mxu0
        %v3956 = vpop.f32.mrb[0].mxu0
        %v3957 = vadd.f32 %v3824, %v3956
        %v3958 = vpop.f32.mrb[0].mxu0
        %3959 = vmatprep.mubr.bf16.mxu0 0
        %3960 = vmatmul.mubr.bf16.gmra.mrb[0].mxu0 %v3887
        %v3961 = vpop.f32.mrb[0].mxu0
        %v3962 = vadd.f32 %v3829, %v3961
        %v3963 = vpop.f32.mrb[0].mxu0
        %v3964 = vpop.f32.mrb[0].mxu0
        %v3965 = vadd.f32 %v3832, %v3964
        %v3966 = vpop.f32.mrb[0].mxu0
        %3967 = vmatprep.mubr.bf16.mxu0 0
        %3968 = vmatmul.mubr.bf16.gmra.mrb[0].mxu0 %v3890
        %v3969 = vpop.f32.mrb[0].mxu0
        %v3970 = vadd.f32 %v3837, %v3969
        %v3971 = vpop.f32.mrb[0].mxu0
        %v3972 = vpop.f32.mrb[0].mxu0
        %v3973 = vadd.f32 %v3840, %v3972
        %v3974 = vpop.f32.mrb[0].mxu0
        %3975 = vmatprep.mubr.bf16.mxu0 0
        %3976 = vmatmul.mubr.bf16.gmra.mrb[0].mxu0 %v3893
        %v3977 = vpop.f32.mrb[0].mxu0
        %v3978 = vadd.f32 %v3845, %v3977
        %v3979 = vpop.f32.mrb[0].mxu0
        %v3980 = vpop.f32.mrb[0].mxu0
        %v3981 = vpop.f32.mrb[0].mxu0
        %3982 = vdwg.mxu0
        %v3983 = vld [vmem:[#allocation3 + $0x7] sm:$0xff]
        %v3984 = vld [vmem:[#allocation3 + $0xf] sm:$0xff]
        %v3985 = vld [vmem:[#allocation3 + $0x17] sm:$0xff]
        %v3986 = vld [vmem:[#allocation3 + $0x1f] sm:$0xff]
        %v3987 = vld [vmem:[#allocation3 + $0x27] sm:$0xff]
        %v3988 = vld [vmem:[#allocation3 + $0x2f] sm:$0xff]
        %v3989 = vld [vmem:[#allocation3 + $0x37] sm:$0xff]
        %v3990 = vld [vmem:[#allocation3 + $0x3f] sm:$0xff]
        %v3991 = vld [vmem:[#allocation3 + $0x47] sm:$0xff]
        %v3992 = vld [vmem:[#allocation3 + $0x4f] sm:$0xff]
        %v3993 = vld [vmem:[#allocation3 + $0x57] sm:$0xff]
        %v3994 = vld [vmem:[#allocation3 + $0x5f] sm:$0xff]
        %v3995 = vld [vmem:[#allocation3 + $0x67] sm:$0xf]
        %v3996 = vpack.c.bf16 %v3984, %v3983
        %v3997 = vpack.c.bf16 %v3986, %v3985
        %v3998 = vpack.c.bf16 %v3988, %v3987
        %v3999 = vpack.c.bf16 %v3990, %v3989
        %v4000 = vpack.c.bf16 %v3992, %v3991
        %v4001 = vpack.c.bf16 %v3994, %v3993
        %v4002 = vpack.c.bf16 %v3995, %v3995
        %s4003 = scalar_lea.vmem %s5, 64
        %v4004 = vld [vmem:[%s4003] sm:$0xf]
        %v4005 = vld [vmem:[%s4003 + $0x4] sm:$0xf]
        %v4006 = vld [vmem:[%s4003 + $0x8] sm:$0xf]
        %v4007 = vld [vmem:[%s4003 + $0xc] sm:$0xf]
        %v4008 = vld [vmem:[%s4003 + $0x10] sm:$0xf]
        %v4009 = vld [vmem:[%s4003 + $0x14] sm:$0xf]
        %v4010 = vld [vmem:[%s4003 + $0x18] sm:$0xf]
        %v4011 = vld [vmem:[%s4003 + $0x1c] sm:$0xf]
        %v4020 = vunpack.c.l.b16 %v4004
        %v4021 = vunpack.c.l.b16 %v4005
        %v4022 = vunpack.c.l.b16 %v4006
        %v4023 = vunpack.c.l.b16 %v4007
        %v4024 = vunpack.c.l.b16 %v4008
        %v4025 = vunpack.c.l.b16 %v4009
        %v4026 = vunpack.c.l.b16 %v4010
        %v4027 = vunpack.c.l.b16 %v4011
        %v4028 = vpack.c.b16 %v4021, %v4020
        %v4029 = vpack.c.b16 %v4023, %v4022
        %v4030 = vpack.c.b16 %v4025, %v4024
        %v4031 = vpack.c.b16 %v4027, %v4026
        %v4037 = vsel %vm740, %v3996, 0
        %v4040 = vsel %vm740, %v3997, 0
        %v4043 = vsel %vm740, %v3998, 0
        %v4046 = vsel %vm740, %v3999, 0
        %v4049 = vsel %vm740, %v4000, 0
        %v4052 = vsel %vm740, %v4001, 0
        %v4055 = vsel %vm740, %v4002, 0
        %4057 = vmatprep.subr.bf16.mxu0 0
        %4058 = vmatpush1.bf16.msra.mxu0 %v4028
        %4059 = vmatprep.subr.bf16.mxu0 0
        %4060 = vmatpush1.bf16.msra.mxu0 %v4029
        %4061 = vmatprep.subr.bf16.mxu0 0
        %4062 = vmatpush1.bf16.msra.mxu0 %v4030
        %4063 = vmatprep.subr.bf16.mxu0 0
        %4064 = vmatpush1.bf16.msra.mxu0 %v4031
        %4065 = vmatprep.subr.bf16.mxu0 0
        %4066 = vmatpush1.bf16.msra.mxu0 0
        %4067 = vmatprep.subr.bf16.mxu0 0
        %4068 = vmatpush1.bf16.msra.mxu0 0
        %4069 = vmatprep.subr.bf16.mxu0 0
        %4070 = vmatpush1.bf16.msra.mxu0 0
        %4071 = vmatprep.subr.bf16.mxu0 0
        %4072 = vmatpush1.bf16.msra.mxu0 0
        %4073 = vmatprep.subr.bf16.mxu0 0
        %4074 = vmatpush1.bf16.msra.mxu0 0
        %4075 = vmatprep.subr.bf16.mxu0 0
        %4076 = vmatpush1.bf16.msra.mxu0 0
        %4077 = vmatprep.subr.bf16.mxu0 0
        %4078 = vmatpush1.bf16.msra.mxu0 0
        %4079 = vmatprep.subr.bf16.mxu0 0
        %4080 = vmatpush1.bf16.msra.mxu0 0
        %4081 = vmatprep.subr.bf16.mxu0 0
        %4082 = vmatpush1.bf16.msra.mxu0 0
        %4083 = vmatprep.subr.bf16.mxu0 0
        %4084 = vmatpush1.bf16.msra.mxu0 0
        %4085 = vmatprep.subr.bf16.mxu0 0
        %4086 = vmatpush1.bf16.msra.mxu0 0
        %4087 = vmatprep.subr.bf16.mxu0 0
        %4088 = vmatpush1.bf16.msra.mxu0 0
        %4089 = vmatprep.mubr.bf16.mxu0 0
        %4090 = vmatmul.mubr.bf16.gmra.mrb[0].mxu0 %v4037
        %v4091 = vpop.f32.mrb[0].mxu0
        %v4092 = vadd.f32 0.0, %v4091
        %v4093 = vpop.f32.mrb[0].mxu0
        %v4094 = vpop.f32.mrb[0].mxu0
        %v4095 = vadd.f32 0.0, %v4094
        %v4096 = vpop.f32.mrb[0].mxu0
        %4097 = vmatprep.mubr.bf16.mxu0 0
        %4098 = vmatmul.mubr.bf16.gmra.mrb[0].mxu0 %v4040
        %v4099 = vpop.f32.mrb[0].mxu0
        %v4100 = vadd.f32 0.0, %v4099
        %v4101 = vpop.f32.mrb[0].mxu0
        %v4102 = vpop.f32.mrb[0].mxu0
        %v4103 = vadd.f32 0.0, %v4102
        %v4104 = vpop.f32.mrb[0].mxu0
        %4105 = vmatprep.mubr.bf16.mxu0 0
        %4106 = vmatmul.mubr.bf16.gmra.mrb[0].mxu0 %v4043
        %v4107 = vpop.f32.mrb[0].mxu0
        %v4108 = vadd.f32 0.0, %v4107
        %v4109 = vpop.f32.mrb[0].mxu0
        %v4110 = vpop.f32.mrb[0].mxu0
        %v4111 = vadd.f32 0.0, %v4110
        %v4112 = vpop.f32.mrb[0].mxu0
        %4113 = vmatprep.mubr.bf16.mxu0 0
        %4114 = vmatmul.mubr.bf16.gmra.mrb[0].mxu0 %v4046
        %v4115 = vpop.f32.mrb[0].mxu0
        %v4116 = vadd.f32 0.0, %v4115
        %v4117 = vpop.f32.mrb[0].mxu0
        %v4118 = vpop.f32.mrb[0].mxu0
        %v4119 = vadd.f32 0.0, %v4118
        %v4120 = vpop.f32.mrb[0].mxu0
        %4121 = vmatprep.mubr.bf16.mxu0 0
        %4122 = vmatmul.mubr.bf16.gmra.mrb[0].mxu0 %v4049
        %v4123 = vpop.f32.mrb[0].mxu0
        %v4124 = vadd.f32 0.0, %v4123
        %v4125 = vpop.f32.mrb[0].mxu0
        %v4126 = vpop.f32.mrb[0].mxu0
        %v4127 = vadd.f32 0.0, %v4126
        %v4128 = vpop.f32.mrb[0].mxu0
        %4129 = vmatprep.mubr.bf16.mxu0 0
        %4130 = vmatmul.mubr.bf16.gmra.mrb[0].mxu0 %v4052
        %v4131 = vpop.f32.mrb[0].mxu0
        %v4132 = vadd.f32 0.0, %v4131
        %v4133 = vpop.f32.mrb[0].mxu0
        %v4134 = vpop.f32.mrb[0].mxu0
        %v4135 = vadd.f32 0.0, %v4134
        %v4136 = vpop.f32.mrb[0].mxu0
        %4137 = vmatprep.mubr.bf16.mxu0 0
        %4138 = vmatmul.mubr.bf16.gmra.mrb[0].mxu0 %v4055
        %v4139 = vpop.f32.mrb[0].mxu0
        %v4140 = vadd.f32 0.0, %v4139
        %v4141 = vpop.f32.mrb[0].mxu0
        %v4142 = vpop.f32.mrb[0].mxu0
        %v4143 = vpop.f32.mrb[0].mxu0
        %4144 = vdwg.mxu0
        %v4145 = vadd.f32 %v3930, %v4092
        %v4146 = vadd.f32 %v3933, %v4095
        %v4147 = vadd.f32 %v3938, %v4100
        %v4148 = vadd.f32 %v3941, %v4103
        %v4149 = vadd.f32 %v3946, %v4108
        %v4150 = vadd.f32 %v3949, %v4111
        %v4151 = vadd.f32 %v3954, %v4116
        %v4152 = vadd.f32 %v3957, %v4119
        %v4153 = vadd.f32 %v3962, %v4124
        %v4154 = vadd.f32 %v3965, %v4127
        %v4155 = vadd.f32 %v3970, %v4132
        %v4156 = vadd.f32 %v3973, %v4135
        %v4157 = vadd.f32 %v3978, %v4140
        %v4158 = vld [vmem:[#allocation3 + $0xf] sm:$0xff]
        %v4159 = vld [vmem:[#allocation3 + $0x17] sm:$0xff]
        %v4160 = vld [vmem:[#allocation3 + $0x1f] sm:$0xff]
        %v4161 = vld [vmem:[#allocation3 + $0x27] sm:$0xff]
        %v4162 = vld [vmem:[#allocation3 + $0x2f] sm:$0xff]
        %v4163 = vld [vmem:[#allocation3 + $0x37] sm:$0xff]
        %v4164 = vld [vmem:[#allocation3 + $0x3f] sm:$0xff]
        %v4165 = vld [vmem:[#allocation3 + $0x47] sm:$0xff]
        %v4166 = vld [vmem:[#allocation3 + $0x4f] sm:$0xff]
        %v4167 = vld [vmem:[#allocation3 + $0x57] sm:$0xff]
        %v4168 = vld [vmem:[#allocation3 + $0x5f] sm:$0xff]
        %v4169 = vld [vmem:[#allocation3 + $0x67] sm:$0xff]
        %v4170 = vld [vmem:[#allocation3 + $0x6f] sm:$0xf]
        %v4171 = vpack.c.bf16 %v4159, %v4158
        %v4172 = vpack.c.bf16 %v4161, %v4160
        %v4173 = vpack.c.bf16 %v4163, %v4162
        %v4174 = vpack.c.bf16 %v4165, %v4164
        %v4175 = vpack.c.bf16 %v4167, %v4166
        %v4176 = vpack.c.bf16 %v4169, %v4168
        %v4177 = vpack.c.bf16 %v4170, %v4170
        %s4178 = scalar_lea.vmem %s5, 96
        %v4179 = vld [vmem:[%s4178] sm:$0xf]
        %v4180 = vld [vmem:[%s4178 + $0x4] sm:$0xf]
        %v4181 = vld [vmem:[%s4178 + $0x8] sm:$0xf]
        %v4182 = vld [vmem:[%s4178 + $0xc] sm:$0xf]
        %v4183 = vld [vmem:[%s4178 + $0x10] sm:$0xf]
        %v4184 = vld [vmem:[%s4178 + $0x14] sm:$0xf]
        %v4185 = vld [vmem:[%s4178 + $0x18] sm:$0xf]
        %v4186 = vld [vmem:[%s4178 + $0x1c] sm:$0xf]
        %v4195 = vunpack.c.l.b16 %v4179
        %v4196 = vunpack.c.l.b16 %v4180
        %v4197 = vunpack.c.l.b16 %v4181
        %v4198 = vunpack.c.l.b16 %v4182
        %v4199 = vunpack.c.l.b16 %v4183
        %v4200 = vunpack.c.l.b16 %v4184
        %v4201 = vunpack.c.l.b16 %v4185
        %v4202 = vunpack.c.l.b16 %v4186
        %v4203 = vpack.c.b16 %v4196, %v4195
        %v4204 = vpack.c.b16 %v4198, %v4197
        %v4205 = vpack.c.b16 %v4200, %v4199
        %v4206 = vpack.c.b16 %v4202, %v4201
        %v4212 = vsel %vm740, %v4171, 0
        %v4215 = vsel %vm740, %v4172, 0
        %v4218 = vsel %vm740, %v4173, 0
        %v4221 = vsel %vm740, %v4174, 0
        %v4224 = vsel %vm740, %v4175, 0
        %v4227 = vsel %vm740, %v4176, 0
        %v4230 = vsel %vm740, %v4177, 0
        %4232 = vmatprep.subr.bf16.mxu0 0
        %4233 = vmatpush1.bf16.msra.mxu0 %v4203
        %4234 = vmatprep.subr.bf16.mxu0 0
        %4235 = vmatpush1.bf16.msra.mxu0 %v4204
        %4236 = vmatprep.subr.bf16.mxu0 0
        %4237 = vmatpush1.bf16.msra.mxu0 %v4205
        %4238 = vmatprep.subr.bf16.mxu0 0
        %4239 = vmatpush1.bf16.msra.mxu0 %v4206
        %4240 = vmatprep.subr.bf16.mxu0 0
        %4241 = vmatpush1.bf16.msra.mxu0 0
        %4242 = vmatprep.subr.bf16.mxu0 0
        %4243 = vmatpush1.bf16.msra.mxu0 0
        %4244 = vmatprep.subr.bf16.mxu0 0
        %4245 = vmatpush1.bf16.msra.mxu0 0
        %4246 = vmatprep.subr.bf16.mxu0 0
        %4247 = vmatpush1.bf16.msra.mxu0 0
        %4248 = vmatprep.subr.bf16.mxu0 0
        %4249 = vmatpush1.bf16.msra.mxu0 0
        %4250 = vmatprep.subr.bf16.mxu0 0
        %4251 = vmatpush1.bf16.msra.mxu0 0
        %4252 = vmatprep.subr.bf16.mxu0 0
        %4253 = vmatpush1.bf16.msra.mxu0 0
        %4254 = vmatprep.subr.bf16.mxu0 0
        %4255 = vmatpush1.bf16.msra.mxu0 0
        %4256 = vmatprep.subr.bf16.mxu0 0
        %4257 = vmatpush1.bf16.msra.mxu0 0
        %4258 = vmatprep.subr.bf16.mxu0 0
        %4259 = vmatpush1.bf16.msra.mxu0 0
        %4260 = vmatprep.subr.bf16.mxu0 0
        %4261 = vmatpush1.bf16.msra.mxu0 0
        %4262 = vmatprep.subr.bf16.mxu0 0
        %4263 = vmatpush1.bf16.msra.mxu0 0
        %4264 = vmatprep.mubr.bf16.mxu0 0
        %4265 = vmatmul.mubr.bf16.gmra.mrb[0].mxu0 %v4212
        %v4266 = vpop.f32.mrb[0].mxu0
        %v4267 = vadd.f32 0.0, %v4266
        %v4268 = vpop.f32.mrb[0].mxu0
        %v4269 = vpop.f32.mrb[0].mxu0
        %v4270 = vadd.f32 0.0, %v4269
        %v4271 = vpop.f32.mrb[0].mxu0
        %4272 = vmatprep.mubr.bf16.mxu0 0
        %4273 = vmatmul.mubr.bf16.gmra.mrb[0].mxu0 %v4215
        %v4274 = vpop.f32.mrb[0].mxu0
        %v4275 = vadd.f32 0.0, %v4274
        %v4276 = vpop.f32.mrb[0].mxu0
        %v4277 = vpop.f32.mrb[0].mxu0
        %v4278 = vadd.f32 0.0, %v4277
        %v4279 = vpop.f32.mrb[0].mxu0
        %4280 = vmatprep.mubr.bf16.mxu0 0
        %4281 = vmatmul.mubr.bf16.gmra.mrb[0].mxu0 %v4218
        %v4282 = vpop.f32.mrb[0].mxu0
        %v4283 = vadd.f32 0.0, %v4282
        %v4284 = vpop.f32.mrb[0].mxu0
        %v4285 = vpop.f32.mrb[0].mxu0
        %v4286 = vadd.f32 0.0, %v4285
        %v4287 = vpop.f32.mrb[0].mxu0
        %4288 = vmatprep.mubr.bf16.mxu0 0
        %4289 = vmatmul.mubr.bf16.gmra.mrb[0].mxu0 %v4221
        %v4290 = vpop.f32.mrb[0].mxu0
        %v4291 = vadd.f32 0.0, %v4290
        %v4292 = vpop.f32.mrb[0].mxu0
        %v4293 = vpop.f32.mrb[0].mxu0
        %v4294 = vadd.f32 0.0, %v4293
        %v4295 = vpop.f32.mrb[0].mxu0
        %4296 = vmatprep.mubr.bf16.mxu0 0
        %4297 = vmatmul.mubr.bf16.gmra.mrb[0].mxu0 %v4224
        %v4298 = vpop.f32.mrb[0].mxu0
        %v4299 = vadd.f32 0.0, %v4298
        %v4300 = vpop.f32.mrb[0].mxu0
        %v4301 = vpop.f32.mrb[0].mxu0
        %v4302 = vadd.f32 0.0, %v4301
        %v4303 = vpop.f32.mrb[0].mxu0
        %4304 = vmatprep.mubr.bf16.mxu0 0
        %4305 = vmatmul.mubr.bf16.gmra.mrb[0].mxu0 %v4227
        %v4306 = vpop.f32.mrb[0].mxu0
        %v4307 = vadd.f32 0.0, %v4306
        %v4308 = vpop.f32.mrb[0].mxu0
        %v4309 = vpop.f32.mrb[0].mxu0
        %v4310 = vadd.f32 0.0, %v4309
        %v4311 = vpop.f32.mrb[0].mxu0
        %4312 = vmatprep.mubr.bf16.mxu0 0
        %4313 = vmatmul.mubr.bf16.gmra.mrb[0].mxu0 %v4230
        %v4314 = vpop.f32.mrb[0].mxu0
        %v4315 = vadd.f32 0.0, %v4314
        %v4316 = vpop.f32.mrb[0].mxu0
        %v4317 = vpop.f32.mrb[0].mxu0
        %v4318 = vpop.f32.mrb[0].mxu0
        %4319 = vdwg.mxu0
        %v4320 = vadd.f32 %v4145, %v4267
        %v4321 = vadd.f32 %v4146, %v4270
        %v4322 = vadd.f32 %v4147, %v4275
        %v4323 = vadd.f32 %v4148, %v4278
        %v4324 = vadd.f32 %v4149, %v4283
        %v4325 = vadd.f32 %v4150, %v4286
        %v4326 = vadd.f32 %v4151, %v4291
        %v4327 = vadd.f32 %v4152, %v4294
        %v4328 = vadd.f32 %v4153, %v4299
        %v4329 = vadd.f32 %v4154, %v4302
        %v4330 = vadd.f32 %v4155, %v4307
        %v4331 = vadd.f32 %v4156, %v4310
        %v4332 = vadd.f32 %v4157, %v4315
        %v4333 = vld [vmem:[#allocation3 + $0x10] sm:$0xff]
        %v4334 = vld [vmem:[#allocation3 + $0x18] sm:$0xff]
        %v4335 = vld [vmem:[#allocation3 + $0x20] sm:$0xff]
        %v4336 = vld [vmem:[#allocation3 + $0x28] sm:$0xff]
        %v4337 = vld [vmem:[#allocation3 + $0x30] sm:$0xff]
        %v4338 = vld [vmem:[#allocation3 + $0x38] sm:$0xff]
        %v4339 = vld [vmem:[#allocation3 + $0x40] sm:$0xff]
        %v4340 = vld [vmem:[#allocation3 + $0x48] sm:$0xff]
        %v4341 = vld [vmem:[#allocation3 + $0x50] sm:$0xff]
        %v4342 = vld [vmem:[#allocation3 + $0x58] sm:$0xff]
        %v4343 = vld [vmem:[#allocation3 + $0x60] sm:$0xff]
        %v4344 = vld [vmem:[#allocation3 + $0x68] sm:$0xff]
        %v4345 = vld [vmem:[#allocation3 + $0x70] sm:$0xf]
        %v4346 = vpack.c.bf16 %v4334, %v4333
        %v4347 = vpack.c.bf16 %v4336, %v4335
        %v4348 = vpack.c.bf16 %v4338, %v4337
        %v4349 = vpack.c.bf16 %v4340, %v4339
        %v4350 = vpack.c.bf16 %v4342, %v4341
        %v4351 = vpack.c.bf16 %v4344, %v4343
        %v4352 = vpack.c.bf16 %v4345, %v4345
        %s4353 = scalar_lea.vmem %s5, 128
        %v4354 = vld [vmem:[%s4353] sm:$0xf]
        %v4355 = vld [vmem:[%s4353 + $0x4] sm:$0xf]
        %v4356 = vld [vmem:[%s4353 + $0x8] sm:$0xf]
        %v4357 = vld [vmem:[%s4353 + $0xc] sm:$0xf]
        %v4358 = vld [vmem:[%s4353 + $0x10] sm:$0xf]
        %v4359 = vld [vmem:[%s4353 + $0x14] sm:$0xf]
        %v4360 = vld [vmem:[%s4353 + $0x18] sm:$0xf]
        %v4361 = vld [vmem:[%s4353 + $0x1c] sm:$0xf]
        %v4370 = vunpack.c.l.b16 %v4354
        %v4371 = vunpack.c.l.b16 %v4355
        %v4372 = vunpack.c.l.b16 %v4356
        %v4373 = vunpack.c.l.b16 %v4357
        %v4374 = vunpack.c.l.b16 %v4358
        %v4375 = vunpack.c.l.b16 %v4359
        %v4376 = vunpack.c.l.b16 %v4360
        %v4377 = vunpack.c.l.b16 %v4361
        %v4378 = vpack.c.b16 %v4371, %v4370
        %v4379 = vpack.c.b16 %v4373, %v4372
        %v4380 = vpack.c.b16 %v4375, %v4374
        %v4381 = vpack.c.b16 %v4377, %v4376
        %v4387 = vsel %vm740, %v4346, 0
        %v4390 = vsel %vm740, %v4347, 0
        %v4393 = vsel %vm740, %v4348, 0
        %v4396 = vsel %vm740, %v4349, 0
        %v4399 = vsel %vm740, %v4350, 0
        %v4402 = vsel %vm740, %v4351, 0
        %v4405 = vsel %vm740, %v4352, 0
        %4407 = vmatprep.subr.bf16.mxu0 0
        %4408 = vmatpush1.bf16.msra.mxu0 %v4378
        %4409 = vmatprep.subr.bf16.mxu0 0
        %4410 = vmatpush1.bf16.msra.mxu0 %v4379
        %4411 = vmatprep.subr.bf16.mxu0 0
        %4412 = vmatpush1.bf16.msra.mxu0 %v4380
        %4413 = vmatprep.subr.bf16.mxu0 0
        %4414 = vmatpush1.bf16.msra.mxu0 %v4381
        %4415 = vmatprep.subr.bf16.mxu0 0
        %4416 = vmatpush1.bf16.msra.mxu0 0
        %4417 = vmatprep.subr.bf16.mxu0 0
        %4418 = vmatpush1.bf16.msra.mxu0 0
        %4419 = vmatprep.subr.bf16.mxu0 0
        %4420 = vmatpush1.bf16.msra.mxu0 0
        %4421 = vmatprep.subr.bf16.mxu0 0
        %4422 = vmatpush1.bf16.msra.mxu0 0
        %4423 = vmatprep.subr.bf16.mxu0 0
        %4424 = vmatpush1.bf16.msra.mxu0 0
        %4425 = vmatprep.subr.bf16.mxu0 0
        %4426 = vmatpush1.bf16.msra.mxu0 0
        %4427 = vmatprep.subr.bf16.mxu0 0
        %4428 = vmatpush1.bf16.msra.mxu0 0
        %4429 = vmatprep.subr.bf16.mxu0 0
        %4430 = vmatpush1.bf16.msra.mxu0 0
        %4431 = vmatprep.subr.bf16.mxu0 0
        %4432 = vmatpush1.bf16.msra.mxu0 0
        %4433 = vmatprep.subr.bf16.mxu0 0
        %4434 = vmatpush1.bf16.msra.mxu0 0
        %4435 = vmatprep.subr.bf16.mxu0 0
        %4436 = vmatpush1.bf16.msra.mxu0 0
        %4437 = vmatprep.subr.bf16.mxu0 0
        %4438 = vmatpush1.bf16.msra.mxu0 0
        %4439 = vmatprep.mubr.bf16.mxu0 0
        %4440 = vmatmul.mubr.bf16.gmra.mrb[0].mxu0 %v4387
        %v4441 = vpop.f32.mrb[0].mxu0
        %v4442 = vadd.f32 0.0, %v4441
        %v4443 = vpop.f32.mrb[0].mxu0
        %v4444 = vpop.f32.mrb[0].mxu0
        %v4445 = vadd.f32 0.0, %v4444
        %v4446 = vpop.f32.mrb[0].mxu0
        %4447 = vmatprep.mubr.bf16.mxu0 0
        %4448 = vmatmul.mubr.bf16.gmra.mrb[0].mxu0 %v4390
        %v4449 = vpop.f32.mrb[0].mxu0
        %v4450 = vadd.f32 0.0, %v4449
        %v4451 = vpop.f32.mrb[0].mxu0
        %v4452 = vpop.f32.mrb[0].mxu0
        %v4453 = vadd.f32 0.0, %v4452
        %v4454 = vpop.f32.mrb[0].mxu0
        %4455 = vmatprep.mubr.bf16.mxu0 0
        %4456 = vmatmul.mubr.bf16.gmra.mrb[0].mxu0 %v4393
        %v4457 = vpop.f32.mrb[0].mxu0
        %v4458 = vadd.f32 0.0, %v4457
        %v4459 = vpop.f32.mrb[0].mxu0
        %v4460 = vpop.f32.mrb[0].mxu0
        %v4461 = vadd.f32 0.0, %v4460
        %v4462 = vpop.f32.mrb[0].mxu0
        %4463 = vmatprep.mubr.bf16.mxu0 0
        %4464 = vmatmul.mubr.bf16.gmra.mrb[0].mxu0 %v4396
        %v4465 = vpop.f32.mrb[0].mxu0
        %v4466 = vadd.f32 0.0, %v4465
        %v4467 = vpop.f32.mrb[0].mxu0
        %v4468 = vpop.f32.mrb[0].mxu0
        %v4469 = vadd.f32 0.0, %v4468
        %v4470 = vpop.f32.mrb[0].mxu0
        %4471 = vmatprep.mubr.bf16.mxu0 0
        %4472 = vmatmul.mubr.bf16.gmra.mrb[0].mxu0 %v4399
        %v4473 = vpop.f32.mrb[0].mxu0
        %v4474 = vadd.f32 0.0, %v4473
        %v4475 = vpop.f32.mrb[0].mxu0
        %v4476 = vpop.f32.mrb[0].mxu0
        %v4477 = vadd.f32 0.0, %v4476
        %v4478 = vpop.f32.mrb[0].mxu0
        %4479 = vmatprep.mubr.bf16.mxu0 0
        %4480 = vmatmul.mubr.bf16.gmra.mrb[0].mxu0 %v4402
        %v4481 = vpop.f32.mrb[0].mxu0
        %v4482 = vadd.f32 0.0, %v4481
        %v4483 = vpop.f32.mrb[0].mxu0
        %v4484 = vpop.f32.mrb[0].mxu0
        %v4485 = vadd.f32 0.0, %v4484
        %v4486 = vpop.f32.mrb[0].mxu0
        %4487 = vmatprep.mubr.bf16.mxu0 0
        %4488 = vmatmul.mubr.bf16.gmra.mrb[0].mxu0 %v4405
        %v4489 = vpop.f32.mrb[0].mxu0
        %v4490 = vadd.f32 0.0, %v4489
        %v4491 = vpop.f32.mrb[0].mxu0
        %v4492 = vpop.f32.mrb[0].mxu0
        %v4493 = vpop.f32.mrb[0].mxu0
        %4494 = vdwg.mxu0
        %v4495 = vadd.f32 %v4320, %v4442
        %v4496 = vadd.f32 %v4321, %v4445
        %v4497 = vadd.f32 %v4322, %v4450
        %v4498 = vadd.f32 %v4323, %v4453
        %v4499 = vadd.f32 %v4324, %v4458
        %v4500 = vadd.f32 %v4325, %v4461
        %v4501 = vadd.f32 %v4326, %v4466
        %v4502 = vadd.f32 %v4327, %v4469
        %v4503 = vadd.f32 %v4328, %v4474
        %v4504 = vadd.f32 %v4329, %v4477
        %v4505 = vadd.f32 %v4330, %v4482
        %v4506 = vadd.f32 %v4331, %v4485
        %v4507 = vadd.f32 %v4332, %v4490
        %v4508 = vld [vmem:[#allocation3 + $0x11] sm:$0xff]
        %v4509 = vld [vmem:[#allocation3 + $0x19] sm:$0xff]
        %v4510 = vld [vmem:[#allocation3 + $0x21] sm:$0xff]
        %v4511 = vld [vmem:[#allocation3 + $0x29] sm:$0xff]
        %v4512 = vld [vmem:[#allocation3 + $0x31] sm:$0xff]
        %v4513 = vld [vmem:[#allocation3 + $0x39] sm:$0xff]
        %v4514 = vld [vmem:[#allocation3 + $0x41] sm:$0xff]
        %v4515 = vld [vmem:[#allocation3 + $0x49] sm:$0xff]
        %v4516 = vld [vmem:[#allocation3 + $0x51] sm:$0xff]
        %v4517 = vld [vmem:[#allocation3 + $0x59] sm:$0xff]
        %v4518 = vld [vmem:[#allocation3 + $0x61] sm:$0xff]
        %v4519 = vld [vmem:[#allocation3 + $0x69] sm:$0xff]
        %v4520 = vld [vmem:[#allocation3 + $0x71] sm:$0xf]
        %v4521 = vpack.c.bf16 %v4509, %v4508
        %v4522 = vpack.c.bf16 %v4511, %v4510
        %v4523 = vpack.c.bf16 %v4513, %v4512
        %v4524 = vpack.c.bf16 %v4515, %v4514
        %v4525 = vpack.c.bf16 %v4517, %v4516
        %v4526 = vpack.c.bf16 %v4519, %v4518
        %v4527 = vpack.c.bf16 %v4520, %v4520
        %s4528 = scalar_lea.vmem %s5, 160
        %v4529 = vld [vmem:[%s4528] sm:$0xf]
        %v4530 = vld [vmem:[%s4528 + $0x4] sm:$0xf]
        %v4531 = vld [vmem:[%s4528 + $0x8] sm:$0xf]
        %v4532 = vld [vmem:[%s4528 + $0xc] sm:$0xf]
        %v4533 = vld [vmem:[%s4528 + $0x10] sm:$0xf]
        %v4534 = vld [vmem:[%s4528 + $0x14] sm:$0xf]
        %v4535 = vld [vmem:[%s4528 + $0x18] sm:$0xf]
        %v4536 = vld [vmem:[%s4528 + $0x1c] sm:$0xf]
        %v4545 = vunpack.c.l.b16 %v4529
        %v4546 = vunpack.c.l.b16 %v4530
        %v4547 = vunpack.c.l.b16 %v4531
        %v4548 = vunpack.c.l.b16 %v4532
        %v4549 = vunpack.c.l.b16 %v4533
        %v4550 = vunpack.c.l.b16 %v4534
        %v4551 = vunpack.c.l.b16 %v4535
        %v4552 = vunpack.c.l.b16 %v4536
        %v4553 = vpack.c.b16 %v4546, %v4545
        %v4554 = vpack.c.b16 %v4548, %v4547
        %v4555 = vpack.c.b16 %v4550, %v4549
        %v4556 = vpack.c.b16 %v4552, %v4551
        %v4562 = vsel %vm740, %v4521, 0
        %v4565 = vsel %vm740, %v4522, 0
        %v4568 = vsel %vm740, %v4523, 0
        %v4571 = vsel %vm740, %v4524, 0
        %v4574 = vsel %vm740, %v4525, 0
        %v4577 = vsel %vm740, %v4526, 0
        %v4580 = vsel %vm740, %v4527, 0
        %4582 = vmatprep.subr.bf16.mxu0 0
        %4583 = vmatpush1.bf16.msra.mxu0 %v4553
        %4584 = vmatprep.subr.bf16.mxu0 0
        %4585 = vmatpush1.bf16.msra.mxu0 %v4554
        %4586 = vmatprep.subr.bf16.mxu0 0
        %4587 = vmatpush1.bf16.msra.mxu0 %v4555
        %4588 = vmatprep.subr.bf16.mxu0 0
        %4589 = vmatpush1.bf16.msra.mxu0 %v4556
        %4590 = vmatprep.subr.bf16.mxu0 0
        %4591 = vmatpush1.bf16.msra.mxu0 0
        %4592 = vmatprep.subr.bf16.mxu0 0
        %4593 = vmatpush1.bf16.msra.mxu0 0
        %4594 = vmatprep.subr.bf16.mxu0 0
        %4595 = vmatpush1.bf16.msra.mxu0 0
        %4596 = vmatprep.subr.bf16.mxu0 0
        %4597 = vmatpush1.bf16.msra.mxu0 0
        %4598 = vmatprep.subr.bf16.mxu0 0
        %4599 = vmatpush1.bf16.msra.mxu0 0
        %4600 = vmatprep.subr.bf16.mxu0 0
        %4601 = vmatpush1.bf16.msra.mxu0 0
        %4602 = vmatprep.subr.bf16.mxu0 0
        %4603 = vmatpush1.bf16.msra.mxu0 0
        %4604 = vmatprep.subr.bf16.mxu0 0
        %4605 = vmatpush1.bf16.msra.mxu0 0
        %4606 = vmatprep.subr.bf16.mxu0 0
        %4607 = vmatpush1.bf16.msra.mxu0 0
        %4608 = vmatprep.subr.bf16.mxu0 0
        %4609 = vmatpush1.bf16.msra.mxu0 0
        %4610 = vmatprep.subr.bf16.mxu0 0
        %4611 = vmatpush1.bf16.msra.mxu0 0
        %4612 = vmatprep.subr.bf16.mxu0 0
        %4613 = vmatpush1.bf16.msra.mxu0 0
        %4614 = vmatprep.mubr.bf16.mxu0 0
        %4615 = vmatmul.mubr.bf16.gmra.mrb[0].mxu0 %v4562
        %v4616 = vpop.f32.mrb[0].mxu0
        %v4617 = vadd.f32 0.0, %v4616
        %v4618 = vpop.f32.mrb[0].mxu0
        %v4619 = vpop.f32.mrb[0].mxu0
        %v4620 = vadd.f32 0.0, %v4619
        %v4621 = vpop.f32.mrb[0].mxu0
        %4622 = vmatprep.mubr.bf16.mxu0 0
        %4623 = vmatmul.mubr.bf16.gmra.mrb[0].mxu0 %v4565
        %v4624 = vpop.f32.mrb[0].mxu0
        %v4625 = vadd.f32 0.0, %v4624
        %v4626 = vpop.f32.mrb[0].mxu0
        %v4627 = vpop.f32.mrb[0].mxu0
        %v4628 = vadd.f32 0.0, %v4627
        %v4629 = vpop.f32.mrb[0].mxu0
        %4630 = vmatprep.mubr.bf16.mxu0 0
        %4631 = vmatmul.mubr.bf16.gmra.mrb[0].mxu0 %v4568
        %v4632 = vpop.f32.mrb[0].mxu0
        %v4633 = vadd.f32 0.0, %v4632
        %v4634 = vpop.f32.mrb[0].mxu0
        %v4635 = vpop.f32.mrb[0].mxu0
        %v4636 = vadd.f32 0.0, %v4635
        %v4637 = vpop.f32.mrb[0].mxu0
        %4638 = vmatprep.mubr.bf16.mxu0 0
        %4639 = vmatmul.mubr.bf16.gmra.mrb[0].mxu0 %v4571
        %v4640 = vpop.f32.mrb[0].mxu0
        %v4641 = vadd.f32 0.0, %v4640
        %v4642 = vpop.f32.mrb[0].mxu0
        %v4643 = vpop.f32.mrb[0].mxu0
        %v4644 = vadd.f32 0.0, %v4643
        %v4645 = vpop.f32.mrb[0].mxu0
        %4646 = vmatprep.mubr.bf16.mxu0 0
        %4647 = vmatmul.mubr.bf16.gmra.mrb[0].mxu0 %v4574
        %v4648 = vpop.f32.mrb[0].mxu0
        %v4649 = vadd.f32 0.0, %v4648
        %v4650 = vpop.f32.mrb[0].mxu0
        %v4651 = vpop.f32.mrb[0].mxu0
        %v4652 = vadd.f32 0.0, %v4651
        %v4653 = vpop.f32.mrb[0].mxu0
        %4654 = vmatprep.mubr.bf16.mxu0 0
        %4655 = vmatmul.mubr.bf16.gmra.mrb[0].mxu0 %v4577
        %v4656 = vpop.f32.mrb[0].mxu0
        %v4657 = vadd.f32 0.0, %v4656
        %v4658 = vpop.f32.mrb[0].mxu0
        %v4659 = vpop.f32.mrb[0].mxu0
        %v4660 = vadd.f32 0.0, %v4659
        %v4661 = vpop.f32.mrb[0].mxu0
        %4662 = vmatprep.mubr.bf16.mxu0 0
        %4663 = vmatmul.mubr.bf16.gmra.mrb[0].mxu0 %v4580
        %v4664 = vpop.f32.mrb[0].mxu0
        %v4665 = vadd.f32 0.0, %v4664
        %v4666 = vpop.f32.mrb[0].mxu0
        %v4667 = vpop.f32.mrb[0].mxu0
        %v4668 = vpop.f32.mrb[0].mxu0
        %4669 = vdwg.mxu0
        %v4670 = vadd.f32 %v4495, %v4617
        %v4671 = vadd.f32 %v4496, %v4620
        %v4672 = vadd.f32 %v4497, %v4625
        %v4673 = vadd.f32 %v4498, %v4628
        %v4674 = vadd.f32 %v4499, %v4633
        %v4675 = vadd.f32 %v4500, %v4636
        %v4676 = vadd.f32 %v4501, %v4641
        %v4677 = vadd.f32 %v4502, %v4644
        %v4678 = vadd.f32 %v4503, %v4649
        %v4679 = vadd.f32 %v4504, %v4652
        %v4680 = vadd.f32 %v4505, %v4657
        %v4681 = vadd.f32 %v4506, %v4660
        %v4682 = vadd.f32 %v4507, %v4665
        %v4683 = vld [vmem:[#allocation3 + $0x19] sm:$0xff]
        %v4684 = vld [vmem:[#allocation3 + $0x21] sm:$0xff]
        %v4685 = vld [vmem:[#allocation3 + $0x29] sm:$0xff]
        %v4686 = vld [vmem:[#allocation3 + $0x31] sm:$0xff]
        %v4687 = vld [vmem:[#allocation3 + $0x39] sm:$0xff]
        %v4688 = vld [vmem:[#allocation3 + $0x41] sm:$0xff]
        %v4689 = vld [vmem:[#allocation3 + $0x49] sm:$0xff]
        %v4690 = vld [vmem:[#allocation3 + $0x51] sm:$0xff]
        %v4691 = vld [vmem:[#allocation3 + $0x59] sm:$0xff]
        %v4692 = vld [vmem:[#allocation3 + $0x61] sm:$0xff]
        %v4693 = vld [vmem:[#allocation3 + $0x69] sm:$0xff]
        %v4694 = vld [vmem:[#allocation3 + $0x71] sm:$0xff]
        %v4695 = vld [vmem:[#allocation3 + $0x79] sm:$0xf]
        %v4696 = vpack.c.bf16 %v4684, %v4683
        %v4697 = vpack.c.bf16 %v4686, %v4685
        %v4698 = vpack.c.bf16 %v4688, %v4687
        %v4699 = vpack.c.bf16 %v4690, %v4689
        %v4700 = vpack.c.bf16 %v4692, %v4691
        %v4701 = vpack.c.bf16 %v4694, %v4693
        %v4702 = vpack.c.bf16 %v4695, %v4695
        %s4703 = scalar_lea.vmem %s5, 192
        %v4704 = vld [vmem:[%s4703] sm:$0xf]
        %v4705 = vld [vmem:[%s4703 + $0x4] sm:$0xf]
        %v4706 = vld [vmem:[%s4703 + $0x8] sm:$0xf]
        %v4707 = vld [vmem:[%s4703 + $0xc] sm:$0xf]
        %v4708 = vld [vmem:[%s4703 + $0x10] sm:$0xf]
        %v4709 = vld [vmem:[%s4703 + $0x14] sm:$0xf]
        %v4710 = vld [vmem:[%s4703 + $0x18] sm:$0xf]
        %v4711 = vld [vmem:[%s4703 + $0x1c] sm:$0xf]
        %v4720 = vunpack.c.l.b16 %v4704
        %v4721 = vunpack.c.l.b16 %v4705
        %v4722 = vunpack.c.l.b16 %v4706
        %v4723 = vunpack.c.l.b16 %v4707
        %v4724 = vunpack.c.l.b16 %v4708
        %v4725 = vunpack.c.l.b16 %v4709
        %v4726 = vunpack.c.l.b16 %v4710
        %v4727 = vunpack.c.l.b16 %v4711
        %v4728 = vpack.c.b16 %v4721, %v4720
        %v4729 = vpack.c.b16 %v4723, %v4722
        %v4730 = vpack.c.b16 %v4725, %v4724
        %v4731 = vpack.c.b16 %v4727, %v4726
        %v4737 = vsel %vm740, %v4696, 0
        %v4740 = vsel %vm740, %v4697, 0
        %v4743 = vsel %vm740, %v4698, 0
        %v4746 = vsel %vm740, %v4699, 0
        %v4749 = vsel %vm740, %v4700, 0
        %v4752 = vsel %vm740, %v4701, 0
        %v4755 = vsel %vm740, %v4702, 0
        %4757 = vmatprep.subr.bf16.mxu0 0
        %4758 = vmatpush1.bf16.msra.mxu0 %v4728
        %4759 = vmatprep.subr.bf16.mxu0 0
        %4760 = vmatpush1.bf16.msra.mxu0 %v4729
        %4761 = vmatprep.subr.bf16.mxu0 0
        %4762 = vmatpush1.bf16.msra.mxu0 %v4730
        %4763 = vmatprep.subr.bf16.mxu0 0
        %4764 = vmatpush1.bf16.msra.mxu0 %v4731
        %4765 = vmatprep.subr.bf16.mxu0 0
        %4766 = vmatpush1.bf16.msra.mxu0 0
        %4767 = vmatprep.subr.bf16.mxu0 0
        %4768 = vmatpush1.bf16.msra.mxu0 0
        %4769 = vmatprep.subr.bf16.mxu0 0
        %4770 = vmatpush1.bf16.msra.mxu0 0
        %4771 = vmatprep.subr.bf16.mxu0 0
        %4772 = vmatpush1.bf16.msra.mxu0 0
        %4773 = vmatprep.subr.bf16.mxu0 0
        %4774 = vmatpush1.bf16.msra.mxu0 0
        %4775 = vmatprep.subr.bf16.mxu0 0
        %4776 = vmatpush1.bf16.msra.mxu0 0
        %4777 = vmatprep.subr.bf16.mxu0 0
        %4778 = vmatpush1.bf16.msra.mxu0 0
        %4779 = vmatprep.subr.bf16.mxu0 0
        %4780 = vmatpush1.bf16.msra.mxu0 0
        %4781 = vmatprep.subr.bf16.mxu0 0
        %4782 = vmatpush1.bf16.msra.mxu0 0
        %4783 = vmatprep.subr.bf16.mxu0 0
        %4784 = vmatpush1.bf16.msra.mxu0 0
        %4785 = vmatprep.subr.bf16.mxu0 0
        %4786 = vmatpush1.bf16.msra.mxu0 0
        %4787 = vmatprep.subr.bf16.mxu0 0
        %4788 = vmatpush1.bf16.msra.mxu0 0
        %4789 = vmatprep.mubr.bf16.mxu0 0
        %4790 = vmatmul.mubr.bf16.gmra.mrb[0].mxu0 %v4737
        %v4791 = vpop.f32.mrb[0].mxu0
        %v4792 = vadd.f32 0.0, %v4791
        %v4793 = vpop.f32.mrb[0].mxu0
        %v4794 = vpop.f32.mrb[0].mxu0
        %v4795 = vadd.f32 0.0, %v4794
        %v4796 = vpop.f32.mrb[0].mxu0
        %4797 = vmatprep.mubr.bf16.mxu0 0
        %4798 = vmatmul.mubr.bf16.gmra.mrb[0].mxu0 %v4740
        %v4799 = vpop.f32.mrb[0].mxu0
        %v4800 = vadd.f32 0.0, %v4799
        %v4801 = vpop.f32.mrb[0].mxu0
        %v4802 = vpop.f32.mrb[0].mxu0
        %v4803 = vadd.f32 0.0, %v4802
        %v4804 = vpop.f32.mrb[0].mxu0
        %4805 = vmatprep.mubr.bf16.mxu0 0
        %4806 = vmatmul.mubr.bf16.gmra.mrb[0].mxu0 %v4743
        %v4807 = vpop.f32.mrb[0].mxu0
        %v4808 = vadd.f32 0.0, %v4807
        %v4809 = vpop.f32.mrb[0].mxu0
        %v4810 = vpop.f32.mrb[0].mxu0
        %v4811 = vadd.f32 0.0, %v4810
        %v4812 = vpop.f32.mrb[0].mxu0
        %4813 = vmatprep.mubr.bf16.mxu0 0
        %4814 = vmatmul.mubr.bf16.gmra.mrb[0].mxu0 %v4746
        %v4815 = vpop.f32.mrb[0].mxu0
        %v4816 = vadd.f32 0.0, %v4815
        %v4817 = vpop.f32.mrb[0].mxu0
        %v4818 = vpop.f32.mrb[0].mxu0
        %v4819 = vadd.f32 0.0, %v4818
        %v4820 = vpop.f32.mrb[0].mxu0
        %4821 = vmatprep.mubr.bf16.mxu0 0
        %4822 = vmatmul.mubr.bf16.gmra.mrb[0].mxu0 %v4749
        %v4823 = vpop.f32.mrb[0].mxu0
        %v4824 = vadd.f32 0.0, %v4823
        %v4825 = vpop.f32.mrb[0].mxu0
        %v4826 = vpop.f32.mrb[0].mxu0
        %v4827 = vadd.f32 0.0, %v4826
        %v4828 = vpop.f32.mrb[0].mxu0
        %4829 = vmatprep.mubr.bf16.mxu0 0
        %4830 = vmatmul.mubr.bf16.gmra.mrb[0].mxu0 %v4752
        %v4831 = vpop.f32.mrb[0].mxu0
        %v4832 = vadd.f32 0.0, %v4831
        %v4833 = vpop.f32.mrb[0].mxu0
        %v4834 = vpop.f32.mrb[0].mxu0
        %v4835 = vadd.f32 0.0, %v4834
        %v4836 = vpop.f32.mrb[0].mxu0
        %4837 = vmatprep.mubr.bf16.mxu0 0
        %4838 = vmatmul.mubr.bf16.gmra.mrb[0].mxu0 %v4755
        %v4839 = vpop.f32.mrb[0].mxu0
        %v4840 = vadd.f32 0.0, %v4839
        %v4841 = vpop.f32.mrb[0].mxu0
        %v4842 = vpop.f32.mrb[0].mxu0
        %v4843 = vpop.f32.mrb[0].mxu0
        %4844 = vdwg.mxu0
        %v4845 = vadd.f32 %v4670, %v4792
        %v4846 = vadd.f32 %v4671, %v4795
        %v4847 = vadd.f32 %v4672, %v4800
        %v4848 = vadd.f32 %v4673, %v4803
        %v4849 = vadd.f32 %v4674, %v4808
        %v4850 = vadd.f32 %v4675, %v4811
        %v4851 = vadd.f32 %v4676, %v4816
        %v4852 = vadd.f32 %v4677, %v4819
        %v4853 = vadd.f32 %v4678, %v4824
        %v4854 = vadd.f32 %v4679, %v4827
        %v4855 = vadd.f32 %v4680, %v4832
        %v4856 = vadd.f32 %v4681, %v4835
        %v4857 = vadd.f32 %v4682, %v4840
        %v4858 = vld [vmem:[#allocation3 + $0x1a] sm:$0xff]
        %v4859 = vld [vmem:[#allocation3 + $0x22] sm:$0xff]
        %v4860 = vld [vmem:[#allocation3 + $0x2a] sm:$0xff]
        %v4861 = vld [vmem:[#allocation3 + $0x32] sm:$0xff]
        %v4862 = vld [vmem:[#allocation3 + $0x3a] sm:$0xff]
        %v4863 = vld [vmem:[#allocation3 + $0x42] sm:$0xff]
        %v4864 = vld [vmem:[#allocation3 + $0x4a] sm:$0xff]
        %v4865 = vld [vmem:[#allocation3 + $0x52] sm:$0xff]
        %v4866 = vld [vmem:[#allocation3 + $0x5a] sm:$0xff]
        %v4867 = vld [vmem:[#allocation3 + $0x62] sm:$0xff]
        %v4868 = vld [vmem:[#allocation3 + $0x6a] sm:$0xff]
        %v4869 = vld [vmem:[#allocation3 + $0x72] sm:$0xff]
        %v4870 = vld [vmem:[#allocation3 + $0x7a] sm:$0xf]
        %v4871 = vpack.c.bf16 %v4859, %v4858
        %v4872 = vpack.c.bf16 %v4861, %v4860
        %v4873 = vpack.c.bf16 %v4863, %v4862
        %v4874 = vpack.c.bf16 %v4865, %v4864
        %v4875 = vpack.c.bf16 %v4867, %v4866
        %v4876 = vpack.c.bf16 %v4869, %v4868
        %v4877 = vpack.c.bf16 %v4870, %v4870
        %s4878 = scalar_lea.vmem %s5, 224
        %v4879 = vld [vmem:[%s4878] sm:$0xf]
        %v4880 = vld [vmem:[%s4878 + $0x4] sm:$0xf]
        %v4881 = vld [vmem:[%s4878 + $0x8] sm:$0xf]
        %v4882 = vld [vmem:[%s4878 + $0xc] sm:$0xf]
        %v4883 = vld [vmem:[%s4878 + $0x10] sm:$0xf]
        %v4884 = vld [vmem:[%s4878 + $0x14] sm:$0xf]
        %v4885 = vld [vmem:[%s4878 + $0x18] sm:$0xf]
        %v4886 = vld [vmem:[%s4878 + $0x1c] sm:$0xf]
        %v4895 = vunpack.c.l.b16 %v4879
        %v4896 = vunpack.c.l.b16 %v4880
        %v4897 = vunpack.c.l.b16 %v4881
        %v4898 = vunpack.c.l.b16 %v4882
        %v4899 = vunpack.c.l.b16 %v4883
        %v4900 = vunpack.c.l.b16 %v4884
        %v4901 = vunpack.c.l.b16 %v4885
        %v4902 = vunpack.c.l.b16 %v4886
        %v4903 = vpack.c.b16 %v4896, %v4895
        %v4904 = vpack.c.b16 %v4898, %v4897
        %v4905 = vpack.c.b16 %v4900, %v4899
        %v4906 = vpack.c.b16 %v4902, %v4901
        %v4912 = vsel %vm740, %v4871, 0
        %v4915 = vsel %vm740, %v4872, 0
        %v4918 = vsel %vm740, %v4873, 0
        %v4921 = vsel %vm740, %v4874, 0
        %v4924 = vsel %vm740, %v4875, 0
        %v4927 = vsel %vm740, %v4876, 0
        %v4930 = vsel %vm740, %v4877, 0
        %4932 = vmatprep.subr.bf16.mxu0 0
        %4933 = vmatpush1.bf16.msra.mxu0 %v4903
        %4934 = vmatprep.subr.bf16.mxu0 0
        %4935 = vmatpush1.bf16.msra.mxu0 %v4904
        %4936 = vmatprep.subr.bf16.mxu0 0
        %4937 = vmatpush1.bf16.msra.mxu0 %v4905
        %4938 = vmatprep.subr.bf16.mxu0 0
        %4939 = vmatpush1.bf16.msra.mxu0 %v4906
        %4940 = vmatprep.subr.bf16.mxu0 0
        %4941 = vmatpush1.bf16.msra.mxu0 0
        %4942 = vmatprep.subr.bf16.mxu0 0
        %4943 = vmatpush1.bf16.msra.mxu0 0
        %4944 = vmatprep.subr.bf16.mxu0 0
        %4945 = vmatpush1.bf16.msra.mxu0 0
        %4946 = vmatprep.subr.bf16.mxu0 0
        %4947 = vmatpush1.bf16.msra.mxu0 0
        %4948 = vmatprep.subr.bf16.mxu0 0
        %4949 = vmatpush1.bf16.msra.mxu0 0
        %4950 = vmatprep.subr.bf16.mxu0 0
        %4951 = vmatpush1.bf16.msra.mxu0 0
        %4952 = vmatprep.subr.bf16.mxu0 0
        %4953 = vmatpush1.bf16.msra.mxu0 0
        %4954 = vmatprep.subr.bf16.mxu0 0
        %4955 = vmatpush1.bf16.msra.mxu0 0
        %4956 = vmatprep.subr.bf16.mxu0 0
        %4957 = vmatpush1.bf16.msra.mxu0 0
        %4958 = vmatprep.subr.bf16.mxu0 0
        %4959 = vmatpush1.bf16.msra.mxu0 0
        %4960 = vmatprep.subr.bf16.mxu0 0
        %4961 = vmatpush1.bf16.msra.mxu0 0
        %4962 = vmatprep.subr.bf16.mxu0 0
        %4963 = vmatpush1.bf16.msra.mxu0 0
        %4964 = vmatprep.mubr.bf16.mxu0 0
        %4965 = vmatmul.mubr.bf16.gmra.mrb[0].mxu0 %v4912
        %v4966 = vpop.f32.mrb[0].mxu0
        %v4967 = vadd.f32 0.0, %v4966
        %v4968 = vpop.f32.mrb[0].mxu0
        %v4969 = vpop.f32.mrb[0].mxu0
        %v4970 = vadd.f32 0.0, %v4969
        %v4971 = vpop.f32.mrb[0].mxu0
        %4972 = vmatprep.mubr.bf16.mxu0 0
        %4973 = vmatmul.mubr.bf16.gmra.mrb[0].mxu0 %v4915
        %v4974 = vpop.f32.mrb[0].mxu0
        %v4975 = vadd.f32 0.0, %v4974
        %v4976 = vpop.f32.mrb[0].mxu0
        %v4977 = vpop.f32.mrb[0].mxu0
        %v4978 = vadd.f32 0.0, %v4977
        %v4979 = vpop.f32.mrb[0].mxu0
        %4980 = vmatprep.mubr.bf16.mxu0 0
        %4981 = vmatmul.mubr.bf16.gmra.mrb[0].mxu0 %v4918
        %v4982 = vpop.f32.mrb[0].mxu0
        %v4983 = vadd.f32 0.0, %v4982
        %v4984 = vpop.f32.mrb[0].mxu0
        %v4985 = vpop.f32.mrb[0].mxu0
        %v4986 = vadd.f32 0.0, %v4985
        %v4987 = vpop.f32.mrb[0].mxu0
        %4988 = vmatprep.mubr.bf16.mxu0 0
        %4989 = vmatmul.mubr.bf16.gmra.mrb[0].mxu0 %v4921
        %v4990 = vpop.f32.mrb[0].mxu0
        %v4991 = vadd.f32 0.0, %v4990
        %v4992 = vpop.f32.mrb[0].mxu0
        %v4993 = vpop.f32.mrb[0].mxu0
        %v4994 = vadd.f32 0.0, %v4993
        %v4995 = vpop.f32.mrb[0].mxu0
        %4996 = vmatprep.mubr.bf16.mxu0 0
        %4997 = vmatmul.mubr.bf16.gmra.mrb[0].mxu0 %v4924
        %v4998 = vpop.f32.mrb[0].mxu0
        %v4999 = vadd.f32 0.0, %v4998
        %v5000 = vpop.f32.mrb[0].mxu0
        %v5001 = vpop.f32.mrb[0].mxu0
        %v5002 = vadd.f32 0.0, %v5001
        %v5003 = vpop.f32.mrb[0].mxu0
        %5004 = vmatprep.mubr.bf16.mxu0 0
        %5005 = vmatmul.mubr.bf16.gmra.mrb[0].mxu0 %v4927
        %v5006 = vpop.f32.mrb[0].mxu0
        %v5007 = vadd.f32 0.0, %v5006
        %v5008 = vpop.f32.mrb[0].mxu0
        %v5009 = vpop.f32.mrb[0].mxu0
        %v5010 = vadd.f32 0.0, %v5009
        %v5011 = vpop.f32.mrb[0].mxu0
        %5012 = vmatprep.mubr.bf16.mxu0 0
        %5013 = vmatmul.mubr.bf16.gmra.mrb[0].mxu0 %v4930
        %v5014 = vpop.f32.mrb[0].mxu0
        %v5015 = vadd.f32 0.0, %v5014
        %v5016 = vpop.f32.mrb[0].mxu0
        %v5017 = vpop.f32.mrb[0].mxu0
        %v5018 = vpop.f32.mrb[0].mxu0
        %5019 = vdwg.mxu0
        %v5020 = vadd.f32 %v4845, %v4967
        %v5021 = vadd.f32 %v4846, %v4970
        %v5022 = vadd.f32 %v4847, %v4975
        %v5023 = vadd.f32 %v4848, %v4978
        %v5024 = vadd.f32 %v4849, %v4983
        %v5025 = vadd.f32 %v4850, %v4986
        %v5026 = vadd.f32 %v4851, %v4991
        %v5027 = vadd.f32 %v4852, %v4994
        %v5028 = vadd.f32 %v4853, %v4999
        %v5029 = vadd.f32 %v4854, %v5002
        %v5030 = vadd.f32 %v4855, %v5007
        %v5031 = vadd.f32 %v4856, %v5010
        %v5032 = vadd.f32 %v4857, %v5015
        %v5033 = vld [vmem:[#allocation3 + $0x1b] sm:$0xff]
        %v5034 = vld [vmem:[#allocation3 + $0x23] sm:$0xff]
        %v5035 = vld [vmem:[#allocation3 + $0x2b] sm:$0xff]
        %v5036 = vld [vmem:[#allocation3 + $0x33] sm:$0xff]
        %v5037 = vld [vmem:[#allocation3 + $0x3b] sm:$0xff]
        %v5038 = vld [vmem:[#allocation3 + $0x43] sm:$0xff]
        %v5039 = vld [vmem:[#allocation3 + $0x4b] sm:$0xff]
        %v5040 = vld [vmem:[#allocation3 + $0x53] sm:$0xff]
        %v5041 = vld [vmem:[#allocation3 + $0x5b] sm:$0xff]
        %v5042 = vld [vmem:[#allocation3 + $0x63] sm:$0xff]
        %v5043 = vld [vmem:[#allocation3 + $0x6b] sm:$0xff]
        %v5044 = vld [vmem:[#allocation3 + $0x73] sm:$0xff]
        %v5045 = vld [vmem:[#allocation3 + $0x7b] sm:$0xf]
        %v5046 = vpack.c.bf16 %v5034, %v5033
        %v5047 = vpack.c.bf16 %v5036, %v5035
        %v5048 = vpack.c.bf16 %v5038, %v5037
        %v5049 = vpack.c.bf16 %v5040, %v5039
        %v5050 = vpack.c.bf16 %v5042, %v5041
        %v5051 = vpack.c.bf16 %v5044, %v5043
        %v5052 = vpack.c.bf16 %v5045, %v5045
        %s5053 = scalar_lea.vmem %s5, 256
        %v5054 = vld [vmem:[%s5053] sm:$0xf]
        %v5055 = vld [vmem:[%s5053 + $0x4] sm:$0xf]
        %v5056 = vld [vmem:[%s5053 + $0x8] sm:$0xf]
        %v5057 = vld [vmem:[%s5053 + $0xc] sm:$0xf]
        %v5058 = vld [vmem:[%s5053 + $0x10] sm:$0xf]
        %v5059 = vld [vmem:[%s5053 + $0x14] sm:$0xf]
        %v5060 = vld [vmem:[%s5053 + $0x18] sm:$0xf]
        %v5061 = vld [vmem:[%s5053 + $0x1c] sm:$0xf]
        %v5070 = vunpack.c.l.b16 %v5054
        %v5071 = vunpack.c.l.b16 %v5055
        %v5072 = vunpack.c.l.b16 %v5056
        %v5073 = vunpack.c.l.b16 %v5057
        %v5074 = vunpack.c.l.b16 %v5058
        %v5075 = vunpack.c.l.b16 %v5059
        %v5076 = vunpack.c.l.b16 %v5060
        %v5077 = vunpack.c.l.b16 %v5061
        %v5078 = vpack.c.b16 %v5071, %v5070
        %v5079 = vpack.c.b16 %v5073, %v5072
        %v5080 = vpack.c.b16 %v5075, %v5074
        %v5081 = vpack.c.b16 %v5077, %v5076
        %v5087 = vsel %vm740, %v5046, 0
        %v5090 = vsel %vm740, %v5047, 0
        %v5093 = vsel %vm740, %v5048, 0
        %v5096 = vsel %vm740, %v5049, 0
        %v5099 = vsel %vm740, %v5050, 0
        %v5102 = vsel %vm740, %v5051, 0
        %v5105 = vsel %vm740, %v5052, 0
        %5107 = vmatprep.subr.bf16.mxu0 0
        %5108 = vmatpush1.bf16.msra.mxu0 %v5078
        %5109 = vmatprep.subr.bf16.mxu0 0
        %5110 = vmatpush1.bf16.msra.mxu0 %v5079
        %5111 = vmatprep.subr.bf16.mxu0 0
        %5112 = vmatpush1.bf16.msra.mxu0 %v5080
        %5113 = vmatprep.subr.bf16.mxu0 0
        %5114 = vmatpush1.bf16.msra.mxu0 %v5081
        %5115 = vmatprep.subr.bf16.mxu0 0
        %5116 = vmatpush1.bf16.msra.mxu0 0
        %5117 = vmatprep.subr.bf16.mxu0 0
        %5118 = vmatpush1.bf16.msra.mxu0 0
        %5119 = vmatprep.subr.bf16.mxu0 0
        %5120 = vmatpush1.bf16.msra.mxu0 0
        %5121 = vmatprep.subr.bf16.mxu0 0
        %5122 = vmatpush1.bf16.msra.mxu0 0
        %5123 = vmatprep.subr.bf16.mxu0 0
        %5124 = vmatpush1.bf16.msra.mxu0 0
        %5125 = vmatprep.subr.bf16.mxu0 0
        %5126 = vmatpush1.bf16.msra.mxu0 0
        %5127 = vmatprep.subr.bf16.mxu0 0
        %5128 = vmatpush1.bf16.msra.mxu0 0
        %5129 = vmatprep.subr.bf16.mxu0 0
        %5130 = vmatpush1.bf16.msra.mxu0 0
        %5131 = vmatprep.subr.bf16.mxu0 0
        %5132 = vmatpush1.bf16.msra.mxu0 0
        %5133 = vmatprep.subr.bf16.mxu0 0
        %5134 = vmatpush1.bf16.msra.mxu0 0
        %5135 = vmatprep.subr.bf16.mxu0 0
        %5136 = vmatpush1.bf16.msra.mxu0 0
        %5137 = vmatprep.subr.bf16.mxu0 0
        %5138 = vmatpush1.bf16.msra.mxu0 0
        %5139 = vmatprep.mubr.bf16.mxu0 0
        %5140 = vmatmul.mubr.bf16.gmra.mrb[0].mxu0 %v5087
        %v5141 = vpop.f32.mrb[0].mxu0
        %v5142 = vadd.f32 0.0, %v5141
        %v5143 = vpop.f32.mrb[0].mxu0
        %v5144 = vpop.f32.mrb[0].mxu0
        %v5145 = vadd.f32 0.0, %v5144
        %v5146 = vpop.f32.mrb[0].mxu0
        %5147 = vmatprep.mubr.bf16.mxu0 0
        %5148 = vmatmul.mubr.bf16.gmra.mrb[0].mxu0 %v5090
        %v5149 = vpop.f32.mrb[0].mxu0
        %v5150 = vadd.f32 0.0, %v5149
        %v5151 = vpop.f32.mrb[0].mxu0
        %v5152 = vpop.f32.mrb[0].mxu0
        %v5153 = vadd.f32 0.0, %v5152
        %v5154 = vpop.f32.mrb[0].mxu0
        %5155 = vmatprep.mubr.bf16.mxu0 0
        %5156 = vmatmul.mubr.bf16.gmra.mrb[0].mxu0 %v5093
        %v5157 = vpop.f32.mrb[0].mxu0
        %v5158 = vadd.f32 0.0, %v5157
        %v5159 = vpop.f32.mrb[0].mxu0
        %v5160 = vpop.f32.mrb[0].mxu0
        %v5161 = vadd.f32 0.0, %v5160
        %v5162 = vpop.f32.mrb[0].mxu0
        %5163 = vmatprep.mubr.bf16.mxu0 0
        %5164 = vmatmul.mubr.bf16.gmra.mrb[0].mxu0 %v5096
        %v5165 = vpop.f32.mrb[0].mxu0
        %v5166 = vadd.f32 0.0, %v5165
        %v5167 = vpop.f32.mrb[0].mxu0
        %v5168 = vpop.f32.mrb[0].mxu0
        %v5169 = vadd.f32 0.0, %v5168
        %v5170 = vpop.f32.mrb[0].mxu0
        %5171 = vmatprep.mubr.bf16.mxu0 0
        %5172 = vmatmul.mubr.bf16.gmra.mrb[0].mxu0 %v5099
        %v5173 = vpop.f32.mrb[0].mxu0
        %v5174 = vadd.f32 0.0, %v5173
        %v5175 = vpop.f32.mrb[0].mxu0
        %v5176 = vpop.f32.mrb[0].mxu0
        %v5177 = vadd.f32 0.0, %v5176
        %v5178 = vpop.f32.mrb[0].mxu0
        %5179 = vmatprep.mubr.bf16.mxu0 0
        %5180 = vmatmul.mubr.bf16.gmra.mrb[0].mxu0 %v5102
        %v5181 = vpop.f32.mrb[0].mxu0
        %v5182 = vadd.f32 0.0, %v5181
        %v5183 = vpop.f32.mrb[0].mxu0
        %v5184 = vpop.f32.mrb[0].mxu0
        %v5185 = vadd.f32 0.0, %v5184
        %v5186 = vpop.f32.mrb[0].mxu0
        %5187 = vmatprep.mubr.bf16.mxu0 0
        %5188 = vmatmul.mubr.bf16.gmra.mrb[0].mxu0 %v5105
        %v5189 = vpop.f32.mrb[0].mxu0
        %v5190 = vadd.f32 0.0, %v5189
        %v5191 = vpop.f32.mrb[0].mxu0
        %v5192 = vpop.f32.mrb[0].mxu0
        %v5193 = vpop.f32.mrb[0].mxu0
        %5194 = vdwg.mxu0
        %v5195 = vadd.f32 %v5020, %v5142
        %v5196 = vadd.f32 %v5021, %v5145
        %v5197 = vadd.f32 %v5022, %v5150
        %v5198 = vadd.f32 %v5023, %v5153
        %v5199 = vadd.f32 %v5024, %v5158
        %v5200 = vadd.f32 %v5025, %v5161
        %v5201 = vadd.f32 %v5026, %v5166
        %v5202 = vadd.f32 %v5027, %v5169
        %v5203 = vadd.f32 %v5028, %v5174
        %v5204 = vadd.f32 %v5029, %v5177
        %v5205 = vadd.f32 %v5030, %v5182
        %v5206 = vadd.f32 %v5031, %v5185
        %v5207 = vadd.f32 %v5032, %v5190
        %v5208 = vld [vmem:[%s6] sm:$0x1]
        %v5210 = vlaneseq
        %v5211 = vshrl.u32 %v5210, 7
        %v5212 = vsub.s32 0, %v5211
        %v5213 = vrot.slane %v5208, %v5212
        %v5215 = vadd.f32 %v5195, %v5213
        %v5216 = vadd.f32 %v5196, %v5213
        %v5217 = vadd.f32 %v5197, %v5213
        %v5218 = vadd.f32 %v5198, %v5213
        %v5219 = vadd.f32 %v5199, %v5213
        %v5220 = vadd.f32 %v5200, %v5213
        %v5221 = vadd.f32 %v5201, %v5213
        %v5222 = vadd.f32 %v5202, %v5213
        %v5223 = vadd.f32 %v5203, %v5213
        %v5224 = vadd.f32 %v5204, %v5213
        %v5225 = vadd.f32 %v5205, %v5213
        %v5226 = vadd.f32 %v5206, %v5213
        %v5227 = vadd.f32 %v5207, %v5213
        %v5228 = vmax.f32 %v5215, 0.0
        %v5229 = vmax.f32 %v5216, 0.0
        %v5230 = vmax.f32 %v5217, 0.0
        %v5231 = vmax.f32 %v5218, 0.0
        %v5232 = vmax.f32 %v5219, 0.0
        %v5233 = vmax.f32 %v5220, 0.0
        %v5234 = vmax.f32 %v5221, 0.0
        %v5235 = vmax.f32 %v5222, 0.0
        %v5236 = vmax.f32 %v5223, 0.0
        %v5237 = vmax.f32 %v5224, 0.0
        %v5238 = vmax.f32 %v5225, 0.0
        %v5239 = vmax.f32 %v5226, 0.0
        %v5240 = vmax.f32 %v5227, 0.0
        %v5241 = vmul.f32 %v5228, %v2109
        %v5242 = vmul.f32 %v5229, %v2114
        %v5243 = vmul.f32 %v5230, %v2119
        %v5244 = vmul.f32 %v5231, %v2124
        %v5245 = vmul.f32 %v5232, %v2129
        %v5246 = vmul.f32 %v5233, %v2134
        %v5247 = vmul.f32 %v5234, %v2139
        %v5248 = vmul.f32 %v5235, %v2144
        %v5249 = vmul.f32 %v5236, %v2149
        %v5250 = vmul.f32 %v5237, %v2154
        %v5251 = vmul.f32 %v5238, %v2159
        %v5252 = vmul.f32 %v5239, %v2164
        %v5253 = vmul.f32 %v5240, %v2169
        %5254 = vst [vmem:[#allocation4 + $0x10] sm:$0xff] %v5241
        %5255 = vst [vmem:[#allocation4 + $0x18] sm:$0xff] %v5242
        %5256 = vst [vmem:[#allocation4 + $0x20] sm:$0xff] %v5243
        %5257 = vst [vmem:[#allocation4 + $0x28] sm:$0xff] %v5244
        %5258 = vst [vmem:[#allocation4 + $0x30] sm:$0xff] %v5245
        %5259 = vst [vmem:[#allocation4 + $0x38] sm:$0xff] %v5246
        %5260 = vst [vmem:[#allocation4 + $0x40] sm:$0xff] %v5247
        %5261 = vst [vmem:[#allocation4 + $0x48] sm:$0xff] %v5248
        %5262 = vst [vmem:[#allocation4 + $0x50] sm:$0xff] %v5249
        %5263 = vst [vmem:[#allocation4 + $0x58] sm:$0xff] %v5250
        %5264 = vst [vmem:[#allocation4 + $0x60] sm:$0xff] %v5251
        %5265 = vst [vmem:[#allocation4 + $0x68] sm:$0xff] %v5252
        %5266 = vst [vmem:[#allocation4 + $0x70] sm:$0xf] %v5253
        %v5267 = vld [vmem:[#allocation4 + $0x10] sm:$0xff]
        %v5268 = vld [vmem:[#allocation4 + $0x18] sm:$0xff]
        %v5269 = vld [vmem:[#allocation4 + $0x20] sm:$0xff]
        %v5270 = vld [vmem:[#allocation4 + $0x28] sm:$0xff]
        %v5271 = vld [vmem:[#allocation4 + $0x30] sm:$0xff]
        %v5272 = vld [vmem:[#allocation4 + $0x38] sm:$0xff]
        %v5273 = vld [vmem:[#allocation4 + $0x40] sm:$0xff]
        %v5274 = vld [vmem:[#allocation4 + $0x48] sm:$0xff]
        %v5275 = vld [vmem:[#allocation4 + $0x50] sm:$0xff]
        %v5276 = vld [vmem:[#allocation4 + $0x58] sm:$0xff]
        %v5277 = vld [vmem:[#allocation4 + $0x60] sm:$0xff]
        %v5278 = vld [vmem:[#allocation4 + $0x68] sm:$0xff]
        %v5279 = vld [vmem:[#allocation4 + $0x70] sm:$0xf]
        %v5280 = vpack.c.bf16 %v5268, %v5267
        %v5281 = vpack.c.bf16 %v5270, %v5269
        %v5282 = vpack.c.bf16 %v5272, %v5271
        %v5283 = vpack.c.bf16 %v5274, %v5273
        %v5284 = vpack.c.bf16 %v5276, %v5275
        %v5285 = vpack.c.bf16 %v5278, %v5277
        %v5286 = vpack.c.bf16 %v5279, %v5279
        %v5287 = vld [vmem:[%s7] sm:$0xf]
        %v5288 = vld [vmem:[%s7 + $0x4] sm:$0xf]
        %v5289 = vld [vmem:[%s7 + $0x8] sm:$0xf]
        %v5290 = vld [vmem:[%s7 + $0xc] sm:$0xf]
        %v5291 = vld [vmem:[%s7 + $0x10] sm:$0xf]
        %v5292 = vld [vmem:[%s7 + $0x14] sm:$0xf]
        %v5293 = vld [vmem:[%s7 + $0x18] sm:$0xf]
        %v5294 = vld [vmem:[%s7 + $0x1c] sm:$0xf]
        %v5295 = vld [vmem:[%s7 + $0x20] sm:$0xf]
        %v5296 = vld [vmem:[%s7 + $0x24] sm:$0xf]
        %v5297 = vld [vmem:[%s7 + $0x28] sm:$0xf]
        %v5298 = vld [vmem:[%s7 + $0x2c] sm:$0xf]
        %v5299 = vld [vmem:[%s7 + $0x30] sm:$0xf]
        %v5300 = vld [vmem:[%s7 + $0x34] sm:$0xf]
        %v5301 = vld [vmem:[%s7 + $0x38] sm:$0xf]
        %v5302 = vld [vmem:[%s7 + $0x3c] sm:$0xf]
        %v5303 = vld [vmem:[%s8] sm:$0x1]
        %v5305 = vlaneseq
        %v5306 = vshrl.u32 %v5305, 7
        %v5307 = vsub.s32 0, %v5306
        %v5308 = vrot.slane %v5303, %v5307
        %v5326 = vunpack.c.l.b16 %v5287
        %v5327 = vunpack.c.l.b16 %v5288
        %v5328 = vunpack.c.l.b16 %v5289
        %v5329 = vunpack.c.l.b16 %v5290
        %v5330 = vunpack.c.l.b16 %v5291
        %v5331 = vunpack.c.l.b16 %v5292
        %v5332 = vunpack.c.l.b16 %v5293
        %v5333 = vunpack.c.l.b16 %v5294
        %v5334 = vunpack.c.l.b16 %v5295
        %v5335 = vunpack.c.l.b16 %v5296
        %v5336 = vunpack.c.l.b16 %v5297
        %v5337 = vunpack.c.l.b16 %v5298
        %v5338 = vunpack.c.l.b16 %v5299
        %v5339 = vunpack.c.l.b16 %v5300
        %v5340 = vunpack.c.l.b16 %v5301
        %v5341 = vunpack.c.l.b16 %v5302
        %v5342 = vpack.c.b16 %v5327, %v5326
        %v5343 = vpack.c.b16 %v5329, %v5328
        %v5344 = vpack.c.b16 %v5331, %v5330
        %v5345 = vpack.c.b16 %v5333, %v5332
        %v5346 = vpack.c.b16 %v5335, %v5334
        %v5347 = vpack.c.b16 %v5337, %v5336
        %v5348 = vpack.c.b16 %v5339, %v5338
        %v5349 = vpack.c.b16 %v5341, %v5340
        %5358 = vmatprep.subr.bf16.mxu0 0
        %5359 = vmatpush1.bf16.msra.mxu0 %v5342
        %5360 = vmatprep.subr.bf16.mxu0 0
        %5361 = vmatpush1.bf16.msra.mxu0 %v5343
        %5362 = vmatprep.subr.bf16.mxu0 0
        %5363 = vmatpush1.bf16.msra.mxu0 %v5344
        %5364 = vmatprep.subr.bf16.mxu0 0
        %5365 = vmatpush1.bf16.msra.mxu0 %v5345
        %5366 = vmatprep.subr.bf16.mxu0 0
        %5367 = vmatpush1.bf16.msra.mxu0 %v5346
        %5368 = vmatprep.subr.bf16.mxu0 0
        %5369 = vmatpush1.bf16.msra.mxu0 %v5347
        %5370 = vmatprep.subr.bf16.mxu0 0
        %5371 = vmatpush1.bf16.msra.mxu0 %v5348
        %5372 = vmatprep.subr.bf16.mxu0 0
        %5373 = vmatpush1.bf16.msra.mxu0 %v5349
        %5374 = vmatprep.subr.bf16.mxu0 0
        %5375 = vmatpush1.bf16.msra.mxu0 0
        %5376 = vmatprep.subr.bf16.mxu0 0
        %5377 = vmatpush1.bf16.msra.mxu0 0
        %5378 = vmatprep.subr.bf16.mxu0 0
        %5379 = vmatpush1.bf16.msra.mxu0 0
        %5380 = vmatprep.subr.bf16.mxu0 0
        %5381 = vmatpush1.bf16.msra.mxu0 0
        %5382 = vmatprep.subr.bf16.mxu0 0
        %5383 = vmatpush1.bf16.msra.mxu0 0
        %5384 = vmatprep.subr.bf16.mxu0 0
        %5385 = vmatpush1.bf16.msra.mxu0 0
        %5386 = vmatprep.subr.bf16.mxu0 0
        %5387 = vmatpush1.bf16.msra.mxu0 0
        %5388 = vmatprep.subr.bf16.mxu0 0
        %5389 = vmatpush1.bf16.msra.mxu0 0
        %5390 = vmatprep.mubr.bf16.mxu0 0
        %5391 = vmatmul.mubr.bf16.gmra.mrb[0].mxu0 %v5280
        %v5392 = vpop.f32.mrb[0].mxu0
        %v5393 = vadd.f32 %v5308, %v5392
        %v5394 = vpop.f32.mrb[0].mxu0
        %v5395 = vpop.f32.mrb[0].mxu0
        %v5396 = vadd.f32 %v5308, %v5395
        %v5397 = vpop.f32.mrb[0].mxu0
        %5398 = vmatprep.mubr.bf16.mxu0 0
        %5399 = vmatmul.mubr.bf16.gmra.mrb[0].mxu0 %v5281
        %v5400 = vpop.f32.mrb[0].mxu0
        %v5401 = vadd.f32 %v5308, %v5400
        %v5402 = vpop.f32.mrb[0].mxu0
        %v5403 = vpop.f32.mrb[0].mxu0
        %v5404 = vadd.f32 %v5308, %v5403
        %v5405 = vpop.f32.mrb[0].mxu0
        %5406 = vmatprep.mubr.bf16.mxu0 0
        %5407 = vmatmul.mubr.bf16.gmra.mrb[0].mxu0 %v5282
        %v5408 = vpop.f32.mrb[0].mxu0
        %v5409 = vadd.f32 %v5308, %v5408
        %v5410 = vpop.f32.mrb[0].mxu0
        %v5411 = vpop.f32.mrb[0].mxu0
        %v5412 = vadd.f32 %v5308, %v5411
        %v5413 = vpop.f32.mrb[0].mxu0
        %5414 = vmatprep.mubr.bf16.mxu0 0
        %5415 = vmatmul.mubr.bf16.gmra.mrb[0].mxu0 %v5283
        %v5416 = vpop.f32.mrb[0].mxu0
        %v5417 = vadd.f32 %v5308, %v5416
        %v5418 = vpop.f32.mrb[0].mxu0
        %v5419 = vpop.f32.mrb[0].mxu0
        %v5420 = vadd.f32 %v5308, %v5419
        %v5421 = vpop.f32.mrb[0].mxu0
        %5422 = vmatprep.mubr.bf16.mxu0 0
        %5423 = vmatmul.mubr.bf16.gmra.mrb[0].mxu0 %v5284
        %v5424 = vpop.f32.mrb[0].mxu0
        %v5425 = vadd.f32 %v5308, %v5424
        %v5426 = vpop.f32.mrb[0].mxu0
        %v5427 = vpop.f32.mrb[0].mxu0
        %v5428 = vadd.f32 %v5308, %v5427
        %v5429 = vpop.f32.mrb[0].mxu0
        %5430 = vmatprep.mubr.bf16.mxu0 0
        %5431 = vmatmul.mubr.bf16.gmra.mrb[0].mxu0 %v5285
        %v5432 = vpop.f32.mrb[0].mxu0
        %v5433 = vadd.f32 %v5308, %v5432
        %v5434 = vpop.f32.mrb[0].mxu0
        %v5435 = vpop.f32.mrb[0].mxu0
        %v5436 = vadd.f32 %v5308, %v5435
        %v5437 = vpop.f32.mrb[0].mxu0
        %5438 = vmatprep.mubr.bf16.mxu0 0
        %5439 = vmatmul.mubr.bf16.gmra.mrb[0].mxu0 %v5286
        %v5440 = vpop.f32.mrb[0].mxu0
        %v5441 = vadd.f32 %v5308, %v5440
        %v5442 = vpop.f32.mrb[0].mxu0
        %v5443 = vpop.f32.mrb[0].mxu0
        %v5444 = vpop.f32.mrb[0].mxu0
        %5445 = vdwg.mxu0
        %v5446 = vmax.f32 %v5393, 0.0
        %v5447 = vmax.f32 %v5396, 0.0
        %v5448 = vmax.f32 %v5401, 0.0
        %v5449 = vmax.f32 %v5404, 0.0
        %v5450 = vmax.f32 %v5409, 0.0
        %v5451 = vmax.f32 %v5412, 0.0
        %v5452 = vmax.f32 %v5417, 0.0
        %v5453 = vmax.f32 %v5420, 0.0
        %v5454 = vmax.f32 %v5425, 0.0
        %v5455 = vmax.f32 %v5428, 0.0
        %v5456 = vmax.f32 %v5433, 0.0
        %v5457 = vmax.f32 %v5436, 0.0
        %v5458 = vmax.f32 %v5441, 0.0
        %v5459 = vpack.c.bf16 %v5447, %v5446
        %v5460 = vpack.c.bf16 %v5449, %v5448
        %v5461 = vpack.c.bf16 %v5451, %v5450
        %v5462 = vpack.c.bf16 %v5453, %v5452
        %v5463 = vpack.c.bf16 %v5455, %v5454
        %v5464 = vpack.c.bf16 %v5457, %v5456
        %v5465 = vpack.c.bf16 %v5458, %v5458
        %v5466 = vld [vmem:[%s18] sm:$0xf]
        %v5469 = vunpack.c.l.s4 1983009808
        %v5470 = vunpack.c.0.s8 %v5469
        %v5471 = vlaneseq
        %v5472 = vshrl.u32 %v5471, 7
        %v5473 = vsub.s32 %v5470, %v5472
        %v5474 = vrot.slane %v5466, %v5473
        %v5475 = vcombine.high %v5474, %v5474
        %vm5476 = vcmask 31744
        %v5478 = vsel %vm5476, %v5459, 0
        %v5481 = vsel %vm5476, %v5460, 0
        %v5484 = vsel %vm5476, %v5461, 0
        %v5487 = vsel %vm5476, %v5462, 0
        %v5490 = vsel %vm5476, %v5463, 0
        %v5493 = vsel %vm5476, %v5464, 0
        %v5496 = vsel %vm5476, %v5465, 0
        %v5499 = vsel %vm837, %v5474, 0
        %v5502 = vsel %vm837, %v5475, 0
        %5504 = vmatprep.subr.bf16.mxu0 %v5502
        %5505 = vmatpush1.bf16.msra.mxu0 %v5499
        %5506 = vmatprep.subr.bf16.mxu0 0
        %5507 = vmatpush1.bf16.msra.mxu0 0
        %5508 = vmatprep.subr.bf16.mxu0 0
        %5509 = vmatpush1.bf16.msra.mxu0 0
        %5510 = vmatprep.subr.bf16.mxu0 0
        %5511 = vmatpush1.bf16.msra.mxu0 0
        %5512 = vmatprep.subr.bf16.mxu0 0
        %5513 = vmatpush1.bf16.msra.mxu0 0
        %5514 = vmatprep.subr.bf16.mxu0 0
        %5515 = vmatpush1.bf16.msra.mxu0 0
        %5516 = vmatprep.subr.bf16.mxu0 0
        %5517 = vmatpush1.bf16.msra.mxu0 0
        %5518 = vmatprep.subr.bf16.mxu0 0
        %5519 = vmatpush1.bf16.msra.mxu0 0
        %5520 = vmatprep.subr.bf16.mxu0 0
        %5521 = vmatpush1.bf16.msra.mxu0 0
        %5522 = vmatprep.subr.bf16.mxu0 0
        %5523 = vmatpush1.bf16.msra.mxu0 0
        %5524 = vmatprep.subr.bf16.mxu0 0
        %5525 = vmatpush1.bf16.msra.mxu0 0
        %5526 = vmatprep.subr.bf16.mxu0 0
        %5527 = vmatpush1.bf16.msra.mxu0 0
        %5528 = vmatprep.subr.bf16.mxu0 0
        %5529 = vmatpush1.bf16.msra.mxu0 0
        %5530 = vmatprep.subr.bf16.mxu0 0
        %5531 = vmatpush1.bf16.msra.mxu0 0
        %5532 = vmatprep.subr.bf16.mxu0 0
        %5533 = vmatpush1.bf16.msra.mxu0 0
        %5534 = vmatprep.subr.bf16.mxu0 0
        %5535 = vmatpush1.bf16.msra.mxu0 0
        %5536 = vmatprep.mubr.bf16.mxu0 0
        %5537 = vmatmul.mubr.bf16.gmra.mrb[0].mxu0 %v5478
        %v5538 = vpop.f32.mrb[0].mxu0
        %v5539 = vadd.f32 0.0, %v5538
        %v5540 = vpop.f32.mrb[0].mxu0
        %v5541 = vadd.f32 0.0, %v5540
        %v5542 = vpop.f32.mrb[0].mxu0
        %v5543 = vadd.f32 0.0, %v5542
        %v5544 = vpop.f32.mrb[0].mxu0
        %v5545 = vadd.f32 0.0, %v5544
        %5546 = vmatprep.mubr.bf16.mxu0 0
        %5547 = vmatmul.mubr.bf16.gmra.mrb[0].mxu0 %v5481
        %v5548 = vpop.f32.mrb[0].mxu0
        %v5549 = vadd.f32 0.0, %v5548
        %v5550 = vpop.f32.mrb[0].mxu0
        %v5551 = vadd.f32 0.0, %v5550
        %v5552 = vpop.f32.mrb[0].mxu0
        %v5553 = vadd.f32 0.0, %v5552
        %v5554 = vpop.f32.mrb[0].mxu0
        %v5555 = vadd.f32 0.0, %v5554
        %5556 = vmatprep.mubr.bf16.mxu0 0
        %5557 = vmatmul.mubr.bf16.gmra.mrb[0].mxu0 %v5484
        %v5558 = vpop.f32.mrb[0].mxu0
        %v5559 = vadd.f32 0.0, %v5558
        %v5560 = vpop.f32.mrb[0].mxu0
        %v5561 = vadd.f32 0.0, %v5560
        %v5562 = vpop.f32.mrb[0].mxu0
        %v5563 = vadd.f32 0.0, %v5562
        %v5564 = vpop.f32.mrb[0].mxu0
        %v5565 = vadd.f32 0.0, %v5564
        %5566 = vmatprep.mubr.bf16.mxu0 0
        %5567 = vmatmul.mubr.bf16.gmra.mrb[0].mxu0 %v5487
        %v5568 = vpop.f32.mrb[0].mxu0
        %v5569 = vadd.f32 0.0, %v5568
        %v5570 = vpop.f32.mrb[0].mxu0
        %v5571 = vadd.f32 0.0, %v5570
        %v5572 = vpop.f32.mrb[0].mxu0
        %v5573 = vadd.f32 0.0, %v5572
        %v5574 = vpop.f32.mrb[0].mxu0
        %v5575 = vadd.f32 0.0, %v5574
        %5576 = vmatprep.mubr.bf16.mxu0 0
        %5577 = vmatmul.mubr.bf16.gmra.mrb[0].mxu0 %v5490
        %v5578 = vpop.f32.mrb[0].mxu0
        %v5579 = vadd.f32 0.0, %v5578
        %v5580 = vpop.f32.mrb[0].mxu0
        %v5581 = vadd.f32 0.0, %v5580
        %v5582 = vpop.f32.mrb[0].mxu0
        %v5583 = vadd.f32 0.0, %v5582
        %v5584 = vpop.f32.mrb[0].mxu0
        %v5585 = vadd.f32 0.0, %v5584
        %5586 = vmatprep.mubr.bf16.mxu0 0
        %5587 = vmatmul.mubr.bf16.gmra.mrb[0].mxu0 %v5493
        %v5588 = vpop.f32.mrb[0].mxu0
        %v5589 = vadd.f32 0.0, %v5588
        %v5590 = vpop.f32.mrb[0].mxu0
        %v5591 = vadd.f32 0.0, %v5590
        %v5592 = vpop.f32.mrb[0].mxu0
        %v5593 = vadd.f32 0.0, %v5592
        %v5594 = vpop.f32.mrb[0].mxu0
        %v5595 = vadd.f32 0.0, %v5594
        %5596 = vmatprep.mubr.bf16.mxu0 0
        %5597 = vmatmul.mubr.bf16.gmra.mrb[0].mxu0 %v5496
        %v5598 = vpop.f32.mrb[0].mxu0
        %v5599 = vadd.f32 0.0, %v5598
        %v5600 = vpop.f32.mrb[0].mxu0
        %v5601 = vadd.f32 0.0, %v5600
        %v5602 = vpop.f32.mrb[0].mxu0
        %v5603 = vpop.f32.mrb[0].mxu0
        %5604 = vdwg.mxu0
        %v5605 = vld [vmem:[%s19] sm:$0xff]
        %v5606 = vld [vmem:[%s19 + $0x8] sm:$0xff]
        %v5607 = vld [vmem:[%s19 + $0x10] sm:$0xff]
        %v5608 = vld [vmem:[%s19 + $0x18] sm:$0xff]
        %v5609 = vld [vmem:[%s19 + $0x20] sm:$0xff]
        %v5610 = vld [vmem:[%s19 + $0x28] sm:$0xff]
        %v5611 = vld [vmem:[%s19 + $0x30] sm:$0xff]
        %v5612 = vld [vmem:[%s19 + $0x38] sm:$0xff]
        %v5613 = vld [vmem:[%s19 + $0x40] sm:$0xff]
        %v5614 = vld [vmem:[%s19 + $0x48] sm:$0xff]
        %v5615 = vld [vmem:[%s19 + $0x50] sm:$0xff]
        %v5616 = vld [vmem:[%s19 + $0x58] sm:$0xff]
        %v5617 = vld [vmem:[%s19 + $0x60] sm:$0xff]
        %v5618 = vld [vmem:[%s19 + $0x68] sm:$0xff]
        %v5619 = vld [vmem:[%s19 + $0x70] sm:$0xff]
        %v5620 = vld [vmem:[%s19 + $0x78] sm:$0xff]
        %v5621 = vld [vmem:[%s19 + $0x80] sm:$0xff]
        %v5622 = vld [vmem:[%s19 + $0x88] sm:$0xff]
        %v5623 = vld [vmem:[%s19 + $0x90] sm:$0xff]
        %v5624 = vld [vmem:[%s19 + $0x98] sm:$0xff]
        %v5625 = vld [vmem:[%s19 + $0xa0] sm:$0xff]
        %v5626 = vld [vmem:[%s19 + $0xa8] sm:$0xff]
        %v5627 = vld [vmem:[%s19 + $0xb0] sm:$0xff]
        %v5628 = vld [vmem:[%s19 + $0xb8] sm:$0xff]
        %v5629 = vld [vmem:[%s19 + $0xc0] sm:$0xf]
        %v5630 = vld [vmem:[%s19 + $0xc8] sm:$0xf]
        %v5631 = vmul.f32 %v5539, %v5605
        %v5632 = vmul.f32 %v5541, %v5606
        %v5633 = vmul.f32 %v5543, %v5607
        %v5634 = vmul.f32 %v5545, %v5608
        %v5635 = vmul.f32 %v5549, %v5609
        %v5636 = vmul.f32 %v5551, %v5610
        %v5637 = vmul.f32 %v5553, %v5611
        %v5638 = vmul.f32 %v5555, %v5612
        %v5639 = vmul.f32 %v5559, %v5613
        %v5640 = vmul.f32 %v5561, %v5614
        %v5641 = vmul.f32 %v5563, %v5615
        %v5642 = vmul.f32 %v5565, %v5616
        %v5643 = vmul.f32 %v5569, %v5617
        %v5644 = vmul.f32 %v5571, %v5618
        %v5645 = vmul.f32 %v5573, %v5619
        %v5646 = vmul.f32 %v5575, %v5620
        %v5647 = vmul.f32 %v5579, %v5621
        %v5648 = vmul.f32 %v5581, %v5622
        %v5649 = vmul.f32 %v5583, %v5623
        %v5650 = vmul.f32 %v5585, %v5624
        %v5651 = vmul.f32 %v5589, %v5625
        %v5652 = vmul.f32 %v5591, %v5626
        %v5653 = vmul.f32 %v5593, %v5627
        %v5654 = vmul.f32 %v5595, %v5628
        %v5655 = vmul.f32 %v5599, %v5629
        %v5656 = vmul.f32 %v5601, %v5630
        %v5657 = vpack.c.bf16 %v5633, %v5631
        %v5658 = vpack.c.bf16 %v5634, %v5632
        %v5659 = vpack.c.bf16 %v5637, %v5635
        %v5660 = vpack.c.bf16 %v5638, %v5636
        %v5661 = vpack.c.bf16 %v5641, %v5639
        %v5662 = vpack.c.bf16 %v5642, %v5640
        %v5663 = vpack.c.bf16 %v5645, %v5643
        %v5664 = vpack.c.bf16 %v5646, %v5644
        %v5665 = vpack.c.bf16 %v5649, %v5647
        %v5666 = vpack.c.bf16 %v5650, %v5648
        %v5667 = vpack.c.bf16 %v5653, %v5651
        %v5668 = vpack.c.bf16 %v5654, %v5652
        %v5669 = vpack.c.bf16 %v5655, %v5655
        %v5670 = vpack.c.bf16 %v5656, %v5656
        %vm5671 = vcmask 818176
        %v5673 = vsel %vm5671, 1065369472, 0
        %v5676 = vsel %vm837, %v5669, 0
        %v5679 = vsel %vm837, %v5670, 0
        %5681 = vmatprep.subr.bf16.mxu0 %v5658
        %5682 = vmatpush1.bf16.msra.mxu0 %v5657
        %5683 = vmatprep.subr.bf16.mxu0 %v5660
        %5684 = vmatpush1.bf16.msra.mxu0 %v5659
        %5685 = vmatprep.subr.bf16.mxu0 %v5662
        %5686 = vmatpush1.bf16.msra.mxu0 %v5661
        %5687 = vmatprep.subr.bf16.mxu0 %v5664
        %5688 = vmatpush1.bf16.msra.mxu0 %v5663
        %5689 = vmatprep.subr.bf16.mxu0 %v5666
        %5690 = vmatpush1.bf16.msra.mxu0 %v5665
        %5691 = vmatprep.subr.bf16.mxu0 %v5668
        %5692 = vmatpush1.bf16.msra.mxu0 %v5667
        %5693 = vmatprep.subr.bf16.mxu0 %v5679
        %5694 = vmatpush1.bf16.msra.mxu0 %v5676
        %5695 = vmatprep.subr.bf16.mxu0 0
        %5696 = vmatpush1.bf16.msra.mxu0 0
        %5697 = vmatprep.subr.bf16.mxu0 0
        %5698 = vmatpush1.bf16.msra.mxu0 0
        %5699 = vmatprep.subr.bf16.mxu0 0
        %5700 = vmatpush1.bf16.msra.mxu0 0
        %5701 = vmatprep.subr.bf16.mxu0 0
        %5702 = vmatpush1.bf16.msra.mxu0 0
        %5703 = vmatprep.subr.bf16.mxu0 0
        %5704 = vmatpush1.bf16.msra.mxu0 0
        %5705 = vmatprep.subr.bf16.mxu0 0
        %5706 = vmatpush1.bf16.msra.mxu0 0
        %5707 = vmatprep.subr.bf16.mxu0 0
        %5708 = vmatpush1.bf16.msra.mxu0 0
        %5709 = vmatprep.subr.bf16.mxu0 0
        %5710 = vmatpush1.bf16.msra.mxu0 0
        %5711 = vmatprep.subr.bf16.mxu0 0
        %5712 = vmatpush1.bf16.msra.mxu0 0
        %5713 = vmatprep.mubr.bf16.mxu0 0
        %5714 = vmatmul.mubr.bf16.gmra.mrb[0].mxu0 %v5673
        %v5715 = vpop.f32.mrb[0].mxu0
        %v5716 = vadd.f32 0.0, %v5715
        %v5717 = vpop.f32.mrb[0].mxu0
        %v5718 = vadd.f32 0.0, %v5717
        %v5719 = vpop.f32.mrb[0].mxu0
        %v5720 = vpop.f32.mrb[0].mxu0
        %5721 = vdwg.mxu0
        %v5722 = vpack.c.bf16 %v5716, %v5716
        %v5723 = vpack.c.bf16 %v5718, %v5718
        %v5724 = vld [vmem:[%s11] sm:$0xf]
        %v5725 = vld [vmem:[%s11 + $0x4] sm:$0xf]
        %v5726 = vld [vmem:[%s11 + $0x8] sm:$0xf]
        %v5727 = vld [vmem:[%s11 + $0xc] sm:$0xf]
        %v5728 = vld [vmem:[%s11 + $0x10] sm:$0xf]
        %v5729 = vld [vmem:[%s11 + $0x14] sm:$0xf]
        %v5730 = vld [vmem:[%s11 + $0x18] sm:$0xf]
        %v5731 = vld [vmem:[%s11 + $0x1c] sm:$0xf]
        %v5732 = vld [vmem:[%s11 + $0x20] sm:$0xf]
        %v5733 = vld [vmem:[%s11 + $0x24] sm:$0xf]
        %v5734 = vld [vmem:[%s11 + $0x28] sm:$0xf]
        %v5735 = vld [vmem:[%s11 + $0x2c] sm:$0xf]
        %v5736 = vld [vmem:[%s11 + $0x30] sm:$0xf]
        %v5737 = vld [vmem:[%s11 + $0x34] sm:$0xf]
        %v5738 = vld [vmem:[%s11 + $0x38] sm:$0xf]
        %v5739 = vld [vmem:[%s11 + $0x3c] sm:$0xf]
        %v5740 = vld [vmem:[%s11 + $0x40] sm:$0xf]
        %v5741 = vld [vmem:[%s11 + $0x44] sm:$0xf]
        %v5742 = vld [vmem:[%s11 + $0x48] sm:$0xf]
        %v5743 = vld [vmem:[%s11 + $0x4c] sm:$0xf]
        %v5744 = vld [vmem:[%s11 + $0x50] sm:$0xf]
        %v5745 = vld [vmem:[%s11 + $0x54] sm:$0xf]
        %v5746 = vld [vmem:[%s11 + $0x58] sm:$0xf]
        %v5747 = vld [vmem:[%s11 + $0x5c] sm:$0xf]
        %v5748 = vld [vmem:[%s11 + $0x60] sm:$0xf]
        %v5749 = vld [vmem:[%s11 + $0x64] sm:$0xf]
        %v5750 = vld [vmem:[%s11 + $0x68] sm:$0xf]
        %v5751 = vld [vmem:[%s11 + $0x6c] sm:$0xf]
        %v5752 = vld [vmem:[%s11 + $0x70] sm:$0xf]
        %v5753 = vld [vmem:[%s11 + $0x74] sm:$0xf]
        %v5754 = vld [vmem:[%s11 + $0x78] sm:$0xf]
        %v5755 = vld [vmem:[%s11 + $0x7c] sm:$0xf]
        %v5756 = vld [vmem:[%s12] sm:$0x1]
        %v5789 = vunpack.c.l.b16 %v5724
        %v5790 = vunpack.c.l.b16 %v5725
        %v5791 = vunpack.c.l.b16 %v5726
        %v5792 = vunpack.c.l.b16 %v5727
        %v5793 = vunpack.c.l.b16 %v5728
        %v5794 = vunpack.c.l.b16 %v5729
        %v5795 = vunpack.c.l.b16 %v5730
        %v5796 = vunpack.c.l.b16 %v5731
        %v5797 = vunpack.c.l.b16 %v5732
        %v5798 = vunpack.c.l.b16 %v5733
        %v5799 = vunpack.c.l.b16 %v5734
        %v5800 = vunpack.c.l.b16 %v5735
        %v5801 = vunpack.c.l.b16 %v5736
        %v5802 = vunpack.c.l.b16 %v5737
        %v5803 = vunpack.c.l.b16 %v5738
        %v5804 = vunpack.c.l.b16 %v5739
        %v5805 = vunpack.c.l.b16 %v5740
        %v5806 = vunpack.c.l.b16 %v5741
        %v5807 = vunpack.c.l.b16 %v5742
        %v5808 = vunpack.c.l.b16 %v5743
        %v5809 = vunpack.c.l.b16 %v5744
        %v5810 = vunpack.c.l.b16 %v5745
        %v5811 = vunpack.c.l.b16 %v5746
        %v5812 = vunpack.c.l.b16 %v5747
        %v5813 = vunpack.c.l.b16 %v5748
        %v5814 = vunpack.c.l.b16 %v5749
        %v5815 = vunpack.c.l.b16 %v5750
        %v5816 = vunpack.c.l.b16 %v5751
        %v5817 = vunpack.c.l.b16 %v5752
        %v5818 = vunpack.c.l.b16 %v5753
        %v5819 = vunpack.c.l.b16 %v5754
        %v5820 = vunpack.c.l.b16 %v5755
        %v5821 = vpack.c.b16 %v5790, %v5789
        %v5822 = vpack.c.b16 %v5792, %v5791
        %v5823 = vpack.c.b16 %v5794, %v5793
        %v5824 = vpack.c.b16 %v5796, %v5795
        %v5825 = vpack.c.b16 %v5798, %v5797
        %v5826 = vpack.c.b16 %v5800, %v5799
        %v5827 = vpack.c.b16 %v5802, %v5801
        %v5828 = vpack.c.b16 %v5804, %v5803
        %v5829 = vpack.c.b16 %v5806, %v5805
        %v5830 = vpack.c.b16 %v5808, %v5807
        %v5831 = vpack.c.b16 %v5810, %v5809
        %v5832 = vpack.c.b16 %v5812, %v5811
        %v5833 = vpack.c.b16 %v5814, %v5813
        %v5834 = vpack.c.b16 %v5816, %v5815
        %v5835 = vpack.c.b16 %v5818, %v5817
        %v5836 = vpack.c.b16 %v5820, %v5819
        %5853 = vmatprep.subr.bf16.mxu0 0
        %5854 = vmatpush1.bf16.msra.mxu0 %v5821
        %5855 = vmatprep.subr.bf16.mxu0 0
        %5856 = vmatpush1.bf16.msra.mxu0 %v5822
        %5857 = vmatprep.subr.bf16.mxu0 0
        %5858 = vmatpush1.bf16.msra.mxu0 %v5823
        %5859 = vmatprep.subr.bf16.mxu0 0
        %5860 = vmatpush1.bf16.msra.mxu0 %v5824
        %5861 = vmatprep.subr.bf16.mxu0 0
        %5862 = vmatpush1.bf16.msra.mxu0 %v5825
        %5863 = vmatprep.subr.bf16.mxu0 0
        %5864 = vmatpush1.bf16.msra.mxu0 %v5826
        %5865 = vmatprep.subr.bf16.mxu0 0
        %5866 = vmatpush1.bf16.msra.mxu0 %v5827
        %5867 = vmatprep.subr.bf16.mxu0 0
        %5868 = vmatpush1.bf16.msra.mxu0 %v5828
        %5869 = vmatprep.subr.bf16.mxu0 0
        %5870 = vmatpush1.bf16.msra.mxu0 %v5829
        %5871 = vmatprep.subr.bf16.mxu0 0
        %5872 = vmatpush1.bf16.msra.mxu0 %v5830
        %5873 = vmatprep.subr.bf16.mxu0 0
        %5874 = vmatpush1.bf16.msra.mxu0 %v5831
        %5875 = vmatprep.subr.bf16.mxu0 0
        %5876 = vmatpush1.bf16.msra.mxu0 %v5832
        %5877 = vmatprep.subr.bf16.mxu0 0
        %5878 = vmatpush1.bf16.msra.mxu0 %v5833
        %5879 = vmatprep.subr.bf16.mxu0 0
        %5880 = vmatpush1.bf16.msra.mxu0 %v5834
        %5881 = vmatprep.subr.bf16.mxu0 0
        %5882 = vmatpush1.bf16.msra.mxu0 %v5835
        %5883 = vmatprep.subr.bf16.mxu0 0
        %5884 = vmatpush1.bf16.msra.mxu0 %v5836
        %5885 = vmatprep.mubr.bf16.mxu0 %v5723
        %5886 = vmatmul.mubr.bf16.gmra.mrb[0].mxu0 %v5722
        %v5887 = vpop.f32.mrb[0].mxu0
        %v5888 = vadd.f32 %v5756, %v5887
        %v5889 = vpop.f32.mrb[0].mxu0
        %v5890 = vpop.f32.mrb[0].mxu0
        %v5891 = vpop.f32.mrb[0].mxu0
        %5892 = vdwg.mxu0
        %vm5893 = vcmask 516096
        %v5894 = vsel %vm5893, %v5888, -inf
        %5895 = vmax.xlane.f32.xlu0 %v5894
        %v5896 = vpop.xlane.xlu0 %5895
        %v5897 = vsub.f32 %v5888, %v5896
        %v5898 = vmul.f32 %v5897, 1.442695
        %v5899 = vpow.pop %v5898
        %v5900 = vsel %vm5893, %v5899, 0.0
        %5901 = vadd.xlane.f32.xlu0 %v5900
        %v5902 = vpop.xlane.xlu0 %5901
        %v5903 = vlog2.pop %v5902
        %v5904 = vmul.f32 %v5903, 0.6931472
        %v5905 = vsub.f32 %v5897, %v5904
        %5906 = vst.msk [vmem:[%s703] sm:$0x1] %vm5893, %v5905
        %v5907 = vld [vmem:[%s9] sm:$0xf]
        %v5908 = vld [vmem:[%s9 + $0x4] sm:$0xf]
        %v5909 = vld [vmem:[%s9 + $0x8] sm:$0xf]
        %v5910 = vld [vmem:[%s9 + $0xc] sm:$0xf]
        %v5911 = vld [vmem:[%s9 + $0x10] sm:$0xf]
        %v5912 = vld [vmem:[%s9 + $0x14] sm:$0xf]
        %v5913 = vld [vmem:[%s9 + $0x18] sm:$0xf]
        %v5914 = vld [vmem:[%s9 + $0x1c] sm:$0xf]
        %v5915 = vld [vmem:[%s9 + $0x20] sm:$0xf]
        %v5916 = vld [vmem:[%s9 + $0x24] sm:$0xf]
        %v5917 = vld [vmem:[%s9 + $0x28] sm:$0xf]
        %v5918 = vld [vmem:[%s9 + $0x2c] sm:$0xf]
        %v5919 = vld [vmem:[%s9 + $0x30] sm:$0xf]
        %v5920 = vld [vmem:[%s9 + $0x34] sm:$0xf]
        %v5921 = vld [vmem:[%s9 + $0x38] sm:$0xf]
        %v5922 = vld [vmem:[%s9 + $0x3c] sm:$0xf]
        %v5923 = vld [vmem:[%s10] sm:$0x1]
        %v5925 = vlaneseq
        %v5926 = vshrl.u32 %v5925, 7
        %v5927 = vsub.s32 0, %v5926
        %v5928 = vrot.slane %v5923, %v5927
        %v5946 = vunpack.c.l.b16 %v5907
        %v5947 = vunpack.c.l.b16 %v5908
        %v5948 = vunpack.c.l.b16 %v5909
        %v5949 = vunpack.c.l.b16 %v5910
        %v5950 = vunpack.c.l.b16 %v5911
        %v5951 = vunpack.c.l.b16 %v5912
        %v5952 = vunpack.c.l.b16 %v5913
        %v5953 = vunpack.c.l.b16 %v5914
        %v5954 = vunpack.c.l.b16 %v5915
        %v5955 = vunpack.c.l.b16 %v5916
        %v5956 = vunpack.c.l.b16 %v5917
        %v5957 = vunpack.c.l.b16 %v5918
        %v5958 = vunpack.c.l.b16 %v5919
        %v5959 = vunpack.c.l.b16 %v5920
        %v5960 = vunpack.c.l.b16 %v5921
        %v5961 = vunpack.c.l.b16 %v5922
        %v5962 = vpack.c.b16 %v5947, %v5946
        %v5963 = vpack.c.b16 %v5949, %v5948
        %v5964 = vpack.c.b16 %v5951, %v5950
        %v5965 = vpack.c.b16 %v5953, %v5952
        %v5966 = vpack.c.b16 %v5955, %v5954
        %v5967 = vpack.c.b16 %v5957, %v5956
        %v5968 = vpack.c.b16 %v5959, %v5958
        %v5969 = vpack.c.b16 %v5961, %v5960
        %5978 = vmatprep.subr.bf16.mxu0 0
        %5979 = vmatpush1.bf16.msra.mxu0 %v5962
        %5980 = vmatprep.subr.bf16.mxu0 0
        %5981 = vmatpush1.bf16.msra.mxu0 %v5963
        %5982 = vmatprep.subr.bf16.mxu0 0
        %5983 = vmatpush1.bf16.msra.mxu0 %v5964
        %5984 = vmatprep.subr.bf16.mxu0 0
        %5985 = vmatpush1.bf16.msra.mxu0 %v5965
        %5986 = vmatprep.subr.bf16.mxu0 0
        %5987 = vmatpush1.bf16.msra.mxu0 %v5966
        %5988 = vmatprep.subr.bf16.mxu0 0
        %5989 = vmatpush1.bf16.msra.mxu0 %v5967
        %5990 = vmatprep.subr.bf16.mxu0 0
        %5991 = vmatpush1.bf16.msra.mxu0 %v5968
        %5992 = vmatprep.subr.bf16.mxu0 0
        %5993 = vmatpush1.bf16.msra.mxu0 %v5969
        %5994 = vmatprep.subr.bf16.mxu0 0
        %5995 = vmatpush1.bf16.msra.mxu0 0
        %5996 = vmatprep.subr.bf16.mxu0 0
        %5997 = vmatpush1.bf16.msra.mxu0 0
        %5998 = vmatprep.subr.bf16.mxu0 0
        %5999 = vmatpush1.bf16.msra.mxu0 0
        %6000 = vmatprep.subr.bf16.mxu0 0
        %6001 = vmatpush1.bf16.msra.mxu0 0
        %6002 = vmatprep.subr.bf16.mxu0 0
        %6003 = vmatpush1.bf16.msra.mxu0 0
        %6004 = vmatprep.subr.bf16.mxu0 0
        %6005 = vmatpush1.bf16.msra.mxu0 0
        %6006 = vmatprep.subr.bf16.mxu0 0
        %6007 = vmatpush1.bf16.msra.mxu0 0
        %6008 = vmatprep.subr.bf16.mxu0 0
        %6009 = vmatpush1.bf16.msra.mxu0 0
        %6010 = vmatprep.mubr.bf16.mxu0 0
        %6011 = vmatmul.mubr.bf16.gmra.mrb[0].mxu0 %v5280
        %v6012 = vpop.f32.mrb[0].mxu0
        %v6013 = vadd.f32 %v5928, %v6012
        %v6014 = vpop.f32.mrb[0].mxu0
        %v6015 = vpop.f32.mrb[0].mxu0
        %v6016 = vadd.f32 %v5928, %v6015
        %v6017 = vpop.f32.mrb[0].mxu0
        %6018 = vmatprep.mubr.bf16.mxu0 0
        %6019 = vmatmul.mubr.bf16.gmra.mrb[0].mxu0 %v5281
        %v6020 = vpop.f32.mrb[0].mxu0
        %v6021 = vadd.f32 %v5928, %v6020
        %v6022 = vpop.f32.mrb[0].mxu0
        %v6023 = vpop.f32.mrb[0].mxu0
        %v6024 = vadd.f32 %v5928, %v6023
        %v6025 = vpop.f32.mrb[0].mxu0
        %6026 = vmatprep.mubr.bf16.mxu0 0
        %6027 = vmatmul.mubr.bf16.gmra.mrb[0].mxu0 %v5282
        %v6028 = vpop.f32.mrb[0].mxu0
        %v6029 = vadd.f32 %v5928, %v6028
        %v6030 = vpop.f32.mrb[0].mxu0
        %v6031 = vpop.f32.mrb[0].mxu0
        %v6032 = vadd.f32 %v5928, %v6031
        %v6033 = vpop.f32.mrb[0].mxu0
        %6034 = vmatprep.mubr.bf16.mxu0 0
        %6035 = vmatmul.mubr.bf16.gmra.mrb[0].mxu0 %v5283
        %v6036 = vpop.f32.mrb[0].mxu0
        %v6037 = vadd.f32 %v5928, %v6036
        %v6038 = vpop.f32.mrb[0].mxu0
        %v6039 = vpop.f32.mrb[0].mxu0
        %v6040 = vadd.f32 %v5928, %v6039
        %v6041 = vpop.f32.mrb[0].mxu0
        %6042 = vmatprep.mubr.bf16.mxu0 0
        %6043 = vmatmul.mubr.bf16.gmra.mrb[0].mxu0 %v5284
        %v6044 = vpop.f32.mrb[0].mxu0
        %v6045 = vadd.f32 %v5928, %v6044
        %v6046 = vpop.f32.mrb[0].mxu0
        %v6047 = vpop.f32.mrb[0].mxu0
        %v6048 = vadd.f32 %v5928, %v6047
        %v6049 = vpop.f32.mrb[0].mxu0
        %6050 = vmatprep.mubr.bf16.mxu0 0
        %6051 = vmatmul.mubr.bf16.gmra.mrb[0].mxu0 %v5285
        %v6052 = vpop.f32.mrb[0].mxu0
        %v6053 = vadd.f32 %v5928, %v6052
        %v6054 = vpop.f32.mrb[0].mxu0
        %v6055 = vpop.f32.mrb[0].mxu0
        %v6056 = vadd.f32 %v5928, %v6055
        %v6057 = vpop.f32.mrb[0].mxu0
        %6058 = vmatprep.mubr.bf16.mxu0 0
        %6059 = vmatmul.mubr.bf16.gmra.mrb[0].mxu0 %v5286
        %v6060 = vpop.f32.mrb[0].mxu0
        %v6061 = vadd.f32 %v5928, %v6060
        %v6062 = vpop.f32.mrb[0].mxu0
        %v6063 = vpop.f32.mrb[0].mxu0
        %v6064 = vpop.f32.mrb[0].mxu0
        %6065 = vdwg.mxu0
        %v6066 = vmax.f32 %v6013, 0.0
        %v6067 = vmax.f32 %v6016, 0.0
        %v6068 = vmax.f32 %v6021, 0.0
        %v6069 = vmax.f32 %v6024, 0.0
        %v6070 = vmax.f32 %v6029, 0.0
        %v6071 = vmax.f32 %v6032, 0.0
        %v6072 = vmax.f32 %v6037, 0.0
        %v6073 = vmax.f32 %v6040, 0.0
        %v6074 = vmax.f32 %v6045, 0.0
        %v6075 = vmax.f32 %v6048, 0.0
        %v6076 = vmax.f32 %v6053, 0.0
        %v6077 = vmax.f32 %v6056, 0.0
        %v6078 = vmax.f32 %v6061, 0.0
        %v6079 = vpack.c.bf16 %v6067, %v6066
        %v6080 = vpack.c.bf16 %v6069, %v6068
        %v6081 = vpack.c.bf16 %v6071, %v6070
        %v6082 = vpack.c.bf16 %v6073, %v6072
        %v6083 = vpack.c.bf16 %v6075, %v6074
        %v6084 = vpack.c.bf16 %v6077, %v6076
        %v6085 = vpack.c.bf16 %v6078, %v6078
        %v6086 = vld [vmem:[%s20] sm:$0x1]
        %vm6087 = vcmask 15360
        %v6089 = vsel %vm6087, %v6079, 0
        %v6092 = vsel %vm6087, %v6080, 0
        %v6095 = vsel %vm6087, %v6081, 0
        %v6098 = vsel %vm6087, %v6082, 0
        %v6101 = vsel %vm6087, %v6083, 0
        %v6104 = vsel %vm6087, %v6084, 0
        %v6107 = vsel %vm6087, %v6085, 0
        %vm6109 = vcmask 1040384
        %v6111 = vsel %vm6109, %v6086, 0
        %6113 = vmatprep.subr.bf16.mxu0 0
        %6114 = vmatpush1.bf16.msra.mxu0 %v6111
        %6115 = vmatprep.subr.bf16.mxu0 0
        %6116 = vmatpush1.bf16.msra.mxu0 0
        %6117 = vmatprep.subr.bf16.mxu0 0
        %6118 = vmatpush1.bf16.msra.mxu0 0
        %6119 = vmatprep.subr.bf16.mxu0 0
        %6120 = vmatpush1.bf16.msra.mxu0 0
        %6121 = vmatprep.subr.bf16.mxu0 0
        %6122 = vmatpush1.bf16.msra.mxu0 0
        %6123 = vmatprep.subr.bf16.mxu0 0
        %6124 = vmatpush1.bf16.msra.mxu0 0
        %6125 = vmatprep.subr.bf16.mxu0 0
        %6126 = vmatpush1.bf16.msra.mxu0 0
        %6127 = vmatprep.subr.bf16.mxu0 0
        %6128 = vmatpush1.bf16.msra.mxu0 0
        %6129 = vmatprep.subr.bf16.mxu0 0
        %6130 = vmatpush1.bf16.msra.mxu0 0
        %6131 = vmatprep.subr.bf16.mxu0 0
        %6132 = vmatpush1.bf16.msra.mxu0 0
        %6133 = vmatprep.subr.bf16.mxu0 0
        %6134 = vmatpush1.bf16.msra.mxu0 0
        %6135 = vmatprep.subr.bf16.mxu0 0
        %6136 = vmatpush1.bf16.msra.mxu0 0
        %6137 = vmatprep.subr.bf16.mxu0 0
        %6138 = vmatpush1.bf16.msra.mxu0 0
        %6139 = vmatprep.subr.bf16.mxu0 0
        %6140 = vmatpush1.bf16.msra.mxu0 0
        %6141 = vmatprep.subr.bf16.mxu0 0
        %6142 = vmatpush1.bf16.msra.mxu0 0
        %6143 = vmatprep.subr.bf16.mxu0 0
        %6144 = vmatpush1.bf16.msra.mxu0 0
        %6145 = vmatprep.mubr.bf16.mxu0 0
        %6146 = vmatmul.mubr.bf16.gmra.mrb[0].mxu0 %v6089
        %v6147 = vpop.f32.mrb[0].mxu0
        %v6148 = vadd.f32 0.0, %v6147
        %v6149 = vpop.f32.mrb[0].mxu0
        %v6150 = vpop.f32.mrb[0].mxu0
        %v6151 = vadd.f32 0.0, %v6150
        %v6152 = vpop.f32.mrb[0].mxu0
        %6153 = vmatprep.mubr.bf16.mxu0 0
        %6154 = vmatmul.mubr.bf16.gmra.mrb[0].mxu0 %v6092
        %v6155 = vpop.f32.mrb[0].mxu0
        %v6156 = vadd.f32 0.0, %v6155
        %v6157 = vpop.f32.mrb[0].mxu0
        %v6158 = vpop.f32.mrb[0].mxu0
        %v6159 = vadd.f32 0.0, %v6158
        %v6160 = vpop.f32.mrb[0].mxu0
        %6161 = vmatprep.mubr.bf16.mxu0 0
        %6162 = vmatmul.mubr.bf16.gmra.mrb[0].mxu0 %v6095
        %v6163 = vpop.f32.mrb[0].mxu0
        %v6164 = vadd.f32 0.0, %v6163
        %v6165 = vpop.f32.mrb[0].mxu0
        %v6166 = vpop.f32.mrb[0].mxu0
        %v6167 = vadd.f32 0.0, %v6166
        %v6168 = vpop.f32.mrb[0].mxu0
        %6169 = vmatprep.mubr.bf16.mxu0 0
        %6170 = vmatmul.mubr.bf16.gmra.mrb[0].mxu0 %v6098
        %v6171 = vpop.f32.mrb[0].mxu0
        %v6172 = vadd.f32 0.0, %v6171
        %v6173 = vpop.f32.mrb[0].mxu0
        %v6174 = vpop.f32.mrb[0].mxu0
        %v6175 = vadd.f32 0.0, %v6174
        %v6176 = vpop.f32.mrb[0].mxu0
        %6177 = vmatprep.mubr.bf16.mxu0 0
        %6178 = vmatmul.mubr.bf16.gmra.mrb[0].mxu0 %v6101
        %v6179 = vpop.f32.mrb[0].mxu0
        %v6180 = vadd.f32 0.0, %v6179
        %v6181 = vpop.f32.mrb[0].mxu0
        %v6182 = vpop.f32.mrb[0].mxu0
        %v6183 = vadd.f32 0.0, %v6182
        %v6184 = vpop.f32.mrb[0].mxu0
        %6185 = vmatprep.mubr.bf16.mxu0 0
        %6186 = vmatmul.mubr.bf16.gmra.mrb[0].mxu0 %v6104
        %v6187 = vpop.f32.mrb[0].mxu0
        %v6188 = vadd.f32 0.0, %v6187
        %v6189 = vpop.f32.mrb[0].mxu0
        %v6190 = vpop.f32.mrb[0].mxu0
        %v6191 = vadd.f32 0.0, %v6190
        %v6192 = vpop.f32.mrb[0].mxu0
        %6193 = vmatprep.mubr.bf16.mxu0 0
        %6194 = vmatmul.mubr.bf16.gmra.mrb[0].mxu0 %v6107
        %v6195 = vpop.f32.mrb[0].mxu0
        %v6196 = vadd.f32 0.0, %v6195
        %v6197 = vpop.f32.mrb[0].mxu0
        %v6198 = vpop.f32.mrb[0].mxu0
        %v6199 = vpop.f32.mrb[0].mxu0
        %6200 = vdwg.mxu0
        %v6201 = vld [vmem:[%s21] sm:$0xff]
        %v6202 = vld [vmem:[%s21 + $0x8] sm:$0xff]
        %v6203 = vld [vmem:[%s21 + $0x10] sm:$0xff]
        %v6204 = vld [vmem:[%s21 + $0x18] sm:$0xff]
        %v6205 = vld [vmem:[%s21 + $0x20] sm:$0xff]
        %v6206 = vld [vmem:[%s21 + $0x28] sm:$0xff]
        %v6207 = vld [vmem:[%s21 + $0x30] sm:$0xff]
        %v6208 = vld [vmem:[%s21 + $0x38] sm:$0xff]
        %v6209 = vld [vmem:[%s21 + $0x40] sm:$0xff]
        %v6210 = vld [vmem:[%s21 + $0x48] sm:$0xff]
        %v6211 = vld [vmem:[%s21 + $0x50] sm:$0xff]
        %v6212 = vld [vmem:[%s21 + $0x58] sm:$0xff]
        %v6213 = vld [vmem:[%s21 + $0x60] sm:$0xf]
        %v6214 = vmul.f32 %v6148, %v6201
        %v6215 = vmul.f32 %v6151, %v6202
        %v6216 = vmul.f32 %v6156, %v6203
        %v6217 = vmul.f32 %v6159, %v6204
        %v6218 = vmul.f32 %v6164, %v6205
        %v6219 = vmul.f32 %v6167, %v6206
        %v6220 = vmul.f32 %v6172, %v6207
        %v6221 = vmul.f32 %v6175, %v6208
        %v6222 = vmul.f32 %v6180, %v6209
        %v6223 = vmul.f32 %v6183, %v6210
        %v6224 = vmul.f32 %v6188, %v6211
        %v6225 = vmul.f32 %v6191, %v6212
        %v6226 = vmul.f32 %v6196, %v6213
        %v6227 = vpack.c.bf16 %v6215, %v6214
        %v6228 = vpack.c.bf16 %v6217, %v6216
        %v6229 = vpack.c.bf16 %v6219, %v6218
        %v6230 = vpack.c.bf16 %v6221, %v6220
        %v6231 = vpack.c.bf16 %v6223, %v6222
        %v6232 = vpack.c.bf16 %v6225, %v6224
        %v6233 = vpack.c.bf16 %v6226, %v6226
        %v6235 = vsel %vm837, %v6233, 0
        %6237 = vmatprep.subr.bf16.mxu0 0
        %6238 = vmatpush1.bf16.msra.mxu0 %v6227
        %6239 = vmatprep.subr.bf16.mxu0 0
        %6240 = vmatpush1.bf16.msra.mxu0 %v6228
        %6241 = vmatprep.subr.bf16.mxu0 0
        %6242 = vmatpush1.bf16.msra.mxu0 %v6229
        %6243 = vmatprep.subr.bf16.mxu0 0
        %6244 = vmatpush1.bf16.msra.mxu0 %v6230
        %6245 = vmatprep.subr.bf16.mxu0 0
        %6246 = vmatpush1.bf16.msra.mxu0 %v6231
        %6247 = vmatprep.subr.bf16.mxu0 0
        %6248 = vmatpush1.bf16.msra.mxu0 %v6232
        %6249 = vmatprep.subr.bf16.mxu0 0
        %6250 = vmatpush1.bf16.msra.mxu0 %v6235
        %6251 = vmatprep.subr.bf16.mxu0 0
        %6252 = vmatpush1.bf16.msra.mxu0 0
        %6253 = vmatprep.subr.bf16.mxu0 0
        %6254 = vmatpush1.bf16.msra.mxu0 0
        %6255 = vmatprep.subr.bf16.mxu0 0
        %6256 = vmatpush1.bf16.msra.mxu0 0
        %6257 = vmatprep.subr.bf16.mxu0 0
        %6258 = vmatpush1.bf16.msra.mxu0 0
        %6259 = vmatprep.subr.bf16.mxu0 0
        %6260 = vmatpush1.bf16.msra.mxu0 0
        %6261 = vmatprep.subr.bf16.mxu0 0
        %6262 = vmatpush1.bf16.msra.mxu0 0
        %6263 = vmatprep.subr.bf16.mxu0 0
        %6264 = vmatpush1.bf16.msra.mxu0 0
        %6265 = vmatprep.subr.bf16.mxu0 0
        %6266 = vmatpush1.bf16.msra.mxu0 0
        %6267 = vmatprep.subr.bf16.mxu0 0
        %6268 = vmatpush1.bf16.msra.mxu0 0
        %6269 = vmatprep.mubr.bf16.mxu0 0
        %6270 = vmatmul.mubr.bf16.gmra.mrb[0].mxu0 %v5673
        %v6271 = vpop.f32.mrb[0].mxu0
        %v6272 = vadd.f32 0.0, %v6271
        %v6273 = vpop.f32.mrb[0].mxu0
        %v6274 = vpop.f32.mrb[0].mxu0
        %v6275 = vpop.f32.mrb[0].mxu0
        %6276 = vdwg.mxu0
        %v6277 = vpack.c.bf16 %v6272, %v6272
        %v6278 = vld [vmem:[%s13] sm:$0xf]
        %v6279 = vld [vmem:[%s13 + $0x4] sm:$0xf]
        %v6280 = vld [vmem:[%s13 + $0x8] sm:$0xf]
        %v6281 = vld [vmem:[%s13 + $0xc] sm:$0xf]
        %v6282 = vld [vmem:[%s13 + $0x10] sm:$0xf]
        %v6283 = vld [vmem:[%s13 + $0x14] sm:$0xf]
        %v6284 = vld [vmem:[%s13 + $0x18] sm:$0xf]
        %v6285 = vld [vmem:[%s13 + $0x1c] sm:$0xf]
        %v6286 = vld [vmem:[%s13 + $0x20] sm:$0xf]
        %v6287 = vld [vmem:[%s13 + $0x24] sm:$0xf]
        %v6288 = vld [vmem:[%s13 + $0x28] sm:$0xf]
        %v6289 = vld [vmem:[%s13 + $0x2c] sm:$0xf]
        %v6290 = vld [vmem:[%s13 + $0x30] sm:$0xf]
        %v6291 = vld [vmem:[%s13 + $0x34] sm:$0xf]
        %v6292 = vld [vmem:[%s13 + $0x38] sm:$0xf]
        %v6293 = vld [vmem:[%s13 + $0x3c] sm:$0xf]
        %v6294 = vld [vmem:[%s14] sm:$0x1]
        %v6311 = vunpack.c.l.b16 %v6278
        %v6312 = vunpack.c.l.b16 %v6279
        %v6313 = vunpack.c.l.b16 %v6280
        %v6314 = vunpack.c.l.b16 %v6281
        %v6315 = vunpack.c.l.b16 %v6282
        %v6316 = vunpack.c.l.b16 %v6283
        %v6317 = vunpack.c.l.b16 %v6284
        %v6318 = vunpack.c.l.b16 %v6285
        %v6319 = vunpack.c.l.b16 %v6286
        %v6320 = vunpack.c.l.b16 %v6287
        %v6321 = vunpack.c.l.b16 %v6288
        %v6322 = vunpack.c.l.b16 %v6289
        %v6323 = vunpack.c.l.b16 %v6290
        %v6324 = vunpack.c.l.b16 %v6291
        %v6325 = vunpack.c.l.b16 %v6292
        %v6326 = vunpack.c.l.b16 %v6293
        %v6327 = vpack.c.b16 %v6312, %v6311
        %v6328 = vpack.c.b16 %v6314, %v6313
        %v6329 = vpack.c.b16 %v6316, %v6315
        %v6330 = vpack.c.b16 %v6318, %v6317
        %v6331 = vpack.c.b16 %v6320, %v6319
        %v6332 = vpack.c.b16 %v6322, %v6321
        %v6333 = vpack.c.b16 %v6324, %v6323
        %v6334 = vpack.c.b16 %v6326, %v6325
        %6343 = vmatprep.subr.bf16.mxu0 0
        %6344 = vmatpush1.bf16.msra.mxu0 %v6327
        %6345 = vmatprep.subr.bf16.mxu0 0
        %6346 = vmatpush1.bf16.msra.mxu0 %v6328
        %6347 = vmatprep.subr.bf16.mxu0 0
        %6348 = vmatpush1.bf16.msra.mxu0 %v6329
        %6349 = vmatprep.subr.bf16.mxu0 0
        %6350 = vmatpush1.bf16.msra.mxu0 %v6330
        %6351 = vmatprep.subr.bf16.mxu0 0
        %6352 = vmatpush1.bf16.msra.mxu0 %v6331
        %6353 = vmatprep.subr.bf16.mxu0 0
        %6354 = vmatpush1.bf16.msra.mxu0 %v6332
        %6355 = vmatprep.subr.bf16.mxu0 0
        %6356 = vmatpush1.bf16.msra.mxu0 %v6333
        %6357 = vmatprep.subr.bf16.mxu0 0
        %6358 = vmatpush1.bf16.msra.mxu0 %v6334
        %6359 = vmatprep.subr.bf16.mxu0 0
        %6360 = vmatpush1.bf16.msra.mxu0 0
        %6361 = vmatprep.subr.bf16.mxu0 0
        %6362 = vmatpush1.bf16.msra.mxu0 0
        %6363 = vmatprep.subr.bf16.mxu0 0
        %6364 = vmatpush1.bf16.msra.mxu0 0
        %6365 = vmatprep.subr.bf16.mxu0 0
        %6366 = vmatpush1.bf16.msra.mxu0 0
        %6367 = vmatprep.subr.bf16.mxu0 0
        %6368 = vmatpush1.bf16.msra.mxu0 0
        %6369 = vmatprep.subr.bf16.mxu0 0
        %6370 = vmatpush1.bf16.msra.mxu0 0
        %6371 = vmatprep.subr.bf16.mxu0 0
        %6372 = vmatpush1.bf16.msra.mxu0 0
        %6373 = vmatprep.subr.bf16.mxu0 0
        %6374 = vmatpush1.bf16.msra.mxu0 0
        %6375 = vmatprep.mubr.bf16.mxu0 0
        %6376 = vmatmul.mubr.bf16.gmra.mrb[0].mxu0 %v6277
        %v6377 = vpop.f32.mrb[0].mxu0
        %v6378 = vadd.f32 %v6294, %v6377
        %v6379 = vpop.f32.mrb[0].mxu0
        %v6380 = vpop.f32.mrb[0].mxu0
        %v6381 = vpop.f32.mrb[0].mxu0
        %6382 = vdwg.mxu0
        %v6383 = vmax.f32 %v6378, 0.0
        %v6384 = vpack.c.bf16 %v6383, %v6383
        %v6385 = vld [vmem:[%s15] sm:$0xff]
        %v6386 = vld [vmem:[%s15 + $0x8] sm:$0xff]
        %v6387 = vld [vmem:[%s15 + $0x10] sm:$0xff]
        %v6388 = vld [vmem:[%s15 + $0x18] sm:$0xff]
        %v6389 = vld [vmem:[%s15 + $0x20] sm:$0xff]
        %v6390 = vld [vmem:[%s15 + $0x28] sm:$0xff]
        %v6391 = vld [vmem:[%s15 + $0x30] sm:$0xff]
        %v6392 = vld [vmem:[%s15 + $0x38] sm:$0xff]
        %v6393 = vld [vmem:[%s15 + $0x40] sm:$0xff]
        %v6394 = vld [vmem:[%s15 + $0x48] sm:$0xff]
        %v6395 = vld [vmem:[%s15 + $0x50] sm:$0xff]
        %v6396 = vld [vmem:[%s15 + $0x58] sm:$0xff]
        %v6397 = vld [vmem:[%s15 + $0x60] sm:$0xff]
        %v6398 = vld [vmem:[%s15 + $0x68] sm:$0xff]
        %v6399 = vld [vmem:[%s15 + $0x70] sm:$0xff]
        %v6400 = vld [vmem:[%s15 + $0x78] sm:$0xff]
        %v6401 = vld [vmem:[%s16] sm:$0xf]
        %v6418 = vunpack.c.l.b16 %v6385
        %v6419 = vunpack.c.h.b16 %v6385
        %v6420 = vunpack.c.l.b16 %v6386
        %v6421 = vunpack.c.h.b16 %v6386
        %v6422 = vunpack.c.l.b16 %v6387
        %v6423 = vunpack.c.h.b16 %v6387
        %v6424 = vunpack.c.l.b16 %v6388
        %v6425 = vunpack.c.h.b16 %v6388
        %v6426 = vunpack.c.l.b16 %v6389
        %v6427 = vunpack.c.h.b16 %v6389
        %v6428 = vunpack.c.l.b16 %v6390
        %v6429 = vunpack.c.h.b16 %v6390
        %v6430 = vunpack.c.l.b16 %v6391
        %v6431 = vunpack.c.h.b16 %v6391
        %v6432 = vunpack.c.l.b16 %v6392
        %v6433 = vunpack.c.h.b16 %v6392
        %v6434 = vunpack.c.l.b16 %v6393
        %v6435 = vunpack.c.h.b16 %v6393
        %v6436 = vunpack.c.l.b16 %v6394
        %v6437 = vunpack.c.h.b16 %v6394
        %v6438 = vunpack.c.l.b16 %v6395
        %v6439 = vunpack.c.h.b16 %v6395
        %v6440 = vunpack.c.l.b16 %v6396
        %v6441 = vunpack.c.h.b16 %v6396
        %v6442 = vunpack.c.l.b16 %v6397
        %v6443 = vunpack.c.h.b16 %v6397
        %v6444 = vunpack.c.l.b16 %v6398
        %v6445 = vunpack.c.h.b16 %v6398
        %v6446 = vunpack.c.l.b16 %v6399
        %v6447 = vunpack.c.h.b16 %v6399
        %v6448 = vunpack.c.l.b16 %v6400
        %v6449 = vunpack.c.h.b16 %v6400
        %v6450 = vpack.c.b16 %v6422, %v6418
        %v6451 = vpack.c.b16 %v6423, %v6419
        %v6452 = vpack.c.b16 %v6424, %v6420
        %v6453 = vpack.c.b16 %v6425, %v6421
        %v6454 = vpack.c.b16 %v6430, %v6426
        %v6455 = vpack.c.b16 %v6431, %v6427
        %v6456 = vpack.c.b16 %v6432, %v6428
        %v6457 = vpack.c.b16 %v6433, %v6429
        %v6458 = vpack.c.b16 %v6438, %v6434
        %v6459 = vpack.c.b16 %v6439, %v6435
        %v6460 = vpack.c.b16 %v6440, %v6436
        %v6461 = vpack.c.b16 %v6441, %v6437
        %v6462 = vpack.c.b16 %v6446, %v6442
        %v6463 = vpack.c.b16 %v6447, %v6443
        %v6464 = vpack.c.b16 %v6448, %v6444
        %v6465 = vpack.c.b16 %v6449, %v6445
        %v6483 = vlaneseq
        %v6484 = vshrl.u32 %v6483, 7
        %v6485 = vsub.s32 0, %v6484
        %v6486 = vrot.slane %v6401, %v6485
        %v6487 = vlaneseq
        %v6488 = vshrl.u32 %v6487, 7
        %v6489 = vsub.s32 1, %v6488
        %v6490 = vrot.slane %v6401, %v6489
        %v6491 = vlaneseq
        %v6492 = vshrl.u32 %v6491, 7
        %v6493 = vsub.s32 2, %v6492
        %v6494 = vrot.slane %v6401, %v6493
        %v6495 = vlaneseq
        %v6496 = vshrl.u32 %v6495, 7
        %v6497 = vsub.s32 3, %v6496
        %v6498 = vrot.slane %v6401, %v6497
        %v6504 = vsel %vm740, %v6384, 0
        %6506 = vmatprep.subr.bf16.mxu0 %v6451
        %6507 = vmatpush1.bf16.msra.mxu0 %v6450
        %6508 = vmatprep.subr.bf16.mxu0 %v6455
        %6509 = vmatpush1.bf16.msra.mxu0 %v6454
        %6510 = vmatprep.subr.bf16.mxu0 %v6459
        %6511 = vmatpush1.bf16.msra.mxu0 %v6458
        %6512 = vmatprep.subr.bf16.mxu0 %v6463
        %6513 = vmatpush1.bf16.msra.mxu0 %v6462
        %6514 = vmatprep.subr.bf16.mxu0 0
        %6515 = vmatpush1.bf16.msra.mxu0 0
        %6516 = vmatprep.subr.bf16.mxu0 0
        %6517 = vmatpush1.bf16.msra.mxu0 0
        %6518 = vmatprep.subr.bf16.mxu0 0
        %6519 = vmatpush1.bf16.msra.mxu0 0
        %6520 = vmatprep.subr.bf16.mxu0 0
        %6521 = vmatpush1.bf16.msra.mxu0 0
        %6522 = vmatprep.subr.bf16.mxu0 0
        %6523 = vmatpush1.bf16.msra.mxu0 0
        %6524 = vmatprep.subr.bf16.mxu0 0
        %6525 = vmatpush1.bf16.msra.mxu0 0
        %6526 = vmatprep.subr.bf16.mxu0 0
        %6527 = vmatpush1.bf16.msra.mxu0 0
        %6528 = vmatprep.subr.bf16.mxu0 0
        %6529 = vmatpush1.bf16.msra.mxu0 0
        %6530 = vmatprep.subr.bf16.mxu0 0
        %6531 = vmatpush1.bf16.msra.mxu0 0
        %6532 = vmatprep.subr.bf16.mxu0 0
        %6533 = vmatpush1.bf16.msra.mxu0 0
        %6534 = vmatprep.subr.bf16.mxu0 0
        %6535 = vmatpush1.bf16.msra.mxu0 0
        %6536 = vmatprep.subr.bf16.mxu0 0
        %6537 = vmatpush1.bf16.msra.mxu0 0
        %6538 = vmatprep.mubr.bf16.mxu0 0
        %6539 = vmatmul.mubr.bf16.gmra.mrb[0].mxu0 %v6504
        %v6540 = vpop.f32.mrb[0].mxu0
        %v6541 = vadd.f32 %v6486, %v6540
        %v6542 = vpop.f32.mrb[0].mxu0
        %v6543 = vadd.f32 %v6490, %v6542
        %v6544 = vpop.f32.mrb[0].mxu0
        %v6545 = vpop.f32.mrb[0].mxu0
        %6546 = vdwg.mxu0
        %6547 = vmatprep.subr.bf16.mxu0 %v6453
        %6548 = vmatpush1.bf16.msra.mxu0 %v6452
        %6549 = vmatprep.subr.bf16.mxu0 %v6457
        %6550 = vmatpush1.bf16.msra.mxu0 %v6456
        %6551 = vmatprep.subr.bf16.mxu0 %v6461
        %6552 = vmatpush1.bf16.msra.mxu0 %v6460
        %6553 = vmatprep.subr.bf16.mxu0 %v6465
        %6554 = vmatpush1.bf16.msra.mxu0 %v6464
        %6555 = vmatprep.subr.bf16.mxu0 0
        %6556 = vmatpush1.bf16.msra.mxu0 0
        %6557 = vmatprep.subr.bf16.mxu0 0
        %6558 = vmatpush1.bf16.msra.mxu0 0
        %6559 = vmatprep.subr.bf16.mxu0 0
        %6560 = vmatpush1.bf16.msra.mxu0 0
        %6561 = vmatprep.subr.bf16.mxu0 0
        %6562 = vmatpush1.bf16.msra.mxu0 0
        %6563 = vmatprep.subr.bf16.mxu0 0
        %6564 = vmatpush1.bf16.msra.mxu0 0
        %6565 = vmatprep.subr.bf16.mxu0 0
        %6566 = vmatpush1.bf16.msra.mxu0 0
        %6567 = vmatprep.subr.bf16.mxu0 0
        %6568 = vmatpush1.bf16.msra.mxu0 0
        %6569 = vmatprep.subr.bf16.mxu0 0
        %6570 = vmatpush1.bf16.msra.mxu0 0
        %6571 = vmatprep.subr.bf16.mxu0 0
        %6572 = vmatpush1.bf16.msra.mxu0 0
        %6573 = vmatprep.subr.bf16.mxu0 0
        %6574 = vmatpush1.bf16.msra.mxu0 0
        %6575 = vmatprep.subr.bf16.mxu0 0
        %6576 = vmatpush1.bf16.msra.mxu0 0
        %6577 = vmatprep.subr.bf16.mxu0 0
        %6578 = vmatpush1.bf16.msra.mxu0 0
        %6579 = vmatprep.mubr.bf16.mxu0 0
        %6580 = vmatmul.mubr.bf16.gmra.mrb[0].mxu0 %v6504
        %v6581 = vpop.f32.mrb[0].mxu0
        %v6582 = vadd.f32 %v6494, %v6581
        %v6583 = vpop.f32.mrb[0].mxu0
        %v6584 = vadd.f32 %v6498, %v6583
        %v6585 = vpop.f32.mrb[0].mxu0
        %v6586 = vpop.f32.mrb[0].mxu0
        %6587 = vdwg.mxu0
        %v6592 = vcombine.low %v6541, %v6543
        %v6593 = vcombine.low %v6582, %v6584
        %v6595 = vunpack.c.l.s4 1966171168
        %v6596 = vunpack.c.0.s8 %v6595
        %v6597 = vlaneseq
        %v6598 = vshrl.u32 %v6597, 7
        %v6599 = vsub.s32 %v6596, %v6598
        %v6600 = vrot.slane %v6592, %v6599
        %v6602 = vunpack.c.l.s4 1966171168
        %v6603 = vunpack.c.0.s8 %v6602
        %v6604 = vlaneseq
        %v6605 = vshrl.u32 %v6604, 7
        %v6606 = vsub.s32 %v6603, %v6605
        %v6607 = vrot.slane %v6593, %v6606
        %v6608 = vcombine.low %v6600, %v6607
        %v6610 = vunpack.c.l.s4 1966171168
        %v6611 = vunpack.c.0.s8 %v6610
        %v6612 = vlaneseq
        %v6613 = vshrl.u32 %v6612, 7
        %v6614 = vsub.s32 %v6611, %v6613
        %v6615 = vrot.slane %v6608, %v6614
        %v6617 = vlaneseq
        %vm6618 = vcmp.ge.s32.totalorder %v6617, 0
        %vm6619 = vcmp.lt.s32.totalorder %v6617, 512
        %vm6620 = vmand %vm6618, %vm6619
        %6621 = vst.msk [vmem:[%s718] sm:$0xf] %vm6620, %v6615
        %s6622 = sand.u32 %s513, 1
        %s6623 = scalar_lea.sflag [#allocation6], %s6622
        %s6624 = sand.u32 %s513, 1
        %s6625 = scalar_lea.vmem [#allocation5], %s6624
        %p6626 = scmp.lt.s32.totalorder %s38, 1
        %s6627 = scalar_select %p6626, %s38, 1
        %s6628 = smul.addr %s6627, 4
        %s6629 = scalar_lea.vmem %s23, %s6628
        // Predicated region
        $region109: #{qrqac_forward.1} parent=107 // pred_check
          %p6630 = pneg %p523
        $region110: #{qrqac_forward.1} parent=107 // pred_check_branch
          %6632 = sbr.rel (%p6630) target = $region112
        $region111: #{qrqac_forward.1} parent=107 // pred_region
          %s6634 = ssub.s32 16, 16
          %6635 = vsyncadd %s6623, %s6634
          %s6636 = smul.addr %s38, 16
          %s6637 = scalar_lea.hbm %s22, %s6636
          %s6639 = sshll.u32 %s6625, 4
          %s6640 = int_to_ptr.vmem [resolvable:$true] %s6639
          %6642 = dma.vmem_to_hbm [thread:$0]  %s6640, 16, %s6637, %s6623
        $region112: #{qrqac_forward.1} parent=107 // pred_fallthru
          _
        // Predicated region
        $region113: #{qrqac_forward.1} parent=107 // pred_check
          %p6643 = pneg %p549
        $region114: #{qrqac_forward.1} parent=107 // pred_check_branch
          %6645 = sbr.rel (%p6643) target = $region116
        $region115: #{qrqac_forward.1} parent=107 // pred_region
          _
        $region116: #{qrqac_forward.1} parent=107 // pred_fallthru
          _
      $region108: #{qrqac_forward.1} parent=5 // pred_fallthru
        _
      %p6646 = scmp.le.s32.totalorder 2, %s33
      // Predicated region
      $region117: #{qrqac_forward.1} parent=5 // pred_check
        %p6647 = pneg %p6646
      $region118: #{qrqac_forward.1} parent=5 // pred_check_branch
        %6649 = sbr.rel (%p6647) target = $region120
      $region119: #{qrqac_forward.1} parent=5 // pred_region
        %s6650 = ssub.s32 %s33, 2
        // Predicated region
        $region121: #{qrqac_forward.1} parent=119 // pred_check
          %p6651 = pneg %p529
        $region122: #{qrqac_forward.1} parent=119 // pred_check_branch
          %6653 = sbr.rel (%p6651) target = $region124
        $region123: #{qrqac_forward.1} parent=119 // pred_region
          %s6654 = sand.u32 %s514, 1
          %s6655 = scalar_lea.sflag [#allocation6], %s6654
          %s6656 = sand.u32 %s514, 1
          %s6657 = scalar_lea.vmem [#allocation5], %s6656
          %6658 = dma.done %s6655, 16
        $region124: #{qrqac_forward.1} parent=119 // pred_fallthru
          _
        // Predicated region
        $region125: #{qrqac_forward.1} parent=119 // pred_check
          %p6659 = pneg %p555
        $region126: #{qrqac_forward.1} parent=119 // pred_check_branch
          %6661 = sbr.rel (%p6659) target = $region128
        $region127: #{qrqac_forward.1} parent=119 // pred_region
          %p6662 = scmp.lt.s32.totalorder %s39, 1
          %s6663 = scalar_select %p6662, %s39, 1
          %s6664 = smul.addr %s6663, 4
          %s6665 = scalar_lea.vmem %s23, %s6664
        $region128: #{qrqac_forward.1} parent=119 // pred_fallthru
          _
      $region120: #{qrqac_forward.1} parent=5 // pred_fallthru
        _
    $region6: #{qrqac_forward.1} parent=1 // loop_footer
      %s37 = sadd.s32 1, %s33
    $region7: #{qrqac_forward.1} parent=1 // loop_footer_branch
      %32 = sbr.rel target = $region3
    $region8: #{qrqac_forward.1} parent=1 // loop_exit
      _
    %6666 = vsyncpa [#allocation6], 1
    %s6667 = scalar_lea.sflag [#allocation6], 1
    %6668 = vsyncpa %s6667, 1

</llo_original>
